<compile_context>
chip_gen: v5e
topology: v5e:2x2
jax: 0.10.0
libtpu: 0.0.40
codegen_flags: <defaults>
</compile_context>

<pallas_src>
import jax
import jax.numpy as jnp
from jax.experimental import pallas as pl
from jax.experimental.pallas import tpu as pltpu

C1 = 32        # conv1 output channels
C2 = 16        # conv2 output channels (== torch `batch_size` ctor arg; brittle coupling kept as in spec)
HID = 64       # fc1 hidden
CLASSES = 27


# ---------------------------------------------------------------------------
# Fused Pallas kernel: conv1+pool -> conv2+pool -> fc1+relu -> fc2
# ---------------------------------------------------------------------------
def _character_cnn_kernel(p1_ref, w1t_ref, b1_ref, w2t_ref, b2_ref,
                          wf1t_ref, bf1_ref, wf2t_ref, bf2_ref,
                          out_ref, y1q_ref, p2_ref, flat_ref):
    B = out_ref.shape[0]
    R1 = 4 * B * 64          # rows per pool tap, stage 1 (= 4 parity groups * B * 8*8)
    R2 = B * 64              # rows per pool tap, stage 2 (= B * 8*8)

    # ---- stage 1: conv1 + bias + ReLU + 2x2 max-pool (single wide MXU dot) -------------
    # p1 rows are ordered (tap, parity-group, b, i, j); taps are static row blocks.
    z1 = jnp.dot(p1_ref[...], w1t_ref[...], preferred_element_type=jnp.float32)  # [4*R1, C1]
    m1 = jnp.maximum(jnp.maximum(z1[0 * R1:1 * R1], z1[1 * R1:2 * R1]),
                     jnp.maximum(z1[2 * R1:3 * R1], z1[3 * R1:4 * R1]))
    # max_w(relu(z_w + b)) == relu(max_w(z_w) + b) (bias constant over window, ReLU monotone)
    y1 = jnp.maximum(m1 + b1_ref[...], 0.0)          # [R1, C1], rows = (a, c, b, i, j)
    # TODO(synk): nn.Dropout layers are identity here (eval/inference semantics).

    # ---- stash y1 into a zero-padded, parity-decomposed VMEM scratch --------------------
    # y1q[p, q, b, ii, jj, c1] = y1pad[b, 2*ii+p, 2*jj+q, c1]  (18x18 zero-padded grid),
    # so every stage-2 pool-tap / 3x3 window read below is a static UNSTRIDED slice.
    y1q_ref[...] = jnp.zeros(y1q_ref.shape, y1q_ref.dtype)
    for a in range(2):
        for c in range(2):
            g = 2 * a + c
            blk = y1[g * B * 64:(g + 1) * B * 64, :].reshape(B, 8, 8, C1)
            y1q_ref[1 - a, 1 - c, :, a:a + 8, c:c + 8, :] = blk

    # ---- stage 2: gather 3x3xC1 patches for all 4 pool taps straight from VMEM ----------
    for wy in range(2):
        for wx in range(2):
            t2 = 2 * wy + wx
            for ky in range(3):
                for kx in range(3):
                    k = 3 * ky + kx
                    r = wy + ky
                    s = wx + kx
                    p2_ref[t2, :, :, :, k * C1:(k + 1) * C1] = (
                        y1q_ref[r % 2, s % 2, :,
                                r // 2:r // 2 + 8, s // 2:s // 2 + 8, :])

    p2 = p2_ref[...].reshape(4 * R2, 9 * C1)          # lanes (K) unchanged -> cheap reshape
    z2 = jnp.dot(p2, w2t_ref[...], preferred_element_type=jnp.float32)   # [4*R2, C2]
    m2 = jnp.maximum(jnp.maximum(z2[0 * R2:1 * R2], z2[1 * R2:2 * R2]),
                     jnp.maximum(z2[2 * R2:3 * R2], z2[3 * R2:4 * R2]))
    y2 = jnp.maximum(m2 + b2_ref[...], 0.0)           # [R2, C2], rows = (b, i, j)

    # ---- flatten to torch order (c2*64 + i*8 + j) per batch row via tiny VMEM pivot -----
    y2t = jnp.transpose(y2)                           # [C2, B*64]
    for c2 in range(C2):
        for b in range(B):
            flat_ref[b, c2 * 64:(c2 + 1) * 64] = y2t[c2, b * 64:(b + 1) * 64]

    # ---- fused fc1 + ReLU + fc2 (hidden never leaves VMEM/vregs) -------------------------
    flat = flat_ref[...]                              # [B, 1024]
    h = jnp.maximum(jnp.dot(flat, wf1t_ref[...], preferred_element_type=jnp.float32)
                    + bf1_ref[...], 0.0)
    out_ref[...] = (jnp.dot(h, wf2t_ref[...], preferred_element_type=jnp.float32)
                    + bf2_ref[...])


# ---------------------------------------------------------------------------
# Parameter init / one-time repacking into kernel layouts
# ---------------------------------------------------------------------------
def init_params(key, num_channels=1, classes=CLASSES, batch_size=C2):
    ks = jax.random.split(key, 8)
    s = 0.05
    return dict(
        w1=s * jax.random.normal(ks[0], (C1, num_channels, 3, 3), jnp.float32),
        b1=s * jax.random.normal(ks[1], (C1,), jnp.float32),
        w2=s * jax.random.normal(ks[2], (batch_size, C1, 3, 3), jnp.float32),
        b2=s * jax.random.normal(ks[3], (batch_size,), jnp.float32),
        wf1=s * jax.random.normal(ks[4], (HID, batch_size * 8 * 8), jnp.float32),
        bf1=s * jax.random.normal(ks[5], (HID,), jnp.float32),
        wf2=s * jax.random.normal(ks[6], (classes, HID), jnp.float32),
        bf2=s * jax.random.normal(ks[7], (classes,), jnp.float32),
    )


def prepare_params(params):
    """One-time repack of PyTorch-layout weights into the kernel's layouts (init time)."""
    return dict(
        w1t=params["w1"].reshape(C1, 9).T,                              # [9, 32]
        b1r=params["b1"].reshape(1, C1),
        w2t=params["w2"].transpose(2, 3, 1, 0).reshape(9 * C1, C2),     # [(ky,kx,c1), c2]
        b2r=params["b2"].reshape(1, C2),
        wf1t=params["wf1"].T,                                           # [1024, 64]
        bf1r=params["bf1"].reshape(1, HID),
        wf2t=params["wf2"].T,                                           # [64, 27]
        bf2r=params["bf2"].reshape(1, CLASSES),
    )


# ---------------------------------------------------------------------------
# Forward pass: tiny input-side im2col + ONE pallas_call
# ---------------------------------------------------------------------------
def character_cnn_forward(x, prep):
    """x: NCHW [B, 1, 32, 32] float32 -> logits [B, 27] float32."""
    B = x.shape[0]
    # Pool-window / parity-grouped im2col of the RAW INPUT only (16*B*64 x 9 f32, ~72 KB).
    # Row order (wy, wx, a, c, b, i, j): pool-tap major, then output-pixel parity group, so
    # the kernel's tap-max and parity-grouped VMEM stores use only static, aligned slices.
    xpad = jnp.pad(x[:, 0], ((0, 0), (1, 1), (1, 1)))                        # [B, 34, 34]
    cols = jnp.stack([xpad[:, ky:ky + 32, kx:kx + 32]
                      for ky in range(3) for kx in range(3)], axis=-1)       # [B, 32, 32, 9]
    t = cols.reshape(B, 8, 2, 2, 8, 2, 2, 9)               # (b, i, a, wy, j, c, wx, k)
    p1 = t.transpose(3, 6, 2, 5, 0, 1, 4, 7).reshape(16 * B * 64, 9)
    n_rows = p1.shape[0]

    return pl.pallas_call(
        _character_cnn_kernel,
        out_shape=jax.ShapeDtypeStruct((B, CLASSES), jnp.float32),
        grid_spec=pltpu.PrefetchScalarGridSpec(
            num_scalar_prefetch=0,
            grid=(1,),
            in_specs=[
                pl.BlockSpec((n_rows, 9), lambda i: (0, 0)),
                pl.BlockSpec((9, C1), lambda i: (0, 0)),
                pl.BlockSpec((1, C1), lambda i: (0, 0)),
                pl.BlockSpec((9 * C1, C2), lambda i: (0, 0)),
                pl.BlockSpec((1, C2), lambda i: (0, 0)),
                pl.BlockSpec((C2 * 64, HID), lambda i: (0, 0)),
                pl.BlockSpec((1, HID), lambda i: (0, 0)),
                pl.BlockSpec((HID, CLASSES), lambda i: (0, 0)),
                pl.BlockSpec((1, CLASSES), lambda i: (0, 0)),
            ],
            out_specs=pl.BlockSpec((B, CLASSES), lambda i: (0, 0)),
            scratch_shapes=[
                pltpu.VMEM((2, 2, B, 9, 9, C1), jnp.float32),   # parity-decomposed padded y1
                pltpu.VMEM((4, B, 8, 8, 9 * C1), jnp.float32),  # stage-2 patches (per tap)
                pltpu.VMEM((B, C2 * 64), jnp.float32),          # flattened head input
            ]),
        compiler_params=pltpu.CompilerParams(
            dimension_semantics=("arbitrary",)),
    )(p1, prep["w1t"], prep["b1r"], prep["w2t"], prep["b2r"],
      prep["wf1t"], prep["bf1r"], prep["wf2t"], prep["bf2r"])


# ---------------------------------------------------------------------------
# Pure-JAX reference (mirrors the PyTorch forward, eval mode)
# ---------------------------------------------------------------------------
def reference_forward(x, params):
    def conv(z, w, b):
        y = jax.lax.conv_general_dilated(
            z, w, window_strides=(1, 1), padding="SAME",
            dimension_numbers=("NCHW", "OIHW", "NCHW"))
        return y + b[None, :, None, None]

    def pool(z):
        return jax.lax.reduce_window(z, -jnp.inf, jax.lax.max,
                                     (1, 1, 2, 2), (1, 1, 2, 2), "VALID")

    y = pool(jax.nn.relu(conv(x, params["w1"], params["b1"])))
    y = pool(jax.nn.relu(conv(y, params["w2"], params["b2"])))
    y = y.reshape(y.shape[0], -1)
    y = jax.nn.relu(y @ params["wf1"].T + params["bf1"])
    return y @ params["wf2"].T + params["bf2"]


if __name__ == "__main__":
    key = jax.random.PRNGKey(0)
    kx, kp = jax.random.split(key)
    # Spatial size must be 32x32 so fc1's 16*8*8 input width matches after two 2x pools.
    x = jax.random.normal(kx, (2, 1, 32, 32), jnp.float32)   # NCHW
    params = init_params(kp)
    prep = prepare_params(params)                            # one-time weight repack

    out = jax.jit(character_cnn_forward)(x, prep)
    out = jax.block_until_ready(out)

    ref = reference_forward(x, params)
    assert out.shape == (2, CLASSES), out.shape
    assert bool(jnp.allclose(out, ref, rtol=1e-2, atol=1e-2)), "mismatch vs reference"
    print("KERNEL_OK")
</pallas_src>

<mosaic_0001>
module attributes {stable_mosaic.version = 11 : i64} {
  func.func @_character_cnn_kernel(%arg0: i32, %arg1: memref<2048x9xf32, #tpu.memory_space<vmem>>, %arg2: memref<9x32xf32, #tpu.memory_space<vmem>>, %arg3: memref<1x32xf32, #tpu.memory_space<vmem>>, %arg4: memref<288x16xf32, #tpu.memory_space<vmem>>, %arg5: memref<1x16xf32, #tpu.memory_space<vmem>>, %arg6: memref<1024x64xf32, #tpu.memory_space<vmem>>, %arg7: memref<1x64xf32, #tpu.memory_space<vmem>>, %arg8: memref<64x27xf32, #tpu.memory_space<vmem>>, %arg9: memref<1x27xf32, #tpu.memory_space<vmem>>, %arg10: memref<2x27xf32, #tpu.memory_space<vmem>>, %arg11: memref<2x2x2x9x9x32xf32, #tpu.memory_space<vmem>>, %arg12: memref<4x2x8x8x288xf32, #tpu.memory_space<vmem>>, %arg13: memref<2x1024xf32, #tpu.memory_space<vmem>>) attributes {dimension_semantics = [#tpu.dimension_semantics<arbitrary>], iteration_bounds = array<i64: 1>, scalar_prefetch = 0 : i64, scratch_operands = 3 : i64, tpu.core_type = #tpu.core_type<tc>, window_params = [{pipeline_mode = #tpu.pipeline_mode<synchronous>, transform_indices = @transform_0, window_bounds = array<i64: 2048, 9>}, {pipeline_mode = #tpu.pipeline_mode<synchronous>, transform_indices = @transform_1, window_bounds = array<i64: 9, 32>}, {pipeline_mode = #tpu.pipeline_mode<synchronous>, transform_indices = @transform_2, window_bounds = array<i64: 1, 32>}, {pipeline_mode = #tpu.pipeline_mode<synchronous>, transform_indices = @transform_3, window_bounds = array<i64: 288, 16>}, {pipeline_mode = #tpu.pipeline_mode<synchronous>, transform_indices = @transform_4, window_bounds = array<i64: 1, 16>}, {pipeline_mode = #tpu.pipeline_mode<synchronous>, transform_indices = @transform_5, window_bounds = array<i64: 1024, 64>}, {pipeline_mode = #tpu.pipeline_mode<synchronous>, transform_indices = @transform_6, window_bounds = array<i64: 1, 64>}, {pipeline_mode = #tpu.pipeline_mode<synchronous>, transform_indices = @transform_7, window_bounds = array<i64: 64, 27>}, {pipeline_mode = #tpu.pipeline_mode<synchronous>, transform_indices = @transform_8, window_bounds = array<i64: 1, 27>}, {pipeline_mode = #tpu.pipeline_mode<synchronous>, transform_indices = @transform_9, window_bounds = array<i64: 2, 27>}]} {
    %c0 = arith.constant 0 : index
    %c0_0 = arith.constant 0 : index
    %0 = vector.load %arg1[%c0, %c0_0] : memref<2048x9xf32, #tpu.memory_space<vmem>>, vector<2048x9xf32>
    %c0_1 = arith.constant 0 : index
    %c0_2 = arith.constant 0 : index
    %1 = vector.load %arg2[%c0_1, %c0_2] : memref<9x32xf32, #tpu.memory_space<vmem>>, vector<9x32xf32>
    %cst = arith.constant dense<0.000000e+00> : vector<2048x32xf32>
    %2 = tpu.matmul %0, %1, %cst {dimension_numbers = #tpu.dot_dimension_numbers<[1], [0], [0], [1], [0, 0, 1, 1], [], []>} : vector<2048x9xf32>, vector<9x32xf32>, vector<2048x32xf32> -> vector<2048x32xf32>
    %3 = vector.extract_strided_slice %2 {offsets = [0, 0], sizes = [512, 32], strides = [1, 1]} : vector<2048x32xf32> to vector<512x32xf32>
    %4 = vector.extract_strided_slice %2 {offsets = [512, 0], sizes = [512, 32], strides = [1, 1]} : vector<2048x32xf32> to vector<512x32xf32>
    %5 = arith.maximumf %3, %4 : vector<512x32xf32>
    %6 = vector.extract_strided_slice %2 {offsets = [1024, 0], sizes = [512, 32], strides = [1, 1]} : vector<2048x32xf32> to vector<512x32xf32>
    %7 = vector.extract_strided_slice %2 {offsets = [1536, 0], sizes = [512, 32], strides = [1, 1]} : vector<2048x32xf32> to vector<512x32xf32>
    %8 = arith.maximumf %6, %7 : vector<512x32xf32>
    %9 = arith.maximumf %5, %8 : vector<512x32xf32>
    %c0_3 = arith.constant 0 : index
    %c0_4 = arith.constant 0 : index
    %10 = vector.load %arg3[%c0_3, %c0_4] : memref<1x32xf32, #tpu.memory_space<vmem>>, vector<1x32xf32>
    %11 = vector.broadcast %10 : vector<1x32xf32> to vector<512x32xf32>
    %12 = arith.addf %9, %11 : vector<512x32xf32>
    %cst_5 = arith.constant 0.000000e+00 : f32
    %13 = vector.broadcast %cst_5 : f32 to vector<512x32xf32>
    %14 = arith.maximumf %12, %13 : vector<512x32xf32>
    %cst_6 = arith.constant 0.000000e+00 : f32
    %15 = vector.broadcast %cst_6 : f32 to vector<2x2x2x9x9x32xf32>
    %c0_7 = arith.constant 0 : index
    %c0_8 = arith.constant 0 : index
    %c0_9 = arith.constant 0 : index
    %c0_10 = arith.constant 0 : index
    %c0_11 = arith.constant 0 : index
    %c0_12 = arith.constant 0 : index
    %16 = vector.load %arg11[%c0_7, %c0_8, %c0_9, %c0_10, %c0_11, %c0_12] : memref<2x2x2x9x9x32xf32, #tpu.memory_space<vmem>>, vector<2x2x2x9x9x32xf32>
    tpu.vector_store %arg11[%c0_7, %c0_8, %c0_9, %c0_10, %c0_11, %c0_12], %15 {strides = array<i32>} : memref<2x2x2x9x9x32xf32, #tpu.memory_space<vmem>>, vector<2x2x2x9x9x32xf32>,
    %17 = vector.extract_strided_slice %14 {offsets = [0, 0], sizes = [128, 32], strides = [1, 1]} : vector<512x32xf32> to vector<128x32xf32>
    %18 = vector.shape_cast %17 : vector<128x32xf32> to vector<2x8x8x32xf32>
    %c1 = arith.constant 1 : index
    %c1_13 = arith.constant 1 : index
    %c0_14 = arith.constant 0 : index
    %c0_15 = arith.constant 0 : index
    %c0_16 = arith.constant 0 : index
    %c0_17 = arith.constant 0 : index
    %19 = vector.load %arg11[%c1, %c1_13, %c0_14, %c0_15, %c0_16, %c0_17] : memref<2x2x2x9x9x32xf32, #tpu.memory_space<vmem>>, vector<1x1x2x8x8x32xf32>
    %20 = vector.shape_cast %19 : vector<1x1x2x8x8x32xf32> to vector<2x8x8x32xf32>
    %21 = vector.shape_cast %18 : vector<2x8x8x32xf32> to vector<1x1x2x8x8x32xf32>
    tpu.vector_store %arg11[%c1, %c1_13, %c0_14, %c0_15, %c0_16, %c0_17], %21 {strides = array<i32>} : memref<2x2x2x9x9x32xf32, #tpu.memory_space<vmem>>, vector<1x1x2x8x8x32xf32>,
    %22 = vector.extract_strided_slice %14 {offsets = [128, 0], sizes = [128, 32], strides = [1, 1]} : vector<512x32xf32> to vector<128x32xf32>
    %23 = vector.shape_cast %22 : vector<128x32xf32> to vector<2x8x8x32xf32>
    %c1_18 = arith.constant 1 : index
    %c0_19 = arith.constant 0 : index
    %c0_20 = arith.constant 0 : index
    %c0_21 = arith.constant 0 : index
    %c1_22 = arith.constant 1 : index
    %c0_23 = arith.constant 0 : index
    %24 = vector.load %arg11[%c1_18, %c0_19, %c0_20, %c0_21, %c1_22, %c0_23] : memref<2x2x2x9x9x32xf32, #tpu.memory_space<vmem>>, vector<1x1x2x8x8x32xf32>
    %25 = vector.shape_cast %24 : vector<1x1x2x8x8x32xf32> to vector<2x8x8x32xf32>
    %26 = vector.shape_cast %23 : vector<2x8x8x32xf32> to vector<1x1x2x8x8x32xf32>
    tpu.vector_store %arg11[%c1_18, %c0_19, %c0_20, %c0_21, %c1_22, %c0_23], %26 {strides = array<i32>} : memref<2x2x2x9x9x32xf32, #tpu.memory_space<vmem>>, vector<1x1x2x8x8x32xf32>,
    %27 = vector.extract_strided_slice %14 {offsets = [256, 0], sizes = [128, 32], strides = [1, 1]} : vector<512x32xf32> to vector<128x32xf32>
    %28 = vector.shape_cast %27 : vector<128x32xf32> to vector<2x8x8x32xf32>
    %c0_24 = arith.constant 0 : index
    %c1_25 = arith.constant 1 : index
    %c0_26 = arith.constant 0 : index
    %c1_27 = arith.constant 1 : index
    %c0_28 = arith.constant 0 : index
    %c0_29 = arith.constant 0 : index
    %29 = vector.load %arg11[%c0_24, %c1_25, %c0_26, %c1_27, %c0_28, %c0_29] : memref<2x2x2x9x9x32xf32, #tpu.memory_space<vmem>>, vector<1x1x2x8x8x32xf32>
    %30 = vector.shape_cast %29 : vector<1x1x2x8x8x32xf32> to vector<2x8x8x32xf32>
    %31 = vector.shape_cast %28 : vector<2x8x8x32xf32> to vector<1x1x2x8x8x32xf32>
    tpu.vector_store %arg11[%c0_24, %c1_25, %c0_26, %c1_27, %c0_28, %c0_29], %31 {strides = array<i32>} : memref<2x2x2x9x9x32xf32, #tpu.memory_space<vmem>>, vector<1x1x2x8x8x32xf32>,
    %32 = vector.extract_strided_slice %14 {offsets = [384, 0], sizes = [128, 32], strides = [1, 1]} : vector<512x32xf32> to vector<128x32xf32>
    %33 = vector.shape_cast %32 : vector<128x32xf32> to vector<2x8x8x32xf32>
    %c0_30 = arith.constant 0 : index
    %c0_31 = arith.constant 0 : index
    %c0_32 = arith.constant 0 : index
    %c1_33 = arith.constant 1 : index
    %c1_34 = arith.constant 1 : index
    %c0_35 = arith.constant 0 : index
    %34 = vector.load %arg11[%c0_30, %c0_31, %c0_32, %c1_33, %c1_34, %c0_35] : memref<2x2x2x9x9x32xf32, #tpu.memory_space<vmem>>, vector<1x1x2x8x8x32xf32>
    %35 = vector.shape_cast %34 : vector<1x1x2x8x8x32xf32> to vector<2x8x8x32xf32>
    %36 = vector.shape_cast %33 : vector<2x8x8x32xf32> to vector<1x1x2x8x8x32xf32>
    tpu.vector_store %arg11[%c0_30, %c0_31, %c0_32, %c1_33, %c1_34, %c0_35], %36 {strides = array<i32>} : memref<2x2x2x9x9x32xf32, #tpu.memory_space<vmem>>, vector<1x1x2x8x8x32xf32>,
    %c0_36 = arith.constant 0 : index
    %c0_37 = arith.constant 0 : index
    %c0_38 = arith.constant 0 : index
    %c0_39 = arith.constant 0 : index
    %c0_40 = arith.constant 0 : index
    %c0_41 = arith.constant 0 : index
    %37 = vector.load %arg11[%c0_36, %c0_37, %c0_38, %c0_39, %c0_40, %c0_41] : memref<2x2x2x9x9x32xf32, #tpu.memory_space<vmem>>, vector<1x1x2x8x8x32xf32>
    %38 = vector.shape_cast %37 : vector<1x1x2x8x8x32xf32> to vector<2x8x8x32xf32>
    %c0_42 = arith.constant 0 : index
    %c0_43 = arith.constant 0 : index
    %c0_44 = arith.constant 0 : index
    %c0_45 = arith.constant 0 : index
    %c0_46 = arith.constant 0 : index
    %39 = vector.load %arg12[%c0_42, %c0_43, %c0_44, %c0_45, %c0_46] : memref<4x2x8x8x288xf32, #tpu.memory_space<vmem>>, vector<1x2x8x8x32xf32>
    %40 = vector.shape_cast %39 : vector<1x2x8x8x32xf32> to vector<2x8x8x32xf32>
    %41 = vector.shape_cast %38 : vector<2x8x8x32xf32> to vector<1x2x8x8x32xf32>
    tpu.vector_store %arg12[%c0_42, %c0_43, %c0_44, %c0_45, %c0_46], %41 {strides = array<i32>} : memref<4x2x8x8x288xf32, #tpu.memory_space<vmem>>, vector<1x2x8x8x32xf32>,
    %c0_47 = arith.constant 0 : index
    %c1_48 = arith.constant 1 : index
    %c0_49 = arith.constant 0 : index
    %c0_50 = arith.constant 0 : index
    %c0_51 = arith.constant 0 : index
    %c0_52 = arith.constant 0 : index
    %42 = vector.load %arg11[%c0_47, %c1_48, %c0_49, %c0_50, %c0_51, %c0_52] : memref<2x2x2x9x9x32xf32, #tpu.memory_space<vmem>>, vector<1x1x2x8x8x32xf32>
    %43 = vector.shape_cast %42 : vector<1x1x2x8x8x32xf32> to vector<2x8x8x32xf32>
    %c0_53 = arith.constant 0 : index
    %c0_54 = arith.constant 0 : index
    %c0_55 = arith.constant 0 : index
    %c0_56 = arith.constant 0 : index
    %c32 = arith.constant 32 : index
    %44 = vector.load %arg12[%c0_53, %c0_54, %c0_55, %c0_56, %c32] : memref<4x2x8x8x288xf32, #tpu.memory_space<vmem>>, vector<1x2x8x8x32xf32>
    %45 = vector.shape_cast %44 : vector<1x2x8x8x32xf32> to vector<2x8x8x32xf32>
    %46 = vector.shape_cast %43 : vector<2x8x8x32xf32> to vector<1x2x8x8x32xf32>
    tpu.vector_store %arg12[%c0_53, %c0_54, %c0_55, %c0_56, %c32], %46 {strides = array<i32>} : memref<4x2x8x8x288xf32, #tpu.memory_space<vmem>>, vector<1x2x8x8x32xf32>,
    %c0_57 = arith.constant 0 : index
    %c0_58 = arith.constant 0 : index
    %c0_59 = arith.constant 0 : index
    %c0_60 = arith.constant 0 : index
    %c1_61 = arith.constant 1 : index
    %c0_62 = arith.constant 0 : index
    %47 = vector.load %arg11[%c0_57, %c0_58, %c0_59, %c0_60, %c1_61, %c0_62] : memref<2x2x2x9x9x32xf32, #tpu.memory_space<vmem>>, vector<1x1x2x8x8x32xf32>
    %48 = vector.shape_cast %47 : vector<1x1x2x8x8x32xf32> to vector<2x8x8x32xf32>
    %c0_63 = arith.constant 0 : index
    %c0_64 = arith.constant 0 : index
    %c0_65 = arith.constant 0 : index
    %c0_66 = arith.constant 0 : index
    %c64 = arith.constant 64 : index
    %49 = vector.load %arg12[%c0_63, %c0_64, %c0_65, %c0_66, %c64] : memref<4x2x8x8x288xf32, #tpu.memory_space<vmem>>, vector<1x2x8x8x32xf32>
    %50 = vector.shape_cast %49 : vector<1x2x8x8x32xf32> to vector<2x8x8x32xf32>
    %51 = vector.shape_cast %48 : vector<2x8x8x32xf32> to vector<1x2x8x8x32xf32>
    tpu.vector_store %arg12[%c0_63, %c0_64, %c0_65, %c0_66, %c64], %51 {strides = array<i32>} : memref<4x2x8x8x288xf32, #tpu.memory_space<vmem>>, vector<1x2x8x8x32xf32>,
    %c1_67 = arith.constant 1 : index
    %c0_68 = arith.constant 0 : index
    %c0_69 = arith.constant 0 : index
    %c0_70 = arith.constant 0 : index
    %c0_71 = arith.constant 0 : index
    %c0_72 = arith.constant 0 : index
    %52 = vector.load %arg11[%c1_67, %c0_68, %c0_69, %c0_70, %c0_71, %c0_72] : memref<2x2x2x9x9x32xf32, #tpu.memory_space<vmem>>, vector<1x1x2x8x8x32xf32>
    %53 = vector.shape_cast %52 : vector<1x1x2x8x8x32xf32> to vector<2x8x8x32xf32>
    %c0_73 = arith.constant 0 : index
    %c0_74 = arith.constant 0 : index
    %c0_75 = arith.constant 0 : index
    %c0_76 = arith.constant 0 : index
    %c96 = arith.constant 96 : index
    %54 = vector.load %arg12[%c0_73, %c0_74, %c0_75, %c0_76, %c96] : memref<4x2x8x8x288xf32, #tpu.memory_space<vmem>>, vector<1x2x8x8x32xf32>
    %55 = vector.shape_cast %54 : vector<1x2x8x8x32xf32> to vector<2x8x8x32xf32>
    %56 = vector.shape_cast %53 : vector<2x8x8x32xf32> to vector<1x2x8x8x32xf32>
    tpu.vector_store %arg12[%c0_73, %c0_74, %c0_75, %c0_76, %c96], %56 {strides = array<i32>} : memref<4x2x8x8x288xf32, #tpu.memory_space<vmem>>, vector<1x2x8x8x32xf32>,
    %c1_77 = arith.constant 1 : index
    %c1_78 = arith.constant 1 : index
    %c0_79 = arith.constant 0 : index
    %c0_80 = arith.constant 0 : index
    %c0_81 = arith.constant 0 : index
    %c0_82 = arith.constant 0 : index
    %57 = vector.load %arg11[%c1_77, %c1_78, %c0_79, %c0_80, %c0_81, %c0_82] : memref<2x2x2x9x9x32xf32, #tpu.memory_space<vmem>>, vector<1x1x2x8x8x32xf32>
    %58 = vector.shape_cast %57 : vector<1x1x2x8x8x32xf32> to vector<2x8x8x32xf32>
    %c0_83 = arith.constant 0 : index
    %c0_84 = arith.constant 0 : index
    %c0_85 = arith.constant 0 : index
    %c0_86 = arith.constant 0 : index
    %c128 = arith.constant 128 : index
    %59 = vector.load %arg12[%c0_83, %c0_84, %c0_85, %c0_86, %c128] : memref<4x2x8x8x288xf32, #tpu.memory_space<vmem>>, vector<1x2x8x8x32xf32>
    %60 = vector.shape_cast %59 : vector<1x2x8x8x32xf32> to vector<2x8x8x32xf32>
    %61 = vector.shape_cast %58 : vector<2x8x8x32xf32> to vector<1x2x8x8x32xf32>
    tpu.vector_store %arg12[%c0_83, %c0_84, %c0_85, %c0_86, %c128], %61 {strides = array<i32>} : memref<4x2x8x8x288xf32, #tpu.memory_space<vmem>>, vector<1x2x8x8x32xf32>,
    %c1_87 = arith.constant 1 : index
    %c0_88 = arith.constant 0 : index
    %c0_89 = arith.constant 0 : index
    %c0_90 = arith.constant 0 : index
    %c1_91 = arith.constant 1 : index
    %c0_92 = arith.constant 0 : index
    %62 = vector.load %arg11[%c1_87, %c0_88, %c0_89, %c0_90, %c1_91, %c0_92] : memref<2x2x2x9x9x32xf32, #tpu.memory_space<vmem>>, vector<1x1x2x8x8x32xf32>
    %63 = vector.shape_cast %62 : vector<1x1x2x8x8x32xf32> to vector<2x8x8x32xf32>
    %c0_93 = arith.constant 0 : index
    %c0_94 = arith.constant 0 : index
    %c0_95 = arith.constant 0 : index
    %c0_96 = arith.constant 0 : index
    %c160 = arith.constant 160 : index
    %64 = vector.load %arg12[%c0_93, %c0_94, %c0_95, %c0_96, %c160] : memref<4x2x8x8x288xf32, #tpu.memory_space<vmem>>, vector<1x2x8x8x32xf32>
    %65 = vector.shape_cast %64 : vector<1x2x8x8x32xf32> to vector<2x8x8x32xf32>
    %66 = vector.shape_cast %63 : vector<2x8x8x32xf32> to vector<1x2x8x8x32xf32>
    tpu.vector_store %arg12[%c0_93, %c0_94, %c0_95, %c0_96, %c160], %66 {strides = array<i32>} : memref<4x2x8x8x288xf32, #tpu.memory_space<vmem>>, vector<1x2x8x8x32xf32>,
    %c0_97 = arith.constant 0 : index
    %c0_98 = arith.constant 0 : index
    %c0_99 = arith.constant 0 : index
    %c1_100 = arith.constant 1 : index
    %c0_101 = arith.constant 0 : index
    %c0_102 = arith.constant 0 : index
    %67 = vector.load %arg11[%c0_97, %c0_98, %c0_99, %c1_100, %c0_101, %c0_102] : memref<2x2x2x9x9x32xf32, #tpu.memory_space<vmem>>, vector<1x1x2x8x8x32xf32>
    %68 = vector.shape_cast %67 : vector<1x1x2x8x8x32xf32> to vector<2x8x8x32xf32>
    %c0_103 = arith.constant 0 : index
    %c0_104 = arith.constant 0 : index
    %c0_105 = arith.constant 0 : index
    %c0_106 = arith.constant 0 : index
    %c192 = arith.constant 192 : index
    %69 = vector.load %arg12[%c0_103, %c0_104, %c0_105, %c0_106, %c192] : memref<4x2x8x8x288xf32, #tpu.memory_space<vmem>>, vector<1x2x8x8x32xf32>
    %70 = vector.shape_cast %69 : vector<1x2x8x8x32xf32> to vector<2x8x8x32xf32>
    %71 = vector.shape_cast %68 : vector<2x8x8x32xf32> to vector<1x2x8x8x32xf32>
    tpu.vector_store %arg12[%c0_103, %c0_104, %c0_105, %c0_106, %c192], %71 {strides = array<i32>} : memref<4x2x8x8x288xf32, #tpu.memory_space<vmem>>, vector<1x2x8x8x32xf32>,
    %c0_107 = arith.constant 0 : index
    %c1_108 = arith.constant 1 : index
    %c0_109 = arith.constant 0 : index
    %c1_110 = arith.constant 1 : index
    %c0_111 = arith.constant 0 : index
    %c0_112 = arith.constant 0 : index
    %72 = vector.load %arg11[%c0_107, %c1_108, %c0_109, %c1_110, %c0_111, %c0_112] : memref<2x2x2x9x9x32xf32, #tpu.memory_space<vmem>>, vector<1x1x2x8x8x32xf32>
    %73 = vector.shape_cast %72 : vector<1x1x2x8x8x32xf32> to vector<2x8x8x32xf32>
    %c0_113 = arith.constant 0 : index
    %c0_114 = arith.constant 0 : index
    %c0_115 = arith.constant 0 : index
    %c0_116 = arith.constant 0 : index
    %c224 = arith.constant 224 : index
    %74 = vector.load %arg12[%c0_113, %c0_114, %c0_115, %c0_116, %c224] : memref<4x2x8x8x288xf32, #tpu.memory_space<vmem>>, vector<1x2x8x8x32xf32>
    %75 = vector.shape_cast %74 : vector<1x2x8x8x32xf32> to vector<2x8x8x32xf32>
    %76 = vector.shape_cast %73 : vector<2x8x8x32xf32> to vector<1x2x8x8x32xf32>
    tpu.vector_store %arg12[%c0_113, %c0_114, %c0_115, %c0_116, %c224], %76 {strides = array<i32>} : memref<4x2x8x8x288xf32, #tpu.memory_space<vmem>>, vector<1x2x8x8x32xf32>,
    %c0_117 = arith.constant 0 : index
    %c0_118 = arith.constant 0 : index
    %c0_119 = arith.constant 0 : index
    %c1_120 = arith.constant 1 : index
    %c1_121 = arith.constant 1 : index
    %c0_122 = arith.constant 0 : index
    %77 = vector.load %arg11[%c0_117, %c0_118, %c0_119, %c1_120, %c1_121, %c0_122] : memref<2x2x2x9x9x32xf32, #tpu.memory_space<vmem>>, vector<1x1x2x8x8x32xf32>
    %78 = vector.shape_cast %77 : vector<1x1x2x8x8x32xf32> to vector<2x8x8x32xf32>
    %c0_123 = arith.constant 0 : index
    %c0_124 = arith.constant 0 : index
    %c0_125 = arith.constant 0 : index
    %c0_126 = arith.constant 0 : index
    %c256 = arith.constant 256 : index
    %79 = vector.load %arg12[%c0_123, %c0_124, %c0_125, %c0_126, %c256] : memref<4x2x8x8x288xf32, #tpu.memory_space<vmem>>, vector<1x2x8x8x32xf32>
    %80 = vector.shape_cast %79 : vector<1x2x8x8x32xf32> to vector<2x8x8x32xf32>
    %81 = vector.shape_cast %78 : vector<2x8x8x32xf32> to vector<1x2x8x8x32xf32>
    tpu.vector_store %arg12[%c0_123, %c0_124, %c0_125, %c0_126, %c256], %81 {strides = array<i32>} : memref<4x2x8x8x288xf32, #tpu.memory_space<vmem>>, vector<1x2x8x8x32xf32>,
    %c0_127 = arith.constant 0 : index
    %c1_128 = arith.constant 1 : index
    %c0_129 = arith.constant 0 : index
    %c0_130 = arith.constant 0 : index
    %c0_131 = arith.constant 0 : index
    %c0_132 = arith.constant 0 : index
    %82 = vector.load %arg11[%c0_127, %c1_128, %c0_129, %c0_130, %c0_131, %c0_132] : memref<2x2x2x9x9x32xf32, #tpu.memory_space<vmem>>, vector<1x1x2x8x8x32xf32>
    %83 = vector.shape_cast %82 : vector<1x1x2x8x8x32xf32> to vector<2x8x8x32xf32>
    %c1_133 = arith.constant 1 : index
    %c0_134 = arith.constant 0 : index
    %c0_135 = arith.constant 0 : index
    %c0_136 = arith.constant 0 : index
    %c0_137 = arith.constant 0 : index
    %84 = vector.load %arg12[%c1_133, %c0_134, %c0_135, %c0_136, %c0_137] : memref<4x2x8x8x288xf32, #tpu.memory_space<vmem>>, vector<1x2x8x8x32xf32>
    %85 = vector.shape_cast %84 : vector<1x2x8x8x32xf32> to vector<2x8x8x32xf32>
    %86 = vector.shape_cast %83 : vector<2x8x8x32xf32> to vector<1x2x8x8x32xf32>
    tpu.vector_store %arg12[%c1_133, %c0_134, %c0_135, %c0_136, %c0_137], %86 {strides = array<i32>} : memref<4x2x8x8x288xf32, #tpu.memory_space<vmem>>, vector<1x2x8x8x32xf32>,
    %c0_138 = arith.constant 0 : index
    %c0_139 = arith.constant 0 : index
    %c0_140 = arith.constant 0 : index
    %c0_141 = arith.constant 0 : index
    %c1_142 = arith.constant 1 : index
    %c0_143 = arith.constant 0 : index
    %87 = vector.load %arg11[%c0_138, %c0_139, %c0_140, %c0_141, %c1_142, %c0_143] : memref<2x2x2x9x9x32xf32, #tpu.memory_space<vmem>>, vector<1x1x2x8x8x32xf32>
    %88 = vector.shape_cast %87 : vector<1x1x2x8x8x32xf32> to vector<2x8x8x32xf32>
    %c1_144 = arith.constant 1 : index
    %c0_145 = arith.constant 0 : index
    %c0_146 = arith.constant 0 : index
    %c0_147 = arith.constant 0 : index
    %c32_148 = arith.constant 32 : index
    %89 = vector.load %arg12[%c1_144, %c0_145, %c0_146, %c0_147, %c32_148] : memref<4x2x8x8x288xf32, #tpu.memory_space<vmem>>, vector<1x2x8x8x32xf32>
    %90 = vector.shape_cast %89 : vector<1x2x8x8x32xf32> to vector<2x8x8x32xf32>
    %91 = vector.shape_cast %88 : vector<2x8x8x32xf32> to vector<1x2x8x8x32xf32>
    tpu.vector_store %arg12[%c1_144, %c0_145, %c0_146, %c0_147, %c32_148], %91 {strides = array<i32>} : memref<4x2x8x8x288xf32, #tpu.memory_space<vmem>>, vector<1x2x8x8x32xf32>,
    %c0_149 = arith.constant 0 : index
    %c1_150 = arith.constant 1 : index
    %c0_151 = arith.constant 0 : index
    %c0_152 = arith.constant 0 : index
    %c1_153 = arith.constant 1 : index
    %c0_154 = arith.constant 0 : index
    %92 = vector.load %arg11[%c0_149, %c1_150, %c0_151, %c0_152, %c1_153, %c0_154] : memref<2x2x2x9x9x32xf32, #tpu.memory_space<vmem>>, vector<1x1x2x8x8x32xf32>
    %93 = vector.shape_cast %92 : vector<1x1x2x8x8x32xf32> to vector<2x8x8x32xf32>
    %c1_155 = arith.constant 1 : index
    %c0_156 = arith.constant 0 : index
    %c0_157 = arith.constant 0 : index
    %c0_158 = arith.constant 0 : index
    %c64_159 = arith.constant 64 : index
    %94 = vector.load %arg12[%c1_155, %c0_156, %c0_157, %c0_158, %c64_159] : memref<4x2x8x8x288xf32, #tpu.memory_space<vmem>>, vector<1x2x8x8x32xf32>
    %95 = vector.shape_cast %94 : vector<1x2x8x8x32xf32> to vector<2x8x8x32xf32>
    %96 = vector.shape_cast %93 : vector<2x8x8x32xf32> to vector<1x2x8x8x32xf32>
    tpu.vector_store %arg12[%c1_155, %c0_156, %c0_157, %c0_158, %c64_159], %96 {strides = array<i32>} : memref<4x2x8x8x288xf32, #tpu.memory_space<vmem>>, vector<1x2x8x8x32xf32>,
    %c1_160 = arith.constant 1 : index
    %c1_161 = arith.constant 1 : index
    %c0_162 = arith.constant 0 : index
    %c0_163 = arith.constant 0 : index
    %c0_164 = arith.constant 0 : index
    %c0_165 = arith.constant 0 : index
    %97 = vector.load %arg11[%c1_160, %c1_161, %c0_162, %c0_163, %c0_164, %c0_165] : memref<2x2x2x9x9x32xf32, #tpu.memory_space<vmem>>, vector<1x1x2x8x8x32xf32>
    %98 = vector.shape_cast %97 : vector<1x1x2x8x8x32xf32> to vector<2x8x8x32xf32>
    %c1_166 = arith.constant 1 : index
    %c0_167 = arith.constant 0 : index
    %c0_168 = arith.constant 0 : index
    %c0_169 = arith.constant 0 : index
    %c96_170 = arith.constant 96 : index
    %99 = vector.load %arg12[%c1_166, %c0_167, %c0_168, %c0_169, %c96_170] : memref<4x2x8x8x288xf32, #tpu.memory_space<vmem>>, vector<1x2x8x8x32xf32>
    %100 = vector.shape_cast %99 : vector<1x2x8x8x32xf32> to vector<2x8x8x32xf32>
    %101 = vector.shape_cast %98 : vector<2x8x8x32xf32> to vector<1x2x8x8x32xf32>
    tpu.vector_store %arg12[%c1_166, %c0_167, %c0_168, %c0_169, %c96_170], %101 {strides = array<i32>} : memref<4x2x8x8x288xf32, #tpu.memory_space<vmem>>, vector<1x2x8x8x32xf32>,
    %c1_171 = arith.constant 1 : index
    %c0_172 = arith.constant 0 : index
    %c0_173 = arith.constant 0 : index
    %c0_174 = arith.constant 0 : index
    %c1_175 = arith.constant 1 : index
    %c0_176 = arith.constant 0 : index
    %102 = vector.load %arg11[%c1_171, %c0_172, %c0_173, %c0_174, %c1_175, %c0_176] : memref<2x2x2x9x9x32xf32, #tpu.memory_space<vmem>>, vector<1x1x2x8x8x32xf32>
    %103 = vector.shape_cast %102 : vector<1x1x2x8x8x32xf32> to vector<2x8x8x32xf32>
    %c1_177 = arith.constant 1 : index
    %c0_178 = arith.constant 0 : index
    %c0_179 = arith.constant 0 : index
    %c0_180 = arith.constant 0 : index
    %c128_181 = arith.constant 128 : index
    %104 = vector.load %arg12[%c1_177, %c0_178, %c0_179, %c0_180, %c128_181] : memref<4x2x8x8x288xf32, #tpu.memory_space<vmem>>, vector<1x2x8x8x32xf32>
    %105 = vector.shape_cast %104 : vector<1x2x8x8x32xf32> to vector<2x8x8x32xf32>
    %106 = vector.shape_cast %103 : vector<2x8x8x32xf32> to vector<1x2x8x8x32xf32>
    tpu.vector_store %arg12[%c1_177, %c0_178, %c0_179, %c0_180, %c128_181], %106 {strides = array<i32>} : memref<4x2x8x8x288xf32, #tpu.memory_space<vmem>>, vector<1x2x8x8x32xf32>,
    %c1_182 = arith.constant 1 : index
    %c1_183 = arith.constant 1 : index
    %c0_184 = arith.constant 0 : index
    %c0_185 = arith.constant 0 : index
    %c1_186 = arith.constant 1 : index
    %c0_187 = arith.constant 0 : index
    %107 = vector.load %arg11[%c1_182, %c1_183, %c0_184, %c0_185, %c1_186, %c0_187] : memref<2x2x2x9x9x32xf32, #tpu.memory_space<vmem>>, vector<1x1x2x8x8x32xf32>
    %108 = vector.shape_cast %107 : vector<1x1x2x8x8x32xf32> to vector<2x8x8x32xf32>
    %c1_188 = arith.constant 1 : index
    %c0_189 = arith.constant 0 : index
    %c0_190 = arith.constant 0 : index
    %c0_191 = arith.constant 0 : index
    %c160_192 = arith.constant 160 : index
    %109 = vector.load %arg12[%c1_188, %c0_189, %c0_190, %c0_191, %c160_192] : memref<4x2x8x8x288xf32, #tpu.memory_space<vmem>>, vector<1x2x8x8x32xf32>
    %110 = vector.shape_cast %109 : vector<1x2x8x8x32xf32> to vector<2x8x8x32xf32>
    %111 = vector.shape_cast %108 : vector<2x8x8x32xf32> to vector<1x2x8x8x32xf32>
    tpu.vector_store %arg12[%c1_188, %c0_189, %c0_190, %c0_191, %c160_192], %111 {strides = array<i32>} : memref<4x2x8x8x288xf32, #tpu.memory_space<vmem>>, vector<1x2x8x8x32xf32>,
    %c0_193 = arith.constant 0 : index
    %c1_194 = arith.constant 1 : index
    %c0_195 = arith.constant 0 : index
    %c1_196 = arith.constant 1 : index
    %c0_197 = arith.constant 0 : index
    %c0_198 = arith.constant 0 : index
    %112 = vector.load %arg11[%c0_193, %c1_194, %c0_195, %c1_196, %c0_197, %c0_198] : memref<2x2x2x9x9x32xf32, #tpu.memory_space<vmem>>, vector<1x1x2x8x8x32xf32>
    %113 = vector.shape_cast %112 : vector<1x1x2x8x8x32xf32> to vector<2x8x8x32xf32>
    %c1_199 = arith.constant 1 : index
    %c0_200 = arith.constant 0 : index
    %c0_201 = arith.constant 0 : index
    %c0_202 = arith.constant 0 : index
    %c192_203 = arith.constant 192 : index
    %114 = vector.load %arg12[%c1_199, %c0_200, %c0_201, %c0_202, %c192_203] : memref<4x2x8x8x288xf32, #tpu.memory_space<vmem>>, vector<1x2x8x8x32xf32>
    %115 = vector.shape_cast %114 : vector<1x2x8x8x32xf32> to vector<2x8x8x32xf32>
    %116 = vector.shape_cast %113 : vector<2x8x8x32xf32> to vector<1x2x8x8x32xf32>
    tpu.vector_store %arg12[%c1_199, %c0_200, %c0_201, %c0_202, %c192_203], %116 {strides = array<i32>} : memref<4x2x8x8x288xf32, #tpu.memory_space<vmem>>, vector<1x2x8x8x32xf32>,
    %c0_204 = arith.constant 0 : index
    %c0_205 = arith.constant 0 : index
    %c0_206 = arith.constant 0 : index
    %c1_207 = arith.constant 1 : index
    %c1_208 = arith.constant 1 : index
    %c0_209 = arith.constant 0 : index
    %117 = vector.load %arg11[%c0_204, %c0_205, %c0_206, %c1_207, %c1_208, %c0_209] : memref<2x2x2x9x9x32xf32, #tpu.memory_space<vmem>>, vector<1x1x2x8x8x32xf32>
    %118 = vector.shape_cast %117 : vector<1x1x2x8x8x32xf32> to vector<2x8x8x32xf32>
    %c1_210 = arith.constant 1 : index
    %c0_211 = arith.constant 0 : index
    %c0_212 = arith.constant 0 : index
    %c0_213 = arith.constant 0 : index
    %c224_214 = arith.constant 224 : index
    %119 = vector.load %arg12[%c1_210, %c0_211, %c0_212, %c0_213, %c224_214] : memref<4x2x8x8x288xf32, #tpu.memory_space<vmem>>, vector<1x2x8x8x32xf32>
    %120 = vector.shape_cast %119 : vector<1x2x8x8x32xf32> to vector<2x8x8x32xf32>
    %121 = vector.shape_cast %118 : vector<2x8x8x32xf32> to vector<1x2x8x8x32xf32>
    tpu.vector_store %arg12[%c1_210, %c0_211, %c0_212, %c0_213, %c224_214], %121 {strides = array<i32>} : memref<4x2x8x8x288xf32, #tpu.memory_space<vmem>>, vector<1x2x8x8x32xf32>,
    %c0_215 = arith.constant 0 : index
    %c1_216 = arith.constant 1 : index
    %c0_217 = arith.constant 0 : index
    %c1_218 = arith.constant 1 : index
    %c1_219 = arith.constant 1 : index
    %c0_220 = arith.constant 0 : index
    %122 = vector.load %arg11[%c0_215, %c1_216, %c0_217, %c1_218, %c1_219, %c0_220] : memref<2x2x2x9x9x32xf32, #tpu.memory_space<vmem>>, vector<1x1x2x8x8x32xf32>
    %123 = vector.shape_cast %122 : vector<1x1x2x8x8x32xf32> to vector<2x8x8x32xf32>
    %c1_221 = arith.constant 1 : index
    %c0_222 = arith.constant 0 : index
    %c0_223 = arith.constant 0 : index
    %c0_224 = arith.constant 0 : index
    %c256_225 = arith.constant 256 : index
    %124 = vector.load %arg12[%c1_221, %c0_222, %c0_223, %c0_224, %c256_225] : memref<4x2x8x8x288xf32, #tpu.memory_space<vmem>>, vector<1x2x8x8x32xf32>
    %125 = vector.shape_cast %124 : vector<1x2x8x8x32xf32> to vector<2x8x8x32xf32>
    %126 = vector.shape_cast %123 : vector<2x8x8x32xf32> to vector<1x2x8x8x32xf32>
    tpu.vector_store %arg12[%c1_221, %c0_222, %c0_223, %c0_224, %c256_225], %126 {strides = array<i32>} : memref<4x2x8x8x288xf32, #tpu.memory_space<vmem>>, vector<1x2x8x8x32xf32>,
    %c1_226 = arith.constant 1 : index
    %c0_227 = arith.constant 0 : index
    %c0_228 = arith.constant 0 : index
    %c0_229 = arith.constant 0 : index
    %c0_230 = arith.constant 0 : index
    %c0_231 = arith.constant 0 : index
    %127 = vector.load %arg11[%c1_226, %c0_227, %c0_228, %c0_229, %c0_230, %c0_231] : memref<2x2x2x9x9x32xf32, #tpu.memory_space<vmem>>, vector<1x1x2x8x8x32xf32>
    %128 = vector.shape_cast %127 : vector<1x1x2x8x8x32xf32> to vector<2x8x8x32xf32>
    %c2 = arith.constant 2 : index
    %c0_232 = arith.constant 0 : index
    %c0_233 = arith.constant 0 : index
    %c0_234 = arith.constant 0 : index
    %c0_235 = arith.constant 0 : index
    %129 = vector.load %arg12[%c2, %c0_232, %c0_233, %c0_234, %c0_235] : memref<4x2x8x8x288xf32, #tpu.memory_space<vmem>>, vector<1x2x8x8x32xf32>
    %130 = vector.shape_cast %129 : vector<1x2x8x8x32xf32> to vector<2x8x8x32xf32>
    %131 = vector.shape_cast %128 : vector<2x8x8x32xf32> to vector<1x2x8x8x32xf32>
    tpu.vector_store %arg12[%c2, %c0_232, %c0_233, %c0_234, %c0_235], %131 {strides = array<i32>} : memref<4x2x8x8x288xf32, #tpu.memory_space<vmem>>, vector<1x2x8x8x32xf32>,
    %c1_236 = arith.constant 1 : index
    %c1_237 = arith.constant 1 : index
    %c0_238 = arith.constant 0 : index
    %c0_239 = arith.constant 0 : index
    %c0_240 = arith.constant 0 : index
    %c0_241 = arith.constant 0 : index
    %132 = vector.load %arg11[%c1_236, %c1_237, %c0_238, %c0_239, %c0_240, %c0_241] : memref<2x2x2x9x9x32xf32, #tpu.memory_space<vmem>>, vector<1x1x2x8x8x32xf32>
    %133 = vector.shape_cast %132 : vector<1x1x2x8x8x32xf32> to vector<2x8x8x32xf32>
    %c2_242 = arith.constant 2 : index
    %c0_243 = arith.constant 0 : index
    %c0_244 = arith.constant 0 : index
    %c0_245 = arith.constant 0 : index
    %c32_246 = arith.constant 32 : index
    %134 = vector.load %arg12[%c2_242, %c0_243, %c0_244, %c0_245, %c32_246] : memref<4x2x8x8x288xf32, #tpu.memory_space<vmem>>, vector<1x2x8x8x32xf32>
    %135 = vector.shape_cast %134 : vector<1x2x8x8x32xf32> to vector<2x8x8x32xf32>
    %136 = vector.shape_cast %133 : vector<2x8x8x32xf32> to vector<1x2x8x8x32xf32>
    tpu.vector_store %arg12[%c2_242, %c0_243, %c0_244, %c0_245, %c32_246], %136 {strides = array<i32>} : memref<4x2x8x8x288xf32, #tpu.memory_space<vmem>>, vector<1x2x8x8x32xf32>,
    %c1_247 = arith.constant 1 : index
    %c0_248 = arith.constant 0 : index
    %c0_249 = arith.constant 0 : index
    %c0_250 = arith.constant 0 : index
    %c1_251 = arith.constant 1 : index
    %c0_252 = arith.constant 0 : index
    %137 = vector.load %arg11[%c1_247, %c0_248, %c0_249, %c0_250, %c1_251, %c0_252] : memref<2x2x2x9x9x32xf32, #tpu.memory_space<vmem>>, vector<1x1x2x8x8x32xf32>
    %138 = vector.shape_cast %137 : vector<1x1x2x8x8x32xf32> to vector<2x8x8x32xf32>
    %c2_253 = arith.constant 2 : index
    %c0_254 = arith.constant 0 : index
    %c0_255 = arith.constant 0 : index
    %c0_256 = arith.constant 0 : index
    %c64_257 = arith.constant 64 : index
    %139 = vector.load %arg12[%c2_253, %c0_254, %c0_255, %c0_256, %c64_257] : memref<4x2x8x8x288xf32, #tpu.memory_space<vmem>>, vector<1x2x8x8x32xf32>
    %140 = vector.shape_cast %139 : vector<1x2x8x8x32xf32> to vector<2x8x8x32xf32>
    %141 = vector.shape_cast %138 : vector<2x8x8x32xf32> to vector<1x2x8x8x32xf32>
    tpu.vector_store %arg12[%c2_253, %c0_254, %c0_255, %c0_256, %c64_257], %141 {strides = array<i32>} : memref<4x2x8x8x288xf32, #tpu.memory_space<vmem>>, vector<1x2x8x8x32xf32>,
    %c0_258 = arith.constant 0 : index
    %c0_259 = arith.constant 0 : index
    %c0_260 = arith.constant 0 : index
    %c1_261 = arith.constant 1 : index
    %c0_262 = arith.constant 0 : index
    %c0_263 = arith.constant 0 : index
    %142 = vector.load %arg11[%c0_258, %c0_259, %c0_260, %c1_261, %c0_262, %c0_263] : memref<2x2x2x9x9x32xf32, #tpu.memory_space<vmem>>, vector<1x1x2x8x8x32xf32>
    %143 = vector.shape_cast %142 : vector<1x1x2x8x8x32xf32> to vector<2x8x8x32xf32>
    %c2_264 = arith.constant 2 : index
    %c0_265 = arith.constant 0 : index
    %c0_266 = arith.constant 0 : index
    %c0_267 = arith.constant 0 : index
    %c96_268 = arith.constant 96 : index
    %144 = vector.load %arg12[%c2_264, %c0_265, %c0_266, %c0_267, %c96_268] : memref<4x2x8x8x288xf32, #tpu.memory_space<vmem>>, vector<1x2x8x8x32xf32>
    %145 = vector.shape_cast %144 : vector<1x2x8x8x32xf32> to vector<2x8x8x32xf32>
    %146 = vector.shape_cast %143 : vector<2x8x8x32xf32> to vector<1x2x8x8x32xf32>
    tpu.vector_store %arg12[%c2_264, %c0_265, %c0_266, %c0_267, %c96_268], %146 {strides = array<i32>} : memref<4x2x8x8x288xf32, #tpu.memory_space<vmem>>, vector<1x2x8x8x32xf32>,
    %c0_269 = arith.constant 0 : index
    %c1_270 = arith.constant 1 : index
    %c0_271 = arith.constant 0 : index
    %c1_272 = arith.constant 1 : index
    %c0_273 = arith.constant 0 : index
    %c0_274 = arith.constant 0 : index
    %147 = vector.load %arg11[%c0_269, %c1_270, %c0_271, %c1_272, %c0_273, %c0_274] : memref<2x2x2x9x9x32xf32, #tpu.memory_space<vmem>>, vector<1x1x2x8x8x32xf32>
    %148 = vector.shape_cast %147 : vector<1x1x2x8x8x32xf32> to vector<2x8x8x32xf32>
    %c2_275 = arith.constant 2 : index
    %c0_276 = arith.constant 0 : index
    %c0_277 = arith.constant 0 : index
    %c0_278 = arith.constant 0 : index
    %c128_279 = arith.constant 128 : index
    %149 = vector.load %arg12[%c2_275, %c0_276, %c0_277, %c0_278, %c128_279] : memref<4x2x8x8x288xf32, #tpu.memory_space<vmem>>, vector<1x2x8x8x32xf32>
    %150 = vector.shape_cast %149 : vector<1x2x8x8x32xf32> to vector<2x8x8x32xf32>
    %151 = vector.shape_cast %148 : vector<2x8x8x32xf32> to vector<1x2x8x8x32xf32>
    tpu.vector_store %arg12[%c2_275, %c0_276, %c0_277, %c0_278, %c128_279], %151 {strides = array<i32>} : memref<4x2x8x8x288xf32, #tpu.memory_space<vmem>>, vector<1x2x8x8x32xf32>,
    %c0_280 = arith.constant 0 : index
    %c0_281 = arith.constant 0 : index
    %c0_282 = arith.constant 0 : index
    %c1_283 = arith.constant 1 : index
    %c1_284 = arith.constant 1 : index
    %c0_285 = arith.constant 0 : index
    %152 = vector.load %arg11[%c0_280, %c0_281, %c0_282, %c1_283, %c1_284, %c0_285] : memref<2x2x2x9x9x32xf32, #tpu.memory_space<vmem>>, vector<1x1x2x8x8x32xf32>
    %153 = vector.shape_cast %152 : vector<1x1x2x8x8x32xf32> to vector<2x8x8x32xf32>
    %c2_286 = arith.constant 2 : index
    %c0_287 = arith.constant 0 : index
    %c0_288 = arith.constant 0 : index
    %c0_289 = arith.constant 0 : index
    %c160_290 = arith.constant 160 : index
    %154 = vector.load %arg12[%c2_286, %c0_287, %c0_288, %c0_289, %c160_290] : memref<4x2x8x8x288xf32, #tpu.memory_space<vmem>>, vector<1x2x8x8x32xf32>
    %155 = vector.shape_cast %154 : vector<1x2x8x8x32xf32> to vector<2x8x8x32xf32>
    %156 = vector.shape_cast %153 : vector<2x8x8x32xf32> to vector<1x2x8x8x32xf32>
    tpu.vector_store %arg12[%c2_286, %c0_287, %c0_288, %c0_289, %c160_290], %156 {strides = array<i32>} : memref<4x2x8x8x288xf32, #tpu.memory_space<vmem>>, vector<1x2x8x8x32xf32>,
    %c1_291 = arith.constant 1 : index
    %c0_292 = arith.constant 0 : index
    %c0_293 = arith.constant 0 : index
    %c1_294 = arith.constant 1 : index
    %c0_295 = arith.constant 0 : index
    %c0_296 = arith.constant 0 : index
    %157 = vector.load %arg11[%c1_291, %c0_292, %c0_293, %c1_294, %c0_295, %c0_296] : memref<2x2x2x9x9x32xf32, #tpu.memory_space<vmem>>, vector<1x1x2x8x8x32xf32>
    %158 = vector.shape_cast %157 : vector<1x1x2x8x8x32xf32> to vector<2x8x8x32xf32>
    %c2_297 = arith.constant 2 : index
    %c0_298 = arith.constant 0 : index
    %c0_299 = arith.constant 0 : index
    %c0_300 = arith.constant 0 : index
    %c192_301 = arith.constant 192 : index
    %159 = vector.load %arg12[%c2_297, %c0_298, %c0_299, %c0_300, %c192_301] : memref<4x2x8x8x288xf32, #tpu.memory_space<vmem>>, vector<1x2x8x8x32xf32>
    %160 = vector.shape_cast %159 : vector<1x2x8x8x32xf32> to vector<2x8x8x32xf32>
    %161 = vector.shape_cast %158 : vector<2x8x8x32xf32> to vector<1x2x8x8x32xf32>
    tpu.vector_store %arg12[%c2_297, %c0_298, %c0_299, %c0_300, %c192_301], %161 {strides = array<i32>} : memref<4x2x8x8x288xf32, #tpu.memory_space<vmem>>, vector<1x2x8x8x32xf32>,
    %c1_302 = arith.constant 1 : index
    %c1_303 = arith.constant 1 : index
    %c0_304 = arith.constant 0 : index
    %c1_305 = arith.constant 1 : index
    %c0_306 = arith.constant 0 : index
    %c0_307 = arith.constant 0 : index
    %162 = vector.load %arg11[%c1_302, %c1_303, %c0_304, %c1_305, %c0_306, %c0_307] : memref<2x2x2x9x9x32xf32, #tpu.memory_space<vmem>>, vector<1x1x2x8x8x32xf32>
    %163 = vector.shape_cast %162 : vector<1x1x2x8x8x32xf32> to vector<2x8x8x32xf32>
    %c2_308 = arith.constant 2 : index
    %c0_309 = arith.constant 0 : index
    %c0_310 = arith.constant 0 : index
    %c0_311 = arith.constant 0 : index
    %c224_312 = arith.constant 224 : index
    %164 = vector.load %arg12[%c2_308, %c0_309, %c0_310, %c0_311, %c224_312] : memref<4x2x8x8x288xf32, #tpu.memory_space<vmem>>, vector<1x2x8x8x32xf32>
    %165 = vector.shape_cast %164 : vector<1x2x8x8x32xf32> to vector<2x8x8x32xf32>
    %166 = vector.shape_cast %163 : vector<2x8x8x32xf32> to vector<1x2x8x8x32xf32>
    tpu.vector_store %arg12[%c2_308, %c0_309, %c0_310, %c0_311, %c224_312], %166 {strides = array<i32>} : memref<4x2x8x8x288xf32, #tpu.memory_space<vmem>>, vector<1x2x8x8x32xf32>,
    %c1_313 = arith.constant 1 : index
    %c0_314 = arith.constant 0 : index
    %c0_315 = arith.constant 0 : index
    %c1_316 = arith.constant 1 : index
    %c1_317 = arith.constant 1 : index
    %c0_318 = arith.constant 0 : index
    %167 = vector.load %arg11[%c1_313, %c0_314, %c0_315, %c1_316, %c1_317, %c0_318] : memref<2x2x2x9x9x32xf32, #tpu.memory_space<vmem>>, vector<1x1x2x8x8x32xf32>
    %168 = vector.shape_cast %167 : vector<1x1x2x8x8x32xf32> to vector<2x8x8x32xf32>
    %c2_319 = arith.constant 2 : index
    %c0_320 = arith.constant 0 : index
    %c0_321 = arith.constant 0 : index
    %c0_322 = arith.constant 0 : index
    %c256_323 = arith.constant 256 : index
    %169 = vector.load %arg12[%c2_319, %c0_320, %c0_321, %c0_322, %c256_323] : memref<4x2x8x8x288xf32, #tpu.memory_space<vmem>>, vector<1x2x8x8x32xf32>
    %170 = vector.shape_cast %169 : vector<1x2x8x8x32xf32> to vector<2x8x8x32xf32>
    %171 = vector.shape_cast %168 : vector<2x8x8x32xf32> to vector<1x2x8x8x32xf32>
    tpu.vector_store %arg12[%c2_319, %c0_320, %c0_321, %c0_322, %c256_323], %171 {strides = array<i32>} : memref<4x2x8x8x288xf32, #tpu.memory_space<vmem>>, vector<1x2x8x8x32xf32>,
    %c1_324 = arith.constant 1 : index
    %c1_325 = arith.constant 1 : index
    %c0_326 = arith.constant 0 : index
    %c0_327 = arith.constant 0 : index
    %c0_328 = arith.constant 0 : index
    %c0_329 = arith.constant 0 : index
    %172 = vector.load %arg11[%c1_324, %c1_325, %c0_326, %c0_327, %c0_328, %c0_329] : memref<2x2x2x9x9x32xf32, #tpu.memory_space<vmem>>, vector<1x1x2x8x8x32xf32>
    %173 = vector.shape_cast %172 : vector<1x1x2x8x8x32xf32> to vector<2x8x8x32xf32>
    %c3 = arith.constant 3 : index
    %c0_330 = arith.constant 0 : index
    %c0_331 = arith.constant 0 : index
    %c0_332 = arith.constant 0 : index
    %c0_333 = arith.constant 0 : index
    %174 = vector.load %arg12[%c3, %c0_330, %c0_331, %c0_332, %c0_333] : memref<4x2x8x8x288xf32, #tpu.memory_space<vmem>>, vector<1x2x8x8x32xf32>
    %175 = vector.shape_cast %174 : vector<1x2x8x8x32xf32> to vector<2x8x8x32xf32>
    %176 = vector.shape_cast %173 : vector<2x8x8x32xf32> to vector<1x2x8x8x32xf32>
    tpu.vector_store %arg12[%c3, %c0_330, %c0_331, %c0_332, %c0_333], %176 {strides = array<i32>} : memref<4x2x8x8x288xf32, #tpu.memory_space<vmem>>, vector<1x2x8x8x32xf32>,
    %c1_334 = arith.constant 1 : index
    %c0_335 = arith.constant 0 : index
    %c0_336 = arith.constant 0 : index
    %c0_337 = arith.constant 0 : index
    %c1_338 = arith.constant 1 : index
    %c0_339 = arith.constant 0 : index
    %177 = vector.load %arg11[%c1_334, %c0_335, %c0_336, %c0_337, %c1_338, %c0_339] : memref<2x2x2x9x9x32xf32, #tpu.memory_space<vmem>>, vector<1x1x2x8x8x32xf32>
    %178 = vector.shape_cast %177 : vector<1x1x2x8x8x32xf32> to vector<2x8x8x32xf32>
    %c3_340 = arith.constant 3 : index
    %c0_341 = arith.constant 0 : index
    %c0_342 = arith.constant 0 : index
    %c0_343 = arith.constant 0 : index
    %c32_344 = arith.constant 32 : index
    %179 = vector.load %arg12[%c3_340, %c0_341, %c0_342, %c0_343, %c32_344] : memref<4x2x8x8x288xf32, #tpu.memory_space<vmem>>, vector<1x2x8x8x32xf32>
    %180 = vector.shape_cast %179 : vector<1x2x8x8x32xf32> to vector<2x8x8x32xf32>
    %181 = vector.shape_cast %178 : vector<2x8x8x32xf32> to vector<1x2x8x8x32xf32>
    tpu.vector_store %arg12[%c3_340, %c0_341, %c0_342, %c0_343, %c32_344], %181 {strides = array<i32>} : memref<4x2x8x8x288xf32, #tpu.memory_space<vmem>>, vector<1x2x8x8x32xf32>,
    %c1_345 = arith.constant 1 : index
    %c1_346 = arith.constant 1 : index
    %c0_347 = arith.constant 0 : index
    %c0_348 = arith.constant 0 : index
    %c1_349 = arith.constant 1 : index
    %c0_350 = arith.constant 0 : index
    %182 = vector.load %arg11[%c1_345, %c1_346, %c0_347, %c0_348, %c1_349, %c0_350] : memref<2x2x2x9x9x32xf32, #tpu.memory_space<vmem>>, vector<1x1x2x8x8x32xf32>
    %183 = vector.shape_cast %182 : vector<1x1x2x8x8x32xf32> to vector<2x8x8x32xf32>
    %c3_351 = arith.constant 3 : index
    %c0_352 = arith.constant 0 : index
    %c0_353 = arith.constant 0 : index
    %c0_354 = arith.constant 0 : index
    %c64_355 = arith.constant 64 : index
    %184 = vector.load %arg12[%c3_351, %c0_352, %c0_353, %c0_354, %c64_355] : memref<4x2x8x8x288xf32, #tpu.memory_space<vmem>>, vector<1x2x8x8x32xf32>
    %185 = vector.shape_cast %184 : vector<1x2x8x8x32xf32> to vector<2x8x8x32xf32>
    %186 = vector.shape_cast %183 : vector<2x8x8x32xf32> to vector<1x2x8x8x32xf32>
    tpu.vector_store %arg12[%c3_351, %c0_352, %c0_353, %c0_354, %c64_355], %186 {strides = array<i32>} : memref<4x2x8x8x288xf32, #tpu.memory_space<vmem>>, vector<1x2x8x8x32xf32>,
    %c0_356 = arith.constant 0 : index
    %c1_357 = arith.constant 1 : index
    %c0_358 = arith.constant 0 : index
    %c1_359 = arith.constant 1 : index
    %c0_360 = arith.constant 0 : index
    %c0_361 = arith.constant 0 : index
    %187 = vector.load %arg11[%c0_356, %c1_357, %c0_358, %c1_359, %c0_360, %c0_361] : memref<2x2x2x9x9x32xf32, #tpu.memory_space<vmem>>, vector<1x1x2x8x8x32xf32>
    %188 = vector.shape_cast %187 : vector<1x1x2x8x8x32xf32> to vector<2x8x8x32xf32>
    %c3_362 = arith.constant 3 : index
    %c0_363 = arith.constant 0 : index
    %c0_364 = arith.constant 0 : index
    %c0_365 = arith.constant 0 : index
    %c96_366 = arith.constant 96 : index
    %189 = vector.load %arg12[%c3_362, %c0_363, %c0_364, %c0_365, %c96_366] : memref<4x2x8x8x288xf32, #tpu.memory_space<vmem>>, vector<1x2x8x8x32xf32>
    %190 = vector.shape_cast %189 : vector<1x2x8x8x32xf32> to vector<2x8x8x32xf32>
    %191 = vector.shape_cast %188 : vector<2x8x8x32xf32> to vector<1x2x8x8x32xf32>
    tpu.vector_store %arg12[%c3_362, %c0_363, %c0_364, %c0_365, %c96_366], %191 {strides = array<i32>} : memref<4x2x8x8x288xf32, #tpu.memory_space<vmem>>, vector<1x2x8x8x32xf32>,
    %c0_367 = arith.constant 0 : index
    %c0_368 = arith.constant 0 : index
    %c0_369 = arith.constant 0 : index
    %c1_370 = arith.constant 1 : index
    %c1_371 = arith.constant 1 : index
    %c0_372 = arith.constant 0 : index
    %192 = vector.load %arg11[%c0_367, %c0_368, %c0_369, %c1_370, %c1_371, %c0_372] : memref<2x2x2x9x9x32xf32, #tpu.memory_space<vmem>>, vector<1x1x2x8x8x32xf32>
    %193 = vector.shape_cast %192 : vector<1x1x2x8x8x32xf32> to vector<2x8x8x32xf32>
    %c3_373 = arith.constant 3 : index
    %c0_374 = arith.constant 0 : index
    %c0_375 = arith.constant 0 : index
    %c0_376 = arith.constant 0 : index
    %c128_377 = arith.constant 128 : index
    %194 = vector.load %arg12[%c3_373, %c0_374, %c0_375, %c0_376, %c128_377] : memref<4x2x8x8x288xf32, #tpu.memory_space<vmem>>, vector<1x2x8x8x32xf32>
    %195 = vector.shape_cast %194 : vector<1x2x8x8x32xf32> to vector<2x8x8x32xf32>
    %196 = vector.shape_cast %193 : vector<2x8x8x32xf32> to vector<1x2x8x8x32xf32>
    tpu.vector_store %arg12[%c3_373, %c0_374, %c0_375, %c0_376, %c128_377], %196 {strides = array<i32>} : memref<4x2x8x8x288xf32, #tpu.memory_space<vmem>>, vector<1x2x8x8x32xf32>,
    %c0_378 = arith.constant 0 : index
    %c1_379 = arith.constant 1 : index
    %c0_380 = arith.constant 0 : index
    %c1_381 = arith.constant 1 : index
    %c1_382 = arith.constant 1 : index
    %c0_383 = arith.constant 0 : index
    %197 = vector.load %arg11[%c0_378, %c1_379, %c0_380, %c1_381, %c1_382, %c0_383] : memref<2x2x2x9x9x32xf32, #tpu.memory_space<vmem>>, vector<1x1x2x8x8x32xf32>
    %198 = vector.shape_cast %197 : vector<1x1x2x8x8x32xf32> to vector<2x8x8x32xf32>
    %c3_384 = arith.constant 3 : index
    %c0_385 = arith.constant 0 : index
    %c0_386 = arith.constant 0 : index
    %c0_387 = arith.constant 0 : index
    %c160_388 = arith.constant 160 : index
    %199 = vector.load %arg12[%c3_384, %c0_385, %c0_386, %c0_387, %c160_388] : memref<4x2x8x8x288xf32, #tpu.memory_space<vmem>>, vector<1x2x8x8x32xf32>
    %200 = vector.shape_cast %199 : vector<1x2x8x8x32xf32> to vector<2x8x8x32xf32>
    %201 = vector.shape_cast %198 : vector<2x8x8x32xf32> to vector<1x2x8x8x32xf32>
    tpu.vector_store %arg12[%c3_384, %c0_385, %c0_386, %c0_387, %c160_388], %201 {strides = array<i32>} : memref<4x2x8x8x288xf32, #tpu.memory_space<vmem>>, vector<1x2x8x8x32xf32>,
    %c1_389 = arith.constant 1 : index
    %c1_390 = arith.constant 1 : index
    %c0_391 = arith.constant 0 : index
    %c1_392 = arith.constant 1 : index
    %c0_393 = arith.constant 0 : index
    %c0_394 = arith.constant 0 : index
    %202 = vector.load %arg11[%c1_389, %c1_390, %c0_391, %c1_392, %c0_393, %c0_394] : memref<2x2x2x9x9x32xf32, #tpu.memory_space<vmem>>, vector<1x1x2x8x8x32xf32>
    %203 = vector.shape_cast %202 : vector<1x1x2x8x8x32xf32> to vector<2x8x8x32xf32>
    %c3_395 = arith.constant 3 : index
    %c0_396 = arith.constant 0 : index
    %c0_397 = arith.constant 0 : index
    %c0_398 = arith.constant 0 : index
    %c192_399 = arith.constant 192 : index
    %204 = vector.load %arg12[%c3_395, %c0_396, %c0_397, %c0_398, %c192_399] : memref<4x2x8x8x288xf32, #tpu.memory_space<vmem>>, vector<1x2x8x8x32xf32>
    %205 = vector.shape_cast %204 : vector<1x2x8x8x32xf32> to vector<2x8x8x32xf32>
    %206 = vector.shape_cast %203 : vector<2x8x8x32xf32> to vector<1x2x8x8x32xf32>
    tpu.vector_store %arg12[%c3_395, %c0_396, %c0_397, %c0_398, %c192_399], %206 {strides = array<i32>} : memref<4x2x8x8x288xf32, #tpu.memory_space<vmem>>, vector<1x2x8x8x32xf32>,
    %c1_400 = arith.constant 1 : index
    %c0_401 = arith.constant 0 : index
    %c0_402 = arith.constant 0 : index
    %c1_403 = arith.constant 1 : index
    %c1_404 = arith.constant 1 : index
    %c0_405 = arith.constant 0 : index
    %207 = vector.load %arg11[%c1_400, %c0_401, %c0_402, %c1_403, %c1_404, %c0_405] : memref<2x2x2x9x9x32xf32, #tpu.memory_space<vmem>>, vector<1x1x2x8x8x32xf32>
    %208 = vector.shape_cast %207 : vector<1x1x2x8x8x32xf32> to vector<2x8x8x32xf32>
    %c3_406 = arith.constant 3 : index
    %c0_407 = arith.constant 0 : index
    %c0_408 = arith.constant 0 : index
    %c0_409 = arith.constant 0 : index
    %c224_410 = arith.constant 224 : index
    %209 = vector.load %arg12[%c3_406, %c0_407, %c0_408, %c0_409, %c224_410] : memref<4x2x8x8x288xf32, #tpu.memory_space<vmem>>, vector<1x2x8x8x32xf32>
    %210 = vector.shape_cast %209 : vector<1x2x8x8x32xf32> to vector<2x8x8x32xf32>
    %211 = vector.shape_cast %208 : vector<2x8x8x32xf32> to vector<1x2x8x8x32xf32>
    tpu.vector_store %arg12[%c3_406, %c0_407, %c0_408, %c0_409, %c224_410], %211 {strides = array<i32>} : memref<4x2x8x8x288xf32, #tpu.memory_space<vmem>>, vector<1x2x8x8x32xf32>,
    %c1_411 = arith.constant 1 : index
    %c1_412 = arith.constant 1 : index
    %c0_413 = arith.constant 0 : index
    %c1_414 = arith.constant 1 : index
    %c1_415 = arith.constant 1 : index
    %c0_416 = arith.constant 0 : index
    %212 = vector.load %arg11[%c1_411, %c1_412, %c0_413, %c1_414, %c1_415, %c0_416] : memref<2x2x2x9x9x32xf32, #tpu.memory_space<vmem>>, vector<1x1x2x8x8x32xf32>
    %213 = vector.shape_cast %212 : vector<1x1x2x8x8x32xf32> to vector<2x8x8x32xf32>
    %c3_417 = arith.constant 3 : index
    %c0_418 = arith.constant 0 : index
    %c0_419 = arith.constant 0 : index
    %c0_420 = arith.constant 0 : index
    %c256_421 = arith.constant 256 : index
    %214 = vector.load %arg12[%c3_417, %c0_418, %c0_419, %c0_420, %c256_421] : memref<4x2x8x8x288xf32, #tpu.memory_space<vmem>>, vector<1x2x8x8x32xf32>
    %215 = vector.shape_cast %214 : vector<1x2x8x8x32xf32> to vector<2x8x8x32xf32>
    %216 = vector.shape_cast %213 : vector<2x8x8x32xf32> to vector<1x2x8x8x32xf32>
    tpu.vector_store %arg12[%c3_417, %c0_418, %c0_419, %c0_420, %c256_421], %216 {strides = array<i32>} : memref<4x2x8x8x288xf32, #tpu.memory_space<vmem>>, vector<1x2x8x8x32xf32>,
    %c0_422 = arith.constant 0 : index
    %c0_423 = arith.constant 0 : index
    %c0_424 = arith.constant 0 : index
    %c0_425 = arith.constant 0 : index
    %c0_426 = arith.constant 0 : index
    %217 = vector.load %arg12[%c0_422, %c0_423, %c0_424, %c0_425, %c0_426] : memref<4x2x8x8x288xf32, #tpu.memory_space<vmem>>, vector<4x2x8x8x288xf32>
    %218 = vector.shape_cast %217 : vector<4x2x8x8x288xf32> to vector<512x288xf32>
    %c0_427 = arith.constant 0 : index
    %c0_428 = arith.constant 0 : index
    %219 = vector.load %arg4[%c0_427, %c0_428] : memref<288x16xf32, #tpu.memory_space<vmem>>, vector<288x16xf32>
    %cst_429 = arith.constant dense<0.000000e+00> : vector<512x16xf32>
    %220 = tpu.matmul %218, %219, %cst_429 {dimension_numbers = #tpu.dot_dimension_numbers<[1], [0], [0], [1], [0, 0, 1, 1], [], []>} : vector<512x288xf32>, vector<288x16xf32>, vector<512x16xf32> -> vector<512x16xf32>
    %221 = vector.extract_strided_slice %220 {offsets = [0, 0], sizes = [128, 16], strides = [1, 1]} : vector<512x16xf32> to vector<128x16xf32>
    %222 = vector.extract_strided_slice %220 {offsets = [128, 0], sizes = [128, 16], strides = [1, 1]} : vector<512x16xf32> to vector<128x16xf32>
    %223 = arith.maximumf %221, %222 : vector<128x16xf32>
    %224 = vector.extract_strided_slice %220 {offsets = [256, 0], sizes = [128, 16], strides = [1, 1]} : vector<512x16xf32> to vector<128x16xf32>
    %225 = vector.extract_strided_slice %220 {offsets = [384, 0], sizes = [128, 16], strides = [1, 1]} : vector<512x16xf32> to vector<128x16xf32>
    %226 = arith.maximumf %224, %225 : vector<128x16xf32>
    %227 = arith.maximumf %223, %226 : vector<128x16xf32>
    %c0_430 = arith.constant 0 : index
    %c0_431 = arith.constant 0 : index
    %228 = vector.load %arg5[%c0_430, %c0_431] : memref<1x16xf32, #tpu.memory_space<vmem>>, vector<1x16xf32>
    %229 = vector.broadcast %228 : vector<1x16xf32> to vector<128x16xf32>
    %230 = arith.addf %227, %229 : vector<128x16xf32>
    %cst_432 = arith.constant 0.000000e+00 : f32
    %231 = vector.broadcast %cst_432 : f32 to vector<128x16xf32>
    %232 = arith.maximumf %230, %231 : vector<128x16xf32>
    %233 = tpu.transpose %232, [1, 0] : vector<128x16xf32> -> vector<16x128xf32>
    %234 = vector.extract_strided_slice %233 {offsets = [0, 0], sizes = [1, 64], strides = [1, 1]} : vector<16x128xf32> to vector<1x64xf32>
    %235 = vector.shape_cast %234 : vector<1x64xf32> to vector<64xf32>
    %c0_433 = arith.constant 0 : index
    %c0_434 = arith.constant 0 : index
    %236 = vector.load %arg13[%c0_433, %c0_434] : memref<2x1024xf32, #tpu.memory_space<vmem>>, vector<1x64xf32>
    %237 = vector.shape_cast %236 : vector<1x64xf32> to vector<64xf32>
    %238 = vector.shape_cast %235 : vector<64xf32> to vector<1x64xf32>
    tpu.vector_store %arg13[%c0_433, %c0_434], %238 {strides = array<i32>} : memref<2x1024xf32, #tpu.memory_space<vmem>>, vector<1x64xf32>,
    %239 = vector.extract_strided_slice %233 {offsets = [0, 64], sizes = [1, 64], strides = [1, 1]} : vector<16x128xf32> to vector<1x64xf32>
    %240 = vector.shape_cast %239 : vector<1x64xf32> to vector<64xf32>
    %c1_435 = arith.constant 1 : index
    %c0_436 = arith.constant 0 : index
    %241 = vector.load %arg13[%c1_435, %c0_436] : memref<2x1024xf32, #tpu.memory_space<vmem>>, vector<1x64xf32>
    %242 = vector.shape_cast %241 : vector<1x64xf32> to vector<64xf32>
    %243 = vector.shape_cast %240 : vector<64xf32> to vector<1x64xf32>
    tpu.vector_store %arg13[%c1_435, %c0_436], %243 {strides = array<i32>} : memref<2x1024xf32, #tpu.memory_space<vmem>>, vector<1x64xf32>,
    %244 = vector.extract_strided_slice %233 {offsets = [1, 0], sizes = [1, 64], strides = [1, 1]} : vector<16x128xf32> to vector<1x64xf32>
    %245 = vector.shape_cast %244 : vector<1x64xf32> to vector<64xf32>
    %c0_437 = arith.constant 0 : index
    %c64_438 = arith.constant 64 : index
    %246 = vector.load %arg13[%c0_437, %c64_438] : memref<2x1024xf32, #tpu.memory_space<vmem>>, vector<1x64xf32>
    %247 = vector.shape_cast %246 : vector<1x64xf32> to vector<64xf32>
    %248 = vector.shape_cast %245 : vector<64xf32> to vector<1x64xf32>
    tpu.vector_store %arg13[%c0_437, %c64_438], %248 {strides = array<i32>} : memref<2x1024xf32, #tpu.memory_space<vmem>>, vector<1x64xf32>,
    %249 = vector.extract_strided_slice %233 {offsets = [1, 64], sizes = [1, 64], strides = [1, 1]} : vector<16x128xf32> to vector<1x64xf32>
    %250 = vector.shape_cast %249 : vector<1x64xf32> to vector<64xf32>
    %c1_439 = arith.constant 1 : index
    %c64_440 = arith.constant 64 : index
    %251 = vector.load %arg13[%c1_439, %c64_440] : memref<2x1024xf32, #tpu.memory_space<vmem>>, vector<1x64xf32>
    %252 = vector.shape_cast %251 : vector<1x64xf32> to vector<64xf32>
    %253 = vector.shape_cast %250 : vector<64xf32> to vector<1x64xf32>
    tpu.vector_store %arg13[%c1_439, %c64_440], %253 {strides = array<i32>} : memref<2x1024xf32, #tpu.memory_space<vmem>>, vector<1x64xf32>,
    %254 = vector.extract_strided_slice %233 {offsets = [2, 0], sizes = [1, 64], strides = [1, 1]} : vector<16x128xf32> to vector<1x64xf32>
    %255 = vector.shape_cast %254 : vector<1x64xf32> to vector<64xf32>
    %c0_441 = arith.constant 0 : index
    %c128_442 = arith.constant 128 : index
    %256 = vector.load %arg13[%c0_441, %c128_442] : memref<2x1024xf32, #tpu.memory_space<vmem>>, vector<1x64xf32>
    %257 = vector.shape_cast %256 : vector<1x64xf32> to vector<64xf32>
    %258 = vector.shape_cast %255 : vector<64xf32> to vector<1x64xf32>
    tpu.vector_store %arg13[%c0_441, %c128_442], %258 {strides = array<i32>} : memref<2x1024xf32, #tpu.memory_space<vmem>>, vector<1x64xf32>,
    %259 = vector.extract_strided_slice %233 {offsets = [2, 64], sizes = [1, 64], strides = [1, 1]} : vector<16x128xf32> to vector<1x64xf32>
    %260 = vector.shape_cast %259 : vector<1x64xf32> to vector<64xf32>
    %c1_443 = arith.constant 1 : index
    %c128_444 = arith.constant 128 : index
    %261 = vector.load %arg13[%c1_443, %c128_444] : memref<2x1024xf32, #tpu.memory_space<vmem>>, vector<1x64xf32>
    %262 = vector.shape_cast %261 : vector<1x64xf32> to vector<64xf32>
    %263 = vector.shape_cast %260 : vector<64xf32> to vector<1x64xf32>
    tpu.vector_store %arg13[%c1_443, %c128_444], %263 {strides = array<i32>} : memref<2x1024xf32, #tpu.memory_space<vmem>>, vector<1x64xf32>,
    %264 = vector.extract_strided_slice %233 {offsets = [3, 0], sizes = [1, 64], strides = [1, 1]} : vector<16x128xf32> to vector<1x64xf32>
    %265 = vector.shape_cast %264 : vector<1x64xf32> to vector<64xf32>
    %c0_445 = arith.constant 0 : index
    %c192_446 = arith.constant 192 : index
    %266 = vector.load %arg13[%c0_445, %c192_446] : memref<2x1024xf32, #tpu.memory_space<vmem>>, vector<1x64xf32>
    %267 = vector.shape_cast %266 : vector<1x64xf32> to vector<64xf32>
    %268 = vector.shape_cast %265 : vector<64xf32> to vector<1x64xf32>
    tpu.vector_store %arg13[%c0_445, %c192_446], %268 {strides = array<i32>} : memref<2x1024xf32, #tpu.memory_space<vmem>>, vector<1x64xf32>,
    %269 = vector.extract_strided_slice %233 {offsets = [3, 64], sizes = [1, 64], strides = [1, 1]} : vector<16x128xf32> to vector<1x64xf32>
    %270 = vector.shape_cast %269 : vector<1x64xf32> to vector<64xf32>
    %c1_447 = arith.constant 1 : index
    %c192_448 = arith.constant 192 : index
    %271 = vector.load %arg13[%c1_447, %c192_448] : memref<2x1024xf32, #tpu.memory_space<vmem>>, vector<1x64xf32>
    %272 = vector.shape_cast %271 : vector<1x64xf32> to vector<64xf32>
    %273 = vector.shape_cast %270 : vector<64xf32> to vector<1x64xf32>
    tpu.vector_store %arg13[%c1_447, %c192_448], %273 {strides = array<i32>} : memref<2x1024xf32, #tpu.memory_space<vmem>>, vector<1x64xf32>,
    %274 = vector.extract_strided_slice %233 {offsets = [4, 0], sizes = [1, 64], strides = [1, 1]} : vector<16x128xf32> to vector<1x64xf32>
    %275 = vector.shape_cast %274 : vector<1x64xf32> to vector<64xf32>
    %c0_449 = arith.constant 0 : index
    %c256_450 = arith.constant 256 : index
    %276 = vector.load %arg13[%c0_449, %c256_450] : memref<2x1024xf32, #tpu.memory_space<vmem>>, vector<1x64xf32>
    %277 = vector.shape_cast %276 : vector<1x64xf32> to vector<64xf32>
    %278 = vector.shape_cast %275 : vector<64xf32> to vector<1x64xf32>
    tpu.vector_store %arg13[%c0_449, %c256_450], %278 {strides = array<i32>} : memref<2x1024xf32, #tpu.memory_space<vmem>>, vector<1x64xf32>,
    %279 = vector.extract_strided_slice %233 {offsets = [4, 64], sizes = [1, 64], strides = [1, 1]} : vector<16x128xf32> to vector<1x64xf32>
    %280 = vector.shape_cast %279 : vector<1x64xf32> to vector<64xf32>
    %c1_451 = arith.constant 1 : index
    %c256_452 = arith.constant 256 : index
    %281 = vector.load %arg13[%c1_451, %c256_452] : memref<2x1024xf32, #tpu.memory_space<vmem>>, vector<1x64xf32>
    %282 = vector.shape_cast %281 : vector<1x64xf32> to vector<64xf32>
    %283 = vector.shape_cast %280 : vector<64xf32> to vector<1x64xf32>
    tpu.vector_store %arg13[%c1_451, %c256_452], %283 {strides = array<i32>} : memref<2x1024xf32, #tpu.memory_space<vmem>>, vector<1x64xf32>,
    %284 = vector.extract_strided_slice %233 {offsets = [5, 0], sizes = [1, 64], strides = [1, 1]} : vector<16x128xf32> to vector<1x64xf32>
    %285 = vector.shape_cast %284 : vector<1x64xf32> to vector<64xf32>
    %c0_453 = arith.constant 0 : index
    %c320 = arith.constant 320 : index
    %286 = vector.load %arg13[%c0_453, %c320] : memref<2x1024xf32, #tpu.memory_space<vmem>>, vector<1x64xf32>
    %287 = vector.shape_cast %286 : vector<1x64xf32> to vector<64xf32>
    %288 = vector.shape_cast %285 : vector<64xf32> to vector<1x64xf32>
    tpu.vector_store %arg13[%c0_453, %c320], %288 {strides = array<i32>} : memref<2x1024xf32, #tpu.memory_space<vmem>>, vector<1x64xf32>,
    %289 = vector.extract_strided_slice %233 {offsets = [5, 64], sizes = [1, 64], strides = [1, 1]} : vector<16x128xf32> to vector<1x64xf32>
    %290 = vector.shape_cast %289 : vector<1x64xf32> to vector<64xf32>
    %c1_454 = arith.constant 1 : index
    %c320_455 = arith.constant 320 : index
    %291 = vector.load %arg13[%c1_454, %c320_455] : memref<2x1024xf32, #tpu.memory_space<vmem>>, vector<1x64xf32>
    %292 = vector.shape_cast %291 : vector<1x64xf32> to vector<64xf32>
    %293 = vector.shape_cast %290 : vector<64xf32> to vector<1x64xf32>
    tpu.vector_store %arg13[%c1_454, %c320_455], %293 {strides = array<i32>} : memref<2x1024xf32, #tpu.memory_space<vmem>>, vector<1x64xf32>,
    %294 = vector.extract_strided_slice %233 {offsets = [6, 0], sizes = [1, 64], strides = [1, 1]} : vector<16x128xf32> to vector<1x64xf32>
    %295 = vector.shape_cast %294 : vector<1x64xf32> to vector<64xf32>
    %c0_456 = arith.constant 0 : index
    %c384 = arith.constant 384 : index
    %296 = vector.load %arg13[%c0_456, %c384] : memref<2x1024xf32, #tpu.memory_space<vmem>>, vector<1x64xf32>
    %297 = vector.shape_cast %296 : vector<1x64xf32> to vector<64xf32>
    %298 = vector.shape_cast %295 : vector<64xf32> to vector<1x64xf32>
    tpu.vector_store %arg13[%c0_456, %c384], %298 {strides = array<i32>} : memref<2x1024xf32, #tpu.memory_space<vmem>>, vector<1x64xf32>,
    %299 = vector.extract_strided_slice %233 {offsets = [6, 64], sizes = [1, 64], strides = [1, 1]} : vector<16x128xf32> to vector<1x64xf32>
    %300 = vector.shape_cast %299 : vector<1x64xf32> to vector<64xf32>
    %c1_457 = arith.constant 1 : index
    %c384_458 = arith.constant 384 : index
    %301 = vector.load %arg13[%c1_457, %c384_458] : memref<2x1024xf32, #tpu.memory_space<vmem>>, vector<1x64xf32>
    %302 = vector.shape_cast %301 : vector<1x64xf32> to vector<64xf32>
    %303 = vector.shape_cast %300 : vector<64xf32> to vector<1x64xf32>
    tpu.vector_store %arg13[%c1_457, %c384_458], %303 {strides = array<i32>} : memref<2x1024xf32, #tpu.memory_space<vmem>>, vector<1x64xf32>,
    %304 = vector.extract_strided_slice %233 {offsets = [7, 0], sizes = [1, 64], strides = [1, 1]} : vector<16x128xf32> to vector<1x64xf32>
    %305 = vector.shape_cast %304 : vector<1x64xf32> to vector<64xf32>
    %c0_459 = arith.constant 0 : index
    %c448 = arith.constant 448 : index
    %306 = vector.load %arg13[%c0_459, %c448] : memref<2x1024xf32, #tpu.memory_space<vmem>>, vector<1x64xf32>
    %307 = vector.shape_cast %306 : vector<1x64xf32> to vector<64xf32>
    %308 = vector.shape_cast %305 : vector<64xf32> to vector<1x64xf32>
    tpu.vector_store %arg13[%c0_459, %c448], %308 {strides = array<i32>} : memref<2x1024xf32, #tpu.memory_space<vmem>>, vector<1x64xf32>,
    %309 = vector.extract_strided_slice %233 {offsets = [7, 64], sizes = [1, 64], strides = [1, 1]} : vector<16x128xf32> to vector<1x64xf32>
    %310 = vector.shape_cast %309 : vector<1x64xf32> to vector<64xf32>
    %c1_460 = arith.constant 1 : index
    %c448_461 = arith.constant 448 : index
    %311 = vector.load %arg13[%c1_460, %c448_461] : memref<2x1024xf32, #tpu.memory_space<vmem>>, vector<1x64xf32>
    %312 = vector.shape_cast %311 : vector<1x64xf32> to vector<64xf32>
    %313 = vector.shape_cast %310 : vector<64xf32> to vector<1x64xf32>
    tpu.vector_store %arg13[%c1_460, %c448_461], %313 {strides = array<i32>} : memref<2x1024xf32, #tpu.memory_space<vmem>>, vector<1x64xf32>,
    %314 = vector.extract_strided_slice %233 {offsets = [8, 0], sizes = [1, 64], strides = [1, 1]} : vector<16x128xf32> to vector<1x64xf32>
    %315 = vector.shape_cast %314 : vector<1x64xf32> to vector<64xf32>
    %c0_462 = arith.constant 0 : index
    %c512 = arith.constant 512 : index
    %316 = vector.load %arg13[%c0_462, %c512] : memref<2x1024xf32, #tpu.memory_space<vmem>>, vector<1x64xf32>
    %317 = vector.shape_cast %316 : vector<1x64xf32> to vector<64xf32>
    %318 = vector.shape_cast %315 : vector<64xf32> to vector<1x64xf32>
    tpu.vector_store %arg13[%c0_462, %c512], %318 {strides = array<i32>} : memref<2x1024xf32, #tpu.memory_space<vmem>>, vector<1x64xf32>,
    %319 = vector.extract_strided_slice %233 {offsets = [8, 64], sizes = [1, 64], strides = [1, 1]} : vector<16x128xf32> to vector<1x64xf32>
    %320 = vector.shape_cast %319 : vector<1x64xf32> to vector<64xf32>
    %c1_463 = arith.constant 1 : index
    %c512_464 = arith.constant 512 : index
    %321 = vector.load %arg13[%c1_463, %c512_464] : memref<2x1024xf32, #tpu.memory_space<vmem>>, vector<1x64xf32>
    %322 = vector.shape_cast %321 : vector<1x64xf32> to vector<64xf32>
    %323 = vector.shape_cast %320 : vector<64xf32> to vector<1x64xf32>
    tpu.vector_store %arg13[%c1_463, %c512_464], %323 {strides = array<i32>} : memref<2x1024xf32, #tpu.memory_space<vmem>>, vector<1x64xf32>,
    %324 = vector.extract_strided_slice %233 {offsets = [9, 0], sizes = [1, 64], strides = [1, 1]} : vector<16x128xf32> to vector<1x64xf32>
    %325 = vector.shape_cast %324 : vector<1x64xf32> to vector<64xf32>
    %c0_465 = arith.constant 0 : index
    %c576 = arith.constant 576 : index
    %326 = vector.load %arg13[%c0_465, %c576] : memref<2x1024xf32, #tpu.memory_space<vmem>>, vector<1x64xf32>
    %327 = vector.shape_cast %326 : vector<1x64xf32> to vector<64xf32>
    %328 = vector.shape_cast %325 : vector<64xf32> to vector<1x64xf32>
    tpu.vector_store %arg13[%c0_465, %c576], %328 {strides = array<i32>} : memref<2x1024xf32, #tpu.memory_space<vmem>>, vector<1x64xf32>,
    %329 = vector.extract_strided_slice %233 {offsets = [9, 64], sizes = [1, 64], strides = [1, 1]} : vector<16x128xf32> to vector<1x64xf32>
    %330 = vector.shape_cast %329 : vector<1x64xf32> to vector<64xf32>
    %c1_466 = arith.constant 1 : index
    %c576_467 = arith.constant 576 : index
    %331 = vector.load %arg13[%c1_466, %c576_467] : memref<2x1024xf32, #tpu.memory_space<vmem>>, vector<1x64xf32>
    %332 = vector.shape_cast %331 : vector<1x64xf32> to vector<64xf32>
    %333 = vector.shape_cast %330 : vector<64xf32> to vector<1x64xf32>
    tpu.vector_store %arg13[%c1_466, %c576_467], %333 {strides = array<i32>} : memref<2x1024xf32, #tpu.memory_space<vmem>>, vector<1x64xf32>,
    %334 = vector.extract_strided_slice %233 {offsets = [10, 0], sizes = [1, 64], strides = [1, 1]} : vector<16x128xf32> to vector<1x64xf32>
    %335 = vector.shape_cast %334 : vector<1x64xf32> to vector<64xf32>
    %c0_468 = arith.constant 0 : index
    %c640 = arith.constant 640 : index
    %336 = vector.load %arg13[%c0_468, %c640] : memref<2x1024xf32, #tpu.memory_space<vmem>>, vector<1x64xf32>
    %337 = vector.shape_cast %336 : vector<1x64xf32> to vector<64xf32>
    %338 = vector.shape_cast %335 : vector<64xf32> to vector<1x64xf32>
    tpu.vector_store %arg13[%c0_468, %c640], %338 {strides = array<i32>} : memref<2x1024xf32, #tpu.memory_space<vmem>>, vector<1x64xf32>,
    %339 = vector.extract_strided_slice %233 {offsets = [10, 64], sizes = [1, 64], strides = [1, 1]} : vector<16x128xf32> to vector<1x64xf32>
    %340 = vector.shape_cast %339 : vector<1x64xf32> to vector<64xf32>
    %c1_469 = arith.constant 1 : index
    %c640_470 = arith.constant 640 : index
    %341 = vector.load %arg13[%c1_469, %c640_470] : memref<2x1024xf32, #tpu.memory_space<vmem>>, vector<1x64xf32>
    %342 = vector.shape_cast %341 : vector<1x64xf32> to vector<64xf32>
    %343 = vector.shape_cast %340 : vector<64xf32> to vector<1x64xf32>
    tpu.vector_store %arg13[%c1_469, %c640_470], %343 {strides = array<i32>} : memref<2x1024xf32, #tpu.memory_space<vmem>>, vector<1x64xf32>,
    %344 = vector.extract_strided_slice %233 {offsets = [11, 0], sizes = [1, 64], strides = [1, 1]} : vector<16x128xf32> to vector<1x64xf32>
    %345 = vector.shape_cast %344 : vector<1x64xf32> to vector<64xf32>
    %c0_471 = arith.constant 0 : index
    %c704 = arith.constant 704 : index
    %346 = vector.load %arg13[%c0_471, %c704] : memref<2x1024xf32, #tpu.memory_space<vmem>>, vector<1x64xf32>
    %347 = vector.shape_cast %346 : vector<1x64xf32> to vector<64xf32>
    %348 = vector.shape_cast %345 : vector<64xf32> to vector<1x64xf32>
    tpu.vector_store %arg13[%c0_471, %c704], %348 {strides = array<i32>} : memref<2x1024xf32, #tpu.memory_space<vmem>>, vector<1x64xf32>,
    %349 = vector.extract_strided_slice %233 {offsets = [11, 64], sizes = [1, 64], strides = [1, 1]} : vector<16x128xf32> to vector<1x64xf32>
    %350 = vector.shape_cast %349 : vector<1x64xf32> to vector<64xf32>
    %c1_472 = arith.constant 1 : index
    %c704_473 = arith.constant 704 : index
    %351 = vector.load %arg13[%c1_472, %c704_473] : memref<2x1024xf32, #tpu.memory_space<vmem>>, vector<1x64xf32>
    %352 = vector.shape_cast %351 : vector<1x64xf32> to vector<64xf32>
    %353 = vector.shape_cast %350 : vector<64xf32> to vector<1x64xf32>
    tpu.vector_store %arg13[%c1_472, %c704_473], %353 {strides = array<i32>} : memref<2x1024xf32, #tpu.memory_space<vmem>>, vector<1x64xf32>,
    %354 = vector.extract_strided_slice %233 {offsets = [12, 0], sizes = [1, 64], strides = [1, 1]} : vector<16x128xf32> to vector<1x64xf32>
    %355 = vector.shape_cast %354 : vector<1x64xf32> to vector<64xf32>
    %c0_474 = arith.constant 0 : index
    %c768 = arith.constant 768 : index
    %356 = vector.load %arg13[%c0_474, %c768] : memref<2x1024xf32, #tpu.memory_space<vmem>>, vector<1x64xf32>
    %357 = vector.shape_cast %356 : vector<1x64xf32> to vector<64xf32>
    %358 = vector.shape_cast %355 : vector<64xf32> to vector<1x64xf32>
    tpu.vector_store %arg13[%c0_474, %c768], %358 {strides = array<i32>} : memref<2x1024xf32, #tpu.memory_space<vmem>>, vector<1x64xf32>,
    %359 = vector.extract_strided_slice %233 {offsets = [12, 64], sizes = [1, 64], strides = [1, 1]} : vector<16x128xf32> to vector<1x64xf32>
    %360 = vector.shape_cast %359 : vector<1x64xf32> to vector<64xf32>
    %c1_475 = arith.constant 1 : index
    %c768_476 = arith.constant 768 : index
    %361 = vector.load %arg13[%c1_475, %c768_476] : memref<2x1024xf32, #tpu.memory_space<vmem>>, vector<1x64xf32>
    %362 = vector.shape_cast %361 : vector<1x64xf32> to vector<64xf32>
    %363 = vector.shape_cast %360 : vector<64xf32> to vector<1x64xf32>
    tpu.vector_store %arg13[%c1_475, %c768_476], %363 {strides = array<i32>} : memref<2x1024xf32, #tpu.memory_space<vmem>>, vector<1x64xf32>,
    %364 = vector.extract_strided_slice %233 {offsets = [13, 0], sizes = [1, 64], strides = [1, 1]} : vector<16x128xf32> to vector<1x64xf32>
    %365 = vector.shape_cast %364 : vector<1x64xf32> to vector<64xf32>
    %c0_477 = arith.constant 0 : index
    %c832 = arith.constant 832 : index
    %366 = vector.load %arg13[%c0_477, %c832] : memref<2x1024xf32, #tpu.memory_space<vmem>>, vector<1x64xf32>
    %367 = vector.shape_cast %366 : vector<1x64xf32> to vector<64xf32>
    %368 = vector.shape_cast %365 : vector<64xf32> to vector<1x64xf32>
    tpu.vector_store %arg13[%c0_477, %c832], %368 {strides = array<i32>} : memref<2x1024xf32, #tpu.memory_space<vmem>>, vector<1x64xf32>,
    %369 = vector.extract_strided_slice %233 {offsets = [13, 64], sizes = [1, 64], strides = [1, 1]} : vector<16x128xf32> to vector<1x64xf32>
    %370 = vector.shape_cast %369 : vector<1x64xf32> to vector<64xf32>
    %c1_478 = arith.constant 1 : index
    %c832_479 = arith.constant 832 : index
    %371 = vector.load %arg13[%c1_478, %c832_479] : memref<2x1024xf32, #tpu.memory_space<vmem>>, vector<1x64xf32>
    %372 = vector.shape_cast %371 : vector<1x64xf32> to vector<64xf32>
    %373 = vector.shape_cast %370 : vector<64xf32> to vector<1x64xf32>
    tpu.vector_store %arg13[%c1_478, %c832_479], %373 {strides = array<i32>} : memref<2x1024xf32, #tpu.memory_space<vmem>>, vector<1x64xf32>,
    %374 = vector.extract_strided_slice %233 {offsets = [14, 0], sizes = [1, 64], strides = [1, 1]} : vector<16x128xf32> to vector<1x64xf32>
    %375 = vector.shape_cast %374 : vector<1x64xf32> to vector<64xf32>
    %c0_480 = arith.constant 0 : index
    %c896 = arith.constant 896 : index
    %376 = vector.load %arg13[%c0_480, %c896] : memref<2x1024xf32, #tpu.memory_space<vmem>>, vector<1x64xf32>
    %377 = vector.shape_cast %376 : vector<1x64xf32> to vector<64xf32>
    %378 = vector.shape_cast %375 : vector<64xf32> to vector<1x64xf32>
    tpu.vector_store %arg13[%c0_480, %c896], %378 {strides = array<i32>} : memref<2x1024xf32, #tpu.memory_space<vmem>>, vector<1x64xf32>,
    %379 = vector.extract_strided_slice %233 {offsets = [14, 64], sizes = [1, 64], strides = [1, 1]} : vector<16x128xf32> to vector<1x64xf32>
    %380 = vector.shape_cast %379 : vector<1x64xf32> to vector<64xf32>
    %c1_481 = arith.constant 1 : index
    %c896_482 = arith.constant 896 : index
    %381 = vector.load %arg13[%c1_481, %c896_482] : memref<2x1024xf32, #tpu.memory_space<vmem>>, vector<1x64xf32>
    %382 = vector.shape_cast %381 : vector<1x64xf32> to vector<64xf32>
    %383 = vector.shape_cast %380 : vector<64xf32> to vector<1x64xf32>
    tpu.vector_store %arg13[%c1_481, %c896_482], %383 {strides = array<i32>} : memref<2x1024xf32, #tpu.memory_space<vmem>>, vector<1x64xf32>,
    %384 = vector.extract_strided_slice %233 {offsets = [15, 0], sizes = [1, 64], strides = [1, 1]} : vector<16x128xf32> to vector<1x64xf32>
    %385 = vector.shape_cast %384 : vector<1x64xf32> to vector<64xf32>
    %c0_483 = arith.constant 0 : index
    %c960 = arith.constant 960 : index
    %386 = vector.load %arg13[%c0_483, %c960] : memref<2x1024xf32, #tpu.memory_space<vmem>>, vector<1x64xf32>
    %387 = vector.shape_cast %386 : vector<1x64xf32> to vector<64xf32>
    %388 = vector.shape_cast %385 : vector<64xf32> to vector<1x64xf32>
    tpu.vector_store %arg13[%c0_483, %c960], %388 {strides = array<i32>} : memref<2x1024xf32, #tpu.memory_space<vmem>>, vector<1x64xf32>,
    %389 = vector.extract_strided_slice %233 {offsets = [15, 64], sizes = [1, 64], strides = [1, 1]} : vector<16x128xf32> to vector<1x64xf32>
    %390 = vector.shape_cast %389 : vector<1x64xf32> to vector<64xf32>
    %c1_484 = arith.constant 1 : index
    %c960_485 = arith.constant 960 : index
    %391 = vector.load %arg13[%c1_484, %c960_485] : memref<2x1024xf32, #tpu.memory_space<vmem>>, vector<1x64xf32>
    %392 = vector.shape_cast %391 : vector<1x64xf32> to vector<64xf32>
    %393 = vector.shape_cast %390 : vector<64xf32> to vector<1x64xf32>
    tpu.vector_store %arg13[%c1_484, %c960_485], %393 {strides = array<i32>} : memref<2x1024xf32, #tpu.memory_space<vmem>>, vector<1x64xf32>,
    %c0_486 = arith.constant 0 : index
    %c0_487 = arith.constant 0 : index
    %394 = vector.load %arg13[%c0_486, %c0_487] : memref<2x1024xf32, #tpu.memory_space<vmem>>, vector<2x1024xf32>
    %c0_488 = arith.constant 0 : index
    %c0_489 = arith.constant 0 : index
    %395 = vector.load %arg6[%c0_488, %c0_489] : memref<1024x64xf32, #tpu.memory_space<vmem>>, vector<1024x64xf32>
    %cst_490 = arith.constant dense<0.000000e+00> : vector<2x64xf32>
    %396 = tpu.matmul %394, %395, %cst_490 {dimension_numbers = #tpu.dot_dimension_numbers<[1], [0], [0], [1], [0, 0, 1, 1], [], []>} : vector<2x1024xf32>, vector<1024x64xf32>, vector<2x64xf32> -> vector<2x64xf32>
    %c0_491 = arith.constant 0 : index
    %c0_492 = arith.constant 0 : index
    %397 = vector.load %arg7[%c0_491, %c0_492] : memref<1x64xf32, #tpu.memory_space<vmem>>, vector<1x64xf32>
    %398 = vector.broadcast %397 : vector<1x64xf32> to vector<2x64xf32>
    %399 = arith.addf %396, %398 : vector<2x64xf32>
    %cst_493 = arith.constant 0.000000e+00 : f32
    %400 = vector.broadcast %cst_493 : f32 to vector<2x64xf32>
    %401 = arith.maximumf %399, %400 : vector<2x64xf32>
    %c0_494 = arith.constant 0 : index
    %c0_495 = arith.constant 0 : index
    %402 = vector.load %arg8[%c0_494, %c0_495] : memref<64x27xf32, #tpu.memory_space<vmem>>, vector<64x27xf32>
    %cst_496 = arith.constant dense<0.000000e+00> : vector<2x27xf32>
    %403 = tpu.matmul %401, %402, %cst_496 {dimension_numbers = #tpu.dot_dimension_numbers<[1], [0], [0], [1], [0, 0, 1, 1], [], []>} : vector<2x64xf32>, vector<64x27xf32>, vector<2x27xf32> -> vector<2x27xf32>
    %c0_497 = arith.constant 0 : index
    %c0_498 = arith.constant 0 : index
    %404 = vector.load %arg9[%c0_497, %c0_498] : memref<1x27xf32, #tpu.memory_space<vmem>>, vector<1x27xf32>
    %405 = vector.broadcast %404 : vector<1x27xf32> to vector<2x27xf32>
    %406 = arith.addf %403, %405 : vector<2x27xf32>
    %c0_499 = arith.constant 0 : index
    %c0_500 = arith.constant 0 : index
    %407 = vector.load %arg10[%c0_499, %c0_500] : memref<2x27xf32, #tpu.memory_space<vmem>>, vector<2x27xf32>
    tpu.vector_store %arg10[%c0_499, %c0_500], %406 {strides = array<i32>} : memref<2x27xf32, #tpu.memory_space<vmem>>, vector<2x27xf32>,
    return
  }
  func.func @transform_0(%arg0: i32) -> (i32, i32) {
    %c0_i32 = arith.constant 0 : i32
    %c0_i32_0 = arith.constant 0 : i32
    %c0_i32_1 = arith.constant 0 : i32
    return %c0_i32, %c0_i32_0 : i32, i32
  }
  func.func @transform_1(%arg0: i32) -> (i32, i32) {
    %c0_i32 = arith.constant 0 : i32
    %c0_i32_0 = arith.constant 0 : i32
    %c0_i32_1 = arith.constant 0 : i32
    return %c0_i32, %c0_i32_0 : i32, i32
  }
  func.func @transform_2(%arg0: i32) -> (i32, i32) {
    %c0_i32 = arith.constant 0 : i32
    %c0_i32_0 = arith.constant 0 : i32
    %c0_i32_1 = arith.constant 0 : i32
    return %c0_i32, %c0_i32_0 : i32, i32
  }
  func.func @transform_3(%arg0: i32) -> (i32, i32) {
    %c0_i32 = arith.constant 0 : i32
    %c0_i32_0 = arith.constant 0 : i32
    %c0_i32_1 = arith.constant 0 : i32
    return %c0_i32, %c0_i32_0 : i32, i32
  }
  func.func @transform_4(%arg0: i32) -> (i32, i32) {
    %c0_i32 = arith.constant 0 : i32
    %c0_i32_0 = arith.constant 0 : i32
    %c0_i32_1 = arith.constant 0 : i32
    return %c0_i32, %c0_i32_0 : i32, i32
  }
  func.func @transform_5(%arg0: i32) -> (i32, i32) {
    %c0_i32 = arith.constant 0 : i32
    %c0_i32_0 = arith.constant 0 : i32
    %c0_i32_1 = arith.constant 0 : i32
    return %c0_i32, %c0_i32_0 : i32, i32
  }
  func.func @transform_6(%arg0: i32) -> (i32, i32) {
    %c0_i32 = arith.constant 0 : i32
    %c0_i32_0 = arith.constant 0 : i32
    %c0_i32_1 = arith.constant 0 : i32
    return %c0_i32, %c0_i32_0 : i32, i32
  }
  func.func @transform_7(%arg0: i32) -> (i32, i32) {
    %c0_i32 = arith.constant 0 : i32
    %c0_i32_0 = arith.constant 0 : i32
    %c0_i32_1 = arith.constant 0 : i32
    return %c0_i32, %c0_i32_0 : i32, i32
  }
  func.func @transform_8(%arg0: i32) -> (i32, i32) {
    %c0_i32 = arith.constant 0 : i32
    %c0_i32_0 = arith.constant 0 : i32
    %c0_i32_1 = arith.constant 0 : i32
    return %c0_i32, %c0_i32_0 : i32, i32
  }
  func.func @transform_9(%arg0: i32) -> (i32, i32) {
    %c0_i32 = arith.constant 0 : i32
    %c0_i32_0 = arith.constant 0 : i32
    %c0_i32_1 = arith.constant 0 : i32
    return %c0_i32, %c0_i32_0 : i32, i32
  }
}

</mosaic_0001>

<llo_original>
// kernel: character_cnn_forward.1
$region0: #{character_cnn_forward.1}
  #allocation0 [shape = 'u32[]', space=smem, size = 0x4, offset = 0x4, fixed_abs, tag = 'smem constant byte address 0x4 - core index']
  #allocation1 [shape = 'u32[72,128]{1,0:T(1,128)}', space=vmem, size = 0x9000, scoped, tag = 'internal scratch']
  #allocation2 [shape = 'f32[2,2,2,9,9,32]{5,4,3,2,1,0:T(8,128)}', space=vmem, size = 0x90000, scoped, tag = 'scratch operand']
  #allocation3 [shape = 'f32[4,2,8,8,288]{4,3,2,1,0:T(8,128)}', space=vmem, size = 0xc0000, scoped, tag = 'scratch operand']
  #allocation4 [shape = 'f32[2,1024]{1,0:T(2,128)}', space=vmem, size = 0x2000, scoped, tag = 'scratch operand']
  %s0 = inlined_call_operand.vmem [shape: f32[2048,9], index: 0, kind: input, shape index: {}]
  %s1 = inlined_call_operand.vmem [shape: f32[9,32], index: 1, kind: input, shape index: {}]
  %s2 = inlined_call_operand.vmem [shape: f32[1,32], index: 2, kind: input, shape index: {}]
  %s3 = inlined_call_operand.vmem [shape: f32[288,16], index: 3, kind: input, shape index: {}]
  %s4 = inlined_call_operand.vmem [shape: f32[1,16], index: 4, kind: input, shape index: {}]
  %s5 = inlined_call_operand.vmem [shape: f32[1024,64], index: 5, kind: input, shape index: {}]
  %s6 = inlined_call_operand.vmem [shape: f32[1,64], index: 6, kind: input, shape index: {}]
  %s7 = inlined_call_operand.vmem [shape: f32[64,27], index: 7, kind: input, shape index: {}]
  %s8 = inlined_call_operand.vmem [shape: f32[1,27], index: 8, kind: input, shape index: {}]
  %s9 = inlined_call_operand.hbm [shape: f32[2,27], index: 9, kind: output, shape index: {}]
  %s10 = sld [smem:[#allocation0]]
  $region46: #{character_cnn_forward.1} parent=0
    _
  %s12 = ssub.s32 1, %s10
  %s13 = scalar_select 0, %s12, %s10
  $region1: #{character_cnn_forward.1} parent=0
    #allocation5 [shape = 'u8[1024]{0}', space=vmem, size = 0x400, scoped, tag = 'output window, operand 0, single buffered']
    #allocation6 [shape = 's32[1]{0}', space=sflag, size = 0x4, scoped, tag = 'scoped memory for character_cnn_forward.1']
    %14 = vsyncpa [#allocation6], 0
    // Predicated region
    $region2: #{character_cnn_forward.1} parent=1 // pred_check
      _
    $region3: #{character_cnn_forward.1} parent=1 // pred_check_branch
      %16 = sbr.rel (0) target = $region5
    $region4: #{character_cnn_forward.1} parent=1 // pred_region
      _
    $region5: #{character_cnn_forward.1} parent=1 // pred_fallthru
      _
    // Predicated region
    $region6: #{character_cnn_forward.1} parent=1 // pred_check
      _
    $region7: #{character_cnn_forward.1} parent=1 // pred_check_branch
      %18 = sbr.rel (0) target = $region9
    $region8: #{character_cnn_forward.1} parent=1 // pred_region
      _
    $region9: #{character_cnn_forward.1} parent=1 // pred_fallthru
      _
    // Predicated region
    $region10: #{character_cnn_forward.1} parent=1 // pred_check
      _
    $region11: #{character_cnn_forward.1} parent=1 // pred_check_branch
      %20 = sbr.rel (0) target = $region13
    $region12: #{character_cnn_forward.1} parent=1 // pred_region
      _
    $region13: #{character_cnn_forward.1} parent=1 // pred_fallthru
      _
    // Predicated region
    $region14: #{character_cnn_forward.1} parent=1 // pred_check
      _
    $region15: #{character_cnn_forward.1} parent=1 // pred_check_branch
      %22 = sbr.rel (0) target = $region17
    $region16: #{character_cnn_forward.1} parent=1 // pred_region
      _
    $region17: #{character_cnn_forward.1} parent=1 // pred_fallthru
      _
    // Predicated region
    $region18: #{character_cnn_forward.1} parent=1 // pred_check
      _
    $region19: #{character_cnn_forward.1} parent=1 // pred_check_branch
      %24 = sbr.rel (0) target = $region21
    $region20: #{character_cnn_forward.1} parent=1 // pred_region
      _
    $region21: #{character_cnn_forward.1} parent=1 // pred_fallthru
      _
    // Predicated region
    $region22: #{character_cnn_forward.1} parent=1 // pred_check
      _
    $region23: #{character_cnn_forward.1} parent=1 // pred_check_branch
      %26 = sbr.rel (0) target = $region25
    $region24: #{character_cnn_forward.1} parent=1 // pred_region
      _
    $region25: #{character_cnn_forward.1} parent=1 // pred_fallthru
      _
    // Predicated region
    $region26: #{character_cnn_forward.1} parent=1 // pred_check
      _
    $region27: #{character_cnn_forward.1} parent=1 // pred_check_branch
      %28 = sbr.rel (0) target = $region29
    $region28: #{character_cnn_forward.1} parent=1 // pred_region
      _
    $region29: #{character_cnn_forward.1} parent=1 // pred_fallthru
      _
    // Predicated region
    $region30: #{character_cnn_forward.1} parent=1 // pred_check
      _
    $region31: #{character_cnn_forward.1} parent=1 // pred_check_branch
      %30 = sbr.rel (0) target = $region33
    $region32: #{character_cnn_forward.1} parent=1 // pred_region
      _
    $region33: #{character_cnn_forward.1} parent=1 // pred_fallthru
      _
    // Predicated region
    $region34: #{character_cnn_forward.1} parent=1 // pred_check
      _
    $region35: #{character_cnn_forward.1} parent=1 // pred_check_branch
      %32 = sbr.rel (0) target = $region37
    $region36: #{character_cnn_forward.1} parent=1 // pred_region
      _
    $region37: #{character_cnn_forward.1} parent=1 // pred_fallthru
      _
    %v33 = vld [vmem:[%s0] sm:$0xff]
    %v34 = vld [vmem:[%s0 + $0x8] sm:$0xff]
    %v35 = vld [vmem:[%s0 + $0x10] sm:$0xff]
    %v36 = vld [vmem:[%s0 + $0x18] sm:$0xff]
    %v37 = vld [vmem:[%s0 + $0x20] sm:$0xff]
    %v38 = vld [vmem:[%s0 + $0x28] sm:$0xff]
    %v39 = vld [vmem:[%s0 + $0x30] sm:$0xff]
    %v40 = vld [vmem:[%s0 + $0x38] sm:$0xff]
    %v41 = vld [vmem:[%s0 + $0x40] sm:$0xff]
    %v42 = vld [vmem:[%s0 + $0x48] sm:$0xff]
    %v43 = vld [vmem:[%s0 + $0x50] sm:$0xff]
    %v44 = vld [vmem:[%s0 + $0x58] sm:$0xff]
    %v45 = vld [vmem:[%s0 + $0x60] sm:$0xff]
    %v46 = vld [vmem:[%s0 + $0x68] sm:$0xff]
    %v47 = vld [vmem:[%s0 + $0x70] sm:$0xff]
    %v48 = vld [vmem:[%s0 + $0x78] sm:$0xff]
    %v49 = vld [vmem:[%s0 + $0x80] sm:$0xff]
    %v50 = vld [vmem:[%s0 + $0x88] sm:$0xff]
    %v51 = vld [vmem:[%s0 + $0x90] sm:$0xff]
    %v52 = vld [vmem:[%s0 + $0x98] sm:$0xff]
    %v53 = vld [vmem:[%s0 + $0xa0] sm:$0xff]
    %v54 = vld [vmem:[%s0 + $0xa8] sm:$0xff]
    %v55 = vld [vmem:[%s0 + $0xb0] sm:$0xff]
    %v56 = vld [vmem:[%s0 + $0xb8] sm:$0xff]
    %v57 = vld [vmem:[%s0 + $0xc0] sm:$0xff]
    %v58 = vld [vmem:[%s0 + $0xc8] sm:$0xff]
    %v59 = vld [vmem:[%s0 + $0xd0] sm:$0xff]
    %v60 = vld [vmem:[%s0 + $0xd8] sm:$0xff]
    %v61 = vld [vmem:[%s0 + $0xe0] sm:$0xff]
    %v62 = vld [vmem:[%s0 + $0xe8] sm:$0xff]
    %v63 = vld [vmem:[%s0 + $0xf0] sm:$0xff]
    %v64 = vld [vmem:[%s0 + $0xf8] sm:$0xff]
    %v65 = vld [vmem:[%s0 + $0x100] sm:$0xff]
    %v66 = vld [vmem:[%s0 + $0x108] sm:$0xff]
    %v67 = vld [vmem:[%s0 + $0x110] sm:$0xff]
    %v68 = vld [vmem:[%s0 + $0x118] sm:$0xff]
    %v69 = vld [vmem:[%s0 + $0x120] sm:$0xff]
    %v70 = vld [vmem:[%s0 + $0x128] sm:$0xff]
    %v71 = vld [vmem:[%s0 + $0x130] sm:$0xff]
    %v72 = vld [vmem:[%s0 + $0x138] sm:$0xff]
    %v73 = vld [vmem:[%s0 + $0x140] sm:$0xff]
    %v74 = vld [vmem:[%s0 + $0x148] sm:$0xff]
    %v75 = vld [vmem:[%s0 + $0x150] sm:$0xff]
    %v76 = vld [vmem:[%s0 + $0x158] sm:$0xff]
    %v77 = vld [vmem:[%s0 + $0x160] sm:$0xff]
    %v78 = vld [vmem:[%s0 + $0x168] sm:$0xff]
    %v79 = vld [vmem:[%s0 + $0x170] sm:$0xff]
    %v80 = vld [vmem:[%s0 + $0x178] sm:$0xff]
    %v81 = vld [vmem:[%s0 + $0x180] sm:$0xff]
    %v82 = vld [vmem:[%s0 + $0x188] sm:$0xff]
    %v83 = vld [vmem:[%s0 + $0x190] sm:$0xff]
    %v84 = vld [vmem:[%s0 + $0x198] sm:$0xff]
    %v85 = vld [vmem:[%s0 + $0x1a0] sm:$0xff]
    %v86 = vld [vmem:[%s0 + $0x1a8] sm:$0xff]
    %v87 = vld [vmem:[%s0 + $0x1b0] sm:$0xff]
    %v88 = vld [vmem:[%s0 + $0x1b8] sm:$0xff]
    %v89 = vld [vmem:[%s0 + $0x1c0] sm:$0xff]
    %v90 = vld [vmem:[%s0 + $0x1c8] sm:$0xff]
    %v91 = vld [vmem:[%s0 + $0x1d0] sm:$0xff]
    %v92 = vld [vmem:[%s0 + $0x1d8] sm:$0xff]
    %v93 = vld [vmem:[%s0 + $0x1e0] sm:$0xff]
    %v94 = vld [vmem:[%s0 + $0x1e8] sm:$0xff]
    %v95 = vld [vmem:[%s0 + $0x1f0] sm:$0xff]
    %v96 = vld [vmem:[%s0 + $0x1f8] sm:$0xff]
    %v97 = vld [vmem:[%s0 + $0x200] sm:$0xff]
    %v98 = vld [vmem:[%s0 + $0x208] sm:$0xff]
    %v99 = vld [vmem:[%s0 + $0x210] sm:$0xff]
    %v100 = vld [vmem:[%s0 + $0x218] sm:$0xff]
    %v101 = vld [vmem:[%s0 + $0x220] sm:$0xff]
    %v102 = vld [vmem:[%s0 + $0x228] sm:$0xff]
    %v103 = vld [vmem:[%s0 + $0x230] sm:$0xff]
    %v104 = vld [vmem:[%s0 + $0x238] sm:$0xff]
    %v105 = vld [vmem:[%s0 + $0x240] sm:$0xff]
    %v106 = vld [vmem:[%s0 + $0x248] sm:$0xff]
    %v107 = vld [vmem:[%s0 + $0x250] sm:$0xff]
    %v108 = vld [vmem:[%s0 + $0x258] sm:$0xff]
    %v109 = vld [vmem:[%s0 + $0x260] sm:$0xff]
    %v110 = vld [vmem:[%s0 + $0x268] sm:$0xff]
    %v111 = vld [vmem:[%s0 + $0x270] sm:$0xff]
    %v112 = vld [vmem:[%s0 + $0x278] sm:$0xff]
    %v113 = vld [vmem:[%s0 + $0x280] sm:$0xff]
    %v114 = vld [vmem:[%s0 + $0x288] sm:$0xff]
    %v115 = vld [vmem:[%s0 + $0x290] sm:$0xff]
    %v116 = vld [vmem:[%s0 + $0x298] sm:$0xff]
    %v117 = vld [vmem:[%s0 + $0x2a0] sm:$0xff]
    %v118 = vld [vmem:[%s0 + $0x2a8] sm:$0xff]
    %v119 = vld [vmem:[%s0 + $0x2b0] sm:$0xff]
    %v120 = vld [vmem:[%s0 + $0x2b8] sm:$0xff]
    %v121 = vld [vmem:[%s0 + $0x2c0] sm:$0xff]
    %v122 = vld [vmem:[%s0 + $0x2c8] sm:$0xff]
    %v123 = vld [vmem:[%s0 + $0x2d0] sm:$0xff]
    %v124 = vld [vmem:[%s0 + $0x2d8] sm:$0xff]
    %v125 = vld [vmem:[%s0 + $0x2e0] sm:$0xff]
    %v126 = vld [vmem:[%s0 + $0x2e8] sm:$0xff]
    %v127 = vld [vmem:[%s0 + $0x2f0] sm:$0xff]
    %v128 = vld [vmem:[%s0 + $0x2f8] sm:$0xff]
    %v129 = vld [vmem:[%s0 + $0x300] sm:$0xff]
    %v130 = vld [vmem:[%s0 + $0x308] sm:$0xff]
    %v131 = vld [vmem:[%s0 + $0x310] sm:$0xff]
    %v132 = vld [vmem:[%s0 + $0x318] sm:$0xff]
    %v133 = vld [vmem:[%s0 + $0x320] sm:$0xff]
    %v134 = vld [vmem:[%s0 + $0x328] sm:$0xff]
    %v135 = vld [vmem:[%s0 + $0x330] sm:$0xff]
    %v136 = vld [vmem:[%s0 + $0x338] sm:$0xff]
    %v137 = vld [vmem:[%s0 + $0x340] sm:$0xff]
    %v138 = vld [vmem:[%s0 + $0x348] sm:$0xff]
    %v139 = vld [vmem:[%s0 + $0x350] sm:$0xff]
    %v140 = vld [vmem:[%s0 + $0x358] sm:$0xff]
    %v141 = vld [vmem:[%s0 + $0x360] sm:$0xff]
    %v142 = vld [vmem:[%s0 + $0x368] sm:$0xff]
    %v143 = vld [vmem:[%s0 + $0x370] sm:$0xff]
    %v144 = vld [vmem:[%s0 + $0x378] sm:$0xff]
    %v145 = vld [vmem:[%s0 + $0x380] sm:$0xff]
    %v146 = vld [vmem:[%s0 + $0x388] sm:$0xff]
    %v147 = vld [vmem:[%s0 + $0x390] sm:$0xff]
    %v148 = vld [vmem:[%s0 + $0x398] sm:$0xff]
    %v149 = vld [vmem:[%s0 + $0x3a0] sm:$0xff]
    %v150 = vld [vmem:[%s0 + $0x3a8] sm:$0xff]
    %v151 = vld [vmem:[%s0 + $0x3b0] sm:$0xff]
    %v152 = vld [vmem:[%s0 + $0x3b8] sm:$0xff]
    %v153 = vld [vmem:[%s0 + $0x3c0] sm:$0xff]
    %v154 = vld [vmem:[%s0 + $0x3c8] sm:$0xff]
    %v155 = vld [vmem:[%s0 + $0x3d0] sm:$0xff]
    %v156 = vld [vmem:[%s0 + $0x3d8] sm:$0xff]
    %v157 = vld [vmem:[%s0 + $0x3e0] sm:$0xff]
    %v158 = vld [vmem:[%s0 + $0x3e8] sm:$0xff]
    %v159 = vld [vmem:[%s0 + $0x3f0] sm:$0xff]
    %v160 = vld [vmem:[%s0 + $0x3f8] sm:$0xff]
    %v161 = vld [vmem:[%s0 + $0x400] sm:$0xff]
    %v162 = vld [vmem:[%s0 + $0x408] sm:$0xff]
    %v163 = vld [vmem:[%s0 + $0x410] sm:$0xff]
    %v164 = vld [vmem:[%s0 + $0x418] sm:$0xff]
    %v165 = vld [vmem:[%s0 + $0x420] sm:$0xff]
    %v166 = vld [vmem:[%s0 + $0x428] sm:$0xff]
    %v167 = vld [vmem:[%s0 + $0x430] sm:$0xff]
    %v168 = vld [vmem:[%s0 + $0x438] sm:$0xff]
    %v169 = vld [vmem:[%s0 + $0x440] sm:$0xff]
    %v170 = vld [vmem:[%s0 + $0x448] sm:$0xff]
    %v171 = vld [vmem:[%s0 + $0x450] sm:$0xff]
    %v172 = vld [vmem:[%s0 + $0x458] sm:$0xff]
    %v173 = vld [vmem:[%s0 + $0x460] sm:$0xff]
    %v174 = vld [vmem:[%s0 + $0x468] sm:$0xff]
    %v175 = vld [vmem:[%s0 + $0x470] sm:$0xff]
    %v176 = vld [vmem:[%s0 + $0x478] sm:$0xff]
    %v177 = vld [vmem:[%s0 + $0x480] sm:$0xff]
    %v178 = vld [vmem:[%s0 + $0x488] sm:$0xff]
    %v179 = vld [vmem:[%s0 + $0x490] sm:$0xff]
    %v180 = vld [vmem:[%s0 + $0x498] sm:$0xff]
    %v181 = vld [vmem:[%s0 + $0x4a0] sm:$0xff]
    %v182 = vld [vmem:[%s0 + $0x4a8] sm:$0xff]
    %v183 = vld [vmem:[%s0 + $0x4b0] sm:$0xff]
    %v184 = vld [vmem:[%s0 + $0x4b8] sm:$0xff]
    %v185 = vld [vmem:[%s0 + $0x4c0] sm:$0xff]
    %v186 = vld [vmem:[%s0 + $0x4c8] sm:$0xff]
    %v187 = vld [vmem:[%s0 + $0x4d0] sm:$0xff]
    %v188 = vld [vmem:[%s0 + $0x4d8] sm:$0xff]
    %v189 = vld [vmem:[%s0 + $0x4e0] sm:$0xff]
    %v190 = vld [vmem:[%s0 + $0x4e8] sm:$0xff]
    %v191 = vld [vmem:[%s0 + $0x4f0] sm:$0xff]
    %v192 = vld [vmem:[%s0 + $0x4f8] sm:$0xff]
    %v193 = vld [vmem:[%s0 + $0x500] sm:$0xff]
    %v194 = vld [vmem:[%s0 + $0x508] sm:$0xff]
    %v195 = vld [vmem:[%s0 + $0x510] sm:$0xff]
    %v196 = vld [vmem:[%s0 + $0x518] sm:$0xff]
    %v197 = vld [vmem:[%s0 + $0x520] sm:$0xff]
    %v198 = vld [vmem:[%s0 + $0x528] sm:$0xff]
    %v199 = vld [vmem:[%s0 + $0x530] sm:$0xff]
    %v200 = vld [vmem:[%s0 + $0x538] sm:$0xff]
    %v201 = vld [vmem:[%s0 + $0x540] sm:$0xff]
    %v202 = vld [vmem:[%s0 + $0x548] sm:$0xff]
    %v203 = vld [vmem:[%s0 + $0x550] sm:$0xff]
    %v204 = vld [vmem:[%s0 + $0x558] sm:$0xff]
    %v205 = vld [vmem:[%s0 + $0x560] sm:$0xff]
    %v206 = vld [vmem:[%s0 + $0x568] sm:$0xff]
    %v207 = vld [vmem:[%s0 + $0x570] sm:$0xff]
    %v208 = vld [vmem:[%s0 + $0x578] sm:$0xff]
    %v209 = vld [vmem:[%s0 + $0x580] sm:$0xff]
    %v210 = vld [vmem:[%s0 + $0x588] sm:$0xff]
    %v211 = vld [vmem:[%s0 + $0x590] sm:$0xff]
    %v212 = vld [vmem:[%s0 + $0x598] sm:$0xff]
    %v213 = vld [vmem:[%s0 + $0x5a0] sm:$0xff]
    %v214 = vld [vmem:[%s0 + $0x5a8] sm:$0xff]
    %v215 = vld [vmem:[%s0 + $0x5b0] sm:$0xff]
    %v216 = vld [vmem:[%s0 + $0x5b8] sm:$0xff]
    %v217 = vld [vmem:[%s0 + $0x5c0] sm:$0xff]
    %v218 = vld [vmem:[%s0 + $0x5c8] sm:$0xff]
    %v219 = vld [vmem:[%s0 + $0x5d0] sm:$0xff]
    %v220 = vld [vmem:[%s0 + $0x5d8] sm:$0xff]
    %v221 = vld [vmem:[%s0 + $0x5e0] sm:$0xff]
    %v222 = vld [vmem:[%s0 + $0x5e8] sm:$0xff]
    %v223 = vld [vmem:[%s0 + $0x5f0] sm:$0xff]
    %v224 = vld [vmem:[%s0 + $0x5f8] sm:$0xff]
    %v225 = vld [vmem:[%s0 + $0x600] sm:$0xff]
    %v226 = vld [vmem:[%s0 + $0x608] sm:$0xff]
    %v227 = vld [vmem:[%s0 + $0x610] sm:$0xff]
    %v228 = vld [vmem:[%s0 + $0x618] sm:$0xff]
    %v229 = vld [vmem:[%s0 + $0x620] sm:$0xff]
    %v230 = vld [vmem:[%s0 + $0x628] sm:$0xff]
    %v231 = vld [vmem:[%s0 + $0x630] sm:$0xff]
    %v232 = vld [vmem:[%s0 + $0x638] sm:$0xff]
    %v233 = vld [vmem:[%s0 + $0x640] sm:$0xff]
    %v234 = vld [vmem:[%s0 + $0x648] sm:$0xff]
    %v235 = vld [vmem:[%s0 + $0x650] sm:$0xff]
    %v236 = vld [vmem:[%s0 + $0x658] sm:$0xff]
    %v237 = vld [vmem:[%s0 + $0x660] sm:$0xff]
    %v238 = vld [vmem:[%s0 + $0x668] sm:$0xff]
    %v239 = vld [vmem:[%s0 + $0x670] sm:$0xff]
    %v240 = vld [vmem:[%s0 + $0x678] sm:$0xff]
    %v241 = vld [vmem:[%s0 + $0x680] sm:$0xff]
    %v242 = vld [vmem:[%s0 + $0x688] sm:$0xff]
    %v243 = vld [vmem:[%s0 + $0x690] sm:$0xff]
    %v244 = vld [vmem:[%s0 + $0x698] sm:$0xff]
    %v245 = vld [vmem:[%s0 + $0x6a0] sm:$0xff]
    %v246 = vld [vmem:[%s0 + $0x6a8] sm:$0xff]
    %v247 = vld [vmem:[%s0 + $0x6b0] sm:$0xff]
    %v248 = vld [vmem:[%s0 + $0x6b8] sm:$0xff]
    %v249 = vld [vmem:[%s0 + $0x6c0] sm:$0xff]
    %v250 = vld [vmem:[%s0 + $0x6c8] sm:$0xff]
    %v251 = vld [vmem:[%s0 + $0x6d0] sm:$0xff]
    %v252 = vld [vmem:[%s0 + $0x6d8] sm:$0xff]
    %v253 = vld [vmem:[%s0 + $0x6e0] sm:$0xff]
    %v254 = vld [vmem:[%s0 + $0x6e8] sm:$0xff]
    %v255 = vld [vmem:[%s0 + $0x6f0] sm:$0xff]
    %v256 = vld [vmem:[%s0 + $0x6f8] sm:$0xff]
    %v257 = vld [vmem:[%s0 + $0x700] sm:$0xff]
    %v258 = vld [vmem:[%s0 + $0x708] sm:$0xff]
    %v259 = vld [vmem:[%s0 + $0x710] sm:$0xff]
    %v260 = vld [vmem:[%s0 + $0x718] sm:$0xff]
    %v261 = vld [vmem:[%s0 + $0x720] sm:$0xff]
    %v262 = vld [vmem:[%s0 + $0x728] sm:$0xff]
    %v263 = vld [vmem:[%s0 + $0x730] sm:$0xff]
    %v264 = vld [vmem:[%s0 + $0x738] sm:$0xff]
    %v265 = vld [vmem:[%s0 + $0x740] sm:$0xff]
    %v266 = vld [vmem:[%s0 + $0x748] sm:$0xff]
    %v267 = vld [vmem:[%s0 + $0x750] sm:$0xff]
    %v268 = vld [vmem:[%s0 + $0x758] sm:$0xff]
    %v269 = vld [vmem:[%s0 + $0x760] sm:$0xff]
    %v270 = vld [vmem:[%s0 + $0x768] sm:$0xff]
    %v271 = vld [vmem:[%s0 + $0x770] sm:$0xff]
    %v272 = vld [vmem:[%s0 + $0x778] sm:$0xff]
    %v273 = vld [vmem:[%s0 + $0x780] sm:$0xff]
    %v274 = vld [vmem:[%s0 + $0x788] sm:$0xff]
    %v275 = vld [vmem:[%s0 + $0x790] sm:$0xff]
    %v276 = vld [vmem:[%s0 + $0x798] sm:$0xff]
    %v277 = vld [vmem:[%s0 + $0x7a0] sm:$0xff]
    %v278 = vld [vmem:[%s0 + $0x7a8] sm:$0xff]
    %v279 = vld [vmem:[%s0 + $0x7b0] sm:$0xff]
    %v280 = vld [vmem:[%s0 + $0x7b8] sm:$0xff]
    %v281 = vld [vmem:[%s0 + $0x7c0] sm:$0xff]
    %v282 = vld [vmem:[%s0 + $0x7c8] sm:$0xff]
    %v283 = vld [vmem:[%s0 + $0x7d0] sm:$0xff]
    %v284 = vld [vmem:[%s0 + $0x7d8] sm:$0xff]
    %v285 = vld [vmem:[%s0 + $0x7e0] sm:$0xff]
    %v286 = vld [vmem:[%s0 + $0x7e8] sm:$0xff]
    %v287 = vld [vmem:[%s0 + $0x7f0] sm:$0xff]
    %v288 = vld [vmem:[%s0 + $0x7f8] sm:$0xff]
    %v289 = vld [vmem:[%s1] sm:$0xff]
    %v290 = vld [vmem:[%s1 + $0x8] sm:$0x1]
    %vm291 = vcmask 72704
    %v293 = vsel %vm291, %v33, 0
    %v296 = vsel %vm291, %v34, 0
    %v299 = vsel %vm291, %v35, 0
    %v302 = vsel %vm291, %v36, 0
    %v305 = vsel %vm291, %v37, 0
    %v308 = vsel %vm291, %v38, 0
    %v311 = vsel %vm291, %v39, 0
    %v314 = vsel %vm291, %v40, 0
    %v317 = vsel %vm291, %v41, 0
    %v320 = vsel %vm291, %v42, 0
    %v323 = vsel %vm291, %v43, 0
    %v326 = vsel %vm291, %v44, 0
    %v329 = vsel %vm291, %v45, 0
    %v332 = vsel %vm291, %v46, 0
    %v335 = vsel %vm291, %v47, 0
    %v338 = vsel %vm291, %v48, 0
    %v341 = vsel %vm291, %v49, 0
    %v344 = vsel %vm291, %v50, 0
    %v347 = vsel %vm291, %v51, 0
    %v350 = vsel %vm291, %v52, 0
    %v353 = vsel %vm291, %v53, 0
    %v356 = vsel %vm291, %v54, 0
    %v359 = vsel %vm291, %v55, 0
    %v362 = vsel %vm291, %v56, 0
    %v365 = vsel %vm291, %v57, 0
    %v368 = vsel %vm291, %v58, 0
    %v371 = vsel %vm291, %v59, 0
    %v374 = vsel %vm291, %v60, 0
    %v377 = vsel %vm291, %v61, 0
    %v380 = vsel %vm291, %v62, 0
    %v383 = vsel %vm291, %v63, 0
    %v386 = vsel %vm291, %v64, 0
    %v389 = vsel %vm291, %v65, 0
    %v392 = vsel %vm291, %v66, 0
    %v395 = vsel %vm291, %v67, 0
    %v398 = vsel %vm291, %v68, 0
    %v401 = vsel %vm291, %v69, 0
    %v404 = vsel %vm291, %v70, 0
    %v407 = vsel %vm291, %v71, 0
    %v410 = vsel %vm291, %v72, 0
    %v413 = vsel %vm291, %v73, 0
    %v416 = vsel %vm291, %v74, 0
    %v419 = vsel %vm291, %v75, 0
    %v422 = vsel %vm291, %v76, 0
    %v425 = vsel %vm291, %v77, 0
    %v428 = vsel %vm291, %v78, 0
    %v431 = vsel %vm291, %v79, 0
    %v434 = vsel %vm291, %v80, 0
    %v437 = vsel %vm291, %v81, 0
    %v440 = vsel %vm291, %v82, 0
    %v443 = vsel %vm291, %v83, 0
    %v446 = vsel %vm291, %v84, 0
    %v449 = vsel %vm291, %v85, 0
    %v452 = vsel %vm291, %v86, 0
    %v455 = vsel %vm291, %v87, 0
    %v458 = vsel %vm291, %v88, 0
    %v461 = vsel %vm291, %v89, 0
    %v464 = vsel %vm291, %v90, 0
    %v467 = vsel %vm291, %v91, 0
    %v470 = vsel %vm291, %v92, 0
    %v473 = vsel %vm291, %v93, 0
    %v476 = vsel %vm291, %v94, 0
    %v479 = vsel %vm291, %v95, 0
    %v482 = vsel %vm291, %v96, 0
    %v485 = vsel %vm291, %v97, 0
    %v488 = vsel %vm291, %v98, 0
    %v491 = vsel %vm291, %v99, 0
    %v494 = vsel %vm291, %v100, 0
    %v497 = vsel %vm291, %v101, 0
    %v500 = vsel %vm291, %v102, 0
    %v503 = vsel %vm291, %v103, 0
    %v506 = vsel %vm291, %v104, 0
    %v509 = vsel %vm291, %v105, 0
    %v512 = vsel %vm291, %v106, 0
    %v515 = vsel %vm291, %v107, 0
    %v518 = vsel %vm291, %v108, 0
    %v521 = vsel %vm291, %v109, 0
    %v524 = vsel %vm291, %v110, 0
    %v527 = vsel %vm291, %v111, 0
    %v530 = vsel %vm291, %v112, 0
    %v533 = vsel %vm291, %v113, 0
    %v536 = vsel %vm291, %v114, 0
    %v539 = vsel %vm291, %v115, 0
    %v542 = vsel %vm291, %v116, 0
    %v545 = vsel %vm291, %v117, 0
    %v548 = vsel %vm291, %v118, 0
    %v551 = vsel %vm291, %v119, 0
    %v554 = vsel %vm291, %v120, 0
    %v557 = vsel %vm291, %v121, 0
    %v560 = vsel %vm291, %v122, 0
    %v563 = vsel %vm291, %v123, 0
    %v566 = vsel %vm291, %v124, 0
    %v569 = vsel %vm291, %v125, 0
    %v572 = vsel %vm291, %v126, 0
    %v575 = vsel %vm291, %v127, 0
    %v578 = vsel %vm291, %v128, 0
    %v581 = vsel %vm291, %v129, 0
    %v584 = vsel %vm291, %v130, 0
    %v587 = vsel %vm291, %v131, 0
    %v590 = vsel %vm291, %v132, 0
    %v593 = vsel %vm291, %v133, 0
    %v596 = vsel %vm291, %v134, 0
    %v599 = vsel %vm291, %v135, 0
    %v602 = vsel %vm291, %v136, 0
    %v605 = vsel %vm291, %v137, 0
    %v608 = vsel %vm291, %v138, 0
    %v611 = vsel %vm291, %v139, 0
    %v614 = vsel %vm291, %v140, 0
    %v617 = vsel %vm291, %v141, 0
    %v620 = vsel %vm291, %v142, 0
    %v623 = vsel %vm291, %v143, 0
    %v626 = vsel %vm291, %v144, 0
    %v629 = vsel %vm291, %v145, 0
    %v632 = vsel %vm291, %v146, 0
    %v635 = vsel %vm291, %v147, 0
    %v638 = vsel %vm291, %v148, 0
    %v641 = vsel %vm291, %v149, 0
    %v644 = vsel %vm291, %v150, 0
    %v647 = vsel %vm291, %v151, 0
    %v650 = vsel %vm291, %v152, 0
    %v653 = vsel %vm291, %v153, 0
    %v656 = vsel %vm291, %v154, 0
    %v659 = vsel %vm291, %v155, 0
    %v662 = vsel %vm291, %v156, 0
    %v665 = vsel %vm291, %v157, 0
    %v668 = vsel %vm291, %v158, 0
    %v671 = vsel %vm291, %v159, 0
    %v674 = vsel %vm291, %v160, 0
    %v677 = vsel %vm291, %v161, 0
    %v680 = vsel %vm291, %v162, 0
    %v683 = vsel %vm291, %v163, 0
    %v686 = vsel %vm291, %v164, 0
    %v689 = vsel %vm291, %v165, 0
    %v692 = vsel %vm291, %v166, 0
    %v695 = vsel %vm291, %v167, 0
    %v698 = vsel %vm291, %v168, 0
    %v701 = vsel %vm291, %v169, 0
    %v704 = vsel %vm291, %v170, 0
    %v707 = vsel %vm291, %v171, 0
    %v710 = vsel %vm291, %v172, 0
    %v713 = vsel %vm291, %v173, 0
    %v716 = vsel %vm291, %v174, 0
    %v719 = vsel %vm291, %v175, 0
    %v722 = vsel %vm291, %v176, 0
    %v725 = vsel %vm291, %v177, 0
    %v728 = vsel %vm291, %v178, 0
    %v731 = vsel %vm291, %v179, 0
    %v734 = vsel %vm291, %v180, 0
    %v737 = vsel %vm291, %v181, 0
    %v740 = vsel %vm291, %v182, 0
    %v743 = vsel %vm291, %v183, 0
    %v746 = vsel %vm291, %v184, 0
    %v749 = vsel %vm291, %v185, 0
    %v752 = vsel %vm291, %v186, 0
    %v755 = vsel %vm291, %v187, 0
    %v758 = vsel %vm291, %v188, 0
    %v761 = vsel %vm291, %v189, 0
    %v764 = vsel %vm291, %v190, 0
    %v767 = vsel %vm291, %v191, 0
    %v770 = vsel %vm291, %v192, 0
    %v773 = vsel %vm291, %v193, 0
    %v776 = vsel %vm291, %v194, 0
    %v779 = vsel %vm291, %v195, 0
    %v782 = vsel %vm291, %v196, 0
    %v785 = vsel %vm291, %v197, 0
    %v788 = vsel %vm291, %v198, 0
    %v791 = vsel %vm291, %v199, 0
    %v794 = vsel %vm291, %v200, 0
    %v797 = vsel %vm291, %v201, 0
    %v800 = vsel %vm291, %v202, 0
    %v803 = vsel %vm291, %v203, 0
    %v806 = vsel %vm291, %v204, 0
    %v809 = vsel %vm291, %v205, 0
    %v812 = vsel %vm291, %v206, 0
    %v815 = vsel %vm291, %v207, 0
    %v818 = vsel %vm291, %v208, 0
    %v821 = vsel %vm291, %v209, 0
    %v824 = vsel %vm291, %v210, 0
    %v827 = vsel %vm291, %v211, 0
    %v830 = vsel %vm291, %v212, 0
    %v833 = vsel %vm291, %v213, 0
    %v836 = vsel %vm291, %v214, 0
    %v839 = vsel %vm291, %v215, 0
    %v842 = vsel %vm291, %v216, 0
    %v845 = vsel %vm291, %v217, 0
    %v848 = vsel %vm291, %v218, 0
    %v851 = vsel %vm291, %v219, 0
    %v854 = vsel %vm291, %v220, 0
    %v857 = vsel %vm291, %v221, 0
    %v860 = vsel %vm291, %v222, 0
    %v863 = vsel %vm291, %v223, 0
    %v866 = vsel %vm291, %v224, 0
    %v869 = vsel %vm291, %v225, 0
    %v872 = vsel %vm291, %v226, 0
    %v875 = vsel %vm291, %v227, 0
    %v878 = vsel %vm291, %v228, 0
    %v881 = vsel %vm291, %v229, 0
    %v884 = vsel %vm291, %v230, 0
    %v887 = vsel %vm291, %v231, 0
    %v890 = vsel %vm291, %v232, 0
    %v893 = vsel %vm291, %v233, 0
    %v896 = vsel %vm291, %v234, 0
    %v899 = vsel %vm291, %v235, 0
    %v902 = vsel %vm291, %v236, 0
    %v905 = vsel %vm291, %v237, 0
    %v908 = vsel %vm291, %v238, 0
    %v911 = vsel %vm291, %v239, 0
    %v914 = vsel %vm291, %v240, 0
    %v917 = vsel %vm291, %v241, 0
    %v920 = vsel %vm291, %v242, 0
    %v923 = vsel %vm291, %v243, 0
    %v926 = vsel %vm291, %v244, 0
    %v929 = vsel %vm291, %v245, 0
    %v932 = vsel %vm291, %v246, 0
    %v935 = vsel %vm291, %v247, 0
    %v938 = vsel %vm291, %v248, 0
    %v941 = vsel %vm291, %v249, 0
    %v944 = vsel %vm291, %v250, 0
    %v947 = vsel %vm291, %v251, 0
    %v950 = vsel %vm291, %v252, 0
    %v953 = vsel %vm291, %v253, 0
    %v956 = vsel %vm291, %v254, 0
    %v959 = vsel %vm291, %v255, 0
    %v962 = vsel %vm291, %v256, 0
    %v965 = vsel %vm291, %v257, 0
    %v968 = vsel %vm291, %v258, 0
    %v971 = vsel %vm291, %v259, 0
    %v974 = vsel %vm291, %v260, 0
    %v977 = vsel %vm291, %v261, 0
    %v980 = vsel %vm291, %v262, 0
    %v983 = vsel %vm291, %v263, 0
    %v986 = vsel %vm291, %v264, 0
    %v989 = vsel %vm291, %v265, 0
    %v992 = vsel %vm291, %v266, 0
    %v995 = vsel %vm291, %v267, 0
    %v998 = vsel %vm291, %v268, 0
    %v1001 = vsel %vm291, %v269, 0
    %v1004 = vsel %vm291, %v270, 0
    %v1007 = vsel %vm291, %v271, 0
    %v1010 = vsel %vm291, %v272, 0
    %v1013 = vsel %vm291, %v273, 0
    %v1016 = vsel %vm291, %v274, 0
    %v1019 = vsel %vm291, %v275, 0
    %v1022 = vsel %vm291, %v276, 0
    %v1025 = vsel %vm291, %v277, 0
    %v1028 = vsel %vm291, %v278, 0
    %v1031 = vsel %vm291, %v279, 0
    %v1034 = vsel %vm291, %v280, 0
    %v1037 = vsel %vm291, %v281, 0
    %v1040 = vsel %vm291, %v282, 0
    %v1043 = vsel %vm291, %v283, 0
    %v1046 = vsel %vm291, %v284, 0
    %v1049 = vsel %vm291, %v285, 0
    %v1052 = vsel %vm291, %v286, 0
    %v1055 = vsel %vm291, %v287, 0
    %v1058 = vsel %vm291, %v288, 0
    %vm1060 = vcmask 1040384
    %v1062 = vsel %vm1060, %v290, 0
    %1064 = vmatpush.msra.mxu0 0.0
    %1065 = vmatpush.msra.mxu0 0.0
    %1066 = vmatpush.msra.mxu0 0.0
    %1067 = vmatpush.msra.mxu0 0.0
    %1068 = vmatpush.msra.mxu0 0.0
    %1069 = vmatpush.msra.mxu0 0.0
    %1070 = vmatpush.msra.mxu0 0.0
    %1071 = vmatpush.msra.mxu0 0.0
    %1072 = vmatpush.msra.mxu0 0.0
    %1073 = vmatpush.msra.mxu0 0.0
    %1074 = vmatpush.msra.mxu0 0.0
    %1075 = vmatpush.msra.mxu0 0.0
    %1076 = vmatpush.msra.mxu0 0.0
    %1077 = vmatpush.msra.mxu0 0.0
    %1078 = vmatpush.msra.mxu0 %v1062
    %1079 = vmatpush.msra.mxu0 %v289
    %1080 = vmatmul.f32.gmra.mxu0 %v293
    %v1081 = vpop.f32.mrf.mxu0
    %v1082 = vadd.f32 0.0, %v1081
    %1083 = vmatmul.f32.gmra.mxu0 %v296
    %v1084 = vpop.f32.mrf.mxu0
    %v1085 = vadd.f32 0.0, %v1084
    %1086 = vmatmul.f32.gmra.mxu0 %v299
    %v1087 = vpop.f32.mrf.mxu0
    %v1088 = vadd.f32 0.0, %v1087
    %1089 = vmatmul.f32.gmra.mxu0 %v302
    %v1090 = vpop.f32.mrf.mxu0
    %v1091 = vadd.f32 0.0, %v1090
    %1092 = vmatmul.f32.gmra.mxu0 %v305
    %v1093 = vpop.f32.mrf.mxu0
    %v1094 = vadd.f32 0.0, %v1093
    %1095 = vmatmul.f32.gmra.mxu0 %v308
    %v1096 = vpop.f32.mrf.mxu0
    %v1097 = vadd.f32 0.0, %v1096
    %1098 = vmatmul.f32.gmra.mxu0 %v311
    %v1099 = vpop.f32.mrf.mxu0
    %v1100 = vadd.f32 0.0, %v1099
    %1101 = vmatmul.f32.gmra.mxu0 %v314
    %v1102 = vpop.f32.mrf.mxu0
    %v1103 = vadd.f32 0.0, %v1102
    %1104 = vmatmul.f32.gmra.mxu0 %v317
    %v1105 = vpop.f32.mrf.mxu0
    %v1106 = vadd.f32 0.0, %v1105
    %1107 = vmatmul.f32.gmra.mxu0 %v320
    %v1108 = vpop.f32.mrf.mxu0
    %v1109 = vadd.f32 0.0, %v1108
    %1110 = vmatmul.f32.gmra.mxu0 %v323
    %v1111 = vpop.f32.mrf.mxu0
    %v1112 = vadd.f32 0.0, %v1111
    %1113 = vmatmul.f32.gmra.mxu0 %v326
    %v1114 = vpop.f32.mrf.mxu0
    %v1115 = vadd.f32 0.0, %v1114
    %1116 = vmatmul.f32.gmra.mxu0 %v329
    %v1117 = vpop.f32.mrf.mxu0
    %v1118 = vadd.f32 0.0, %v1117
    %1119 = vmatmul.f32.gmra.mxu0 %v332
    %v1120 = vpop.f32.mrf.mxu0
    %v1121 = vadd.f32 0.0, %v1120
    %1122 = vmatmul.f32.gmra.mxu0 %v335
    %v1123 = vpop.f32.mrf.mxu0
    %v1124 = vadd.f32 0.0, %v1123
    %1125 = vmatmul.f32.gmra.mxu0 %v338
    %v1126 = vpop.f32.mrf.mxu0
    %v1127 = vadd.f32 0.0, %v1126
    %1128 = vmatmul.f32.gmra.mxu0 %v341
    %v1129 = vpop.f32.mrf.mxu0
    %v1130 = vadd.f32 0.0, %v1129
    %1131 = vmatmul.f32.gmra.mxu0 %v344
    %v1132 = vpop.f32.mrf.mxu0
    %v1133 = vadd.f32 0.0, %v1132
    %1134 = vmatmul.f32.gmra.mxu0 %v347
    %v1135 = vpop.f32.mrf.mxu0
    %v1136 = vadd.f32 0.0, %v1135
    %1137 = vmatmul.f32.gmra.mxu0 %v350
    %v1138 = vpop.f32.mrf.mxu0
    %v1139 = vadd.f32 0.0, %v1138
    %1140 = vmatmul.f32.gmra.mxu0 %v353
    %v1141 = vpop.f32.mrf.mxu0
    %v1142 = vadd.f32 0.0, %v1141
    %1143 = vmatmul.f32.gmra.mxu0 %v356
    %v1144 = vpop.f32.mrf.mxu0
    %v1145 = vadd.f32 0.0, %v1144
    %1146 = vmatmul.f32.gmra.mxu0 %v359
    %v1147 = vpop.f32.mrf.mxu0
    %v1148 = vadd.f32 0.0, %v1147
    %1149 = vmatmul.f32.gmra.mxu0 %v362
    %v1150 = vpop.f32.mrf.mxu0
    %v1151 = vadd.f32 0.0, %v1150
    %1152 = vmatmul.f32.gmra.mxu0 %v365
    %v1153 = vpop.f32.mrf.mxu0
    %v1154 = vadd.f32 0.0, %v1153
    %1155 = vmatmul.f32.gmra.mxu0 %v368
    %v1156 = vpop.f32.mrf.mxu0
    %v1157 = vadd.f32 0.0, %v1156
    %1158 = vmatmul.f32.gmra.mxu0 %v371
    %v1159 = vpop.f32.mrf.mxu0
    %v1160 = vadd.f32 0.0, %v1159
    %1161 = vmatmul.f32.gmra.mxu0 %v374
    %v1162 = vpop.f32.mrf.mxu0
    %v1163 = vadd.f32 0.0, %v1162
    %1164 = vmatmul.f32.gmra.mxu0 %v377
    %v1165 = vpop.f32.mrf.mxu0
    %v1166 = vadd.f32 0.0, %v1165
    %1167 = vmatmul.f32.gmra.mxu0 %v380
    %v1168 = vpop.f32.mrf.mxu0
    %v1169 = vadd.f32 0.0, %v1168
    %1170 = vmatmul.f32.gmra.mxu0 %v383
    %v1171 = vpop.f32.mrf.mxu0
    %v1172 = vadd.f32 0.0, %v1171
    %1173 = vmatmul.f32.gmra.mxu0 %v386
    %v1174 = vpop.f32.mrf.mxu0
    %v1175 = vadd.f32 0.0, %v1174
    %1176 = vmatmul.f32.gmra.mxu0 %v389
    %v1177 = vpop.f32.mrf.mxu0
    %v1178 = vadd.f32 0.0, %v1177
    %1179 = vmatmul.f32.gmra.mxu0 %v392
    %v1180 = vpop.f32.mrf.mxu0
    %v1181 = vadd.f32 0.0, %v1180
    %1182 = vmatmul.f32.gmra.mxu0 %v395
    %v1183 = vpop.f32.mrf.mxu0
    %v1184 = vadd.f32 0.0, %v1183
    %1185 = vmatmul.f32.gmra.mxu0 %v398
    %v1186 = vpop.f32.mrf.mxu0
    %v1187 = vadd.f32 0.0, %v1186
    %1188 = vmatmul.f32.gmra.mxu0 %v401
    %v1189 = vpop.f32.mrf.mxu0
    %v1190 = vadd.f32 0.0, %v1189
    %1191 = vmatmul.f32.gmra.mxu0 %v404
    %v1192 = vpop.f32.mrf.mxu0
    %v1193 = vadd.f32 0.0, %v1192
    %1194 = vmatmul.f32.gmra.mxu0 %v407
    %v1195 = vpop.f32.mrf.mxu0
    %v1196 = vadd.f32 0.0, %v1195
    %1197 = vmatmul.f32.gmra.mxu0 %v410
    %v1198 = vpop.f32.mrf.mxu0
    %v1199 = vadd.f32 0.0, %v1198
    %1200 = vmatmul.f32.gmra.mxu0 %v413
    %v1201 = vpop.f32.mrf.mxu0
    %v1202 = vadd.f32 0.0, %v1201
    %1203 = vmatmul.f32.gmra.mxu0 %v416
    %v1204 = vpop.f32.mrf.mxu0
    %v1205 = vadd.f32 0.0, %v1204
    %1206 = vmatmul.f32.gmra.mxu0 %v419
    %v1207 = vpop.f32.mrf.mxu0
    %v1208 = vadd.f32 0.0, %v1207
    %1209 = vmatmul.f32.gmra.mxu0 %v422
    %v1210 = vpop.f32.mrf.mxu0
    %v1211 = vadd.f32 0.0, %v1210
    %1212 = vmatmul.f32.gmra.mxu0 %v425
    %v1213 = vpop.f32.mrf.mxu0
    %v1214 = vadd.f32 0.0, %v1213
    %1215 = vmatmul.f32.gmra.mxu0 %v428
    %v1216 = vpop.f32.mrf.mxu0
    %v1217 = vadd.f32 0.0, %v1216
    %1218 = vmatmul.f32.gmra.mxu0 %v431
    %v1219 = vpop.f32.mrf.mxu0
    %v1220 = vadd.f32 0.0, %v1219
    %1221 = vmatmul.f32.gmra.mxu0 %v434
    %v1222 = vpop.f32.mrf.mxu0
    %v1223 = vadd.f32 0.0, %v1222
    %1224 = vmatmul.f32.gmra.mxu0 %v437
    %v1225 = vpop.f32.mrf.mxu0
    %v1226 = vadd.f32 0.0, %v1225
    %1227 = vmatmul.f32.gmra.mxu0 %v440
    %v1228 = vpop.f32.mrf.mxu0
    %v1229 = vadd.f32 0.0, %v1228
    %1230 = vmatmul.f32.gmra.mxu0 %v443
    %v1231 = vpop.f32.mrf.mxu0
    %v1232 = vadd.f32 0.0, %v1231
    %1233 = vmatmul.f32.gmra.mxu0 %v446
    %v1234 = vpop.f32.mrf.mxu0
    %v1235 = vadd.f32 0.0, %v1234
    %1236 = vmatmul.f32.gmra.mxu0 %v449
    %v1237 = vpop.f32.mrf.mxu0
    %v1238 = vadd.f32 0.0, %v1237
    %1239 = vmatmul.f32.gmra.mxu0 %v452
    %v1240 = vpop.f32.mrf.mxu0
    %v1241 = vadd.f32 0.0, %v1240
    %1242 = vmatmul.f32.gmra.mxu0 %v455
    %v1243 = vpop.f32.mrf.mxu0
    %v1244 = vadd.f32 0.0, %v1243
    %1245 = vmatmul.f32.gmra.mxu0 %v458
    %v1246 = vpop.f32.mrf.mxu0
    %v1247 = vadd.f32 0.0, %v1246
    %1248 = vmatmul.f32.gmra.mxu0 %v461
    %v1249 = vpop.f32.mrf.mxu0
    %v1250 = vadd.f32 0.0, %v1249
    %1251 = vmatmul.f32.gmra.mxu0 %v464
    %v1252 = vpop.f32.mrf.mxu0
    %v1253 = vadd.f32 0.0, %v1252
    %1254 = vmatmul.f32.gmra.mxu0 %v467
    %v1255 = vpop.f32.mrf.mxu0
    %v1256 = vadd.f32 0.0, %v1255
    %1257 = vmatmul.f32.gmra.mxu0 %v470
    %v1258 = vpop.f32.mrf.mxu0
    %v1259 = vadd.f32 0.0, %v1258
    %1260 = vmatmul.f32.gmra.mxu0 %v473
    %v1261 = vpop.f32.mrf.mxu0
    %v1262 = vadd.f32 0.0, %v1261
    %1263 = vmatmul.f32.gmra.mxu0 %v476
    %v1264 = vpop.f32.mrf.mxu0
    %v1265 = vadd.f32 0.0, %v1264
    %1266 = vmatmul.f32.gmra.mxu0 %v479
    %v1267 = vpop.f32.mrf.mxu0
    %v1268 = vadd.f32 0.0, %v1267
    %1269 = vmatmul.f32.gmra.mxu0 %v482
    %v1270 = vpop.f32.mrf.mxu0
    %v1271 = vadd.f32 0.0, %v1270
    %1272 = vmatmul.f32.gmra.mxu0 %v485
    %v1273 = vpop.f32.mrf.mxu0
    %v1274 = vadd.f32 0.0, %v1273
    %1275 = vmatmul.f32.gmra.mxu0 %v488
    %v1276 = vpop.f32.mrf.mxu0
    %v1277 = vadd.f32 0.0, %v1276
    %1278 = vmatmul.f32.gmra.mxu0 %v491
    %v1279 = vpop.f32.mrf.mxu0
    %v1280 = vadd.f32 0.0, %v1279
    %1281 = vmatmul.f32.gmra.mxu0 %v494
    %v1282 = vpop.f32.mrf.mxu0
    %v1283 = vadd.f32 0.0, %v1282
    %1284 = vmatmul.f32.gmra.mxu0 %v497
    %v1285 = vpop.f32.mrf.mxu0
    %v1286 = vadd.f32 0.0, %v1285
    %1287 = vmatmul.f32.gmra.mxu0 %v500
    %v1288 = vpop.f32.mrf.mxu0
    %v1289 = vadd.f32 0.0, %v1288
    %1290 = vmatmul.f32.gmra.mxu0 %v503
    %v1291 = vpop.f32.mrf.mxu0
    %v1292 = vadd.f32 0.0, %v1291
    %1293 = vmatmul.f32.gmra.mxu0 %v506
    %v1294 = vpop.f32.mrf.mxu0
    %v1295 = vadd.f32 0.0, %v1294
    %1296 = vmatmul.f32.gmra.mxu0 %v509
    %v1297 = vpop.f32.mrf.mxu0
    %v1298 = vadd.f32 0.0, %v1297
    %1299 = vmatmul.f32.gmra.mxu0 %v512
    %v1300 = vpop.f32.mrf.mxu0
    %v1301 = vadd.f32 0.0, %v1300
    %1302 = vmatmul.f32.gmra.mxu0 %v515
    %v1303 = vpop.f32.mrf.mxu0
    %v1304 = vadd.f32 0.0, %v1303
    %1305 = vmatmul.f32.gmra.mxu0 %v518
    %v1306 = vpop.f32.mrf.mxu0
    %v1307 = vadd.f32 0.0, %v1306
    %1308 = vmatmul.f32.gmra.mxu0 %v521
    %v1309 = vpop.f32.mrf.mxu0
    %v1310 = vadd.f32 0.0, %v1309
    %1311 = vmatmul.f32.gmra.mxu0 %v524
    %v1312 = vpop.f32.mrf.mxu0
    %v1313 = vadd.f32 0.0, %v1312
    %1314 = vmatmul.f32.gmra.mxu0 %v527
    %v1315 = vpop.f32.mrf.mxu0
    %v1316 = vadd.f32 0.0, %v1315
    %1317 = vmatmul.f32.gmra.mxu0 %v530
    %v1318 = vpop.f32.mrf.mxu0
    %v1319 = vadd.f32 0.0, %v1318
    %1320 = vmatmul.f32.gmra.mxu0 %v533
    %v1321 = vpop.f32.mrf.mxu0
    %v1322 = vadd.f32 0.0, %v1321
    %1323 = vmatmul.f32.gmra.mxu0 %v536
    %v1324 = vpop.f32.mrf.mxu0
    %v1325 = vadd.f32 0.0, %v1324
    %1326 = vmatmul.f32.gmra.mxu0 %v539
    %v1327 = vpop.f32.mrf.mxu0
    %v1328 = vadd.f32 0.0, %v1327
    %1329 = vmatmul.f32.gmra.mxu0 %v542
    %v1330 = vpop.f32.mrf.mxu0
    %v1331 = vadd.f32 0.0, %v1330
    %1332 = vmatmul.f32.gmra.mxu0 %v545
    %v1333 = vpop.f32.mrf.mxu0
    %v1334 = vadd.f32 0.0, %v1333
    %1335 = vmatmul.f32.gmra.mxu0 %v548
    %v1336 = vpop.f32.mrf.mxu0
    %v1337 = vadd.f32 0.0, %v1336
    %1338 = vmatmul.f32.gmra.mxu0 %v551
    %v1339 = vpop.f32.mrf.mxu0
    %v1340 = vadd.f32 0.0, %v1339
    %1341 = vmatmul.f32.gmra.mxu0 %v554
    %v1342 = vpop.f32.mrf.mxu0
    %v1343 = vadd.f32 0.0, %v1342
    %1344 = vmatmul.f32.gmra.mxu0 %v557
    %v1345 = vpop.f32.mrf.mxu0
    %v1346 = vadd.f32 0.0, %v1345
    %1347 = vmatmul.f32.gmra.mxu0 %v560
    %v1348 = vpop.f32.mrf.mxu0
    %v1349 = vadd.f32 0.0, %v1348
    %1350 = vmatmul.f32.gmra.mxu0 %v563
    %v1351 = vpop.f32.mrf.mxu0
    %v1352 = vadd.f32 0.0, %v1351
    %1353 = vmatmul.f32.gmra.mxu0 %v566
    %v1354 = vpop.f32.mrf.mxu0
    %v1355 = vadd.f32 0.0, %v1354
    %1356 = vmatmul.f32.gmra.mxu0 %v569
    %v1357 = vpop.f32.mrf.mxu0
    %v1358 = vadd.f32 0.0, %v1357
    %1359 = vmatmul.f32.gmra.mxu0 %v572
    %v1360 = vpop.f32.mrf.mxu0
    %v1361 = vadd.f32 0.0, %v1360
    %1362 = vmatmul.f32.gmra.mxu0 %v575
    %v1363 = vpop.f32.mrf.mxu0
    %v1364 = vadd.f32 0.0, %v1363
    %1365 = vmatmul.f32.gmra.mxu0 %v578
    %v1366 = vpop.f32.mrf.mxu0
    %v1367 = vadd.f32 0.0, %v1366
    %1368 = vmatmul.f32.gmra.mxu0 %v581
    %v1369 = vpop.f32.mrf.mxu0
    %v1370 = vadd.f32 0.0, %v1369
    %1371 = vmatmul.f32.gmra.mxu0 %v584
    %v1372 = vpop.f32.mrf.mxu0
    %v1373 = vadd.f32 0.0, %v1372
    %1374 = vmatmul.f32.gmra.mxu0 %v587
    %v1375 = vpop.f32.mrf.mxu0
    %v1376 = vadd.f32 0.0, %v1375
    %1377 = vmatmul.f32.gmra.mxu0 %v590
    %v1378 = vpop.f32.mrf.mxu0
    %v1379 = vadd.f32 0.0, %v1378
    %1380 = vmatmul.f32.gmra.mxu0 %v593
    %v1381 = vpop.f32.mrf.mxu0
    %v1382 = vadd.f32 0.0, %v1381
    %1383 = vmatmul.f32.gmra.mxu0 %v596
    %v1384 = vpop.f32.mrf.mxu0
    %v1385 = vadd.f32 0.0, %v1384
    %1386 = vmatmul.f32.gmra.mxu0 %v599
    %v1387 = vpop.f32.mrf.mxu0
    %v1388 = vadd.f32 0.0, %v1387
    %1389 = vmatmul.f32.gmra.mxu0 %v602
    %v1390 = vpop.f32.mrf.mxu0
    %v1391 = vadd.f32 0.0, %v1390
    %1392 = vmatmul.f32.gmra.mxu0 %v605
    %v1393 = vpop.f32.mrf.mxu0
    %v1394 = vadd.f32 0.0, %v1393
    %1395 = vmatmul.f32.gmra.mxu0 %v608
    %v1396 = vpop.f32.mrf.mxu0
    %v1397 = vadd.f32 0.0, %v1396
    %1398 = vmatmul.f32.gmra.mxu0 %v611
    %v1399 = vpop.f32.mrf.mxu0
    %v1400 = vadd.f32 0.0, %v1399
    %1401 = vmatmul.f32.gmra.mxu0 %v614
    %v1402 = vpop.f32.mrf.mxu0
    %v1403 = vadd.f32 0.0, %v1402
    %1404 = vmatmul.f32.gmra.mxu0 %v617
    %v1405 = vpop.f32.mrf.mxu0
    %v1406 = vadd.f32 0.0, %v1405
    %1407 = vmatmul.f32.gmra.mxu0 %v620
    %v1408 = vpop.f32.mrf.mxu0
    %v1409 = vadd.f32 0.0, %v1408
    %1410 = vmatmul.f32.gmra.mxu0 %v623
    %v1411 = vpop.f32.mrf.mxu0
    %v1412 = vadd.f32 0.0, %v1411
    %1413 = vmatmul.f32.gmra.mxu0 %v626
    %v1414 = vpop.f32.mrf.mxu0
    %v1415 = vadd.f32 0.0, %v1414
    %1416 = vmatmul.f32.gmra.mxu0 %v629
    %v1417 = vpop.f32.mrf.mxu0
    %v1418 = vadd.f32 0.0, %v1417
    %1419 = vmatmul.f32.gmra.mxu0 %v632
    %v1420 = vpop.f32.mrf.mxu0
    %v1421 = vadd.f32 0.0, %v1420
    %1422 = vmatmul.f32.gmra.mxu0 %v635
    %v1423 = vpop.f32.mrf.mxu0
    %v1424 = vadd.f32 0.0, %v1423
    %1425 = vmatmul.f32.gmra.mxu0 %v638
    %v1426 = vpop.f32.mrf.mxu0
    %v1427 = vadd.f32 0.0, %v1426
    %1428 = vmatmul.f32.gmra.mxu0 %v641
    %v1429 = vpop.f32.mrf.mxu0
    %v1430 = vadd.f32 0.0, %v1429
    %1431 = vmatmul.f32.gmra.mxu0 %v644
    %v1432 = vpop.f32.mrf.mxu0
    %v1433 = vadd.f32 0.0, %v1432
    %1434 = vmatmul.f32.gmra.mxu0 %v647
    %v1435 = vpop.f32.mrf.mxu0
    %v1436 = vadd.f32 0.0, %v1435
    %1437 = vmatmul.f32.gmra.mxu0 %v650
    %v1438 = vpop.f32.mrf.mxu0
    %v1439 = vadd.f32 0.0, %v1438
    %1440 = vmatmul.f32.gmra.mxu0 %v653
    %v1441 = vpop.f32.mrf.mxu0
    %v1442 = vadd.f32 0.0, %v1441
    %1443 = vmatmul.f32.gmra.mxu0 %v656
    %v1444 = vpop.f32.mrf.mxu0
    %v1445 = vadd.f32 0.0, %v1444
    %1446 = vmatmul.f32.gmra.mxu0 %v659
    %v1447 = vpop.f32.mrf.mxu0
    %v1448 = vadd.f32 0.0, %v1447
    %1449 = vmatmul.f32.gmra.mxu0 %v662
    %v1450 = vpop.f32.mrf.mxu0
    %v1451 = vadd.f32 0.0, %v1450
    %1452 = vmatmul.f32.gmra.mxu0 %v665
    %v1453 = vpop.f32.mrf.mxu0
    %v1454 = vadd.f32 0.0, %v1453
    %1455 = vmatmul.f32.gmra.mxu0 %v668
    %v1456 = vpop.f32.mrf.mxu0
    %v1457 = vadd.f32 0.0, %v1456
    %1458 = vmatmul.f32.gmra.mxu0 %v671
    %v1459 = vpop.f32.mrf.mxu0
    %v1460 = vadd.f32 0.0, %v1459
    %1461 = vmatmul.f32.gmra.mxu0 %v674
    %v1462 = vpop.f32.mrf.mxu0
    %v1463 = vadd.f32 0.0, %v1462
    %1464 = vmatmul.f32.gmra.mxu0 %v677
    %v1465 = vpop.f32.mrf.mxu0
    %v1466 = vadd.f32 0.0, %v1465
    %1467 = vmatmul.f32.gmra.mxu0 %v680
    %v1468 = vpop.f32.mrf.mxu0
    %v1469 = vadd.f32 0.0, %v1468
    %1470 = vmatmul.f32.gmra.mxu0 %v683
    %v1471 = vpop.f32.mrf.mxu0
    %v1472 = vadd.f32 0.0, %v1471
    %1473 = vmatmul.f32.gmra.mxu0 %v686
    %v1474 = vpop.f32.mrf.mxu0
    %v1475 = vadd.f32 0.0, %v1474
    %1476 = vmatmul.f32.gmra.mxu0 %v689
    %v1477 = vpop.f32.mrf.mxu0
    %v1478 = vadd.f32 0.0, %v1477
    %1479 = vmatmul.f32.gmra.mxu0 %v692
    %v1480 = vpop.f32.mrf.mxu0
    %v1481 = vadd.f32 0.0, %v1480
    %1482 = vmatmul.f32.gmra.mxu0 %v695
    %v1483 = vpop.f32.mrf.mxu0
    %v1484 = vadd.f32 0.0, %v1483
    %1485 = vmatmul.f32.gmra.mxu0 %v698
    %v1486 = vpop.f32.mrf.mxu0
    %v1487 = vadd.f32 0.0, %v1486
    %1488 = vmatmul.f32.gmra.mxu0 %v701
    %v1489 = vpop.f32.mrf.mxu0
    %v1490 = vadd.f32 0.0, %v1489
    %1491 = vmatmul.f32.gmra.mxu0 %v704
    %v1492 = vpop.f32.mrf.mxu0
    %v1493 = vadd.f32 0.0, %v1492
    %1494 = vmatmul.f32.gmra.mxu0 %v707
    %v1495 = vpop.f32.mrf.mxu0
    %v1496 = vadd.f32 0.0, %v1495
    %1497 = vmatmul.f32.gmra.mxu0 %v710
    %v1498 = vpop.f32.mrf.mxu0
    %v1499 = vadd.f32 0.0, %v1498
    %1500 = vmatmul.f32.gmra.mxu0 %v713
    %v1501 = vpop.f32.mrf.mxu0
    %v1502 = vadd.f32 0.0, %v1501
    %1503 = vmatmul.f32.gmra.mxu0 %v716
    %v1504 = vpop.f32.mrf.mxu0
    %v1505 = vadd.f32 0.0, %v1504
    %1506 = vmatmul.f32.gmra.mxu0 %v719
    %v1507 = vpop.f32.mrf.mxu0
    %v1508 = vadd.f32 0.0, %v1507
    %1509 = vmatmul.f32.gmra.mxu0 %v722
    %v1510 = vpop.f32.mrf.mxu0
    %v1511 = vadd.f32 0.0, %v1510
    %1512 = vmatmul.f32.gmra.mxu0 %v725
    %v1513 = vpop.f32.mrf.mxu0
    %v1514 = vadd.f32 0.0, %v1513
    %1515 = vmatmul.f32.gmra.mxu0 %v728
    %v1516 = vpop.f32.mrf.mxu0
    %v1517 = vadd.f32 0.0, %v1516
    %1518 = vmatmul.f32.gmra.mxu0 %v731
    %v1519 = vpop.f32.mrf.mxu0
    %v1520 = vadd.f32 0.0, %v1519
    %1521 = vmatmul.f32.gmra.mxu0 %v734
    %v1522 = vpop.f32.mrf.mxu0
    %v1523 = vadd.f32 0.0, %v1522
    %1524 = vmatmul.f32.gmra.mxu0 %v737
    %v1525 = vpop.f32.mrf.mxu0
    %v1526 = vadd.f32 0.0, %v1525
    %1527 = vmatmul.f32.gmra.mxu0 %v740
    %v1528 = vpop.f32.mrf.mxu0
    %v1529 = vadd.f32 0.0, %v1528
    %1530 = vmatmul.f32.gmra.mxu0 %v743
    %v1531 = vpop.f32.mrf.mxu0
    %v1532 = vadd.f32 0.0, %v1531
    %1533 = vmatmul.f32.gmra.mxu0 %v746
    %v1534 = vpop.f32.mrf.mxu0
    %v1535 = vadd.f32 0.0, %v1534
    %1536 = vmatmul.f32.gmra.mxu0 %v749
    %v1537 = vpop.f32.mrf.mxu0
    %v1538 = vadd.f32 0.0, %v1537
    %1539 = vmatmul.f32.gmra.mxu0 %v752
    %v1540 = vpop.f32.mrf.mxu0
    %v1541 = vadd.f32 0.0, %v1540
    %1542 = vmatmul.f32.gmra.mxu0 %v755
    %v1543 = vpop.f32.mrf.mxu0
    %v1544 = vadd.f32 0.0, %v1543
    %1545 = vmatmul.f32.gmra.mxu0 %v758
    %v1546 = vpop.f32.mrf.mxu0
    %v1547 = vadd.f32 0.0, %v1546
    %1548 = vmatmul.f32.gmra.mxu0 %v761
    %v1549 = vpop.f32.mrf.mxu0
    %v1550 = vadd.f32 0.0, %v1549
    %1551 = vmatmul.f32.gmra.mxu0 %v764
    %v1552 = vpop.f32.mrf.mxu0
    %v1553 = vadd.f32 0.0, %v1552
    %1554 = vmatmul.f32.gmra.mxu0 %v767
    %v1555 = vpop.f32.mrf.mxu0
    %v1556 = vadd.f32 0.0, %v1555
    %1557 = vmatmul.f32.gmra.mxu0 %v770
    %v1558 = vpop.f32.mrf.mxu0
    %v1559 = vadd.f32 0.0, %v1558
    %1560 = vmatmul.f32.gmra.mxu0 %v773
    %v1561 = vpop.f32.mrf.mxu0
    %v1562 = vadd.f32 0.0, %v1561
    %1563 = vmatmul.f32.gmra.mxu0 %v776
    %v1564 = vpop.f32.mrf.mxu0
    %v1565 = vadd.f32 0.0, %v1564
    %1566 = vmatmul.f32.gmra.mxu0 %v779
    %v1567 = vpop.f32.mrf.mxu0
    %v1568 = vadd.f32 0.0, %v1567
    %1569 = vmatmul.f32.gmra.mxu0 %v782
    %v1570 = vpop.f32.mrf.mxu0
    %v1571 = vadd.f32 0.0, %v1570
    %1572 = vmatmul.f32.gmra.mxu0 %v785
    %v1573 = vpop.f32.mrf.mxu0
    %v1574 = vadd.f32 0.0, %v1573
    %1575 = vmatmul.f32.gmra.mxu0 %v788
    %v1576 = vpop.f32.mrf.mxu0
    %v1577 = vadd.f32 0.0, %v1576
    %1578 = vmatmul.f32.gmra.mxu0 %v791
    %v1579 = vpop.f32.mrf.mxu0
    %v1580 = vadd.f32 0.0, %v1579
    %1581 = vmatmul.f32.gmra.mxu0 %v794
    %v1582 = vpop.f32.mrf.mxu0
    %v1583 = vadd.f32 0.0, %v1582
    %1584 = vmatmul.f32.gmra.mxu0 %v797
    %v1585 = vpop.f32.mrf.mxu0
    %v1586 = vadd.f32 0.0, %v1585
    %1587 = vmatmul.f32.gmra.mxu0 %v800
    %v1588 = vpop.f32.mrf.mxu0
    %v1589 = vadd.f32 0.0, %v1588
    %1590 = vmatmul.f32.gmra.mxu0 %v803
    %v1591 = vpop.f32.mrf.mxu0
    %v1592 = vadd.f32 0.0, %v1591
    %1593 = vmatmul.f32.gmra.mxu0 %v806
    %v1594 = vpop.f32.mrf.mxu0
    %v1595 = vadd.f32 0.0, %v1594
    %1596 = vmatmul.f32.gmra.mxu0 %v809
    %v1597 = vpop.f32.mrf.mxu0
    %v1598 = vadd.f32 0.0, %v1597
    %1599 = vmatmul.f32.gmra.mxu0 %v812
    %v1600 = vpop.f32.mrf.mxu0
    %v1601 = vadd.f32 0.0, %v1600
    %1602 = vmatmul.f32.gmra.mxu0 %v815
    %v1603 = vpop.f32.mrf.mxu0
    %v1604 = vadd.f32 0.0, %v1603
    %1605 = vmatmul.f32.gmra.mxu0 %v818
    %v1606 = vpop.f32.mrf.mxu0
    %v1607 = vadd.f32 0.0, %v1606
    %1608 = vmatmul.f32.gmra.mxu0 %v821
    %v1609 = vpop.f32.mrf.mxu0
    %v1610 = vadd.f32 0.0, %v1609
    %1611 = vmatmul.f32.gmra.mxu0 %v824
    %v1612 = vpop.f32.mrf.mxu0
    %v1613 = vadd.f32 0.0, %v1612
    %1614 = vmatmul.f32.gmra.mxu0 %v827
    %v1615 = vpop.f32.mrf.mxu0
    %v1616 = vadd.f32 0.0, %v1615
    %1617 = vmatmul.f32.gmra.mxu0 %v830
    %v1618 = vpop.f32.mrf.mxu0
    %v1619 = vadd.f32 0.0, %v1618
    %1620 = vmatmul.f32.gmra.mxu0 %v833
    %v1621 = vpop.f32.mrf.mxu0
    %v1622 = vadd.f32 0.0, %v1621
    %1623 = vmatmul.f32.gmra.mxu0 %v836
    %v1624 = vpop.f32.mrf.mxu0
    %v1625 = vadd.f32 0.0, %v1624
    %1626 = vmatmul.f32.gmra.mxu0 %v839
    %v1627 = vpop.f32.mrf.mxu0
    %v1628 = vadd.f32 0.0, %v1627
    %1629 = vmatmul.f32.gmra.mxu0 %v842
    %v1630 = vpop.f32.mrf.mxu0
    %v1631 = vadd.f32 0.0, %v1630
    %1632 = vmatmul.f32.gmra.mxu0 %v845
    %v1633 = vpop.f32.mrf.mxu0
    %v1634 = vadd.f32 0.0, %v1633
    %1635 = vmatmul.f32.gmra.mxu0 %v848
    %v1636 = vpop.f32.mrf.mxu0
    %v1637 = vadd.f32 0.0, %v1636
    %1638 = vmatmul.f32.gmra.mxu0 %v851
    %v1639 = vpop.f32.mrf.mxu0
    %v1640 = vadd.f32 0.0, %v1639
    %1641 = vmatmul.f32.gmra.mxu0 %v854
    %v1642 = vpop.f32.mrf.mxu0
    %v1643 = vadd.f32 0.0, %v1642
    %1644 = vmatmul.f32.gmra.mxu0 %v857
    %v1645 = vpop.f32.mrf.mxu0
    %v1646 = vadd.f32 0.0, %v1645
    %1647 = vmatmul.f32.gmra.mxu0 %v860
    %v1648 = vpop.f32.mrf.mxu0
    %v1649 = vadd.f32 0.0, %v1648
    %1650 = vmatmul.f32.gmra.mxu0 %v863
    %v1651 = vpop.f32.mrf.mxu0
    %v1652 = vadd.f32 0.0, %v1651
    %1653 = vmatmul.f32.gmra.mxu0 %v866
    %v1654 = vpop.f32.mrf.mxu0
    %v1655 = vadd.f32 0.0, %v1654
    %1656 = vmatmul.f32.gmra.mxu0 %v869
    %v1657 = vpop.f32.mrf.mxu0
    %v1658 = vadd.f32 0.0, %v1657
    %1659 = vmatmul.f32.gmra.mxu0 %v872
    %v1660 = vpop.f32.mrf.mxu0
    %v1661 = vadd.f32 0.0, %v1660
    %1662 = vmatmul.f32.gmra.mxu0 %v875
    %v1663 = vpop.f32.mrf.mxu0
    %v1664 = vadd.f32 0.0, %v1663
    %1665 = vmatmul.f32.gmra.mxu0 %v878
    %v1666 = vpop.f32.mrf.mxu0
    %v1667 = vadd.f32 0.0, %v1666
    %1668 = vmatmul.f32.gmra.mxu0 %v881
    %v1669 = vpop.f32.mrf.mxu0
    %v1670 = vadd.f32 0.0, %v1669
    %1671 = vmatmul.f32.gmra.mxu0 %v884
    %v1672 = vpop.f32.mrf.mxu0
    %v1673 = vadd.f32 0.0, %v1672
    %1674 = vmatmul.f32.gmra.mxu0 %v887
    %v1675 = vpop.f32.mrf.mxu0
    %v1676 = vadd.f32 0.0, %v1675
    %1677 = vmatmul.f32.gmra.mxu0 %v890
    %v1678 = vpop.f32.mrf.mxu0
    %v1679 = vadd.f32 0.0, %v1678
    %1680 = vmatmul.f32.gmra.mxu0 %v893
    %v1681 = vpop.f32.mrf.mxu0
    %v1682 = vadd.f32 0.0, %v1681
    %1683 = vmatmul.f32.gmra.mxu0 %v896
    %v1684 = vpop.f32.mrf.mxu0
    %v1685 = vadd.f32 0.0, %v1684
    %1686 = vmatmul.f32.gmra.mxu0 %v899
    %v1687 = vpop.f32.mrf.mxu0
    %v1688 = vadd.f32 0.0, %v1687
    %1689 = vmatmul.f32.gmra.mxu0 %v902
    %v1690 = vpop.f32.mrf.mxu0
    %v1691 = vadd.f32 0.0, %v1690
    %1692 = vmatmul.f32.gmra.mxu0 %v905
    %v1693 = vpop.f32.mrf.mxu0
    %v1694 = vadd.f32 0.0, %v1693
    %1695 = vmatmul.f32.gmra.mxu0 %v908
    %v1696 = vpop.f32.mrf.mxu0
    %v1697 = vadd.f32 0.0, %v1696
    %1698 = vmatmul.f32.gmra.mxu0 %v911
    %v1699 = vpop.f32.mrf.mxu0
    %v1700 = vadd.f32 0.0, %v1699
    %1701 = vmatmul.f32.gmra.mxu0 %v914
    %v1702 = vpop.f32.mrf.mxu0
    %v1703 = vadd.f32 0.0, %v1702
    %1704 = vmatmul.f32.gmra.mxu0 %v917
    %v1705 = vpop.f32.mrf.mxu0
    %v1706 = vadd.f32 0.0, %v1705
    %1707 = vmatmul.f32.gmra.mxu0 %v920
    %v1708 = vpop.f32.mrf.mxu0
    %v1709 = vadd.f32 0.0, %v1708
    %1710 = vmatmul.f32.gmra.mxu0 %v923
    %v1711 = vpop.f32.mrf.mxu0
    %v1712 = vadd.f32 0.0, %v1711
    %1713 = vmatmul.f32.gmra.mxu0 %v926
    %v1714 = vpop.f32.mrf.mxu0
    %v1715 = vadd.f32 0.0, %v1714
    %1716 = vmatmul.f32.gmra.mxu0 %v929
    %v1717 = vpop.f32.mrf.mxu0
    %v1718 = vadd.f32 0.0, %v1717
    %1719 = vmatmul.f32.gmra.mxu0 %v932
    %v1720 = vpop.f32.mrf.mxu0
    %v1721 = vadd.f32 0.0, %v1720
    %1722 = vmatmul.f32.gmra.mxu0 %v935
    %v1723 = vpop.f32.mrf.mxu0
    %v1724 = vadd.f32 0.0, %v1723
    %1725 = vmatmul.f32.gmra.mxu0 %v938
    %v1726 = vpop.f32.mrf.mxu0
    %v1727 = vadd.f32 0.0, %v1726
    %1728 = vmatmul.f32.gmra.mxu0 %v941
    %v1729 = vpop.f32.mrf.mxu0
    %v1730 = vadd.f32 0.0, %v1729
    %1731 = vmatmul.f32.gmra.mxu0 %v944
    %v1732 = vpop.f32.mrf.mxu0
    %v1733 = vadd.f32 0.0, %v1732
    %1734 = vmatmul.f32.gmra.mxu0 %v947
    %v1735 = vpop.f32.mrf.mxu0
    %v1736 = vadd.f32 0.0, %v1735
    %1737 = vmatmul.f32.gmra.mxu0 %v950
    %v1738 = vpop.f32.mrf.mxu0
    %v1739 = vadd.f32 0.0, %v1738
    %1740 = vmatmul.f32.gmra.mxu0 %v953
    %v1741 = vpop.f32.mrf.mxu0
    %v1742 = vadd.f32 0.0, %v1741
    %1743 = vmatmul.f32.gmra.mxu0 %v956
    %v1744 = vpop.f32.mrf.mxu0
    %v1745 = vadd.f32 0.0, %v1744
    %1746 = vmatmul.f32.gmra.mxu0 %v959
    %v1747 = vpop.f32.mrf.mxu0
    %v1748 = vadd.f32 0.0, %v1747
    %1749 = vmatmul.f32.gmra.mxu0 %v962
    %v1750 = vpop.f32.mrf.mxu0
    %v1751 = vadd.f32 0.0, %v1750
    %1752 = vmatmul.f32.gmra.mxu0 %v965
    %v1753 = vpop.f32.mrf.mxu0
    %v1754 = vadd.f32 0.0, %v1753
    %1755 = vmatmul.f32.gmra.mxu0 %v968
    %v1756 = vpop.f32.mrf.mxu0
    %v1757 = vadd.f32 0.0, %v1756
    %1758 = vmatmul.f32.gmra.mxu0 %v971
    %v1759 = vpop.f32.mrf.mxu0
    %v1760 = vadd.f32 0.0, %v1759
    %1761 = vmatmul.f32.gmra.mxu0 %v974
    %v1762 = vpop.f32.mrf.mxu0
    %v1763 = vadd.f32 0.0, %v1762
    %1764 = vmatmul.f32.gmra.mxu0 %v977
    %v1765 = vpop.f32.mrf.mxu0
    %v1766 = vadd.f32 0.0, %v1765
    %1767 = vmatmul.f32.gmra.mxu0 %v980
    %v1768 = vpop.f32.mrf.mxu0
    %v1769 = vadd.f32 0.0, %v1768
    %1770 = vmatmul.f32.gmra.mxu0 %v983
    %v1771 = vpop.f32.mrf.mxu0
    %v1772 = vadd.f32 0.0, %v1771
    %1773 = vmatmul.f32.gmra.mxu0 %v986
    %v1774 = vpop.f32.mrf.mxu0
    %v1775 = vadd.f32 0.0, %v1774
    %1776 = vmatmul.f32.gmra.mxu0 %v989
    %v1777 = vpop.f32.mrf.mxu0
    %v1778 = vadd.f32 0.0, %v1777
    %1779 = vmatmul.f32.gmra.mxu0 %v992
    %v1780 = vpop.f32.mrf.mxu0
    %v1781 = vadd.f32 0.0, %v1780
    %1782 = vmatmul.f32.gmra.mxu0 %v995
    %v1783 = vpop.f32.mrf.mxu0
    %v1784 = vadd.f32 0.0, %v1783
    %1785 = vmatmul.f32.gmra.mxu0 %v998
    %v1786 = vpop.f32.mrf.mxu0
    %v1787 = vadd.f32 0.0, %v1786
    %1788 = vmatmul.f32.gmra.mxu0 %v1001
    %v1789 = vpop.f32.mrf.mxu0
    %v1790 = vadd.f32 0.0, %v1789
    %1791 = vmatmul.f32.gmra.mxu0 %v1004
    %v1792 = vpop.f32.mrf.mxu0
    %v1793 = vadd.f32 0.0, %v1792
    %1794 = vmatmul.f32.gmra.mxu0 %v1007
    %v1795 = vpop.f32.mrf.mxu0
    %v1796 = vadd.f32 0.0, %v1795
    %1797 = vmatmul.f32.gmra.mxu0 %v1010
    %v1798 = vpop.f32.mrf.mxu0
    %v1799 = vadd.f32 0.0, %v1798
    %1800 = vmatmul.f32.gmra.mxu0 %v1013
    %v1801 = vpop.f32.mrf.mxu0
    %v1802 = vadd.f32 0.0, %v1801
    %1803 = vmatmul.f32.gmra.mxu0 %v1016
    %v1804 = vpop.f32.mrf.mxu0
    %v1805 = vadd.f32 0.0, %v1804
    %1806 = vmatmul.f32.gmra.mxu0 %v1019
    %v1807 = vpop.f32.mrf.mxu0
    %v1808 = vadd.f32 0.0, %v1807
    %1809 = vmatmul.f32.gmra.mxu0 %v1022
    %v1810 = vpop.f32.mrf.mxu0
    %v1811 = vadd.f32 0.0, %v1810
    %1812 = vmatmul.f32.gmra.mxu0 %v1025
    %v1813 = vpop.f32.mrf.mxu0
    %v1814 = vadd.f32 0.0, %v1813
    %1815 = vmatmul.f32.gmra.mxu0 %v1028
    %v1816 = vpop.f32.mrf.mxu0
    %v1817 = vadd.f32 0.0, %v1816
    %1818 = vmatmul.f32.gmra.mxu0 %v1031
    %v1819 = vpop.f32.mrf.mxu0
    %v1820 = vadd.f32 0.0, %v1819
    %1821 = vmatmul.f32.gmra.mxu0 %v1034
    %v1822 = vpop.f32.mrf.mxu0
    %v1823 = vadd.f32 0.0, %v1822
    %1824 = vmatmul.f32.gmra.mxu0 %v1037
    %v1825 = vpop.f32.mrf.mxu0
    %v1826 = vadd.f32 0.0, %v1825
    %1827 = vmatmul.f32.gmra.mxu0 %v1040
    %v1828 = vpop.f32.mrf.mxu0
    %v1829 = vadd.f32 0.0, %v1828
    %1830 = vmatmul.f32.gmra.mxu0 %v1043
    %v1831 = vpop.f32.mrf.mxu0
    %v1832 = vadd.f32 0.0, %v1831
    %1833 = vmatmul.f32.gmra.mxu0 %v1046
    %v1834 = vpop.f32.mrf.mxu0
    %v1835 = vadd.f32 0.0, %v1834
    %1836 = vmatmul.f32.gmra.mxu0 %v1049
    %v1837 = vpop.f32.mrf.mxu0
    %v1838 = vadd.f32 0.0, %v1837
    %1839 = vmatmul.f32.gmra.mxu0 %v1052
    %v1840 = vpop.f32.mrf.mxu0
    %v1841 = vadd.f32 0.0, %v1840
    %1842 = vmatmul.f32.gmra.mxu0 %v1055
    %v1843 = vpop.f32.mrf.mxu0
    %v1844 = vadd.f32 0.0, %v1843
    %1845 = vmatmul.f32.gmra.mxu0 %v1058
    %v1846 = vpop.f32.mrf.mxu0
    %v1847 = vadd.f32 0.0, %v1846
    %1848 = vdwg.mxu0
    %v1849 = vmax.f32 %v1082, %v1274
    %v1850 = vmax.f32 %v1085, %v1277
    %v1851 = vmax.f32 %v1088, %v1280
    %v1852 = vmax.f32 %v1091, %v1283
    %v1853 = vmax.f32 %v1094, %v1286
    %v1854 = vmax.f32 %v1097, %v1289
    %v1855 = vmax.f32 %v1100, %v1292
    %v1856 = vmax.f32 %v1103, %v1295
    %v1857 = vmax.f32 %v1106, %v1298
    %v1858 = vmax.f32 %v1109, %v1301
    %v1859 = vmax.f32 %v1112, %v1304
    %v1860 = vmax.f32 %v1115, %v1307
    %v1861 = vmax.f32 %v1118, %v1310
    %v1862 = vmax.f32 %v1121, %v1313
    %v1863 = vmax.f32 %v1124, %v1316
    %v1864 = vmax.f32 %v1127, %v1319
    %v1865 = vmax.f32 %v1130, %v1322
    %v1866 = vmax.f32 %v1133, %v1325
    %v1867 = vmax.f32 %v1136, %v1328
    %v1868 = vmax.f32 %v1139, %v1331
    %v1869 = vmax.f32 %v1142, %v1334
    %v1870 = vmax.f32 %v1145, %v1337
    %v1871 = vmax.f32 %v1148, %v1340
    %v1872 = vmax.f32 %v1151, %v1343
    %v1873 = vmax.f32 %v1154, %v1346
    %v1874 = vmax.f32 %v1157, %v1349
    %v1875 = vmax.f32 %v1160, %v1352
    %v1876 = vmax.f32 %v1163, %v1355
    %v1877 = vmax.f32 %v1166, %v1358
    %v1878 = vmax.f32 %v1169, %v1361
    %v1879 = vmax.f32 %v1172, %v1364
    %v1880 = vmax.f32 %v1175, %v1367
    %v1881 = vmax.f32 %v1178, %v1370
    %v1882 = vmax.f32 %v1181, %v1373
    %v1883 = vmax.f32 %v1184, %v1376
    %v1884 = vmax.f32 %v1187, %v1379
    %v1885 = vmax.f32 %v1190, %v1382
    %v1886 = vmax.f32 %v1193, %v1385
    %v1887 = vmax.f32 %v1196, %v1388
    %v1888 = vmax.f32 %v1199, %v1391
    %v1889 = vmax.f32 %v1202, %v1394
    %v1890 = vmax.f32 %v1205, %v1397
    %v1891 = vmax.f32 %v1208, %v1400
    %v1892 = vmax.f32 %v1211, %v1403
    %v1893 = vmax.f32 %v1214, %v1406
    %v1894 = vmax.f32 %v1217, %v1409
    %v1895 = vmax.f32 %v1220, %v1412
    %v1896 = vmax.f32 %v1223, %v1415
    %v1897 = vmax.f32 %v1226, %v1418
    %v1898 = vmax.f32 %v1229, %v1421
    %v1899 = vmax.f32 %v1232, %v1424
    %v1900 = vmax.f32 %v1235, %v1427
    %v1901 = vmax.f32 %v1238, %v1430
    %v1902 = vmax.f32 %v1241, %v1433
    %v1903 = vmax.f32 %v1244, %v1436
    %v1904 = vmax.f32 %v1247, %v1439
    %v1905 = vmax.f32 %v1250, %v1442
    %v1906 = vmax.f32 %v1253, %v1445
    %v1907 = vmax.f32 %v1256, %v1448
    %v1908 = vmax.f32 %v1259, %v1451
    %v1909 = vmax.f32 %v1262, %v1454
    %v1910 = vmax.f32 %v1265, %v1457
    %v1911 = vmax.f32 %v1268, %v1460
    %v1912 = vmax.f32 %v1271, %v1463
    %v1913 = vmax.f32 %v1466, %v1658
    %v1914 = vmax.f32 %v1469, %v1661
    %v1915 = vmax.f32 %v1472, %v1664
    %v1916 = vmax.f32 %v1475, %v1667
    %v1917 = vmax.f32 %v1478, %v1670
    %v1918 = vmax.f32 %v1481, %v1673
    %v1919 = vmax.f32 %v1484, %v1676
    %v1920 = vmax.f32 %v1487, %v1679
    %v1921 = vmax.f32 %v1490, %v1682
    %v1922 = vmax.f32 %v1493, %v1685
    %v1923 = vmax.f32 %v1496, %v1688
    %v1924 = vmax.f32 %v1499, %v1691
    %v1925 = vmax.f32 %v1502, %v1694
    %v1926 = vmax.f32 %v1505, %v1697
    %v1927 = vmax.f32 %v1508, %v1700
    %v1928 = vmax.f32 %v1511, %v1703
    %v1929 = vmax.f32 %v1514, %v1706
    %v1930 = vmax.f32 %v1517, %v1709
    %v1931 = vmax.f32 %v1520, %v1712
    %v1932 = vmax.f32 %v1523, %v1715
    %v1933 = vmax.f32 %v1526, %v1718
    %v1934 = vmax.f32 %v1529, %v1721
    %v1935 = vmax.f32 %v1532, %v1724
    %v1936 = vmax.f32 %v1535, %v1727
    %v1937 = vmax.f32 %v1538, %v1730
    %v1938 = vmax.f32 %v1541, %v1733
    %v1939 = vmax.f32 %v1544, %v1736
    %v1940 = vmax.f32 %v1547, %v1739
    %v1941 = vmax.f32 %v1550, %v1742
    %v1942 = vmax.f32 %v1553, %v1745
    %v1943 = vmax.f32 %v1556, %v1748
    %v1944 = vmax.f32 %v1559, %v1751
    %v1945 = vmax.f32 %v1562, %v1754
    %v1946 = vmax.f32 %v1565, %v1757
    %v1947 = vmax.f32 %v1568, %v1760
    %v1948 = vmax.f32 %v1571, %v1763
    %v1949 = vmax.f32 %v1574, %v1766
    %v1950 = vmax.f32 %v1577, %v1769
    %v1951 = vmax.f32 %v1580, %v1772
    %v1952 = vmax.f32 %v1583, %v1775
    %v1953 = vmax.f32 %v1586, %v1778
    %v1954 = vmax.f32 %v1589, %v1781
    %v1955 = vmax.f32 %v1592, %v1784
    %v1956 = vmax.f32 %v1595, %v1787
    %v1957 = vmax.f32 %v1598, %v1790
    %v1958 = vmax.f32 %v1601, %v1793
    %v1959 = vmax.f32 %v1604, %v1796
    %v1960 = vmax.f32 %v1607, %v1799
    %v1961 = vmax.f32 %v1610, %v1802
    %v1962 = vmax.f32 %v1613, %v1805
    %v1963 = vmax.f32 %v1616, %v1808
    %v1964 = vmax.f32 %v1619, %v1811
    %v1965 = vmax.f32 %v1622, %v1814
    %v1966 = vmax.f32 %v1625, %v1817
    %v1967 = vmax.f32 %v1628, %v1820
    %v1968 = vmax.f32 %v1631, %v1823
    %v1969 = vmax.f32 %v1634, %v1826
    %v1970 = vmax.f32 %v1637, %v1829
    %v1971 = vmax.f32 %v1640, %v1832
    %v1972 = vmax.f32 %v1643, %v1835
    %v1973 = vmax.f32 %v1646, %v1838
    %v1974 = vmax.f32 %v1649, %v1841
    %v1975 = vmax.f32 %v1652, %v1844
    %v1976 = vmax.f32 %v1655, %v1847
    %v1977 = vmax.f32 %v1849, %v1913
    %v1978 = vmax.f32 %v1850, %v1914
    %v1979 = vmax.f32 %v1851, %v1915
    %v1980 = vmax.f32 %v1852, %v1916
    %v1981 = vmax.f32 %v1853, %v1917
    %v1982 = vmax.f32 %v1854, %v1918
    %v1983 = vmax.f32 %v1855, %v1919
    %v1984 = vmax.f32 %v1856, %v1920
    %v1985 = vmax.f32 %v1857, %v1921
    %v1986 = vmax.f32 %v1858, %v1922
    %v1987 = vmax.f32 %v1859, %v1923
    %v1988 = vmax.f32 %v1860, %v1924
    %v1989 = vmax.f32 %v1861, %v1925
    %v1990 = vmax.f32 %v1862, %v1926
    %v1991 = vmax.f32 %v1863, %v1927
    %v1992 = vmax.f32 %v1864, %v1928
    %v1993 = vmax.f32 %v1865, %v1929
    %v1994 = vmax.f32 %v1866, %v1930
    %v1995 = vmax.f32 %v1867, %v1931
    %v1996 = vmax.f32 %v1868, %v1932
    %v1997 = vmax.f32 %v1869, %v1933
    %v1998 = vmax.f32 %v1870, %v1934
    %v1999 = vmax.f32 %v1871, %v1935
    %v2000 = vmax.f32 %v1872, %v1936
    %v2001 = vmax.f32 %v1873, %v1937
    %v2002 = vmax.f32 %v1874, %v1938
    %v2003 = vmax.f32 %v1875, %v1939
    %v2004 = vmax.f32 %v1876, %v1940
    %v2005 = vmax.f32 %v1877, %v1941
    %v2006 = vmax.f32 %v1878, %v1942
    %v2007 = vmax.f32 %v1879, %v1943
    %v2008 = vmax.f32 %v1880, %v1944
    %v2009 = vmax.f32 %v1881, %v1945
    %v2010 = vmax.f32 %v1882, %v1946
    %v2011 = vmax.f32 %v1883, %v1947
    %v2012 = vmax.f32 %v1884, %v1948
    %v2013 = vmax.f32 %v1885, %v1949
    %v2014 = vmax.f32 %v1886, %v1950
    %v2015 = vmax.f32 %v1887, %v1951
    %v2016 = vmax.f32 %v1888, %v1952
    %v2017 = vmax.f32 %v1889, %v1953
    %v2018 = vmax.f32 %v1890, %v1954
    %v2019 = vmax.f32 %v1891, %v1955
    %v2020 = vmax.f32 %v1892, %v1956
    %v2021 = vmax.f32 %v1893, %v1957
    %v2022 = vmax.f32 %v1894, %v1958
    %v2023 = vmax.f32 %v1895, %v1959
    %v2024 = vmax.f32 %v1896, %v1960
    %v2025 = vmax.f32 %v1897, %v1961
    %v2026 = vmax.f32 %v1898, %v1962
    %v2027 = vmax.f32 %v1899, %v1963
    %v2028 = vmax.f32 %v1900, %v1964
    %v2029 = vmax.f32 %v1901, %v1965
    %v2030 = vmax.f32 %v1902, %v1966
    %v2031 = vmax.f32 %v1903, %v1967
    %v2032 = vmax.f32 %v1904, %v1968
    %v2033 = vmax.f32 %v1905, %v1969
    %v2034 = vmax.f32 %v1906, %v1970
    %v2035 = vmax.f32 %v1907, %v1971
    %v2036 = vmax.f32 %v1908, %v1972
    %v2037 = vmax.f32 %v1909, %v1973
    %v2038 = vmax.f32 %v1910, %v1974
    %v2039 = vmax.f32 %v1911, %v1975
    %v2040 = vmax.f32 %v1912, %v1976
    %v2041 = vld [vmem:[%s2] sm:$0x1]
    %v2043 = vperm.slane %v2041, 0
    %v2045 = vadd.f32 %v1977, %v2043
    %v2046 = vadd.f32 %v1978, %v2043
    %v2047 = vadd.f32 %v1979, %v2043
    %v2048 = vadd.f32 %v1980, %v2043
    %v2049 = vadd.f32 %v1981, %v2043
    %v2050 = vadd.f32 %v1982, %v2043
    %v2051 = vadd.f32 %v1983, %v2043
    %v2052 = vadd.f32 %v1984, %v2043
    %v2053 = vadd.f32 %v1985, %v2043
    %v2054 = vadd.f32 %v1986, %v2043
    %v2055 = vadd.f32 %v1987, %v2043
    %v2056 = vadd.f32 %v1988, %v2043
    %v2057 = vadd.f32 %v1989, %v2043
    %v2058 = vadd.f32 %v1990, %v2043
    %v2059 = vadd.f32 %v1991, %v2043
    %v2060 = vadd.f32 %v1992, %v2043
    %v2061 = vadd.f32 %v1993, %v2043
    %v2062 = vadd.f32 %v1994, %v2043
    %v2063 = vadd.f32 %v1995, %v2043
    %v2064 = vadd.f32 %v1996, %v2043
    %v2065 = vadd.f32 %v1997, %v2043
    %v2066 = vadd.f32 %v1998, %v2043
    %v2067 = vadd.f32 %v1999, %v2043
    %v2068 = vadd.f32 %v2000, %v2043
    %v2069 = vadd.f32 %v2001, %v2043
    %v2070 = vadd.f32 %v2002, %v2043
    %v2071 = vadd.f32 %v2003, %v2043
    %v2072 = vadd.f32 %v2004, %v2043
    %v2073 = vadd.f32 %v2005, %v2043
    %v2074 = vadd.f32 %v2006, %v2043
    %v2075 = vadd.f32 %v2007, %v2043
    %v2076 = vadd.f32 %v2008, %v2043
    %v2077 = vadd.f32 %v2009, %v2043
    %v2078 = vadd.f32 %v2010, %v2043
    %v2079 = vadd.f32 %v2011, %v2043
    %v2080 = vadd.f32 %v2012, %v2043
    %v2081 = vadd.f32 %v2013, %v2043
    %v2082 = vadd.f32 %v2014, %v2043
    %v2083 = vadd.f32 %v2015, %v2043
    %v2084 = vadd.f32 %v2016, %v2043
    %v2085 = vadd.f32 %v2017, %v2043
    %v2086 = vadd.f32 %v2018, %v2043
    %v2087 = vadd.f32 %v2019, %v2043
    %v2088 = vadd.f32 %v2020, %v2043
    %v2089 = vadd.f32 %v2021, %v2043
    %v2090 = vadd.f32 %v2022, %v2043
    %v2091 = vadd.f32 %v2023, %v2043
    %v2092 = vadd.f32 %v2024, %v2043
    %v2093 = vadd.f32 %v2025, %v2043
    %v2094 = vadd.f32 %v2026, %v2043
    %v2095 = vadd.f32 %v2027, %v2043
    %v2096 = vadd.f32 %v2028, %v2043
    %v2097 = vadd.f32 %v2029, %v2043
    %v2098 = vadd.f32 %v2030, %v2043
    %v2099 = vadd.f32 %v2031, %v2043
    %v2100 = vadd.f32 %v2032, %v2043
    %v2101 = vadd.f32 %v2033, %v2043
    %v2102 = vadd.f32 %v2034, %v2043
    %v2103 = vadd.f32 %v2035, %v2043
    %v2104 = vadd.f32 %v2036, %v2043
    %v2105 = vadd.f32 %v2037, %v2043
    %v2106 = vadd.f32 %v2038, %v2043
    %v2107 = vadd.f32 %v2039, %v2043
    %v2108 = vadd.f32 %v2040, %v2043
    %v2109 = vmax.f32 %v2045, 0.0
    %v2110 = vmax.f32 %v2046, 0.0
    %v2111 = vmax.f32 %v2047, 0.0
    %v2112 = vmax.f32 %v2048, 0.0
    %v2113 = vmax.f32 %v2049, 0.0
    %v2114 = vmax.f32 %v2050, 0.0
    %v2115 = vmax.f32 %v2051, 0.0
    %v2116 = vmax.f32 %v2052, 0.0
    %v2117 = vmax.f32 %v2053, 0.0
    %v2118 = vmax.f32 %v2054, 0.0
    %v2119 = vmax.f32 %v2055, 0.0
    %v2120 = vmax.f32 %v2056, 0.0
    %v2121 = vmax.f32 %v2057, 0.0
    %v2122 = vmax.f32 %v2058, 0.0
    %v2123 = vmax.f32 %v2059, 0.0
    %v2124 = vmax.f32 %v2060, 0.0
    %v2125 = vmax.f32 %v2061, 0.0
    %v2126 = vmax.f32 %v2062, 0.0
    %v2127 = vmax.f32 %v2063, 0.0
    %v2128 = vmax.f32 %v2064, 0.0
    %v2129 = vmax.f32 %v2065, 0.0
    %v2130 = vmax.f32 %v2066, 0.0
    %v2131 = vmax.f32 %v2067, 0.0
    %v2132 = vmax.f32 %v2068, 0.0
    %v2133 = vmax.f32 %v2069, 0.0
    %v2134 = vmax.f32 %v2070, 0.0
    %v2135 = vmax.f32 %v2071, 0.0
    %v2136 = vmax.f32 %v2072, 0.0
    %v2137 = vmax.f32 %v2073, 0.0
    %v2138 = vmax.f32 %v2074, 0.0
    %v2139 = vmax.f32 %v2075, 0.0
    %v2140 = vmax.f32 %v2076, 0.0
    %v2141 = vmax.f32 %v2077, 0.0
    %v2142 = vmax.f32 %v2078, 0.0
    %v2143 = vmax.f32 %v2079, 0.0
    %v2144 = vmax.f32 %v2080, 0.0
    %v2145 = vmax.f32 %v2081, 0.0
    %v2146 = vmax.f32 %v2082, 0.0
    %v2147 = vmax.f32 %v2083, 0.0
    %v2148 = vmax.f32 %v2084, 0.0
    %v2149 = vmax.f32 %v2085, 0.0
    %v2150 = vmax.f32 %v2086, 0.0
    %v2151 = vmax.f32 %v2087, 0.0
    %v2152 = vmax.f32 %v2088, 0.0
    %v2153 = vmax.f32 %v2089, 0.0
    %v2154 = vmax.f32 %v2090, 0.0
    %v2155 = vmax.f32 %v2091, 0.0
    %v2156 = vmax.f32 %v2092, 0.0
    %v2157 = vmax.f32 %v2093, 0.0
    %v2158 = vmax.f32 %v2094, 0.0
    %v2159 = vmax.f32 %v2095, 0.0
    %v2160 = vmax.f32 %v2096, 0.0
    %v2161 = vmax.f32 %v2097, 0.0
    %v2162 = vmax.f32 %v2098, 0.0
    %v2163 = vmax.f32 %v2099, 0.0
    %v2164 = vmax.f32 %v2100, 0.0
    %v2165 = vmax.f32 %v2101, 0.0
    %v2166 = vmax.f32 %v2102, 0.0
    %v2167 = vmax.f32 %v2103, 0.0
    %v2168 = vmax.f32 %v2104, 0.0
    %v2169 = vmax.f32 %v2105, 0.0
    %v2170 = vmax.f32 %v2106, 0.0
    %v2171 = vmax.f32 %v2107, 0.0
    %v2172 = vmax.f32 %v2108, 0.0
    %vm2173 = vcmask 261120
    %2174 = vst.msk [vmem:[#allocation2] sm:$0xff] %vm2173, 0.0
    %vm2175 = vcmask 253952
    %2176 = vst.msk [vmem:[#allocation2 + $0x8] sm:$0x1] %vm2175, 0.0
    %2177 = vst.msk [vmem:[#allocation2 + $0x10] sm:$0xff] %vm2173, 0.0
    %2178 = vst.msk [vmem:[#allocation2 + $0x18] sm:$0x1] %vm2175, 0.0
    %2179 = vst.msk [vmem:[#allocation2 + $0x20] sm:$0xff] %vm2173, 0.0
    %2180 = vst.msk [vmem:[#allocation2 + $0x28] sm:$0x1] %vm2175, 0.0
    %2181 = vst.msk [vmem:[#allocation2 + $0x30] sm:$0xff] %vm2173, 0.0
    %2182 = vst.msk [vmem:[#allocation2 + $0x38] sm:$0x1] %vm2175, 0.0
    %2183 = vst.msk [vmem:[#allocation2 + $0x40] sm:$0xff] %vm2173, 0.0
    %2184 = vst.msk [vmem:[#allocation2 + $0x48] sm:$0x1] %vm2175, 0.0
    %2185 = vst.msk [vmem:[#allocation2 + $0x50] sm:$0xff] %vm2173, 0.0
    %2186 = vst.msk [vmem:[#allocation2 + $0x58] sm:$0x1] %vm2175, 0.0
    %2187 = vst.msk [vmem:[#allocation2 + $0x60] sm:$0xff] %vm2173, 0.0
    %2188 = vst.msk [vmem:[#allocation2 + $0x68] sm:$0x1] %vm2175, 0.0
    %2189 = vst.msk [vmem:[#allocation2 + $0x70] sm:$0xff] %vm2173, 0.0
    %2190 = vst.msk [vmem:[#allocation2 + $0x78] sm:$0x1] %vm2175, 0.0
    %2191 = vst.msk [vmem:[#allocation2 + $0x80] sm:$0xff] %vm2173, 0.0
    %2192 = vst.msk [vmem:[#allocation2 + $0x88] sm:$0x1] %vm2175, 0.0
    %2193 = vst.msk [vmem:[#allocation2 + $0x90] sm:$0xff] %vm2173, 0.0
    %2194 = vst.msk [vmem:[#allocation2 + $0x98] sm:$0x1] %vm2175, 0.0
    %2195 = vst.msk [vmem:[#allocation2 + $0xa0] sm:$0xff] %vm2173, 0.0
    %2196 = vst.msk [vmem:[#allocation2 + $0xa8] sm:$0x1] %vm2175, 0.0
    %2197 = vst.msk [vmem:[#allocation2 + $0xb0] sm:$0xff] %vm2173, 0.0
    %2198 = vst.msk [vmem:[#allocation2 + $0xb8] sm:$0x1] %vm2175, 0.0
    %2199 = vst.msk [vmem:[#allocation2 + $0xc0] sm:$0xff] %vm2173, 0.0
    %2200 = vst.msk [vmem:[#allocation2 + $0xc8] sm:$0x1] %vm2175, 0.0
    %2201 = vst.msk [vmem:[#allocation2 + $0xd0] sm:$0xff] %vm2173, 0.0
    %2202 = vst.msk [vmem:[#allocation2 + $0xd8] sm:$0x1] %vm2175, 0.0
    %2203 = vst.msk [vmem:[#allocation2 + $0xe0] sm:$0xff] %vm2173, 0.0
    %2204 = vst.msk [vmem:[#allocation2 + $0xe8] sm:$0x1] %vm2175, 0.0
    %2205 = vst.msk [vmem:[#allocation2 + $0xf0] sm:$0xff] %vm2173, 0.0
    %2206 = vst.msk [vmem:[#allocation2 + $0xf8] sm:$0x1] %vm2175, 0.0
    %2207 = vst.msk [vmem:[#allocation2 + $0x100] sm:$0xff] %vm2173, 0.0
    %2208 = vst.msk [vmem:[#allocation2 + $0x108] sm:$0x1] %vm2175, 0.0
    %2209 = vst.msk [vmem:[#allocation2 + $0x110] sm:$0xff] %vm2173, 0.0
    %2210 = vst.msk [vmem:[#allocation2 + $0x118] sm:$0x1] %vm2175, 0.0
    %2211 = vst.msk [vmem:[#allocation2 + $0x120] sm:$0xff] %vm2173, 0.0
    %2212 = vst.msk [vmem:[#allocation2 + $0x128] sm:$0x1] %vm2175, 0.0
    %2213 = vst.msk [vmem:[#allocation2 + $0x130] sm:$0xff] %vm2173, 0.0
    %2214 = vst.msk [vmem:[#allocation2 + $0x138] sm:$0x1] %vm2175, 0.0
    %2215 = vst.msk [vmem:[#allocation2 + $0x140] sm:$0xff] %vm2173, 0.0
    %2216 = vst.msk [vmem:[#allocation2 + $0x148] sm:$0x1] %vm2175, 0.0
    %2217 = vst.msk [vmem:[#allocation2 + $0x150] sm:$0xff] %vm2173, 0.0
    %2218 = vst.msk [vmem:[#allocation2 + $0x158] sm:$0x1] %vm2175, 0.0
    %2219 = vst.msk [vmem:[#allocation2 + $0x160] sm:$0xff] %vm2173, 0.0
    %2220 = vst.msk [vmem:[#allocation2 + $0x168] sm:$0x1] %vm2175, 0.0
    %2221 = vst.msk [vmem:[#allocation2 + $0x170] sm:$0xff] %vm2173, 0.0
    %2222 = vst.msk [vmem:[#allocation2 + $0x178] sm:$0x1] %vm2175, 0.0
    %2223 = vst.msk [vmem:[#allocation2 + $0x180] sm:$0xff] %vm2173, 0.0
    %2224 = vst.msk [vmem:[#allocation2 + $0x188] sm:$0x1] %vm2175, 0.0
    %2225 = vst.msk [vmem:[#allocation2 + $0x190] sm:$0xff] %vm2173, 0.0
    %2226 = vst.msk [vmem:[#allocation2 + $0x198] sm:$0x1] %vm2175, 0.0
    %2227 = vst.msk [vmem:[#allocation2 + $0x1a0] sm:$0xff] %vm2173, 0.0
    %2228 = vst.msk [vmem:[#allocation2 + $0x1a8] sm:$0x1] %vm2175, 0.0
    %2229 = vst.msk [vmem:[#allocation2 + $0x1b0] sm:$0xff] %vm2173, 0.0
    %2230 = vst.msk [vmem:[#allocation2 + $0x1b8] sm:$0x1] %vm2175, 0.0
    %2231 = vst.msk [vmem:[#allocation2 + $0x1c0] sm:$0xff] %vm2173, 0.0
    %2232 = vst.msk [vmem:[#allocation2 + $0x1c8] sm:$0x1] %vm2175, 0.0
    %2233 = vst.msk [vmem:[#allocation2 + $0x1d0] sm:$0xff] %vm2173, 0.0
    %2234 = vst.msk [vmem:[#allocation2 + $0x1d8] sm:$0x1] %vm2175, 0.0
    %2235 = vst.msk [vmem:[#allocation2 + $0x1e0] sm:$0xff] %vm2173, 0.0
    %2236 = vst.msk [vmem:[#allocation2 + $0x1e8] sm:$0x1] %vm2175, 0.0
    %2237 = vst.msk [vmem:[#allocation2 + $0x1f0] sm:$0xff] %vm2173, 0.0
    %2238 = vst.msk [vmem:[#allocation2 + $0x1f8] sm:$0x1] %vm2175, 0.0
    %2239 = vst.msk [vmem:[#allocation2 + $0x200] sm:$0xff] %vm2173, 0.0
    %2240 = vst.msk [vmem:[#allocation2 + $0x208] sm:$0x1] %vm2175, 0.0
    %2241 = vst.msk [vmem:[#allocation2 + $0x210] sm:$0xff] %vm2173, 0.0
    %2242 = vst.msk [vmem:[#allocation2 + $0x218] sm:$0x1] %vm2175, 0.0
    %2243 = vst.msk [vmem:[#allocation2 + $0x220] sm:$0xff] %vm2173, 0.0
    %2244 = vst.msk [vmem:[#allocation2 + $0x228] sm:$0x1] %vm2175, 0.0
    %2245 = vst.msk [vmem:[#allocation2 + $0x230] sm:$0xff] %vm2173, 0.0
    %2246 = vst.msk [vmem:[#allocation2 + $0x238] sm:$0x1] %vm2175, 0.0
    %2247 = vst.msk [vmem:[#allocation2 + $0x240] sm:$0xff] %vm2173, 0.0
    %2248 = vst.msk [vmem:[#allocation2 + $0x248] sm:$0x1] %vm2175, 0.0
    %2249 = vst.msk [vmem:[#allocation2 + $0x250] sm:$0xff] %vm2173, 0.0
    %2250 = vst.msk [vmem:[#allocation2 + $0x258] sm:$0x1] %vm2175, 0.0
    %2251 = vst.msk [vmem:[#allocation2 + $0x260] sm:$0xff] %vm2173, 0.0
    %2252 = vst.msk [vmem:[#allocation2 + $0x268] sm:$0x1] %vm2175, 0.0
    %2253 = vst.msk [vmem:[#allocation2 + $0x270] sm:$0xff] %vm2173, 0.0
    %2254 = vst.msk [vmem:[#allocation2 + $0x278] sm:$0x1] %vm2175, 0.0
    %2255 = vst.msk [vmem:[#allocation2 + $0x280] sm:$0xff] %vm2173, 0.0
    %2256 = vst.msk [vmem:[#allocation2 + $0x288] sm:$0x1] %vm2175, 0.0
    %2257 = vst.msk [vmem:[#allocation2 + $0x290] sm:$0xff] %vm2173, 0.0
    %2258 = vst.msk [vmem:[#allocation2 + $0x298] sm:$0x1] %vm2175, 0.0
    %2259 = vst.msk [vmem:[#allocation2 + $0x2a0] sm:$0xff] %vm2173, 0.0
    %2260 = vst.msk [vmem:[#allocation2 + $0x2a8] sm:$0x1] %vm2175, 0.0
    %2261 = vst.msk [vmem:[#allocation2 + $0x2b0] sm:$0xff] %vm2173, 0.0
    %2262 = vst.msk [vmem:[#allocation2 + $0x2b8] sm:$0x1] %vm2175, 0.0
    %2263 = vst.msk [vmem:[#allocation2 + $0x2c0] sm:$0xff] %vm2173, 0.0
    %2264 = vst.msk [vmem:[#allocation2 + $0x2c8] sm:$0x1] %vm2175, 0.0
    %2265 = vst.msk [vmem:[#allocation2 + $0x2d0] sm:$0xff] %vm2173, 0.0
    %2266 = vst.msk [vmem:[#allocation2 + $0x2d8] sm:$0x1] %vm2175, 0.0
    %2267 = vst.msk [vmem:[#allocation2 + $0x2e0] sm:$0xff] %vm2173, 0.0
    %2268 = vst.msk [vmem:[#allocation2 + $0x2e8] sm:$0x1] %vm2175, 0.0
    %2269 = vst.msk [vmem:[#allocation2 + $0x2f0] sm:$0xff] %vm2173, 0.0
    %2270 = vst.msk [vmem:[#allocation2 + $0x2f8] sm:$0x1] %vm2175, 0.0
    %2271 = vst.msk [vmem:[#allocation2 + $0x300] sm:$0xff] %vm2173, 0.0
    %2272 = vst.msk [vmem:[#allocation2 + $0x308] sm:$0x1] %vm2175, 0.0
    %2273 = vst.msk [vmem:[#allocation2 + $0x310] sm:$0xff] %vm2173, 0.0
    %2274 = vst.msk [vmem:[#allocation2 + $0x318] sm:$0x1] %vm2175, 0.0
    %2275 = vst.msk [vmem:[#allocation2 + $0x320] sm:$0xff] %vm2173, 0.0
    %2276 = vst.msk [vmem:[#allocation2 + $0x328] sm:$0x1] %vm2175, 0.0
    %2277 = vst.msk [vmem:[#allocation2 + $0x330] sm:$0xff] %vm2173, 0.0
    %2278 = vst.msk [vmem:[#allocation2 + $0x338] sm:$0x1] %vm2175, 0.0
    %2279 = vst.msk [vmem:[#allocation2 + $0x340] sm:$0xff] %vm2173, 0.0
    %2280 = vst.msk [vmem:[#allocation2 + $0x348] sm:$0x1] %vm2175, 0.0
    %2281 = vst.msk [vmem:[#allocation2 + $0x350] sm:$0xff] %vm2173, 0.0
    %2282 = vst.msk [vmem:[#allocation2 + $0x358] sm:$0x1] %vm2175, 0.0
    %2283 = vst.msk [vmem:[#allocation2 + $0x360] sm:$0xff] %vm2173, 0.0
    %2284 = vst.msk [vmem:[#allocation2 + $0x368] sm:$0x1] %vm2175, 0.0
    %2285 = vst.msk [vmem:[#allocation2 + $0x370] sm:$0xff] %vm2173, 0.0
    %2286 = vst.msk [vmem:[#allocation2 + $0x378] sm:$0x1] %vm2175, 0.0
    %2287 = vst.msk [vmem:[#allocation2 + $0x380] sm:$0xff] %vm2173, 0.0
    %2288 = vst.msk [vmem:[#allocation2 + $0x388] sm:$0x1] %vm2175, 0.0
    %2289 = vst.msk [vmem:[#allocation2 + $0x390] sm:$0xff] %vm2173, 0.0
    %2290 = vst.msk [vmem:[#allocation2 + $0x398] sm:$0x1] %vm2175, 0.0
    %2291 = vst.msk [vmem:[#allocation2 + $0x3a0] sm:$0xff] %vm2173, 0.0
    %2292 = vst.msk [vmem:[#allocation2 + $0x3a8] sm:$0x1] %vm2175, 0.0
    %2293 = vst.msk [vmem:[#allocation2 + $0x3b0] sm:$0xff] %vm2173, 0.0
    %2294 = vst.msk [vmem:[#allocation2 + $0x3b8] sm:$0x1] %vm2175, 0.0
    %2295 = vst.msk [vmem:[#allocation2 + $0x3c0] sm:$0xff] %vm2173, 0.0
    %2296 = vst.msk [vmem:[#allocation2 + $0x3c8] sm:$0x1] %vm2175, 0.0
    %2297 = vst.msk [vmem:[#allocation2 + $0x3d0] sm:$0xff] %vm2173, 0.0
    %2298 = vst.msk [vmem:[#allocation2 + $0x3d8] sm:$0x1] %vm2175, 0.0
    %2299 = vst.msk [vmem:[#allocation2 + $0x3e0] sm:$0xff] %vm2173, 0.0
    %2300 = vst.msk [vmem:[#allocation2 + $0x3e8] sm:$0x1] %vm2175, 0.0
    %2301 = vst.msk [vmem:[#allocation2 + $0x3f0] sm:$0xff] %vm2173, 0.0
    %2302 = vst.msk [vmem:[#allocation2 + $0x3f8] sm:$0x1] %vm2175, 0.0
    %2303 = vst.msk [vmem:[#allocation2 + $0x400] sm:$0xff] %vm2173, 0.0
    %2304 = vst.msk [vmem:[#allocation2 + $0x408] sm:$0x1] %vm2175, 0.0
    %2305 = vst.msk [vmem:[#allocation2 + $0x410] sm:$0xff] %vm2173, 0.0
    %2306 = vst.msk [vmem:[#allocation2 + $0x418] sm:$0x1] %vm2175, 0.0
    %2307 = vst.msk [vmem:[#allocation2 + $0x420] sm:$0xff] %vm2173, 0.0
    %2308 = vst.msk [vmem:[#allocation2 + $0x428] sm:$0x1] %vm2175, 0.0
    %2309 = vst.msk [vmem:[#allocation2 + $0x430] sm:$0xff] %vm2173, 0.0
    %2310 = vst.msk [vmem:[#allocation2 + $0x438] sm:$0x1] %vm2175, 0.0
    %2311 = vst.msk [vmem:[#allocation2 + $0x440] sm:$0xff] %vm2173, 0.0
    %2312 = vst.msk [vmem:[#allocation2 + $0x448] sm:$0x1] %vm2175, 0.0
    %2313 = vst.msk [vmem:[#allocation2 + $0x450] sm:$0xff] %vm2173, 0.0
    %2314 = vst.msk [vmem:[#allocation2 + $0x458] sm:$0x1] %vm2175, 0.0
    %2315 = vst.msk [vmem:[#allocation2 + $0x460] sm:$0xff] %vm2173, 0.0
    %2316 = vst.msk [vmem:[#allocation2 + $0x468] sm:$0x1] %vm2175, 0.0
    %2317 = vst.msk [vmem:[#allocation2 + $0x470] sm:$0xff] %vm2173, 0.0
    %2318 = vst.msk [vmem:[#allocation2 + $0x478] sm:$0x1] %vm2175, 0.0
    %s2319 = scalar_lea.vmem [#allocation2], 864
    %2320 = vst.msk [vmem:[%s2319] sm:$0xff] %vm2173, %v2109
    %2321 = vst.msk [vmem:[%s2319 + $0x10] sm:$0xff] %vm2173, %v2110
    %2322 = vst.msk [vmem:[%s2319 + $0x20] sm:$0xff] %vm2173, %v2111
    %2323 = vst.msk [vmem:[%s2319 + $0x30] sm:$0xff] %vm2173, %v2112
    %2324 = vst.msk [vmem:[%s2319 + $0x40] sm:$0xff] %vm2173, %v2113
    %2325 = vst.msk [vmem:[%s2319 + $0x50] sm:$0xff] %vm2173, %v2114
    %2326 = vst.msk [vmem:[%s2319 + $0x60] sm:$0xff] %vm2173, %v2115
    %2327 = vst.msk [vmem:[%s2319 + $0x70] sm:$0xff] %vm2173, %v2116
    %2328 = vst.msk [vmem:[%s2319 + $0x90] sm:$0xff] %vm2173, %v2117
    %2329 = vst.msk [vmem:[%s2319 + $0xa0] sm:$0xff] %vm2173, %v2118
    %2330 = vst.msk [vmem:[%s2319 + $0xb0] sm:$0xff] %vm2173, %v2119
    %2331 = vst.msk [vmem:[%s2319 + $0xc0] sm:$0xff] %vm2173, %v2120
    %2332 = vst.msk [vmem:[%s2319 + $0xd0] sm:$0xff] %vm2173, %v2121
    %2333 = vst.msk [vmem:[%s2319 + $0xe0] sm:$0xff] %vm2173, %v2122
    %2334 = vst.msk [vmem:[%s2319 + $0xf0] sm:$0xff] %vm2173, %v2123
    %2335 = vst.msk [vmem:[%s2319 + $0x100] sm:$0xff] %vm2173, %v2124
    %s2336 = scalar_lea.vmem [#allocation2], 576
    %2337 = vst.msk [vmem:[%s2336 + $0x1] sm:$0xff] %vm2173, %v2125
    %2338 = vst.msk [vmem:[%s2336 + $0x11] sm:$0xff] %vm2173, %v2126
    %2339 = vst.msk [vmem:[%s2336 + $0x21] sm:$0xff] %vm2173, %v2127
    %2340 = vst.msk [vmem:[%s2336 + $0x31] sm:$0xff] %vm2173, %v2128
    %2341 = vst.msk [vmem:[%s2336 + $0x41] sm:$0xff] %vm2173, %v2129
    %2342 = vst.msk [vmem:[%s2336 + $0x51] sm:$0xff] %vm2173, %v2130
    %2343 = vst.msk [vmem:[%s2336 + $0x61] sm:$0xff] %vm2173, %v2131
    %2344 = vst.msk [vmem:[%s2336 + $0x71] sm:$0xff] %vm2173, %v2132
    %2345 = vst.msk [vmem:[%s2336 + $0x91] sm:$0xff] %vm2173, %v2133
    %2346 = vst.msk [vmem:[%s2336 + $0xa1] sm:$0xff] %vm2173, %v2134
    %2347 = vst.msk [vmem:[%s2336 + $0xb1] sm:$0xff] %vm2173, %v2135
    %2348 = vst.msk [vmem:[%s2336 + $0xc1] sm:$0xff] %vm2173, %v2136
    %2349 = vst.msk [vmem:[%s2336 + $0xd1] sm:$0xff] %vm2173, %v2137
    %2350 = vst.msk [vmem:[%s2336 + $0xe1] sm:$0xff] %vm2173, %v2138
    %2351 = vst.msk [vmem:[%s2336 + $0xf1] sm:$0xff] %vm2173, %v2139
    %2352 = vst.msk [vmem:[%s2336 + $0x101] sm:$0xff] %vm2173, %v2140
    %s2353 = scalar_lea.vmem [#allocation2], 304
    %2354 = vst.msk [vmem:[%s2353] sm:$0xff] %vm2173, %v2141
    %2355 = vst.msk [vmem:[%s2353 + $0x10] sm:$0xff] %vm2173, %v2142
    %2356 = vst.msk [vmem:[%s2353 + $0x20] sm:$0xff] %vm2173, %v2143
    %2357 = vst.msk [vmem:[%s2353 + $0x30] sm:$0xff] %vm2173, %v2144
    %2358 = vst.msk [vmem:[%s2353 + $0x40] sm:$0xff] %vm2173, %v2145
    %2359 = vst.msk [vmem:[%s2353 + $0x50] sm:$0xff] %vm2173, %v2146
    %2360 = vst.msk [vmem:[%s2353 + $0x60] sm:$0xff] %vm2173, %v2147
    %2361 = vst.msk [vmem:[%s2353 + $0x70] sm:$0xff] %vm2173, %v2148
    %2362 = vst.msk [vmem:[%s2353 + $0x90] sm:$0xff] %vm2173, %v2149
    %2363 = vst.msk [vmem:[%s2353 + $0xa0] sm:$0xff] %vm2173, %v2150
    %2364 = vst.msk [vmem:[%s2353 + $0xb0] sm:$0xff] %vm2173, %v2151
    %2365 = vst.msk [vmem:[%s2353 + $0xc0] sm:$0xff] %vm2173, %v2152
    %2366 = vst.msk [vmem:[%s2353 + $0xd0] sm:$0xff] %vm2173, %v2153
    %2367 = vst.msk [vmem:[%s2353 + $0xe0] sm:$0xff] %vm2173, %v2154
    %2368 = vst.msk [vmem:[%s2353 + $0xf0] sm:$0xff] %vm2173, %v2155
    %2369 = vst.msk [vmem:[%s2353 + $0x100] sm:$0xff] %vm2173, %v2156
    %s2370 = scalar_lea.vmem [#allocation2], 16
    %2371 = vst.msk [vmem:[%s2370 + $0x1] sm:$0xff] %vm2173, %v2157
    %2372 = vst.msk [vmem:[%s2370 + $0x11] sm:$0xff] %vm2173, %v2158
    %2373 = vst.msk [vmem:[%s2370 + $0x21] sm:$0xff] %vm2173, %v2159
    %2374 = vst.msk [vmem:[%s2370 + $0x31] sm:$0xff] %vm2173, %v2160
    %2375 = vst.msk [vmem:[%s2370 + $0x41] sm:$0xff] %vm2173, %v2161
    %2376 = vst.msk [vmem:[%s2370 + $0x51] sm:$0xff] %vm2173, %v2162
    %2377 = vst.msk [vmem:[%s2370 + $0x61] sm:$0xff] %vm2173, %v2163
    %2378 = vst.msk [vmem:[%s2370 + $0x71] sm:$0xff] %vm2173, %v2164
    %2379 = vst.msk [vmem:[%s2370 + $0x91] sm:$0xff] %vm2173, %v2165
    %2380 = vst.msk [vmem:[%s2370 + $0xa1] sm:$0xff] %vm2173, %v2166
    %2381 = vst.msk [vmem:[%s2370 + $0xb1] sm:$0xff] %vm2173, %v2167
    %2382 = vst.msk [vmem:[%s2370 + $0xc1] sm:$0xff] %vm2173, %v2168
    %2383 = vst.msk [vmem:[%s2370 + $0xd1] sm:$0xff] %vm2173, %v2169
    %2384 = vst.msk [vmem:[%s2370 + $0xe1] sm:$0xff] %vm2173, %v2170
    %2385 = vst.msk [vmem:[%s2370 + $0xf1] sm:$0xff] %vm2173, %v2171
    %2386 = vst.msk [vmem:[%s2370 + $0x101] sm:$0xff] %vm2173, %v2172
    %v2387 = vld [vmem:[#allocation2] sm:$0xff]
    %v2388 = vld [vmem:[#allocation2 + $0x10] sm:$0xff]
    %v2389 = vld [vmem:[#allocation2 + $0x20] sm:$0xff]
    %v2390 = vld [vmem:[#allocation2 + $0x30] sm:$0xff]
    %v2391 = vld [vmem:[#allocation2 + $0x40] sm:$0xff]
    %v2392 = vld [vmem:[#allocation2 + $0x50] sm:$0xff]
    %v2393 = vld [vmem:[#allocation2 + $0x60] sm:$0xff]
    %v2394 = vld [vmem:[#allocation2 + $0x70] sm:$0xff]
    %v2395 = vld [vmem:[#allocation2 + $0x90] sm:$0xff]
    %v2396 = vld [vmem:[#allocation2 + $0xa0] sm:$0xff]
    %v2397 = vld [vmem:[#allocation2 + $0xb0] sm:$0xff]
    %v2398 = vld [vmem:[#allocation2 + $0xc0] sm:$0xff]
    %v2399 = vld [vmem:[#allocation2 + $0xd0] sm:$0xff]
    %v2400 = vld [vmem:[#allocation2 + $0xe0] sm:$0xff]
    %v2401 = vld [vmem:[#allocation2 + $0xf0] sm:$0xff]
    %v2402 = vld [vmem:[#allocation2 + $0x100] sm:$0xff]
    %2403 = vst.msk [vmem:[#allocation3] sm:$0xff] %vm2173, %v2387
    %2404 = vst.msk [vmem:[#allocation3 + $0x18] sm:$0xff] %vm2173, %v2388
    %2405 = vst.msk [vmem:[#allocation3 + $0x30] sm:$0xff] %vm2173, %v2389
    %2406 = vst.msk [vmem:[#allocation3 + $0x48] sm:$0xff] %vm2173, %v2390
    %2407 = vst.msk [vmem:[#allocation3 + $0x60] sm:$0xff] %vm2173, %v2391
    %2408 = vst.msk [vmem:[#allocation3 + $0x78] sm:$0xff] %vm2173, %v2392
    %2409 = vst.msk [vmem:[#allocation3 + $0x90] sm:$0xff] %vm2173, %v2393
    %2410 = vst.msk [vmem:[#allocation3 + $0xa8] sm:$0xff] %vm2173, %v2394
    %2411 = vst.msk [vmem:[#allocation3 + $0xc0] sm:$0xff] %vm2173, %v2395
    %2412 = vst.msk [vmem:[#allocation3 + $0xd8] sm:$0xff] %vm2173, %v2396
    %2413 = vst.msk [vmem:[#allocation3 + $0xf0] sm:$0xff] %vm2173, %v2397
    %2414 = vst.msk [vmem:[#allocation3 + $0x108] sm:$0xff] %vm2173, %v2398
    %2415 = vst.msk [vmem:[#allocation3 + $0x120] sm:$0xff] %vm2173, %v2399
    %2416 = vst.msk [vmem:[#allocation3 + $0x138] sm:$0xff] %vm2173, %v2400
    %2417 = vst.msk [vmem:[#allocation3 + $0x150] sm:$0xff] %vm2173, %v2401
    %2418 = vst.msk [vmem:[#allocation3 + $0x168] sm:$0xff] %vm2173, %v2402
    %s2419 = scalar_lea.vmem [#allocation2], 288
    %v2420 = vld [vmem:[%s2419] sm:$0xff]
    %v2421 = vld [vmem:[%s2419 + $0x10] sm:$0xff]
    %v2422 = vld [vmem:[%s2419 + $0x20] sm:$0xff]
    %v2423 = vld [vmem:[%s2419 + $0x30] sm:$0xff]
    %v2424 = vld [vmem:[%s2419 + $0x40] sm:$0xff]
    %v2425 = vld [vmem:[%s2419 + $0x50] sm:$0xff]
    %v2426 = vld [vmem:[%s2419 + $0x60] sm:$0xff]
    %v2427 = vld [vmem:[%s2419 + $0x70] sm:$0xff]
    %v2428 = vld [vmem:[%s2419 + $0x90] sm:$0xff]
    %v2429 = vld [vmem:[%s2419 + $0xa0] sm:$0xff]
    %v2430 = vld [vmem:[%s2419 + $0xb0] sm:$0xff]
    %v2431 = vld [vmem:[%s2419 + $0xc0] sm:$0xff]
    %v2432 = vld [vmem:[%s2419 + $0xd0] sm:$0xff]
    %v2433 = vld [vmem:[%s2419 + $0xe0] sm:$0xff]
    %v2434 = vld [vmem:[%s2419 + $0xf0] sm:$0xff]
    %v2435 = vld [vmem:[%s2419 + $0x100] sm:$0xff]
    %2452 = vrot.lane.b32.xlu0 %v2420, 32
    %v2453 = vpop.permute.xlu0 %2452
    %2454 = vrot.lane.b32.xlu0 %v2421, 32
    %v2455 = vpop.permute.xlu0 %2454
    %2456 = vrot.lane.b32.xlu0 %v2422, 32
    %v2457 = vpop.permute.xlu0 %2456
    %2458 = vrot.lane.b32.xlu0 %v2423, 32
    %v2459 = vpop.permute.xlu0 %2458
    %2460 = vrot.lane.b32.xlu0 %v2424, 32
    %v2461 = vpop.permute.xlu0 %2460
    %2462 = vrot.lane.b32.xlu0 %v2425, 32
    %v2463 = vpop.permute.xlu0 %2462
    %2464 = vrot.lane.b32.xlu0 %v2426, 32
    %v2465 = vpop.permute.xlu0 %2464
    %2466 = vrot.lane.b32.xlu0 %v2427, 32
    %v2467 = vpop.permute.xlu0 %2466
    %2468 = vrot.lane.b32.xlu0 %v2428, 32
    %v2469 = vpop.permute.xlu0 %2468
    %2470 = vrot.lane.b32.xlu0 %v2429, 32
    %v2471 = vpop.permute.xlu0 %2470
    %2472 = vrot.lane.b32.xlu0 %v2430, 32
    %v2473 = vpop.permute.xlu0 %2472
    %2474 = vrot.lane.b32.xlu0 %v2431, 32
    %v2475 = vpop.permute.xlu0 %2474
    %2476 = vrot.lane.b32.xlu0 %v2432, 32
    %v2477 = vpop.permute.xlu0 %2476
    %2478 = vrot.lane.b32.xlu0 %v2433, 32
    %v2479 = vpop.permute.xlu0 %2478
    %2480 = vrot.lane.b32.xlu0 %v2434, 32
    %v2481 = vpop.permute.xlu0 %2480
    %2482 = vrot.lane.b32.xlu0 %v2435, 32
    %v2483 = vpop.permute.xlu0 %2482
    %vm2500 = vcmask 523520
    %2501 = vst.msk [vmem:[#allocation3] sm:$0xff] %vm2500, %v2453
    %2502 = vst.msk [vmem:[#allocation3 + $0x18] sm:$0xff] %vm2500, %v2455
    %2503 = vst.msk [vmem:[#allocation3 + $0x30] sm:$0xff] %vm2500, %v2457
    %2504 = vst.msk [vmem:[#allocation3 + $0x48] sm:$0xff] %vm2500, %v2459
    %2505 = vst.msk [vmem:[#allocation3 + $0x60] sm:$0xff] %vm2500, %v2461
    %2506 = vst.msk [vmem:[#allocation3 + $0x78] sm:$0xff] %vm2500, %v2463
    %2507 = vst.msk [vmem:[#allocation3 + $0x90] sm:$0xff] %vm2500, %v2465
    %2508 = vst.msk [vmem:[#allocation3 + $0xa8] sm:$0xff] %vm2500, %v2467
    %2509 = vst.msk [vmem:[#allocation3 + $0xc0] sm:$0xff] %vm2500, %v2469
    %2510 = vst.msk [vmem:[#allocation3 + $0xd8] sm:$0xff] %vm2500, %v2471
    %2511 = vst.msk [vmem:[#allocation3 + $0xf0] sm:$0xff] %vm2500, %v2473
    %2512 = vst.msk [vmem:[#allocation3 + $0x108] sm:$0xff] %vm2500, %v2475
    %2513 = vst.msk [vmem:[#allocation3 + $0x120] sm:$0xff] %vm2500, %v2477
    %2514 = vst.msk [vmem:[#allocation3 + $0x138] sm:$0xff] %vm2500, %v2479
    %2515 = vst.msk [vmem:[#allocation3 + $0x150] sm:$0xff] %vm2500, %v2481
    %2516 = vst.msk [vmem:[#allocation3 + $0x168] sm:$0xff] %vm2500, %v2483
    %v2517 = vld [vmem:[#allocation2 + $0x1] sm:$0xff]
    %v2518 = vld [vmem:[#allocation2 + $0x11] sm:$0xff]
    %v2519 = vld [vmem:[#allocation2 + $0x21] sm:$0xff]
    %v2520 = vld [vmem:[#allocation2 + $0x31] sm:$0xff]
    %v2521 = vld [vmem:[#allocation2 + $0x41] sm:$0xff]
    %v2522 = vld [vmem:[#allocation2 + $0x51] sm:$0xff]
    %v2523 = vld [vmem:[#allocation2 + $0x61] sm:$0xff]
    %v2524 = vld [vmem:[#allocation2 + $0x71] sm:$0xff]
    %v2525 = vld [vmem:[#allocation2 + $0x91] sm:$0xff]
    %v2526 = vld [vmem:[#allocation2 + $0xa1] sm:$0xff]
    %v2527 = vld [vmem:[#allocation2 + $0xb1] sm:$0xff]
    %v2528 = vld [vmem:[#allocation2 + $0xc1] sm:$0xff]
    %v2529 = vld [vmem:[#allocation2 + $0xd1] sm:$0xff]
    %v2530 = vld [vmem:[#allocation2 + $0xe1] sm:$0xff]
    %v2531 = vld [vmem:[#allocation2 + $0xf1] sm:$0xff]
    %v2532 = vld [vmem:[#allocation2 + $0x101] sm:$0xff]
    %2549 = vrot.lane.b32.xlu0 %v2517, 64
    %v2550 = vpop.permute.xlu0 %2549
    %2551 = vrot.lane.b32.xlu0 %v2518, 64
    %v2552 = vpop.permute.xlu0 %2551
    %2553 = vrot.lane.b32.xlu0 %v2519, 64
    %v2554 = vpop.permute.xlu0 %2553
    %2555 = vrot.lane.b32.xlu0 %v2520, 64
    %v2556 = vpop.permute.xlu0 %2555
    %2557 = vrot.lane.b32.xlu0 %v2521, 64
    %v2558 = vpop.permute.xlu0 %2557
    %2559 = vrot.lane.b32.xlu0 %v2522, 64
    %v2560 = vpop.permute.xlu0 %2559
    %2561 = vrot.lane.b32.xlu0 %v2523, 64
    %v2562 = vpop.permute.xlu0 %2561
    %2563 = vrot.lane.b32.xlu0 %v2524, 64
    %v2564 = vpop.permute.xlu0 %2563
    %2565 = vrot.lane.b32.xlu0 %v2525, 64
    %v2566 = vpop.permute.xlu0 %2565
    %2567 = vrot.lane.b32.xlu0 %v2526, 64
    %v2568 = vpop.permute.xlu0 %2567
    %2569 = vrot.lane.b32.xlu0 %v2527, 64
    %v2570 = vpop.permute.xlu0 %2569
    %2571 = vrot.lane.b32.xlu0 %v2528, 64
    %v2572 = vpop.permute.xlu0 %2571
    %2573 = vrot.lane.b32.xlu0 %v2529, 64
    %v2574 = vpop.permute.xlu0 %2573
    %2575 = vrot.lane.b32.xlu0 %v2530, 64
    %v2576 = vpop.permute.xlu0 %2575
    %2577 = vrot.lane.b32.xlu0 %v2531, 64
    %v2578 = vpop.permute.xlu0 %2577
    %2579 = vrot.lane.b32.xlu0 %v2532, 64
    %v2580 = vpop.permute.xlu0 %2579
    %vm2597 = vcmask 785920
    %2598 = vst.msk [vmem:[#allocation3] sm:$0xff] %vm2597, %v2550
    %2599 = vst.msk [vmem:[#allocation3 + $0x18] sm:$0xff] %vm2597, %v2552
    %2600 = vst.msk [vmem:[#allocation3 + $0x30] sm:$0xff] %vm2597, %v2554
    %2601 = vst.msk [vmem:[#allocation3 + $0x48] sm:$0xff] %vm2597, %v2556
    %2602 = vst.msk [vmem:[#allocation3 + $0x60] sm:$0xff] %vm2597, %v2558
    %2603 = vst.msk [vmem:[#allocation3 + $0x78] sm:$0xff] %vm2597, %v2560
    %2604 = vst.msk [vmem:[#allocation3 + $0x90] sm:$0xff] %vm2597, %v2562
    %2605 = vst.msk [vmem:[#allocation3 + $0xa8] sm:$0xff] %vm2597, %v2564
    %2606 = vst.msk [vmem:[#allocation3 + $0xc0] sm:$0xff] %vm2597, %v2566
    %2607 = vst.msk [vmem:[#allocation3 + $0xd8] sm:$0xff] %vm2597, %v2568
    %2608 = vst.msk [vmem:[#allocation3 + $0xf0] sm:$0xff] %vm2597, %v2570
    %2609 = vst.msk [vmem:[#allocation3 + $0x108] sm:$0xff] %vm2597, %v2572
    %2610 = vst.msk [vmem:[#allocation3 + $0x120] sm:$0xff] %vm2597, %v2574
    %2611 = vst.msk [vmem:[#allocation3 + $0x138] sm:$0xff] %vm2597, %v2576
    %2612 = vst.msk [vmem:[#allocation3 + $0x150] sm:$0xff] %vm2597, %v2578
    %2613 = vst.msk [vmem:[#allocation3 + $0x168] sm:$0xff] %vm2597, %v2580
    %v2614 = vld [vmem:[%s2336] sm:$0xff]
    %v2615 = vld [vmem:[%s2336 + $0x10] sm:$0xff]
    %v2616 = vld [vmem:[%s2336 + $0x20] sm:$0xff]
    %v2617 = vld [vmem:[%s2336 + $0x30] sm:$0xff]
    %v2618 = vld [vmem:[%s2336 + $0x40] sm:$0xff]
    %v2619 = vld [vmem:[%s2336 + $0x50] sm:$0xff]
    %v2620 = vld [vmem:[%s2336 + $0x60] sm:$0xff]
    %v2621 = vld [vmem:[%s2336 + $0x70] sm:$0xff]
    %v2622 = vld [vmem:[%s2336 + $0x90] sm:$0xff]
    %v2623 = vld [vmem:[%s2336 + $0xa0] sm:$0xff]
    %v2624 = vld [vmem:[%s2336 + $0xb0] sm:$0xff]
    %v2625 = vld [vmem:[%s2336 + $0xc0] sm:$0xff]
    %v2626 = vld [vmem:[%s2336 + $0xd0] sm:$0xff]
    %v2627 = vld [vmem:[%s2336 + $0xe0] sm:$0xff]
    %v2628 = vld [vmem:[%s2336 + $0xf0] sm:$0xff]
    %v2629 = vld [vmem:[%s2336 + $0x100] sm:$0xff]
    %2646 = vrot.lane.b32.xlu0 %v2614, 96
    %v2647 = vpop.permute.xlu0 %2646
    %2648 = vrot.lane.b32.xlu0 %v2615, 96
    %v2649 = vpop.permute.xlu0 %2648
    %2650 = vrot.lane.b32.xlu0 %v2616, 96
    %v2651 = vpop.permute.xlu0 %2650
    %2652 = vrot.lane.b32.xlu0 %v2617, 96
    %v2653 = vpop.permute.xlu0 %2652
    %2654 = vrot.lane.b32.xlu0 %v2618, 96
    %v2655 = vpop.permute.xlu0 %2654
    %2656 = vrot.lane.b32.xlu0 %v2619, 96
    %v2657 = vpop.permute.xlu0 %2656
    %2658 = vrot.lane.b32.xlu0 %v2620, 96
    %v2659 = vpop.permute.xlu0 %2658
    %2660 = vrot.lane.b32.xlu0 %v2621, 96
    %v2661 = vpop.permute.xlu0 %2660
    %2662 = vrot.lane.b32.xlu0 %v2622, 96
    %v2663 = vpop.permute.xlu0 %2662
    %2664 = vrot.lane.b32.xlu0 %v2623, 96
    %v2665 = vpop.permute.xlu0 %2664
    %2666 = vrot.lane.b32.xlu0 %v2624, 96
    %v2667 = vpop.permute.xlu0 %2666
    %2668 = vrot.lane.b32.xlu0 %v2625, 96
    %v2669 = vpop.permute.xlu0 %2668
    %2670 = vrot.lane.b32.xlu0 %v2626, 96
    %v2671 = vpop.permute.xlu0 %2670
    %2672 = vrot.lane.b32.xlu0 %v2627, 96
    %v2673 = vpop.permute.xlu0 %2672
    %2674 = vrot.lane.b32.xlu0 %v2628, 96
    %v2675 = vpop.permute.xlu0 %2674
    %2676 = vrot.lane.b32.xlu0 %v2629, 96
    %v2677 = vpop.permute.xlu0 %2676
    %vm2694 = vcmask 1048320
    %2695 = vst.msk [vmem:[#allocation3] sm:$0xff] %vm2694, %v2647
    %2696 = vst.msk [vmem:[#allocation3 + $0x18] sm:$0xff] %vm2694, %v2649
    %2697 = vst.msk [vmem:[#allocation3 + $0x30] sm:$0xff] %vm2694, %v2651
    %2698 = vst.msk [vmem:[#allocation3 + $0x48] sm:$0xff] %vm2694, %v2653
    %2699 = vst.msk [vmem:[#allocation3 + $0x60] sm:$0xff] %vm2694, %v2655
    %2700 = vst.msk [vmem:[#allocation3 + $0x78] sm:$0xff] %vm2694, %v2657
    %2701 = vst.msk [vmem:[#allocation3 + $0x90] sm:$0xff] %vm2694, %v2659
    %2702 = vst.msk [vmem:[#allocation3 + $0xa8] sm:$0xff] %vm2694, %v2661
    %2703 = vst.msk [vmem:[#allocation3 + $0xc0] sm:$0xff] %vm2694, %v2663
    %2704 = vst.msk [vmem:[#allocation3 + $0xd8] sm:$0xff] %vm2694, %v2665
    %2705 = vst.msk [vmem:[#allocation3 + $0xf0] sm:$0xff] %vm2694, %v2667
    %2706 = vst.msk [vmem:[#allocation3 + $0x108] sm:$0xff] %vm2694, %v2669
    %2707 = vst.msk [vmem:[#allocation3 + $0x120] sm:$0xff] %vm2694, %v2671
    %2708 = vst.msk [vmem:[#allocation3 + $0x138] sm:$0xff] %vm2694, %v2673
    %2709 = vst.msk [vmem:[#allocation3 + $0x150] sm:$0xff] %vm2694, %v2675
    %2710 = vst.msk [vmem:[#allocation3 + $0x168] sm:$0xff] %vm2694, %v2677
    %v2711 = vld [vmem:[%s2319] sm:$0xff]
    %v2712 = vld [vmem:[%s2319 + $0x10] sm:$0xff]
    %v2713 = vld [vmem:[%s2319 + $0x20] sm:$0xff]
    %v2714 = vld [vmem:[%s2319 + $0x30] sm:$0xff]
    %v2715 = vld [vmem:[%s2319 + $0x40] sm:$0xff]
    %v2716 = vld [vmem:[%s2319 + $0x50] sm:$0xff]
    %v2717 = vld [vmem:[%s2319 + $0x60] sm:$0xff]
    %v2718 = vld [vmem:[%s2319 + $0x70] sm:$0xff]
    %v2719 = vld [vmem:[%s2319 + $0x90] sm:$0xff]
    %v2720 = vld [vmem:[%s2319 + $0xa0] sm:$0xff]
    %v2721 = vld [vmem:[%s2319 + $0xb0] sm:$0xff]
    %v2722 = vld [vmem:[%s2319 + $0xc0] sm:$0xff]
    %v2723 = vld [vmem:[%s2319 + $0xd0] sm:$0xff]
    %v2724 = vld [vmem:[%s2319 + $0xe0] sm:$0xff]
    %v2725 = vld [vmem:[%s2319 + $0xf0] sm:$0xff]
    %v2726 = vld [vmem:[%s2319 + $0x100] sm:$0xff]
    %2727 = vst.msk [vmem:[#allocation3 + $0x8] sm:$0xff] %vm2173, %v2711
    %2728 = vst.msk [vmem:[#allocation3 + $0x20] sm:$0xff] %vm2173, %v2712
    %2729 = vst.msk [vmem:[#allocation3 + $0x38] sm:$0xff] %vm2173, %v2713
    %2730 = vst.msk [vmem:[#allocation3 + $0x50] sm:$0xff] %vm2173, %v2714
    %2731 = vst.msk [vmem:[#allocation3 + $0x68] sm:$0xff] %vm2173, %v2715
    %2732 = vst.msk [vmem:[#allocation3 + $0x80] sm:$0xff] %vm2173, %v2716
    %2733 = vst.msk [vmem:[#allocation3 + $0x98] sm:$0xff] %vm2173, %v2717
    %2734 = vst.msk [vmem:[#allocation3 + $0xb0] sm:$0xff] %vm2173, %v2718
    %2735 = vst.msk [vmem:[#allocation3 + $0xc8] sm:$0xff] %vm2173, %v2719
    %2736 = vst.msk [vmem:[#allocation3 + $0xe0] sm:$0xff] %vm2173, %v2720
    %2737 = vst.msk [vmem:[#allocation3 + $0xf8] sm:$0xff] %vm2173, %v2721
    %2738 = vst.msk [vmem:[#allocation3 + $0x110] sm:$0xff] %vm2173, %v2722
    %2739 = vst.msk [vmem:[#allocation3 + $0x128] sm:$0xff] %vm2173, %v2723
    %2740 = vst.msk [vmem:[#allocation3 + $0x140] sm:$0xff] %vm2173, %v2724
    %2741 = vst.msk [vmem:[#allocation3 + $0x158] sm:$0xff] %vm2173, %v2725
    %2742 = vst.msk [vmem:[#allocation3 + $0x170] sm:$0xff] %vm2173, %v2726
    %v2743 = vld [vmem:[%s2336 + $0x1] sm:$0xff]
    %v2744 = vld [vmem:[%s2336 + $0x11] sm:$0xff]
    %v2745 = vld [vmem:[%s2336 + $0x21] sm:$0xff]
    %v2746 = vld [vmem:[%s2336 + $0x31] sm:$0xff]
    %v2747 = vld [vmem:[%s2336 + $0x41] sm:$0xff]
    %v2748 = vld [vmem:[%s2336 + $0x51] sm:$0xff]
    %v2749 = vld [vmem:[%s2336 + $0x61] sm:$0xff]
    %v2750 = vld [vmem:[%s2336 + $0x71] sm:$0xff]
    %v2751 = vld [vmem:[%s2336 + $0x91] sm:$0xff]
    %v2752 = vld [vmem:[%s2336 + $0xa1] sm:$0xff]
    %v2753 = vld [vmem:[%s2336 + $0xb1] sm:$0xff]
    %v2754 = vld [vmem:[%s2336 + $0xc1] sm:$0xff]
    %v2755 = vld [vmem:[%s2336 + $0xd1] sm:$0xff]
    %v2756 = vld [vmem:[%s2336 + $0xe1] sm:$0xff]
    %v2757 = vld [vmem:[%s2336 + $0xf1] sm:$0xff]
    %v2758 = vld [vmem:[%s2336 + $0x101] sm:$0xff]
    %2775 = vrot.lane.b32.xlu0 %v2743, 32
    %v2776 = vpop.permute.xlu0 %2775
    %2777 = vrot.lane.b32.xlu0 %v2744, 32
    %v2778 = vpop.permute.xlu0 %2777
    %2779 = vrot.lane.b32.xlu0 %v2745, 32
    %v2780 = vpop.permute.xlu0 %2779
    %2781 = vrot.lane.b32.xlu0 %v2746, 32
    %v2782 = vpop.permute.xlu0 %2781
    %2783 = vrot.lane.b32.xlu0 %v2747, 32
    %v2784 = vpop.permute.xlu0 %2783
    %2785 = vrot.lane.b32.xlu0 %v2748, 32
    %v2786 = vpop.permute.xlu0 %2785
    %2787 = vrot.lane.b32.xlu0 %v2749, 32
    %v2788 = vpop.permute.xlu0 %2787
    %2789 = vrot.lane.b32.xlu0 %v2750, 32
    %v2790 = vpop.permute.xlu0 %2789
    %2791 = vrot.lane.b32.xlu0 %v2751, 32
    %v2792 = vpop.permute.xlu0 %2791
    %2793 = vrot.lane.b32.xlu0 %v2752, 32
    %v2794 = vpop.permute.xlu0 %2793
    %2795 = vrot.lane.b32.xlu0 %v2753, 32
    %v2796 = vpop.permute.xlu0 %2795
    %2797 = vrot.lane.b32.xlu0 %v2754, 32
    %v2798 = vpop.permute.xlu0 %2797
    %2799 = vrot.lane.b32.xlu0 %v2755, 32
    %v2800 = vpop.permute.xlu0 %2799
    %2801 = vrot.lane.b32.xlu0 %v2756, 32
    %v2802 = vpop.permute.xlu0 %2801
    %2803 = vrot.lane.b32.xlu0 %v2757, 32
    %v2804 = vpop.permute.xlu0 %2803
    %2805 = vrot.lane.b32.xlu0 %v2758, 32
    %v2806 = vpop.permute.xlu0 %2805
    %2823 = vst.msk [vmem:[#allocation3 + $0x8] sm:$0xff] %vm2500, %v2776
    %2824 = vst.msk [vmem:[#allocation3 + $0x20] sm:$0xff] %vm2500, %v2778
    %2825 = vst.msk [vmem:[#allocation3 + $0x38] sm:$0xff] %vm2500, %v2780
    %2826 = vst.msk [vmem:[#allocation3 + $0x50] sm:$0xff] %vm2500, %v2782
    %2827 = vst.msk [vmem:[#allocation3 + $0x68] sm:$0xff] %vm2500, %v2784
    %2828 = vst.msk [vmem:[#allocation3 + $0x80] sm:$0xff] %vm2500, %v2786
    %2829 = vst.msk [vmem:[#allocation3 + $0x98] sm:$0xff] %vm2500, %v2788
    %2830 = vst.msk [vmem:[#allocation3 + $0xb0] sm:$0xff] %vm2500, %v2790
    %2831 = vst.msk [vmem:[#allocation3 + $0xc8] sm:$0xff] %vm2500, %v2792
    %2832 = vst.msk [vmem:[#allocation3 + $0xe0] sm:$0xff] %vm2500, %v2794
    %2833 = vst.msk [vmem:[#allocation3 + $0xf8] sm:$0xff] %vm2500, %v2796
    %2834 = vst.msk [vmem:[#allocation3 + $0x110] sm:$0xff] %vm2500, %v2798
    %2835 = vst.msk [vmem:[#allocation3 + $0x128] sm:$0xff] %vm2500, %v2800
    %2836 = vst.msk [vmem:[#allocation3 + $0x140] sm:$0xff] %vm2500, %v2802
    %2837 = vst.msk [vmem:[#allocation3 + $0x158] sm:$0xff] %vm2500, %v2804
    %2838 = vst.msk [vmem:[#allocation3 + $0x170] sm:$0xff] %vm2500, %v2806
    %v2839 = vld [vmem:[%s2370] sm:$0xff]
    %v2840 = vld [vmem:[%s2370 + $0x10] sm:$0xff]
    %v2841 = vld [vmem:[%s2370 + $0x20] sm:$0xff]
    %v2842 = vld [vmem:[%s2370 + $0x30] sm:$0xff]
    %v2843 = vld [vmem:[%s2370 + $0x40] sm:$0xff]
    %v2844 = vld [vmem:[%s2370 + $0x50] sm:$0xff]
    %v2845 = vld [vmem:[%s2370 + $0x60] sm:$0xff]
    %v2846 = vld [vmem:[%s2370 + $0x70] sm:$0xff]
    %v2847 = vld [vmem:[%s2370 + $0x90] sm:$0xff]
    %v2848 = vld [vmem:[%s2370 + $0xa0] sm:$0xff]
    %v2849 = vld [vmem:[%s2370 + $0xb0] sm:$0xff]
    %v2850 = vld [vmem:[%s2370 + $0xc0] sm:$0xff]
    %v2851 = vld [vmem:[%s2370 + $0xd0] sm:$0xff]
    %v2852 = vld [vmem:[%s2370 + $0xe0] sm:$0xff]
    %v2853 = vld [vmem:[%s2370 + $0xf0] sm:$0xff]
    %v2854 = vld [vmem:[%s2370 + $0x100] sm:$0xff]
    %2871 = vrot.lane.b32.xlu0 %v2839, 64
    %v2872 = vpop.permute.xlu0 %2871
    %2873 = vrot.lane.b32.xlu0 %v2840, 64
    %v2874 = vpop.permute.xlu0 %2873
    %2875 = vrot.lane.b32.xlu0 %v2841, 64
    %v2876 = vpop.permute.xlu0 %2875
    %2877 = vrot.lane.b32.xlu0 %v2842, 64
    %v2878 = vpop.permute.xlu0 %2877
    %2879 = vrot.lane.b32.xlu0 %v2843, 64
    %v2880 = vpop.permute.xlu0 %2879
    %2881 = vrot.lane.b32.xlu0 %v2844, 64
    %v2882 = vpop.permute.xlu0 %2881
    %2883 = vrot.lane.b32.xlu0 %v2845, 64
    %v2884 = vpop.permute.xlu0 %2883
    %2885 = vrot.lane.b32.xlu0 %v2846, 64
    %v2886 = vpop.permute.xlu0 %2885
    %2887 = vrot.lane.b32.xlu0 %v2847, 64
    %v2888 = vpop.permute.xlu0 %2887
    %2889 = vrot.lane.b32.xlu0 %v2848, 64
    %v2890 = vpop.permute.xlu0 %2889
    %2891 = vrot.lane.b32.xlu0 %v2849, 64
    %v2892 = vpop.permute.xlu0 %2891
    %2893 = vrot.lane.b32.xlu0 %v2850, 64
    %v2894 = vpop.permute.xlu0 %2893
    %2895 = vrot.lane.b32.xlu0 %v2851, 64
    %v2896 = vpop.permute.xlu0 %2895
    %2897 = vrot.lane.b32.xlu0 %v2852, 64
    %v2898 = vpop.permute.xlu0 %2897
    %2899 = vrot.lane.b32.xlu0 %v2853, 64
    %v2900 = vpop.permute.xlu0 %2899
    %2901 = vrot.lane.b32.xlu0 %v2854, 64
    %v2902 = vpop.permute.xlu0 %2901
    %2919 = vst.msk [vmem:[#allocation3 + $0x8] sm:$0xff] %vm2597, %v2872
    %2920 = vst.msk [vmem:[#allocation3 + $0x20] sm:$0xff] %vm2597, %v2874
    %2921 = vst.msk [vmem:[#allocation3 + $0x38] sm:$0xff] %vm2597, %v2876
    %2922 = vst.msk [vmem:[#allocation3 + $0x50] sm:$0xff] %vm2597, %v2878
    %2923 = vst.msk [vmem:[#allocation3 + $0x68] sm:$0xff] %vm2597, %v2880
    %2924 = vst.msk [vmem:[#allocation3 + $0x80] sm:$0xff] %vm2597, %v2882
    %2925 = vst.msk [vmem:[#allocation3 + $0x98] sm:$0xff] %vm2597, %v2884
    %2926 = vst.msk [vmem:[#allocation3 + $0xb0] sm:$0xff] %vm2597, %v2886
    %2927 = vst.msk [vmem:[#allocation3 + $0xc8] sm:$0xff] %vm2597, %v2888
    %2928 = vst.msk [vmem:[#allocation3 + $0xe0] sm:$0xff] %vm2597, %v2890
    %2929 = vst.msk [vmem:[#allocation3 + $0xf8] sm:$0xff] %vm2597, %v2892
    %2930 = vst.msk [vmem:[#allocation3 + $0x110] sm:$0xff] %vm2597, %v2894
    %2931 = vst.msk [vmem:[#allocation3 + $0x128] sm:$0xff] %vm2597, %v2896
    %2932 = vst.msk [vmem:[#allocation3 + $0x140] sm:$0xff] %vm2597, %v2898
    %2933 = vst.msk [vmem:[#allocation3 + $0x158] sm:$0xff] %vm2597, %v2900
    %2934 = vst.msk [vmem:[#allocation3 + $0x170] sm:$0xff] %vm2597, %v2902
    %v2935 = vld [vmem:[%s2353] sm:$0xff]
    %v2936 = vld [vmem:[%s2353 + $0x10] sm:$0xff]
    %v2937 = vld [vmem:[%s2353 + $0x20] sm:$0xff]
    %v2938 = vld [vmem:[%s2353 + $0x30] sm:$0xff]
    %v2939 = vld [vmem:[%s2353 + $0x40] sm:$0xff]
    %v2940 = vld [vmem:[%s2353 + $0x50] sm:$0xff]
    %v2941 = vld [vmem:[%s2353 + $0x60] sm:$0xff]
    %v2942 = vld [vmem:[%s2353 + $0x70] sm:$0xff]
    %v2943 = vld [vmem:[%s2353 + $0x90] sm:$0xff]
    %v2944 = vld [vmem:[%s2353 + $0xa0] sm:$0xff]
    %v2945 = vld [vmem:[%s2353 + $0xb0] sm:$0xff]
    %v2946 = vld [vmem:[%s2353 + $0xc0] sm:$0xff]
    %v2947 = vld [vmem:[%s2353 + $0xd0] sm:$0xff]
    %v2948 = vld [vmem:[%s2353 + $0xe0] sm:$0xff]
    %v2949 = vld [vmem:[%s2353 + $0xf0] sm:$0xff]
    %v2950 = vld [vmem:[%s2353 + $0x100] sm:$0xff]
    %2967 = vrot.lane.b32.xlu0 %v2935, 96
    %v2968 = vpop.permute.xlu0 %2967
    %2969 = vrot.lane.b32.xlu0 %v2936, 96
    %v2970 = vpop.permute.xlu0 %2969
    %2971 = vrot.lane.b32.xlu0 %v2937, 96
    %v2972 = vpop.permute.xlu0 %2971
    %2973 = vrot.lane.b32.xlu0 %v2938, 96
    %v2974 = vpop.permute.xlu0 %2973
    %2975 = vrot.lane.b32.xlu0 %v2939, 96
    %v2976 = vpop.permute.xlu0 %2975
    %2977 = vrot.lane.b32.xlu0 %v2940, 96
    %v2978 = vpop.permute.xlu0 %2977
    %2979 = vrot.lane.b32.xlu0 %v2941, 96
    %v2980 = vpop.permute.xlu0 %2979
    %2981 = vrot.lane.b32.xlu0 %v2942, 96
    %v2982 = vpop.permute.xlu0 %2981
    %2983 = vrot.lane.b32.xlu0 %v2943, 96
    %v2984 = vpop.permute.xlu0 %2983
    %2985 = vrot.lane.b32.xlu0 %v2944, 96
    %v2986 = vpop.permute.xlu0 %2985
    %2987 = vrot.lane.b32.xlu0 %v2945, 96
    %v2988 = vpop.permute.xlu0 %2987
    %2989 = vrot.lane.b32.xlu0 %v2946, 96
    %v2990 = vpop.permute.xlu0 %2989
    %2991 = vrot.lane.b32.xlu0 %v2947, 96
    %v2992 = vpop.permute.xlu0 %2991
    %2993 = vrot.lane.b32.xlu0 %v2948, 96
    %v2994 = vpop.permute.xlu0 %2993
    %2995 = vrot.lane.b32.xlu0 %v2949, 96
    %v2996 = vpop.permute.xlu0 %2995
    %2997 = vrot.lane.b32.xlu0 %v2950, 96
    %v2998 = vpop.permute.xlu0 %2997
    %3015 = vst.msk [vmem:[#allocation3 + $0x8] sm:$0xff] %vm2694, %v2968
    %3016 = vst.msk [vmem:[#allocation3 + $0x20] sm:$0xff] %vm2694, %v2970
    %3017 = vst.msk [vmem:[#allocation3 + $0x38] sm:$0xff] %vm2694, %v2972
    %3018 = vst.msk [vmem:[#allocation3 + $0x50] sm:$0xff] %vm2694, %v2974
    %3019 = vst.msk [vmem:[#allocation3 + $0x68] sm:$0xff] %vm2694, %v2976
    %3020 = vst.msk [vmem:[#allocation3 + $0x80] sm:$0xff] %vm2694, %v2978
    %3021 = vst.msk [vmem:[#allocation3 + $0x98] sm:$0xff] %vm2694, %v2980
    %3022 = vst.msk [vmem:[#allocation3 + $0xb0] sm:$0xff] %vm2694, %v2982
    %3023 = vst.msk [vmem:[#allocation3 + $0xc8] sm:$0xff] %vm2694, %v2984
    %3024 = vst.msk [vmem:[#allocation3 + $0xe0] sm:$0xff] %vm2694, %v2986
    %3025 = vst.msk [vmem:[#allocation3 + $0xf8] sm:$0xff] %vm2694, %v2988
    %3026 = vst.msk [vmem:[#allocation3 + $0x110] sm:$0xff] %vm2694, %v2990
    %3027 = vst.msk [vmem:[#allocation3 + $0x128] sm:$0xff] %vm2694, %v2992
    %3028 = vst.msk [vmem:[#allocation3 + $0x140] sm:$0xff] %vm2694, %v2994
    %3029 = vst.msk [vmem:[#allocation3 + $0x158] sm:$0xff] %vm2694, %v2996
    %3030 = vst.msk [vmem:[#allocation3 + $0x170] sm:$0xff] %vm2694, %v2998
    %v3031 = vld [vmem:[%s2370 + $0x1] sm:$0xff]
    %v3032 = vld [vmem:[%s2370 + $0x11] sm:$0xff]
    %v3033 = vld [vmem:[%s2370 + $0x21] sm:$0xff]
    %v3034 = vld [vmem:[%s2370 + $0x31] sm:$0xff]
    %v3035 = vld [vmem:[%s2370 + $0x41] sm:$0xff]
    %v3036 = vld [vmem:[%s2370 + $0x51] sm:$0xff]
    %v3037 = vld [vmem:[%s2370 + $0x61] sm:$0xff]
    %v3038 = vld [vmem:[%s2370 + $0x71] sm:$0xff]
    %v3039 = vld [vmem:[%s2370 + $0x91] sm:$0xff]
    %v3040 = vld [vmem:[%s2370 + $0xa1] sm:$0xff]
    %v3041 = vld [vmem:[%s2370 + $0xb1] sm:$0xff]
    %v3042 = vld [vmem:[%s2370 + $0xc1] sm:$0xff]
    %v3043 = vld [vmem:[%s2370 + $0xd1] sm:$0xff]
    %v3044 = vld [vmem:[%s2370 + $0xe1] sm:$0xff]
    %v3045 = vld [vmem:[%s2370 + $0xf1] sm:$0xff]
    %v3046 = vld [vmem:[%s2370 + $0x101] sm:$0xff]
    %3047 = vst.msk [vmem:[#allocation3 + $0x10] sm:$0xff] %vm2173, %v3031
    %3048 = vst.msk [vmem:[#allocation3 + $0x28] sm:$0xff] %vm2173, %v3032
    %3049 = vst.msk [vmem:[#allocation3 + $0x40] sm:$0xff] %vm2173, %v3033
    %3050 = vst.msk [vmem:[#allocation3 + $0x58] sm:$0xff] %vm2173, %v3034
    %3051 = vst.msk [vmem:[#allocation3 + $0x70] sm:$0xff] %vm2173, %v3035
    %3052 = vst.msk [vmem:[#allocation3 + $0x88] sm:$0xff] %vm2173, %v3036
    %3053 = vst.msk [vmem:[#allocation3 + $0xa0] sm:$0xff] %vm2173, %v3037
    %3054 = vst.msk [vmem:[#allocation3 + $0xb8] sm:$0xff] %vm2173, %v3038
    %3055 = vst.msk [vmem:[#allocation3 + $0xd0] sm:$0xff] %vm2173, %v3039
    %3056 = vst.msk [vmem:[#allocation3 + $0xe8] sm:$0xff] %vm2173, %v3040
    %3057 = vst.msk [vmem:[#allocation3 + $0x100] sm:$0xff] %vm2173, %v3041
    %3058 = vst.msk [vmem:[#allocation3 + $0x118] sm:$0xff] %vm2173, %v3042
    %3059 = vst.msk [vmem:[#allocation3 + $0x130] sm:$0xff] %vm2173, %v3043
    %3060 = vst.msk [vmem:[#allocation3 + $0x148] sm:$0xff] %vm2173, %v3044
    %3061 = vst.msk [vmem:[#allocation3 + $0x160] sm:$0xff] %vm2173, %v3045
    %3062 = vst.msk [vmem:[#allocation3 + $0x178] sm:$0xff] %vm2173, %v3046
    %v3063 = vld [vmem:[%s2419] sm:$0xff]
    %v3064 = vld [vmem:[%s2419 + $0x10] sm:$0xff]
    %v3065 = vld [vmem:[%s2419 + $0x20] sm:$0xff]
    %v3066 = vld [vmem:[%s2419 + $0x30] sm:$0xff]
    %v3067 = vld [vmem:[%s2419 + $0x40] sm:$0xff]
    %v3068 = vld [vmem:[%s2419 + $0x50] sm:$0xff]
    %v3069 = vld [vmem:[%s2419 + $0x60] sm:$0xff]
    %v3070 = vld [vmem:[%s2419 + $0x70] sm:$0xff]
    %v3071 = vld [vmem:[%s2419 + $0x90] sm:$0xff]
    %v3072 = vld [vmem:[%s2419 + $0xa0] sm:$0xff]
    %v3073 = vld [vmem:[%s2419 + $0xb0] sm:$0xff]
    %v3074 = vld [vmem:[%s2419 + $0xc0] sm:$0xff]
    %v3075 = vld [vmem:[%s2419 + $0xd0] sm:$0xff]
    %v3076 = vld [vmem:[%s2419 + $0xe0] sm:$0xff]
    %v3077 = vld [vmem:[%s2419 + $0xf0] sm:$0xff]
    %v3078 = vld [vmem:[%s2419 + $0x100] sm:$0xff]
    %s3079 = scalar_lea.vmem [#allocation3], 384
    %3080 = vst.msk [vmem:[%s3079] sm:$0xff] %vm2173, %v3063
    %3081 = vst.msk [vmem:[%s3079 + $0x18] sm:$0xff] %vm2173, %v3064
    %3082 = vst.msk [vmem:[%s3079 + $0x30] sm:$0xff] %vm2173, %v3065
    %3083 = vst.msk [vmem:[%s3079 + $0x48] sm:$0xff] %vm2173, %v3066
    %3084 = vst.msk [vmem:[%s3079 + $0x60] sm:$0xff] %vm2173, %v3067
    %3085 = vst.msk [vmem:[%s3079 + $0x78] sm:$0xff] %vm2173, %v3068
    %3086 = vst.msk [vmem:[%s3079 + $0x90] sm:$0xff] %vm2173, %v3069
    %3087 = vst.msk [vmem:[%s3079 + $0xa8] sm:$0xff] %vm2173, %v3070
    %3088 = vst.msk [vmem:[%s3079 + $0xc0] sm:$0xff] %vm2173, %v3071
    %3089 = vst.msk [vmem:[%s3079 + $0xd8] sm:$0xff] %vm2173, %v3072
    %3090 = vst.msk [vmem:[%s3079 + $0xf0] sm:$0xff] %vm2173, %v3073
    %3091 = vst.msk [vmem:[%s3079 + $0x108] sm:$0xff] %vm2173, %v3074
    %3092 = vst.msk [vmem:[%s3079 + $0x120] sm:$0xff] %vm2173, %v3075
    %3093 = vst.msk [vmem:[%s3079 + $0x138] sm:$0xff] %vm2173, %v3076
    %3094 = vst.msk [vmem:[%s3079 + $0x150] sm:$0xff] %vm2173, %v3077
    %3095 = vst.msk [vmem:[%s3079 + $0x168] sm:$0xff] %vm2173, %v3078
    %v3096 = vld [vmem:[#allocation2 + $0x1] sm:$0xff]
    %v3097 = vld [vmem:[#allocation2 + $0x11] sm:$0xff]
    %v3098 = vld [vmem:[#allocation2 + $0x21] sm:$0xff]
    %v3099 = vld [vmem:[#allocation2 + $0x31] sm:$0xff]
    %v3100 = vld [vmem:[#allocation2 + $0x41] sm:$0xff]
    %v3101 = vld [vmem:[#allocation2 + $0x51] sm:$0xff]
    %v3102 = vld [vmem:[#allocation2 + $0x61] sm:$0xff]
    %v3103 = vld [vmem:[#allocation2 + $0x71] sm:$0xff]
    %v3104 = vld [vmem:[#allocation2 + $0x91] sm:$0xff]
    %v3105 = vld [vmem:[#allocation2 + $0xa1] sm:$0xff]
    %v3106 = vld [vmem:[#allocation2 + $0xb1] sm:$0xff]
    %v3107 = vld [vmem:[#allocation2 + $0xc1] sm:$0xff]
    %v3108 = vld [vmem:[#allocation2 + $0xd1] sm:$0xff]
    %v3109 = vld [vmem:[#allocation2 + $0xe1] sm:$0xff]
    %v3110 = vld [vmem:[#allocation2 + $0xf1] sm:$0xff]
    %v3111 = vld [vmem:[#allocation2 + $0x101] sm:$0xff]
    %3128 = vrot.lane.b32.xlu0 %v3096, 32
    %v3129 = vpop.permute.xlu0 %3128
    %3130 = vrot.lane.b32.xlu0 %v3097, 32
    %v3131 = vpop.permute.xlu0 %3130
    %3132 = vrot.lane.b32.xlu0 %v3098, 32
    %v3133 = vpop.permute.xlu0 %3132
    %3134 = vrot.lane.b32.xlu0 %v3099, 32
    %v3135 = vpop.permute.xlu0 %3134
    %3136 = vrot.lane.b32.xlu0 %v3100, 32
    %v3137 = vpop.permute.xlu0 %3136
    %3138 = vrot.lane.b32.xlu0 %v3101, 32
    %v3139 = vpop.permute.xlu0 %3138
    %3140 = vrot.lane.b32.xlu0 %v3102, 32
    %v3141 = vpop.permute.xlu0 %3140
    %3142 = vrot.lane.b32.xlu0 %v3103, 32
    %v3143 = vpop.permute.xlu0 %3142
    %3144 = vrot.lane.b32.xlu0 %v3104, 32
    %v3145 = vpop.permute.xlu0 %3144
    %3146 = vrot.lane.b32.xlu0 %v3105, 32
    %v3147 = vpop.permute.xlu0 %3146
    %3148 = vrot.lane.b32.xlu0 %v3106, 32
    %v3149 = vpop.permute.xlu0 %3148
    %3150 = vrot.lane.b32.xlu0 %v3107, 32
    %v3151 = vpop.permute.xlu0 %3150
    %3152 = vrot.lane.b32.xlu0 %v3108, 32
    %v3153 = vpop.permute.xlu0 %3152
    %3154 = vrot.lane.b32.xlu0 %v3109, 32
    %v3155 = vpop.permute.xlu0 %3154
    %3156 = vrot.lane.b32.xlu0 %v3110, 32
    %v3157 = vpop.permute.xlu0 %3156
    %3158 = vrot.lane.b32.xlu0 %v3111, 32
    %v3159 = vpop.permute.xlu0 %3158
    %3176 = vst.msk [vmem:[%s3079] sm:$0xff] %vm2500, %v3129
    %3177 = vst.msk [vmem:[%s3079 + $0x18] sm:$0xff] %vm2500, %v3131
    %3178 = vst.msk [vmem:[%s3079 + $0x30] sm:$0xff] %vm2500, %v3133
    %3179 = vst.msk [vmem:[%s3079 + $0x48] sm:$0xff] %vm2500, %v3135
    %3180 = vst.msk [vmem:[%s3079 + $0x60] sm:$0xff] %vm2500, %v3137
    %3181 = vst.msk [vmem:[%s3079 + $0x78] sm:$0xff] %vm2500, %v3139
    %3182 = vst.msk [vmem:[%s3079 + $0x90] sm:$0xff] %vm2500, %v3141
    %3183 = vst.msk [vmem:[%s3079 + $0xa8] sm:$0xff] %vm2500, %v3143
    %3184 = vst.msk [vmem:[%s3079 + $0xc0] sm:$0xff] %vm2500, %v3145
    %3185 = vst.msk [vmem:[%s3079 + $0xd8] sm:$0xff] %vm2500, %v3147
    %3186 = vst.msk [vmem:[%s3079 + $0xf0] sm:$0xff] %vm2500, %v3149
    %3187 = vst.msk [vmem:[%s3079 + $0x108] sm:$0xff] %vm2500, %v3151
    %3188 = vst.msk [vmem:[%s3079 + $0x120] sm:$0xff] %vm2500, %v3153
    %3189 = vst.msk [vmem:[%s3079 + $0x138] sm:$0xff] %vm2500, %v3155
    %3190 = vst.msk [vmem:[%s3079 + $0x150] sm:$0xff] %vm2500, %v3157
    %3191 = vst.msk [vmem:[%s3079 + $0x168] sm:$0xff] %vm2500, %v3159
    %v3192 = vld [vmem:[%s2419 + $0x1] sm:$0xff]
    %v3193 = vld [vmem:[%s2419 + $0x11] sm:$0xff]
    %v3194 = vld [vmem:[%s2419 + $0x21] sm:$0xff]
    %v3195 = vld [vmem:[%s2419 + $0x31] sm:$0xff]
    %v3196 = vld [vmem:[%s2419 + $0x41] sm:$0xff]
    %v3197 = vld [vmem:[%s2419 + $0x51] sm:$0xff]
    %v3198 = vld [vmem:[%s2419 + $0x61] sm:$0xff]
    %v3199 = vld [vmem:[%s2419 + $0x71] sm:$0xff]
    %v3200 = vld [vmem:[%s2419 + $0x91] sm:$0xff]
    %v3201 = vld [vmem:[%s2419 + $0xa1] sm:$0xff]
    %v3202 = vld [vmem:[%s2419 + $0xb1] sm:$0xff]
    %v3203 = vld [vmem:[%s2419 + $0xc1] sm:$0xff]
    %v3204 = vld [vmem:[%s2419 + $0xd1] sm:$0xff]
    %v3205 = vld [vmem:[%s2419 + $0xe1] sm:$0xff]
    %v3206 = vld [vmem:[%s2419 + $0xf1] sm:$0xff]
    %v3207 = vld [vmem:[%s2419 + $0x101] sm:$0xff]
    %3224 = vrot.lane.b32.xlu0 %v3192, 64
    %v3225 = vpop.permute.xlu0 %3224
    %3226 = vrot.lane.b32.xlu0 %v3193, 64
    %v3227 = vpop.permute.xlu0 %3226
    %3228 = vrot.lane.b32.xlu0 %v3194, 64
    %v3229 = vpop.permute.xlu0 %3228
    %3230 = vrot.lane.b32.xlu0 %v3195, 64
    %v3231 = vpop.permute.xlu0 %3230
    %3232 = vrot.lane.b32.xlu0 %v3196, 64
    %v3233 = vpop.permute.xlu0 %3232
    %3234 = vrot.lane.b32.xlu0 %v3197, 64
    %v3235 = vpop.permute.xlu0 %3234
    %3236 = vrot.lane.b32.xlu0 %v3198, 64
    %v3237 = vpop.permute.xlu0 %3236
    %3238 = vrot.lane.b32.xlu0 %v3199, 64
    %v3239 = vpop.permute.xlu0 %3238
    %3240 = vrot.lane.b32.xlu0 %v3200, 64
    %v3241 = vpop.permute.xlu0 %3240
    %3242 = vrot.lane.b32.xlu0 %v3201, 64
    %v3243 = vpop.permute.xlu0 %3242
    %3244 = vrot.lane.b32.xlu0 %v3202, 64
    %v3245 = vpop.permute.xlu0 %3244
    %3246 = vrot.lane.b32.xlu0 %v3203, 64
    %v3247 = vpop.permute.xlu0 %3246
    %3248 = vrot.lane.b32.xlu0 %v3204, 64
    %v3249 = vpop.permute.xlu0 %3248
    %3250 = vrot.lane.b32.xlu0 %v3205, 64
    %v3251 = vpop.permute.xlu0 %3250
    %3252 = vrot.lane.b32.xlu0 %v3206, 64
    %v3253 = vpop.permute.xlu0 %3252
    %3254 = vrot.lane.b32.xlu0 %v3207, 64
    %v3255 = vpop.permute.xlu0 %3254
    %3272 = vst.msk [vmem:[%s3079] sm:$0xff] %vm2597, %v3225
    %3273 = vst.msk [vmem:[%s3079 + $0x18] sm:$0xff] %vm2597, %v3227
    %3274 = vst.msk [vmem:[%s3079 + $0x30] sm:$0xff] %vm2597, %v3229
    %3275 = vst.msk [vmem:[%s3079 + $0x48] sm:$0xff] %vm2597, %v3231
    %3276 = vst.msk [vmem:[%s3079 + $0x60] sm:$0xff] %vm2597, %v3233
    %3277 = vst.msk [vmem:[%s3079 + $0x78] sm:$0xff] %vm2597, %v3235
    %3278 = vst.msk [vmem:[%s3079 + $0x90] sm:$0xff] %vm2597, %v3237
    %3279 = vst.msk [vmem:[%s3079 + $0xa8] sm:$0xff] %vm2597, %v3239
    %3280 = vst.msk [vmem:[%s3079 + $0xc0] sm:$0xff] %vm2597, %v3241
    %3281 = vst.msk [vmem:[%s3079 + $0xd8] sm:$0xff] %vm2597, %v3243
    %3282 = vst.msk [vmem:[%s3079 + $0xf0] sm:$0xff] %vm2597, %v3245
    %3283 = vst.msk [vmem:[%s3079 + $0x108] sm:$0xff] %vm2597, %v3247
    %3284 = vst.msk [vmem:[%s3079 + $0x120] sm:$0xff] %vm2597, %v3249
    %3285 = vst.msk [vmem:[%s3079 + $0x138] sm:$0xff] %vm2597, %v3251
    %3286 = vst.msk [vmem:[%s3079 + $0x150] sm:$0xff] %vm2597, %v3253
    %3287 = vst.msk [vmem:[%s3079 + $0x168] sm:$0xff] %vm2597, %v3255
    %v3288 = vld [vmem:[%s2319] sm:$0xff]
    %v3289 = vld [vmem:[%s2319 + $0x10] sm:$0xff]
    %v3290 = vld [vmem:[%s2319 + $0x20] sm:$0xff]
    %v3291 = vld [vmem:[%s2319 + $0x30] sm:$0xff]
    %v3292 = vld [vmem:[%s2319 + $0x40] sm:$0xff]
    %v3293 = vld [vmem:[%s2319 + $0x50] sm:$0xff]
    %v3294 = vld [vmem:[%s2319 + $0x60] sm:$0xff]
    %v3295 = vld [vmem:[%s2319 + $0x70] sm:$0xff]
    %v3296 = vld [vmem:[%s2319 + $0x90] sm:$0xff]
    %v3297 = vld [vmem:[%s2319 + $0xa0] sm:$0xff]
    %v3298 = vld [vmem:[%s2319 + $0xb0] sm:$0xff]
    %v3299 = vld [vmem:[%s2319 + $0xc0] sm:$0xff]
    %v3300 = vld [vmem:[%s2319 + $0xd0] sm:$0xff]
    %v3301 = vld [vmem:[%s2319 + $0xe0] sm:$0xff]
    %v3302 = vld [vmem:[%s2319 + $0xf0] sm:$0xff]
    %v3303 = vld [vmem:[%s2319 + $0x100] sm:$0xff]
    %3320 = vrot.lane.b32.xlu0 %v3288, 96
    %v3321 = vpop.permute.xlu0 %3320
    %3322 = vrot.lane.b32.xlu0 %v3289, 96
    %v3323 = vpop.permute.xlu0 %3322
    %3324 = vrot.lane.b32.xlu0 %v3290, 96
    %v3325 = vpop.permute.xlu0 %3324
    %3326 = vrot.lane.b32.xlu0 %v3291, 96
    %v3327 = vpop.permute.xlu0 %3326
    %3328 = vrot.lane.b32.xlu0 %v3292, 96
    %v3329 = vpop.permute.xlu0 %3328
    %3330 = vrot.lane.b32.xlu0 %v3293, 96
    %v3331 = vpop.permute.xlu0 %3330
    %3332 = vrot.lane.b32.xlu0 %v3294, 96
    %v3333 = vpop.permute.xlu0 %3332
    %3334 = vrot.lane.b32.xlu0 %v3295, 96
    %v3335 = vpop.permute.xlu0 %3334
    %3336 = vrot.lane.b32.xlu0 %v3296, 96
    %v3337 = vpop.permute.xlu0 %3336
    %3338 = vrot.lane.b32.xlu0 %v3297, 96
    %v3339 = vpop.permute.xlu0 %3338
    %3340 = vrot.lane.b32.xlu0 %v3298, 96
    %v3341 = vpop.permute.xlu0 %3340
    %3342 = vrot.lane.b32.xlu0 %v3299, 96
    %v3343 = vpop.permute.xlu0 %3342
    %3344 = vrot.lane.b32.xlu0 %v3300, 96
    %v3345 = vpop.permute.xlu0 %3344
    %3346 = vrot.lane.b32.xlu0 %v3301, 96
    %v3347 = vpop.permute.xlu0 %3346
    %3348 = vrot.lane.b32.xlu0 %v3302, 96
    %v3349 = vpop.permute.xlu0 %3348
    %3350 = vrot.lane.b32.xlu0 %v3303, 96
    %v3351 = vpop.permute.xlu0 %3350
    %3368 = vst.msk [vmem:[%s3079] sm:$0xff] %vm2694, %v3321
    %3369 = vst.msk [vmem:[%s3079 + $0x18] sm:$0xff] %vm2694, %v3323
    %3370 = vst.msk [vmem:[%s3079 + $0x30] sm:$0xff] %vm2694, %v3325
    %3371 = vst.msk [vmem:[%s3079 + $0x48] sm:$0xff] %vm2694, %v3327
    %3372 = vst.msk [vmem:[%s3079 + $0x60] sm:$0xff] %vm2694, %v3329
    %3373 = vst.msk [vmem:[%s3079 + $0x78] sm:$0xff] %vm2694, %v3331
    %3374 = vst.msk [vmem:[%s3079 + $0x90] sm:$0xff] %vm2694, %v3333
    %3375 = vst.msk [vmem:[%s3079 + $0xa8] sm:$0xff] %vm2694, %v3335
    %3376 = vst.msk [vmem:[%s3079 + $0xc0] sm:$0xff] %vm2694, %v3337
    %3377 = vst.msk [vmem:[%s3079 + $0xd8] sm:$0xff] %vm2694, %v3339
    %3378 = vst.msk [vmem:[%s3079 + $0xf0] sm:$0xff] %vm2694, %v3341
    %3379 = vst.msk [vmem:[%s3079 + $0x108] sm:$0xff] %vm2694, %v3343
    %3380 = vst.msk [vmem:[%s3079 + $0x120] sm:$0xff] %vm2694, %v3345
    %3381 = vst.msk [vmem:[%s3079 + $0x138] sm:$0xff] %vm2694, %v3347
    %3382 = vst.msk [vmem:[%s3079 + $0x150] sm:$0xff] %vm2694, %v3349
    %3383 = vst.msk [vmem:[%s3079 + $0x168] sm:$0xff] %vm2694, %v3351
    %v3384 = vld [vmem:[%s2336 + $0x1] sm:$0xff]
    %v3385 = vld [vmem:[%s2336 + $0x11] sm:$0xff]
    %v3386 = vld [vmem:[%s2336 + $0x21] sm:$0xff]
    %v3387 = vld [vmem:[%s2336 + $0x31] sm:$0xff]
    %v3388 = vld [vmem:[%s2336 + $0x41] sm:$0xff]
    %v3389 = vld [vmem:[%s2336 + $0x51] sm:$0xff]
    %v3390 = vld [vmem:[%s2336 + $0x61] sm:$0xff]
    %v3391 = vld [vmem:[%s2336 + $0x71] sm:$0xff]
    %v3392 = vld [vmem:[%s2336 + $0x91] sm:$0xff]
    %v3393 = vld [vmem:[%s2336 + $0xa1] sm:$0xff]
    %v3394 = vld [vmem:[%s2336 + $0xb1] sm:$0xff]
    %v3395 = vld [vmem:[%s2336 + $0xc1] sm:$0xff]
    %v3396 = vld [vmem:[%s2336 + $0xd1] sm:$0xff]
    %v3397 = vld [vmem:[%s2336 + $0xe1] sm:$0xff]
    %v3398 = vld [vmem:[%s2336 + $0xf1] sm:$0xff]
    %v3399 = vld [vmem:[%s2336 + $0x101] sm:$0xff]
    %3400 = vst.msk [vmem:[%s3079 + $0x8] sm:$0xff] %vm2173, %v3384
    %3401 = vst.msk [vmem:[%s3079 + $0x20] sm:$0xff] %vm2173, %v3385
    %3402 = vst.msk [vmem:[%s3079 + $0x38] sm:$0xff] %vm2173, %v3386
    %3403 = vst.msk [vmem:[%s3079 + $0x50] sm:$0xff] %vm2173, %v3387
    %3404 = vst.msk [vmem:[%s3079 + $0x68] sm:$0xff] %vm2173, %v3388
    %3405 = vst.msk [vmem:[%s3079 + $0x80] sm:$0xff] %vm2173, %v3389
    %3406 = vst.msk [vmem:[%s3079 + $0x98] sm:$0xff] %vm2173, %v3390
    %3407 = vst.msk [vmem:[%s3079 + $0xb0] sm:$0xff] %vm2173, %v3391
    %3408 = vst.msk [vmem:[%s3079 + $0xc8] sm:$0xff] %vm2173, %v3392
    %3409 = vst.msk [vmem:[%s3079 + $0xe0] sm:$0xff] %vm2173, %v3393
    %3410 = vst.msk [vmem:[%s3079 + $0xf8] sm:$0xff] %vm2173, %v3394
    %3411 = vst.msk [vmem:[%s3079 + $0x110] sm:$0xff] %vm2173, %v3395
    %3412 = vst.msk [vmem:[%s3079 + $0x128] sm:$0xff] %vm2173, %v3396
    %3413 = vst.msk [vmem:[%s3079 + $0x140] sm:$0xff] %vm2173, %v3397
    %3414 = vst.msk [vmem:[%s3079 + $0x158] sm:$0xff] %vm2173, %v3398
    %3415 = vst.msk [vmem:[%s3079 + $0x170] sm:$0xff] %vm2173, %v3399
    %v3416 = vld [vmem:[%s2319 + $0x1] sm:$0xff]
    %v3417 = vld [vmem:[%s2319 + $0x11] sm:$0xff]
    %v3418 = vld [vmem:[%s2319 + $0x21] sm:$0xff]
    %v3419 = vld [vmem:[%s2319 + $0x31] sm:$0xff]
    %v3420 = vld [vmem:[%s2319 + $0x41] sm:$0xff]
    %v3421 = vld [vmem:[%s2319 + $0x51] sm:$0xff]
    %v3422 = vld [vmem:[%s2319 + $0x61] sm:$0xff]
    %v3423 = vld [vmem:[%s2319 + $0x71] sm:$0xff]
    %v3424 = vld [vmem:[%s2319 + $0x91] sm:$0xff]
    %v3425 = vld [vmem:[%s2319 + $0xa1] sm:$0xff]
    %v3426 = vld [vmem:[%s2319 + $0xb1] sm:$0xff]
    %v3427 = vld [vmem:[%s2319 + $0xc1] sm:$0xff]
    %v3428 = vld [vmem:[%s2319 + $0xd1] sm:$0xff]
    %v3429 = vld [vmem:[%s2319 + $0xe1] sm:$0xff]
    %v3430 = vld [vmem:[%s2319 + $0xf1] sm:$0xff]
    %v3431 = vld [vmem:[%s2319 + $0x101] sm:$0xff]
    %3448 = vrot.lane.b32.xlu0 %v3416, 32
    %v3449 = vpop.permute.xlu0 %3448
    %3450 = vrot.lane.b32.xlu0 %v3417, 32
    %v3451 = vpop.permute.xlu0 %3450
    %3452 = vrot.lane.b32.xlu0 %v3418, 32
    %v3453 = vpop.permute.xlu0 %3452
    %3454 = vrot.lane.b32.xlu0 %v3419, 32
    %v3455 = vpop.permute.xlu0 %3454
    %3456 = vrot.lane.b32.xlu0 %v3420, 32
    %v3457 = vpop.permute.xlu0 %3456
    %3458 = vrot.lane.b32.xlu0 %v3421, 32
    %v3459 = vpop.permute.xlu0 %3458
    %3460 = vrot.lane.b32.xlu0 %v3422, 32
    %v3461 = vpop.permute.xlu0 %3460
    %3462 = vrot.lane.b32.xlu0 %v3423, 32
    %v3463 = vpop.permute.xlu0 %3462
    %3464 = vrot.lane.b32.xlu0 %v3424, 32
    %v3465 = vpop.permute.xlu0 %3464
    %3466 = vrot.lane.b32.xlu0 %v3425, 32
    %v3467 = vpop.permute.xlu0 %3466
    %3468 = vrot.lane.b32.xlu0 %v3426, 32
    %v3469 = vpop.permute.xlu0 %3468
    %3470 = vrot.lane.b32.xlu0 %v3427, 32
    %v3471 = vpop.permute.xlu0 %3470
    %3472 = vrot.lane.b32.xlu0 %v3428, 32
    %v3473 = vpop.permute.xlu0 %3472
    %3474 = vrot.lane.b32.xlu0 %v3429, 32
    %v3475 = vpop.permute.xlu0 %3474
    %3476 = vrot.lane.b32.xlu0 %v3430, 32
    %v3477 = vpop.permute.xlu0 %3476
    %3478 = vrot.lane.b32.xlu0 %v3431, 32
    %v3479 = vpop.permute.xlu0 %3478
    %3496 = vst.msk [vmem:[%s3079 + $0x8] sm:$0xff] %vm2500, %v3449
    %3497 = vst.msk [vmem:[%s3079 + $0x20] sm:$0xff] %vm2500, %v3451
    %3498 = vst.msk [vmem:[%s3079 + $0x38] sm:$0xff] %vm2500, %v3453
    %3499 = vst.msk [vmem:[%s3079 + $0x50] sm:$0xff] %vm2500, %v3455
    %3500 = vst.msk [vmem:[%s3079 + $0x68] sm:$0xff] %vm2500, %v3457
    %3501 = vst.msk [vmem:[%s3079 + $0x80] sm:$0xff] %vm2500, %v3459
    %3502 = vst.msk [vmem:[%s3079 + $0x98] sm:$0xff] %vm2500, %v3461
    %3503 = vst.msk [vmem:[%s3079 + $0xb0] sm:$0xff] %vm2500, %v3463
    %3504 = vst.msk [vmem:[%s3079 + $0xc8] sm:$0xff] %vm2500, %v3465
    %3505 = vst.msk [vmem:[%s3079 + $0xe0] sm:$0xff] %vm2500, %v3467
    %3506 = vst.msk [vmem:[%s3079 + $0xf8] sm:$0xff] %vm2500, %v3469
    %3507 = vst.msk [vmem:[%s3079 + $0x110] sm:$0xff] %vm2500, %v3471
    %3508 = vst.msk [vmem:[%s3079 + $0x128] sm:$0xff] %vm2500, %v3473
    %3509 = vst.msk [vmem:[%s3079 + $0x140] sm:$0xff] %vm2500, %v3475
    %3510 = vst.msk [vmem:[%s3079 + $0x158] sm:$0xff] %vm2500, %v3477
    %3511 = vst.msk [vmem:[%s3079 + $0x170] sm:$0xff] %vm2500, %v3479
    %v3512 = vld [vmem:[%s2353] sm:$0xff]
    %v3513 = vld [vmem:[%s2353 + $0x10] sm:$0xff]
    %v3514 = vld [vmem:[%s2353 + $0x20] sm:$0xff]
    %v3515 = vld [vmem:[%s2353 + $0x30] sm:$0xff]
    %v3516 = vld [vmem:[%s2353 + $0x40] sm:$0xff]
    %v3517 = vld [vmem:[%s2353 + $0x50] sm:$0xff]
    %v3518 = vld [vmem:[%s2353 + $0x60] sm:$0xff]
    %v3519 = vld [vmem:[%s2353 + $0x70] sm:$0xff]
    %v3520 = vld [vmem:[%s2353 + $0x90] sm:$0xff]
    %v3521 = vld [vmem:[%s2353 + $0xa0] sm:$0xff]
    %v3522 = vld [vmem:[%s2353 + $0xb0] sm:$0xff]
    %v3523 = vld [vmem:[%s2353 + $0xc0] sm:$0xff]
    %v3524 = vld [vmem:[%s2353 + $0xd0] sm:$0xff]
    %v3525 = vld [vmem:[%s2353 + $0xe0] sm:$0xff]
    %v3526 = vld [vmem:[%s2353 + $0xf0] sm:$0xff]
    %v3527 = vld [vmem:[%s2353 + $0x100] sm:$0xff]
    %3544 = vrot.lane.b32.xlu0 %v3512, 64
    %v3545 = vpop.permute.xlu0 %3544
    %3546 = vrot.lane.b32.xlu0 %v3513, 64
    %v3547 = vpop.permute.xlu0 %3546
    %3548 = vrot.lane.b32.xlu0 %v3514, 64
    %v3549 = vpop.permute.xlu0 %3548
    %3550 = vrot.lane.b32.xlu0 %v3515, 64
    %v3551 = vpop.permute.xlu0 %3550
    %3552 = vrot.lane.b32.xlu0 %v3516, 64
    %v3553 = vpop.permute.xlu0 %3552
    %3554 = vrot.lane.b32.xlu0 %v3517, 64
    %v3555 = vpop.permute.xlu0 %3554
    %3556 = vrot.lane.b32.xlu0 %v3518, 64
    %v3557 = vpop.permute.xlu0 %3556
    %3558 = vrot.lane.b32.xlu0 %v3519, 64
    %v3559 = vpop.permute.xlu0 %3558
    %3560 = vrot.lane.b32.xlu0 %v3520, 64
    %v3561 = vpop.permute.xlu0 %3560
    %3562 = vrot.lane.b32.xlu0 %v3521, 64
    %v3563 = vpop.permute.xlu0 %3562
    %3564 = vrot.lane.b32.xlu0 %v3522, 64
    %v3565 = vpop.permute.xlu0 %3564
    %3566 = vrot.lane.b32.xlu0 %v3523, 64
    %v3567 = vpop.permute.xlu0 %3566
    %3568 = vrot.lane.b32.xlu0 %v3524, 64
    %v3569 = vpop.permute.xlu0 %3568
    %3570 = vrot.lane.b32.xlu0 %v3525, 64
    %v3571 = vpop.permute.xlu0 %3570
    %3572 = vrot.lane.b32.xlu0 %v3526, 64
    %v3573 = vpop.permute.xlu0 %3572
    %3574 = vrot.lane.b32.xlu0 %v3527, 64
    %v3575 = vpop.permute.xlu0 %3574
    %3592 = vst.msk [vmem:[%s3079 + $0x8] sm:$0xff] %vm2597, %v3545
    %3593 = vst.msk [vmem:[%s3079 + $0x20] sm:$0xff] %vm2597, %v3547
    %3594 = vst.msk [vmem:[%s3079 + $0x38] sm:$0xff] %vm2597, %v3549
    %3595 = vst.msk [vmem:[%s3079 + $0x50] sm:$0xff] %vm2597, %v3551
    %3596 = vst.msk [vmem:[%s3079 + $0x68] sm:$0xff] %vm2597, %v3553
    %3597 = vst.msk [vmem:[%s3079 + $0x80] sm:$0xff] %vm2597, %v3555
    %3598 = vst.msk [vmem:[%s3079 + $0x98] sm:$0xff] %vm2597, %v3557
    %3599 = vst.msk [vmem:[%s3079 + $0xb0] sm:$0xff] %vm2597, %v3559
    %3600 = vst.msk [vmem:[%s3079 + $0xc8] sm:$0xff] %vm2597, %v3561
    %3601 = vst.msk [vmem:[%s3079 + $0xe0] sm:$0xff] %vm2597, %v3563
    %3602 = vst.msk [vmem:[%s3079 + $0xf8] sm:$0xff] %vm2597, %v3565
    %3603 = vst.msk [vmem:[%s3079 + $0x110] sm:$0xff] %vm2597, %v3567
    %3604 = vst.msk [vmem:[%s3079 + $0x128] sm:$0xff] %vm2597, %v3569
    %3605 = vst.msk [vmem:[%s3079 + $0x140] sm:$0xff] %vm2597, %v3571
    %3606 = vst.msk [vmem:[%s3079 + $0x158] sm:$0xff] %vm2597, %v3573
    %3607 = vst.msk [vmem:[%s3079 + $0x170] sm:$0xff] %vm2597, %v3575
    %v3608 = vld [vmem:[%s2370 + $0x1] sm:$0xff]
    %v3609 = vld [vmem:[%s2370 + $0x11] sm:$0xff]
    %v3610 = vld [vmem:[%s2370 + $0x21] sm:$0xff]
    %v3611 = vld [vmem:[%s2370 + $0x31] sm:$0xff]
    %v3612 = vld [vmem:[%s2370 + $0x41] sm:$0xff]
    %v3613 = vld [vmem:[%s2370 + $0x51] sm:$0xff]
    %v3614 = vld [vmem:[%s2370 + $0x61] sm:$0xff]
    %v3615 = vld [vmem:[%s2370 + $0x71] sm:$0xff]
    %v3616 = vld [vmem:[%s2370 + $0x91] sm:$0xff]
    %v3617 = vld [vmem:[%s2370 + $0xa1] sm:$0xff]
    %v3618 = vld [vmem:[%s2370 + $0xb1] sm:$0xff]
    %v3619 = vld [vmem:[%s2370 + $0xc1] sm:$0xff]
    %v3620 = vld [vmem:[%s2370 + $0xd1] sm:$0xff]
    %v3621 = vld [vmem:[%s2370 + $0xe1] sm:$0xff]
    %v3622 = vld [vmem:[%s2370 + $0xf1] sm:$0xff]
    %v3623 = vld [vmem:[%s2370 + $0x101] sm:$0xff]
    %3640 = vrot.lane.b32.xlu0 %v3608, 96
    %v3641 = vpop.permute.xlu0 %3640
    %3642 = vrot.lane.b32.xlu0 %v3609, 96
    %v3643 = vpop.permute.xlu0 %3642
    %3644 = vrot.lane.b32.xlu0 %v3610, 96
    %v3645 = vpop.permute.xlu0 %3644
    %3646 = vrot.lane.b32.xlu0 %v3611, 96
    %v3647 = vpop.permute.xlu0 %3646
    %3648 = vrot.lane.b32.xlu0 %v3612, 96
    %v3649 = vpop.permute.xlu0 %3648
    %3650 = vrot.lane.b32.xlu0 %v3613, 96
    %v3651 = vpop.permute.xlu0 %3650
    %3652 = vrot.lane.b32.xlu0 %v3614, 96
    %v3653 = vpop.permute.xlu0 %3652
    %3654 = vrot.lane.b32.xlu0 %v3615, 96
    %v3655 = vpop.permute.xlu0 %3654
    %3656 = vrot.lane.b32.xlu0 %v3616, 96
    %v3657 = vpop.permute.xlu0 %3656
    %3658 = vrot.lane.b32.xlu0 %v3617, 96
    %v3659 = vpop.permute.xlu0 %3658
    %3660 = vrot.lane.b32.xlu0 %v3618, 96
    %v3661 = vpop.permute.xlu0 %3660
    %3662 = vrot.lane.b32.xlu0 %v3619, 96
    %v3663 = vpop.permute.xlu0 %3662
    %3664 = vrot.lane.b32.xlu0 %v3620, 96
    %v3665 = vpop.permute.xlu0 %3664
    %3666 = vrot.lane.b32.xlu0 %v3621, 96
    %v3667 = vpop.permute.xlu0 %3666
    %3668 = vrot.lane.b32.xlu0 %v3622, 96
    %v3669 = vpop.permute.xlu0 %3668
    %3670 = vrot.lane.b32.xlu0 %v3623, 96
    %v3671 = vpop.permute.xlu0 %3670
    %3688 = vst.msk [vmem:[%s3079 + $0x8] sm:$0xff] %vm2694, %v3641
    %3689 = vst.msk [vmem:[%s3079 + $0x20] sm:$0xff] %vm2694, %v3643
    %3690 = vst.msk [vmem:[%s3079 + $0x38] sm:$0xff] %vm2694, %v3645
    %3691 = vst.msk [vmem:[%s3079 + $0x50] sm:$0xff] %vm2694, %v3647
    %3692 = vst.msk [vmem:[%s3079 + $0x68] sm:$0xff] %vm2694, %v3649
    %3693 = vst.msk [vmem:[%s3079 + $0x80] sm:$0xff] %vm2694, %v3651
    %3694 = vst.msk [vmem:[%s3079 + $0x98] sm:$0xff] %vm2694, %v3653
    %3695 = vst.msk [vmem:[%s3079 + $0xb0] sm:$0xff] %vm2694, %v3655
    %3696 = vst.msk [vmem:[%s3079 + $0xc8] sm:$0xff] %vm2694, %v3657
    %3697 = vst.msk [vmem:[%s3079 + $0xe0] sm:$0xff] %vm2694, %v3659
    %3698 = vst.msk [vmem:[%s3079 + $0xf8] sm:$0xff] %vm2694, %v3661
    %3699 = vst.msk [vmem:[%s3079 + $0x110] sm:$0xff] %vm2694, %v3663
    %3700 = vst.msk [vmem:[%s3079 + $0x128] sm:$0xff] %vm2694, %v3665
    %3701 = vst.msk [vmem:[%s3079 + $0x140] sm:$0xff] %vm2694, %v3667
    %3702 = vst.msk [vmem:[%s3079 + $0x158] sm:$0xff] %vm2694, %v3669
    %3703 = vst.msk [vmem:[%s3079 + $0x170] sm:$0xff] %vm2694, %v3671
    %v3704 = vld [vmem:[%s2353 + $0x1] sm:$0xff]
    %v3705 = vld [vmem:[%s2353 + $0x11] sm:$0xff]
    %v3706 = vld [vmem:[%s2353 + $0x21] sm:$0xff]
    %v3707 = vld [vmem:[%s2353 + $0x31] sm:$0xff]
    %v3708 = vld [vmem:[%s2353 + $0x41] sm:$0xff]
    %v3709 = vld [vmem:[%s2353 + $0x51] sm:$0xff]
    %v3710 = vld [vmem:[%s2353 + $0x61] sm:$0xff]
    %v3711 = vld [vmem:[%s2353 + $0x71] sm:$0xff]
    %v3712 = vld [vmem:[%s2353 + $0x91] sm:$0xff]
    %v3713 = vld [vmem:[%s2353 + $0xa1] sm:$0xff]
    %v3714 = vld [vmem:[%s2353 + $0xb1] sm:$0xff]
    %v3715 = vld [vmem:[%s2353 + $0xc1] sm:$0xff]
    %v3716 = vld [vmem:[%s2353 + $0xd1] sm:$0xff]
    %v3717 = vld [vmem:[%s2353 + $0xe1] sm:$0xff]
    %v3718 = vld [vmem:[%s2353 + $0xf1] sm:$0xff]
    %v3719 = vld [vmem:[%s2353 + $0x101] sm:$0xff]
    %3720 = vst.msk [vmem:[%s3079 + $0x10] sm:$0xff] %vm2173, %v3704
    %3721 = vst.msk [vmem:[%s3079 + $0x28] sm:$0xff] %vm2173, %v3705
    %3722 = vst.msk [vmem:[%s3079 + $0x40] sm:$0xff] %vm2173, %v3706
    %3723 = vst.msk [vmem:[%s3079 + $0x58] sm:$0xff] %vm2173, %v3707
    %3724 = vst.msk [vmem:[%s3079 + $0x70] sm:$0xff] %vm2173, %v3708
    %3725 = vst.msk [vmem:[%s3079 + $0x88] sm:$0xff] %vm2173, %v3709
    %3726 = vst.msk [vmem:[%s3079 + $0xa0] sm:$0xff] %vm2173, %v3710
    %3727 = vst.msk [vmem:[%s3079 + $0xb8] sm:$0xff] %vm2173, %v3711
    %3728 = vst.msk [vmem:[%s3079 + $0xd0] sm:$0xff] %vm2173, %v3712
    %3729 = vst.msk [vmem:[%s3079 + $0xe8] sm:$0xff] %vm2173, %v3713
    %3730 = vst.msk [vmem:[%s3079 + $0x100] sm:$0xff] %vm2173, %v3714
    %3731 = vst.msk [vmem:[%s3079 + $0x118] sm:$0xff] %vm2173, %v3715
    %3732 = vst.msk [vmem:[%s3079 + $0x130] sm:$0xff] %vm2173, %v3716
    %3733 = vst.msk [vmem:[%s3079 + $0x148] sm:$0xff] %vm2173, %v3717
    %3734 = vst.msk [vmem:[%s3079 + $0x160] sm:$0xff] %vm2173, %v3718
    %3735 = vst.msk [vmem:[%s3079 + $0x178] sm:$0xff] %vm2173, %v3719
    %v3736 = vld [vmem:[%s2336] sm:$0xff]
    %v3737 = vld [vmem:[%s2336 + $0x10] sm:$0xff]
    %v3738 = vld [vmem:[%s2336 + $0x20] sm:$0xff]
    %v3739 = vld [vmem:[%s2336 + $0x30] sm:$0xff]
    %v3740 = vld [vmem:[%s2336 + $0x40] sm:$0xff]
    %v3741 = vld [vmem:[%s2336 + $0x50] sm:$0xff]
    %v3742 = vld [vmem:[%s2336 + $0x60] sm:$0xff]
    %v3743 = vld [vmem:[%s2336 + $0x70] sm:$0xff]
    %v3744 = vld [vmem:[%s2336 + $0x90] sm:$0xff]
    %v3745 = vld [vmem:[%s2336 + $0xa0] sm:$0xff]
    %v3746 = vld [vmem:[%s2336 + $0xb0] sm:$0xff]
    %v3747 = vld [vmem:[%s2336 + $0xc0] sm:$0xff]
    %v3748 = vld [vmem:[%s2336 + $0xd0] sm:$0xff]
    %v3749 = vld [vmem:[%s2336 + $0xe0] sm:$0xff]
    %v3750 = vld [vmem:[%s2336 + $0xf0] sm:$0xff]
    %v3751 = vld [vmem:[%s2336 + $0x100] sm:$0xff]
    %s3752 = scalar_lea.vmem [#allocation3], 768
    %3753 = vst.msk [vmem:[%s3752] sm:$0xff] %vm2173, %v3736
    %3754 = vst.msk [vmem:[%s3752 + $0x18] sm:$0xff] %vm2173, %v3737
    %3755 = vst.msk [vmem:[%s3752 + $0x30] sm:$0xff] %vm2173, %v3738
    %3756 = vst.msk [vmem:[%s3752 + $0x48] sm:$0xff] %vm2173, %v3739
    %3757 = vst.msk [vmem:[%s3752 + $0x60] sm:$0xff] %vm2173, %v3740
    %3758 = vst.msk [vmem:[%s3752 + $0x78] sm:$0xff] %vm2173, %v3741
    %3759 = vst.msk [vmem:[%s3752 + $0x90] sm:$0xff] %vm2173, %v3742
    %3760 = vst.msk [vmem:[%s3752 + $0xa8] sm:$0xff] %vm2173, %v3743
    %3761 = vst.msk [vmem:[%s3752 + $0xc0] sm:$0xff] %vm2173, %v3744
    %3762 = vst.msk [vmem:[%s3752 + $0xd8] sm:$0xff] %vm2173, %v3745
    %3763 = vst.msk [vmem:[%s3752 + $0xf0] sm:$0xff] %vm2173, %v3746
    %3764 = vst.msk [vmem:[%s3752 + $0x108] sm:$0xff] %vm2173, %v3747
    %3765 = vst.msk [vmem:[%s3752 + $0x120] sm:$0xff] %vm2173, %v3748
    %3766 = vst.msk [vmem:[%s3752 + $0x138] sm:$0xff] %vm2173, %v3749
    %3767 = vst.msk [vmem:[%s3752 + $0x150] sm:$0xff] %vm2173, %v3750
    %3768 = vst.msk [vmem:[%s3752 + $0x168] sm:$0xff] %vm2173, %v3751
    %v3769 = vld [vmem:[%s2319] sm:$0xff]
    %v3770 = vld [vmem:[%s2319 + $0x10] sm:$0xff]
    %v3771 = vld [vmem:[%s2319 + $0x20] sm:$0xff]
    %v3772 = vld [vmem:[%s2319 + $0x30] sm:$0xff]
    %v3773 = vld [vmem:[%s2319 + $0x40] sm:$0xff]
    %v3774 = vld [vmem:[%s2319 + $0x50] sm:$0xff]
    %v3775 = vld [vmem:[%s2319 + $0x60] sm:$0xff]
    %v3776 = vld [vmem:[%s2319 + $0x70] sm:$0xff]
    %v3777 = vld [vmem:[%s2319 + $0x90] sm:$0xff]
    %v3778 = vld [vmem:[%s2319 + $0xa0] sm:$0xff]
    %v3779 = vld [vmem:[%s2319 + $0xb0] sm:$0xff]
    %v3780 = vld [vmem:[%s2319 + $0xc0] sm:$0xff]
    %v3781 = vld [vmem:[%s2319 + $0xd0] sm:$0xff]
    %v3782 = vld [vmem:[%s2319 + $0xe0] sm:$0xff]
    %v3783 = vld [vmem:[%s2319 + $0xf0] sm:$0xff]
    %v3784 = vld [vmem:[%s2319 + $0x100] sm:$0xff]
    %3801 = vrot.lane.b32.xlu0 %v3769, 32
    %v3802 = vpop.permute.xlu0 %3801
    %3803 = vrot.lane.b32.xlu0 %v3770, 32
    %v3804 = vpop.permute.xlu0 %3803
    %3805 = vrot.lane.b32.xlu0 %v3771, 32
    %v3806 = vpop.permute.xlu0 %3805
    %3807 = vrot.lane.b32.xlu0 %v3772, 32
    %v3808 = vpop.permute.xlu0 %3807
    %3809 = vrot.lane.b32.xlu0 %v3773, 32
    %v3810 = vpop.permute.xlu0 %3809
    %3811 = vrot.lane.b32.xlu0 %v3774, 32
    %v3812 = vpop.permute.xlu0 %3811
    %3813 = vrot.lane.b32.xlu0 %v3775, 32
    %v3814 = vpop.permute.xlu0 %3813
    %3815 = vrot.lane.b32.xlu0 %v3776, 32
    %v3816 = vpop.permute.xlu0 %3815
    %3817 = vrot.lane.b32.xlu0 %v3777, 32
    %v3818 = vpop.permute.xlu0 %3817
    %3819 = vrot.lane.b32.xlu0 %v3778, 32
    %v3820 = vpop.permute.xlu0 %3819
    %3821 = vrot.lane.b32.xlu0 %v3779, 32
    %v3822 = vpop.permute.xlu0 %3821
    %3823 = vrot.lane.b32.xlu0 %v3780, 32
    %v3824 = vpop.permute.xlu0 %3823
    %3825 = vrot.lane.b32.xlu0 %v3781, 32
    %v3826 = vpop.permute.xlu0 %3825
    %3827 = vrot.lane.b32.xlu0 %v3782, 32
    %v3828 = vpop.permute.xlu0 %3827
    %3829 = vrot.lane.b32.xlu0 %v3783, 32
    %v3830 = vpop.permute.xlu0 %3829
    %3831 = vrot.lane.b32.xlu0 %v3784, 32
    %v3832 = vpop.permute.xlu0 %3831
    %3849 = vst.msk [vmem:[%s3752] sm:$0xff] %vm2500, %v3802
    %3850 = vst.msk [vmem:[%s3752 + $0x18] sm:$0xff] %vm2500, %v3804
    %3851 = vst.msk [vmem:[%s3752 + $0x30] sm:$0xff] %vm2500, %v3806
    %3852 = vst.msk [vmem:[%s3752 + $0x48] sm:$0xff] %vm2500, %v3808
    %3853 = vst.msk [vmem:[%s3752 + $0x60] sm:$0xff] %vm2500, %v3810
    %3854 = vst.msk [vmem:[%s3752 + $0x78] sm:$0xff] %vm2500, %v3812
    %3855 = vst.msk [vmem:[%s3752 + $0x90] sm:$0xff] %vm2500, %v3814
    %3856 = vst.msk [vmem:[%s3752 + $0xa8] sm:$0xff] %vm2500, %v3816
    %3857 = vst.msk [vmem:[%s3752 + $0xc0] sm:$0xff] %vm2500, %v3818
    %3858 = vst.msk [vmem:[%s3752 + $0xd8] sm:$0xff] %vm2500, %v3820
    %3859 = vst.msk [vmem:[%s3752 + $0xf0] sm:$0xff] %vm2500, %v3822
    %3860 = vst.msk [vmem:[%s3752 + $0x108] sm:$0xff] %vm2500, %v3824
    %3861 = vst.msk [vmem:[%s3752 + $0x120] sm:$0xff] %vm2500, %v3826
    %3862 = vst.msk [vmem:[%s3752 + $0x138] sm:$0xff] %vm2500, %v3828
    %3863 = vst.msk [vmem:[%s3752 + $0x150] sm:$0xff] %vm2500, %v3830
    %3864 = vst.msk [vmem:[%s3752 + $0x168] sm:$0xff] %vm2500, %v3832
    %v3865 = vld [vmem:[%s2336 + $0x1] sm:$0xff]
    %v3866 = vld [vmem:[%s2336 + $0x11] sm:$0xff]
    %v3867 = vld [vmem:[%s2336 + $0x21] sm:$0xff]
    %v3868 = vld [vmem:[%s2336 + $0x31] sm:$0xff]
    %v3869 = vld [vmem:[%s2336 + $0x41] sm:$0xff]
    %v3870 = vld [vmem:[%s2336 + $0x51] sm:$0xff]
    %v3871 = vld [vmem:[%s2336 + $0x61] sm:$0xff]
    %v3872 = vld [vmem:[%s2336 + $0x71] sm:$0xff]
    %v3873 = vld [vmem:[%s2336 + $0x91] sm:$0xff]
    %v3874 = vld [vmem:[%s2336 + $0xa1] sm:$0xff]
    %v3875 = vld [vmem:[%s2336 + $0xb1] sm:$0xff]
    %v3876 = vld [vmem:[%s2336 + $0xc1] sm:$0xff]
    %v3877 = vld [vmem:[%s2336 + $0xd1] sm:$0xff]
    %v3878 = vld [vmem:[%s2336 + $0xe1] sm:$0xff]
    %v3879 = vld [vmem:[%s2336 + $0xf1] sm:$0xff]
    %v3880 = vld [vmem:[%s2336 + $0x101] sm:$0xff]
    %3897 = vrot.lane.b32.xlu0 %v3865, 64
    %v3898 = vpop.permute.xlu0 %3897
    %3899 = vrot.lane.b32.xlu0 %v3866, 64
    %v3900 = vpop.permute.xlu0 %3899
    %3901 = vrot.lane.b32.xlu0 %v3867, 64
    %v3902 = vpop.permute.xlu0 %3901
    %3903 = vrot.lane.b32.xlu0 %v3868, 64
    %v3904 = vpop.permute.xlu0 %3903
    %3905 = vrot.lane.b32.xlu0 %v3869, 64
    %v3906 = vpop.permute.xlu0 %3905
    %3907 = vrot.lane.b32.xlu0 %v3870, 64
    %v3908 = vpop.permute.xlu0 %3907
    %3909 = vrot.lane.b32.xlu0 %v3871, 64
    %v3910 = vpop.permute.xlu0 %3909
    %3911 = vrot.lane.b32.xlu0 %v3872, 64
    %v3912 = vpop.permute.xlu0 %3911
    %3913 = vrot.lane.b32.xlu0 %v3873, 64
    %v3914 = vpop.permute.xlu0 %3913
    %3915 = vrot.lane.b32.xlu0 %v3874, 64
    %v3916 = vpop.permute.xlu0 %3915
    %3917 = vrot.lane.b32.xlu0 %v3875, 64
    %v3918 = vpop.permute.xlu0 %3917
    %3919 = vrot.lane.b32.xlu0 %v3876, 64
    %v3920 = vpop.permute.xlu0 %3919
    %3921 = vrot.lane.b32.xlu0 %v3877, 64
    %v3922 = vpop.permute.xlu0 %3921
    %3923 = vrot.lane.b32.xlu0 %v3878, 64
    %v3924 = vpop.permute.xlu0 %3923
    %3925 = vrot.lane.b32.xlu0 %v3879, 64
    %v3926 = vpop.permute.xlu0 %3925
    %3927 = vrot.lane.b32.xlu0 %v3880, 64
    %v3928 = vpop.permute.xlu0 %3927
    %3945 = vst.msk [vmem:[%s3752] sm:$0xff] %vm2597, %v3898
    %3946 = vst.msk [vmem:[%s3752 + $0x18] sm:$0xff] %vm2597, %v3900
    %3947 = vst.msk [vmem:[%s3752 + $0x30] sm:$0xff] %vm2597, %v3902
    %3948 = vst.msk [vmem:[%s3752 + $0x48] sm:$0xff] %vm2597, %v3904
    %3949 = vst.msk [vmem:[%s3752 + $0x60] sm:$0xff] %vm2597, %v3906
    %3950 = vst.msk [vmem:[%s3752 + $0x78] sm:$0xff] %vm2597, %v3908
    %3951 = vst.msk [vmem:[%s3752 + $0x90] sm:$0xff] %vm2597, %v3910
    %3952 = vst.msk [vmem:[%s3752 + $0xa8] sm:$0xff] %vm2597, %v3912
    %3953 = vst.msk [vmem:[%s3752 + $0xc0] sm:$0xff] %vm2597, %v3914
    %3954 = vst.msk [vmem:[%s3752 + $0xd8] sm:$0xff] %vm2597, %v3916
    %3955 = vst.msk [vmem:[%s3752 + $0xf0] sm:$0xff] %vm2597, %v3918
    %3956 = vst.msk [vmem:[%s3752 + $0x108] sm:$0xff] %vm2597, %v3920
    %3957 = vst.msk [vmem:[%s3752 + $0x120] sm:$0xff] %vm2597, %v3922
    %3958 = vst.msk [vmem:[%s3752 + $0x138] sm:$0xff] %vm2597, %v3924
    %3959 = vst.msk [vmem:[%s3752 + $0x150] sm:$0xff] %vm2597, %v3926
    %3960 = vst.msk [vmem:[%s3752 + $0x168] sm:$0xff] %vm2597, %v3928
    %v3961 = vld [vmem:[%s2370] sm:$0xff]
    %v3962 = vld [vmem:[%s2370 + $0x10] sm:$0xff]
    %v3963 = vld [vmem:[%s2370 + $0x20] sm:$0xff]
    %v3964 = vld [vmem:[%s2370 + $0x30] sm:$0xff]
    %v3965 = vld [vmem:[%s2370 + $0x40] sm:$0xff]
    %v3966 = vld [vmem:[%s2370 + $0x50] sm:$0xff]
    %v3967 = vld [vmem:[%s2370 + $0x60] sm:$0xff]
    %v3968 = vld [vmem:[%s2370 + $0x70] sm:$0xff]
    %v3969 = vld [vmem:[%s2370 + $0x90] sm:$0xff]
    %v3970 = vld [vmem:[%s2370 + $0xa0] sm:$0xff]
    %v3971 = vld [vmem:[%s2370 + $0xb0] sm:$0xff]
    %v3972 = vld [vmem:[%s2370 + $0xc0] sm:$0xff]
    %v3973 = vld [vmem:[%s2370 + $0xd0] sm:$0xff]
    %v3974 = vld [vmem:[%s2370 + $0xe0] sm:$0xff]
    %v3975 = vld [vmem:[%s2370 + $0xf0] sm:$0xff]
    %v3976 = vld [vmem:[%s2370 + $0x100] sm:$0xff]
    %3993 = vrot.lane.b32.xlu0 %v3961, 96
    %v3994 = vpop.permute.xlu0 %3993
    %3995 = vrot.lane.b32.xlu0 %v3962, 96
    %v3996 = vpop.permute.xlu0 %3995
    %3997 = vrot.lane.b32.xlu0 %v3963, 96
    %v3998 = vpop.permute.xlu0 %3997
    %3999 = vrot.lane.b32.xlu0 %v3964, 96
    %v4000 = vpop.permute.xlu0 %3999
    %4001 = vrot.lane.b32.xlu0 %v3965, 96
    %v4002 = vpop.permute.xlu0 %4001
    %4003 = vrot.lane.b32.xlu0 %v3966, 96
    %v4004 = vpop.permute.xlu0 %4003
    %4005 = vrot.lane.b32.xlu0 %v3967, 96
    %v4006 = vpop.permute.xlu0 %4005
    %4007 = vrot.lane.b32.xlu0 %v3968, 96
    %v4008 = vpop.permute.xlu0 %4007
    %4009 = vrot.lane.b32.xlu0 %v3969, 96
    %v4010 = vpop.permute.xlu0 %4009
    %4011 = vrot.lane.b32.xlu0 %v3970, 96
    %v4012 = vpop.permute.xlu0 %4011
    %4013 = vrot.lane.b32.xlu0 %v3971, 96
    %v4014 = vpop.permute.xlu0 %4013
    %4015 = vrot.lane.b32.xlu0 %v3972, 96
    %v4016 = vpop.permute.xlu0 %4015
    %4017 = vrot.lane.b32.xlu0 %v3973, 96
    %v4018 = vpop.permute.xlu0 %4017
    %4019 = vrot.lane.b32.xlu0 %v3974, 96
    %v4020 = vpop.permute.xlu0 %4019
    %4021 = vrot.lane.b32.xlu0 %v3975, 96
    %v4022 = vpop.permute.xlu0 %4021
    %4023 = vrot.lane.b32.xlu0 %v3976, 96
    %v4024 = vpop.permute.xlu0 %4023
    %4041 = vst.msk [vmem:[%s3752] sm:$0xff] %vm2694, %v3994
    %4042 = vst.msk [vmem:[%s3752 + $0x18] sm:$0xff] %vm2694, %v3996
    %4043 = vst.msk [vmem:[%s3752 + $0x30] sm:$0xff] %vm2694, %v3998
    %4044 = vst.msk [vmem:[%s3752 + $0x48] sm:$0xff] %vm2694, %v4000
    %4045 = vst.msk [vmem:[%s3752 + $0x60] sm:$0xff] %vm2694, %v4002
    %4046 = vst.msk [vmem:[%s3752 + $0x78] sm:$0xff] %vm2694, %v4004
    %4047 = vst.msk [vmem:[%s3752 + $0x90] sm:$0xff] %vm2694, %v4006
    %4048 = vst.msk [vmem:[%s3752 + $0xa8] sm:$0xff] %vm2694, %v4008
    %4049 = vst.msk [vmem:[%s3752 + $0xc0] sm:$0xff] %vm2694, %v4010
    %4050 = vst.msk [vmem:[%s3752 + $0xd8] sm:$0xff] %vm2694, %v4012
    %4051 = vst.msk [vmem:[%s3752 + $0xf0] sm:$0xff] %vm2694, %v4014
    %4052 = vst.msk [vmem:[%s3752 + $0x108] sm:$0xff] %vm2694, %v4016
    %4053 = vst.msk [vmem:[%s3752 + $0x120] sm:$0xff] %vm2694, %v4018
    %4054 = vst.msk [vmem:[%s3752 + $0x138] sm:$0xff] %vm2694, %v4020
    %4055 = vst.msk [vmem:[%s3752 + $0x150] sm:$0xff] %vm2694, %v4022
    %4056 = vst.msk [vmem:[%s3752 + $0x168] sm:$0xff] %vm2694, %v4024
    %v4057 = vld [vmem:[%s2353] sm:$0xff]
    %v4058 = vld [vmem:[%s2353 + $0x10] sm:$0xff]
    %v4059 = vld [vmem:[%s2353 + $0x20] sm:$0xff]
    %v4060 = vld [vmem:[%s2353 + $0x30] sm:$0xff]
    %v4061 = vld [vmem:[%s2353 + $0x40] sm:$0xff]
    %v4062 = vld [vmem:[%s2353 + $0x50] sm:$0xff]
    %v4063 = vld [vmem:[%s2353 + $0x60] sm:$0xff]
    %v4064 = vld [vmem:[%s2353 + $0x70] sm:$0xff]
    %v4065 = vld [vmem:[%s2353 + $0x90] sm:$0xff]
    %v4066 = vld [vmem:[%s2353 + $0xa0] sm:$0xff]
    %v4067 = vld [vmem:[%s2353 + $0xb0] sm:$0xff]
    %v4068 = vld [vmem:[%s2353 + $0xc0] sm:$0xff]
    %v4069 = vld [vmem:[%s2353 + $0xd0] sm:$0xff]
    %v4070 = vld [vmem:[%s2353 + $0xe0] sm:$0xff]
    %v4071 = vld [vmem:[%s2353 + $0xf0] sm:$0xff]
    %v4072 = vld [vmem:[%s2353 + $0x100] sm:$0xff]
    %4073 = vst.msk [vmem:[%s3752 + $0x8] sm:$0xff] %vm2173, %v4057
    %4074 = vst.msk [vmem:[%s3752 + $0x20] sm:$0xff] %vm2173, %v4058
    %4075 = vst.msk [vmem:[%s3752 + $0x38] sm:$0xff] %vm2173, %v4059
    %4076 = vst.msk [vmem:[%s3752 + $0x50] sm:$0xff] %vm2173, %v4060
    %4077 = vst.msk [vmem:[%s3752 + $0x68] sm:$0xff] %vm2173, %v4061
    %4078 = vst.msk [vmem:[%s3752 + $0x80] sm:$0xff] %vm2173, %v4062
    %4079 = vst.msk [vmem:[%s3752 + $0x98] sm:$0xff] %vm2173, %v4063
    %4080 = vst.msk [vmem:[%s3752 + $0xb0] sm:$0xff] %vm2173, %v4064
    %4081 = vst.msk [vmem:[%s3752 + $0xc8] sm:$0xff] %vm2173, %v4065
    %4082 = vst.msk [vmem:[%s3752 + $0xe0] sm:$0xff] %vm2173, %v4066
    %4083 = vst.msk [vmem:[%s3752 + $0xf8] sm:$0xff] %vm2173, %v4067
    %4084 = vst.msk [vmem:[%s3752 + $0x110] sm:$0xff] %vm2173, %v4068
    %4085 = vst.msk [vmem:[%s3752 + $0x128] sm:$0xff] %vm2173, %v4069
    %4086 = vst.msk [vmem:[%s3752 + $0x140] sm:$0xff] %vm2173, %v4070
    %4087 = vst.msk [vmem:[%s3752 + $0x158] sm:$0xff] %vm2173, %v4071
    %4088 = vst.msk [vmem:[%s3752 + $0x170] sm:$0xff] %vm2173, %v4072
    %v4089 = vld [vmem:[%s2370 + $0x1] sm:$0xff]
    %v4090 = vld [vmem:[%s2370 + $0x11] sm:$0xff]
    %v4091 = vld [vmem:[%s2370 + $0x21] sm:$0xff]
    %v4092 = vld [vmem:[%s2370 + $0x31] sm:$0xff]
    %v4093 = vld [vmem:[%s2370 + $0x41] sm:$0xff]
    %v4094 = vld [vmem:[%s2370 + $0x51] sm:$0xff]
    %v4095 = vld [vmem:[%s2370 + $0x61] sm:$0xff]
    %v4096 = vld [vmem:[%s2370 + $0x71] sm:$0xff]
    %v4097 = vld [vmem:[%s2370 + $0x91] sm:$0xff]
    %v4098 = vld [vmem:[%s2370 + $0xa1] sm:$0xff]
    %v4099 = vld [vmem:[%s2370 + $0xb1] sm:$0xff]
    %v4100 = vld [vmem:[%s2370 + $0xc1] sm:$0xff]
    %v4101 = vld [vmem:[%s2370 + $0xd1] sm:$0xff]
    %v4102 = vld [vmem:[%s2370 + $0xe1] sm:$0xff]
    %v4103 = vld [vmem:[%s2370 + $0xf1] sm:$0xff]
    %v4104 = vld [vmem:[%s2370 + $0x101] sm:$0xff]
    %4121 = vrot.lane.b32.xlu0 %v4089, 32
    %v4122 = vpop.permute.xlu0 %4121
    %4123 = vrot.lane.b32.xlu0 %v4090, 32
    %v4124 = vpop.permute.xlu0 %4123
    %4125 = vrot.lane.b32.xlu0 %v4091, 32
    %v4126 = vpop.permute.xlu0 %4125
    %4127 = vrot.lane.b32.xlu0 %v4092, 32
    %v4128 = vpop.permute.xlu0 %4127
    %4129 = vrot.lane.b32.xlu0 %v4093, 32
    %v4130 = vpop.permute.xlu0 %4129
    %4131 = vrot.lane.b32.xlu0 %v4094, 32
    %v4132 = vpop.permute.xlu0 %4131
    %4133 = vrot.lane.b32.xlu0 %v4095, 32
    %v4134 = vpop.permute.xlu0 %4133
    %4135 = vrot.lane.b32.xlu0 %v4096, 32
    %v4136 = vpop.permute.xlu0 %4135
    %4137 = vrot.lane.b32.xlu0 %v4097, 32
    %v4138 = vpop.permute.xlu0 %4137
    %4139 = vrot.lane.b32.xlu0 %v4098, 32
    %v4140 = vpop.permute.xlu0 %4139
    %4141 = vrot.lane.b32.xlu0 %v4099, 32
    %v4142 = vpop.permute.xlu0 %4141
    %4143 = vrot.lane.b32.xlu0 %v4100, 32
    %v4144 = vpop.permute.xlu0 %4143
    %4145 = vrot.lane.b32.xlu0 %v4101, 32
    %v4146 = vpop.permute.xlu0 %4145
    %4147 = vrot.lane.b32.xlu0 %v4102, 32
    %v4148 = vpop.permute.xlu0 %4147
    %4149 = vrot.lane.b32.xlu0 %v4103, 32
    %v4150 = vpop.permute.xlu0 %4149
    %4151 = vrot.lane.b32.xlu0 %v4104, 32
    %v4152 = vpop.permute.xlu0 %4151
    %4169 = vst.msk [vmem:[%s3752 + $0x8] sm:$0xff] %vm2500, %v4122
    %4170 = vst.msk [vmem:[%s3752 + $0x20] sm:$0xff] %vm2500, %v4124
    %4171 = vst.msk [vmem:[%s3752 + $0x38] sm:$0xff] %vm2500, %v4126
    %4172 = vst.msk [vmem:[%s3752 + $0x50] sm:$0xff] %vm2500, %v4128
    %4173 = vst.msk [vmem:[%s3752 + $0x68] sm:$0xff] %vm2500, %v4130
    %4174 = vst.msk [vmem:[%s3752 + $0x80] sm:$0xff] %vm2500, %v4132
    %4175 = vst.msk [vmem:[%s3752 + $0x98] sm:$0xff] %vm2500, %v4134
    %4176 = vst.msk [vmem:[%s3752 + $0xb0] sm:$0xff] %vm2500, %v4136
    %4177 = vst.msk [vmem:[%s3752 + $0xc8] sm:$0xff] %vm2500, %v4138
    %4178 = vst.msk [vmem:[%s3752 + $0xe0] sm:$0xff] %vm2500, %v4140
    %4179 = vst.msk [vmem:[%s3752 + $0xf8] sm:$0xff] %vm2500, %v4142
    %4180 = vst.msk [vmem:[%s3752 + $0x110] sm:$0xff] %vm2500, %v4144
    %4181 = vst.msk [vmem:[%s3752 + $0x128] sm:$0xff] %vm2500, %v4146
    %4182 = vst.msk [vmem:[%s3752 + $0x140] sm:$0xff] %vm2500, %v4148
    %4183 = vst.msk [vmem:[%s3752 + $0x158] sm:$0xff] %vm2500, %v4150
    %4184 = vst.msk [vmem:[%s3752 + $0x170] sm:$0xff] %vm2500, %v4152
    %s4185 = scalar_lea.vmem [#allocation2], 592
    %v4186 = vld [vmem:[%s4185] sm:$0xff]
    %v4187 = vld [vmem:[%s4185 + $0x10] sm:$0xff]
    %v4188 = vld [vmem:[%s4185 + $0x20] sm:$0xff]
    %v4189 = vld [vmem:[%s4185 + $0x30] sm:$0xff]
    %v4190 = vld [vmem:[%s4185 + $0x40] sm:$0xff]
    %v4191 = vld [vmem:[%s4185 + $0x50] sm:$0xff]
    %v4192 = vld [vmem:[%s4185 + $0x60] sm:$0xff]
    %v4193 = vld [vmem:[%s4185 + $0x70] sm:$0xff]
    %v4194 = vld [vmem:[%s4185 + $0x90] sm:$0xff]
    %v4195 = vld [vmem:[%s4185 + $0xa0] sm:$0xff]
    %v4196 = vld [vmem:[%s4185 + $0xb0] sm:$0xff]
    %v4197 = vld [vmem:[%s4185 + $0xc0] sm:$0xff]
    %v4198 = vld [vmem:[%s4185 + $0xd0] sm:$0xff]
    %v4199 = vld [vmem:[%s4185 + $0xe0] sm:$0xff]
    %v4200 = vld [vmem:[%s4185 + $0xf0] sm:$0xff]
    %v4201 = vld [vmem:[%s4185 + $0x100] sm:$0xff]
    %4218 = vrot.lane.b32.xlu0 %v4186, 64
    %v4219 = vpop.permute.xlu0 %4218
    %4220 = vrot.lane.b32.xlu0 %v4187, 64
    %v4221 = vpop.permute.xlu0 %4220
    %4222 = vrot.lane.b32.xlu0 %v4188, 64
    %v4223 = vpop.permute.xlu0 %4222
    %4224 = vrot.lane.b32.xlu0 %v4189, 64
    %v4225 = vpop.permute.xlu0 %4224
    %4226 = vrot.lane.b32.xlu0 %v4190, 64
    %v4227 = vpop.permute.xlu0 %4226
    %4228 = vrot.lane.b32.xlu0 %v4191, 64
    %v4229 = vpop.permute.xlu0 %4228
    %4230 = vrot.lane.b32.xlu0 %v4192, 64
    %v4231 = vpop.permute.xlu0 %4230
    %4232 = vrot.lane.b32.xlu0 %v4193, 64
    %v4233 = vpop.permute.xlu0 %4232
    %4234 = vrot.lane.b32.xlu0 %v4194, 64
    %v4235 = vpop.permute.xlu0 %4234
    %4236 = vrot.lane.b32.xlu0 %v4195, 64
    %v4237 = vpop.permute.xlu0 %4236
    %4238 = vrot.lane.b32.xlu0 %v4196, 64
    %v4239 = vpop.permute.xlu0 %4238
    %4240 = vrot.lane.b32.xlu0 %v4197, 64
    %v4241 = vpop.permute.xlu0 %4240
    %4242 = vrot.lane.b32.xlu0 %v4198, 64
    %v4243 = vpop.permute.xlu0 %4242
    %4244 = vrot.lane.b32.xlu0 %v4199, 64
    %v4245 = vpop.permute.xlu0 %4244
    %4246 = vrot.lane.b32.xlu0 %v4200, 64
    %v4247 = vpop.permute.xlu0 %4246
    %4248 = vrot.lane.b32.xlu0 %v4201, 64
    %v4249 = vpop.permute.xlu0 %4248
    %4266 = vst.msk [vmem:[%s3752 + $0x8] sm:$0xff] %vm2597, %v4219
    %4267 = vst.msk [vmem:[%s3752 + $0x20] sm:$0xff] %vm2597, %v4221
    %4268 = vst.msk [vmem:[%s3752 + $0x38] sm:$0xff] %vm2597, %v4223
    %4269 = vst.msk [vmem:[%s3752 + $0x50] sm:$0xff] %vm2597, %v4225
    %4270 = vst.msk [vmem:[%s3752 + $0x68] sm:$0xff] %vm2597, %v4227
    %4271 = vst.msk [vmem:[%s3752 + $0x80] sm:$0xff] %vm2597, %v4229
    %4272 = vst.msk [vmem:[%s3752 + $0x98] sm:$0xff] %vm2597, %v4231
    %4273 = vst.msk [vmem:[%s3752 + $0xb0] sm:$0xff] %vm2597, %v4233
    %4274 = vst.msk [vmem:[%s3752 + $0xc8] sm:$0xff] %vm2597, %v4235
    %4275 = vst.msk [vmem:[%s3752 + $0xe0] sm:$0xff] %vm2597, %v4237
    %4276 = vst.msk [vmem:[%s3752 + $0xf8] sm:$0xff] %vm2597, %v4239
    %4277 = vst.msk [vmem:[%s3752 + $0x110] sm:$0xff] %vm2597, %v4241
    %4278 = vst.msk [vmem:[%s3752 + $0x128] sm:$0xff] %vm2597, %v4243
    %4279 = vst.msk [vmem:[%s3752 + $0x140] sm:$0xff] %vm2597, %v4245
    %4280 = vst.msk [vmem:[%s3752 + $0x158] sm:$0xff] %vm2597, %v4247
    %4281 = vst.msk [vmem:[%s3752 + $0x170] sm:$0xff] %vm2597, %v4249
    %s4282 = scalar_lea.vmem [#allocation2], 880
    %v4283 = vld [vmem:[%s4282] sm:$0xff]
    %v4284 = vld [vmem:[%s4282 + $0x10] sm:$0xff]
    %v4285 = vld [vmem:[%s4282 + $0x20] sm:$0xff]
    %v4286 = vld [vmem:[%s4282 + $0x30] sm:$0xff]
    %v4287 = vld [vmem:[%s4282 + $0x40] sm:$0xff]
    %v4288 = vld [vmem:[%s4282 + $0x50] sm:$0xff]
    %v4289 = vld [vmem:[%s4282 + $0x60] sm:$0xff]
    %v4290 = vld [vmem:[%s4282 + $0x70] sm:$0xff]
    %v4291 = vld [vmem:[%s4282 + $0x90] sm:$0xff]
    %v4292 = vld [vmem:[%s4282 + $0xa0] sm:$0xff]
    %v4293 = vld [vmem:[%s4282 + $0xb0] sm:$0xff]
    %v4294 = vld [vmem:[%s4282 + $0xc0] sm:$0xff]
    %v4295 = vld [vmem:[%s4282 + $0xd0] sm:$0xff]
    %v4296 = vld [vmem:[%s4282 + $0xe0] sm:$0xff]
    %v4297 = vld [vmem:[%s4282 + $0xf0] sm:$0xff]
    %v4298 = vld [vmem:[%s4282 + $0x100] sm:$0xff]
    %4315 = vrot.lane.b32.xlu0 %v4283, 96
    %v4316 = vpop.permute.xlu0 %4315
    %4317 = vrot.lane.b32.xlu0 %v4284, 96
    %v4318 = vpop.permute.xlu0 %4317
    %4319 = vrot.lane.b32.xlu0 %v4285, 96
    %v4320 = vpop.permute.xlu0 %4319
    %4321 = vrot.lane.b32.xlu0 %v4286, 96
    %v4322 = vpop.permute.xlu0 %4321
    %4323 = vrot.lane.b32.xlu0 %v4287, 96
    %v4324 = vpop.permute.xlu0 %4323
    %4325 = vrot.lane.b32.xlu0 %v4288, 96
    %v4326 = vpop.permute.xlu0 %4325
    %4327 = vrot.lane.b32.xlu0 %v4289, 96
    %v4328 = vpop.permute.xlu0 %4327
    %4329 = vrot.lane.b32.xlu0 %v4290, 96
    %v4330 = vpop.permute.xlu0 %4329
    %4331 = vrot.lane.b32.xlu0 %v4291, 96
    %v4332 = vpop.permute.xlu0 %4331
    %4333 = vrot.lane.b32.xlu0 %v4292, 96
    %v4334 = vpop.permute.xlu0 %4333
    %4335 = vrot.lane.b32.xlu0 %v4293, 96
    %v4336 = vpop.permute.xlu0 %4335
    %4337 = vrot.lane.b32.xlu0 %v4294, 96
    %v4338 = vpop.permute.xlu0 %4337
    %4339 = vrot.lane.b32.xlu0 %v4295, 96
    %v4340 = vpop.permute.xlu0 %4339
    %4341 = vrot.lane.b32.xlu0 %v4296, 96
    %v4342 = vpop.permute.xlu0 %4341
    %4343 = vrot.lane.b32.xlu0 %v4297, 96
    %v4344 = vpop.permute.xlu0 %4343
    %4345 = vrot.lane.b32.xlu0 %v4298, 96
    %v4346 = vpop.permute.xlu0 %4345
    %4363 = vst.msk [vmem:[%s3752 + $0x8] sm:$0xff] %vm2694, %v4316
    %4364 = vst.msk [vmem:[%s3752 + $0x20] sm:$0xff] %vm2694, %v4318
    %4365 = vst.msk [vmem:[%s3752 + $0x38] sm:$0xff] %vm2694, %v4320
    %4366 = vst.msk [vmem:[%s3752 + $0x50] sm:$0xff] %vm2694, %v4322
    %4367 = vst.msk [vmem:[%s3752 + $0x68] sm:$0xff] %vm2694, %v4324
    %4368 = vst.msk [vmem:[%s3752 + $0x80] sm:$0xff] %vm2694, %v4326
    %4369 = vst.msk [vmem:[%s3752 + $0x98] sm:$0xff] %vm2694, %v4328
    %4370 = vst.msk [vmem:[%s3752 + $0xb0] sm:$0xff] %vm2694, %v4330
    %4371 = vst.msk [vmem:[%s3752 + $0xc8] sm:$0xff] %vm2694, %v4332
    %4372 = vst.msk [vmem:[%s3752 + $0xe0] sm:$0xff] %vm2694, %v4334
    %4373 = vst.msk [vmem:[%s3752 + $0xf8] sm:$0xff] %vm2694, %v4336
    %4374 = vst.msk [vmem:[%s3752 + $0x110] sm:$0xff] %vm2694, %v4338
    %4375 = vst.msk [vmem:[%s3752 + $0x128] sm:$0xff] %vm2694, %v4340
    %4376 = vst.msk [vmem:[%s3752 + $0x140] sm:$0xff] %vm2694, %v4342
    %4377 = vst.msk [vmem:[%s3752 + $0x158] sm:$0xff] %vm2694, %v4344
    %4378 = vst.msk [vmem:[%s3752 + $0x170] sm:$0xff] %vm2694, %v4346
    %v4379 = vld [vmem:[%s4185 + $0x1] sm:$0xff]
    %v4380 = vld [vmem:[%s4185 + $0x11] sm:$0xff]
    %v4381 = vld [vmem:[%s4185 + $0x21] sm:$0xff]
    %v4382 = vld [vmem:[%s4185 + $0x31] sm:$0xff]
    %v4383 = vld [vmem:[%s4185 + $0x41] sm:$0xff]
    %v4384 = vld [vmem:[%s4185 + $0x51] sm:$0xff]
    %v4385 = vld [vmem:[%s4185 + $0x61] sm:$0xff]
    %v4386 = vld [vmem:[%s4185 + $0x71] sm:$0xff]
    %v4387 = vld [vmem:[%s4185 + $0x91] sm:$0xff]
    %v4388 = vld [vmem:[%s4185 + $0xa1] sm:$0xff]
    %v4389 = vld [vmem:[%s4185 + $0xb1] sm:$0xff]
    %v4390 = vld [vmem:[%s4185 + $0xc1] sm:$0xff]
    %v4391 = vld [vmem:[%s4185 + $0xd1] sm:$0xff]
    %v4392 = vld [vmem:[%s4185 + $0xe1] sm:$0xff]
    %v4393 = vld [vmem:[%s4185 + $0xf1] sm:$0xff]
    %v4394 = vld [vmem:[%s4185 + $0x101] sm:$0xff]
    %4395 = vst.msk [vmem:[%s3752 + $0x10] sm:$0xff] %vm2173, %v4379
    %4396 = vst.msk [vmem:[%s3752 + $0x28] sm:$0xff] %vm2173, %v4380
    %4397 = vst.msk [vmem:[%s3752 + $0x40] sm:$0xff] %vm2173, %v4381
    %4398 = vst.msk [vmem:[%s3752 + $0x58] sm:$0xff] %vm2173, %v4382
    %4399 = vst.msk [vmem:[%s3752 + $0x70] sm:$0xff] %vm2173, %v4383
    %4400 = vst.msk [vmem:[%s3752 + $0x88] sm:$0xff] %vm2173, %v4384
    %4401 = vst.msk [vmem:[%s3752 + $0xa0] sm:$0xff] %vm2173, %v4385
    %4402 = vst.msk [vmem:[%s3752 + $0xb8] sm:$0xff] %vm2173, %v4386
    %4403 = vst.msk [vmem:[%s3752 + $0xd0] sm:$0xff] %vm2173, %v4387
    %4404 = vst.msk [vmem:[%s3752 + $0xe8] sm:$0xff] %vm2173, %v4388
    %4405 = vst.msk [vmem:[%s3752 + $0x100] sm:$0xff] %vm2173, %v4389
    %4406 = vst.msk [vmem:[%s3752 + $0x118] sm:$0xff] %vm2173, %v4390
    %4407 = vst.msk [vmem:[%s3752 + $0x130] sm:$0xff] %vm2173, %v4391
    %4408 = vst.msk [vmem:[%s3752 + $0x148] sm:$0xff] %vm2173, %v4392
    %4409 = vst.msk [vmem:[%s3752 + $0x160] sm:$0xff] %vm2173, %v4393
    %4410 = vst.msk [vmem:[%s3752 + $0x178] sm:$0xff] %vm2173, %v4394
    %v4411 = vld [vmem:[%s2319] sm:$0xff]
    %v4412 = vld [vmem:[%s2319 + $0x10] sm:$0xff]
    %v4413 = vld [vmem:[%s2319 + $0x20] sm:$0xff]
    %v4414 = vld [vmem:[%s2319 + $0x30] sm:$0xff]
    %v4415 = vld [vmem:[%s2319 + $0x40] sm:$0xff]
    %v4416 = vld [vmem:[%s2319 + $0x50] sm:$0xff]
    %v4417 = vld [vmem:[%s2319 + $0x60] sm:$0xff]
    %v4418 = vld [vmem:[%s2319 + $0x70] sm:$0xff]
    %v4419 = vld [vmem:[%s2319 + $0x90] sm:$0xff]
    %v4420 = vld [vmem:[%s2319 + $0xa0] sm:$0xff]
    %v4421 = vld [vmem:[%s2319 + $0xb0] sm:$0xff]
    %v4422 = vld [vmem:[%s2319 + $0xc0] sm:$0xff]
    %v4423 = vld [vmem:[%s2319 + $0xd0] sm:$0xff]
    %v4424 = vld [vmem:[%s2319 + $0xe0] sm:$0xff]
    %v4425 = vld [vmem:[%s2319 + $0xf0] sm:$0xff]
    %v4426 = vld [vmem:[%s2319 + $0x100] sm:$0xff]
    %s4427 = scalar_lea.vmem [#allocation3], 1152
    %4428 = vst.msk [vmem:[%s4427] sm:$0xff] %vm2173, %v4411
    %4429 = vst.msk [vmem:[%s4427 + $0x18] sm:$0xff] %vm2173, %v4412
    %4430 = vst.msk [vmem:[%s4427 + $0x30] sm:$0xff] %vm2173, %v4413
    %4431 = vst.msk [vmem:[%s4427 + $0x48] sm:$0xff] %vm2173, %v4414
    %4432 = vst.msk [vmem:[%s4427 + $0x60] sm:$0xff] %vm2173, %v4415
    %4433 = vst.msk [vmem:[%s4427 + $0x78] sm:$0xff] %vm2173, %v4416
    %4434 = vst.msk [vmem:[%s4427 + $0x90] sm:$0xff] %vm2173, %v4417
    %4435 = vst.msk [vmem:[%s4427 + $0xa8] sm:$0xff] %vm2173, %v4418
    %4436 = vst.msk [vmem:[%s4427 + $0xc0] sm:$0xff] %vm2173, %v4419
    %4437 = vst.msk [vmem:[%s4427 + $0xd8] sm:$0xff] %vm2173, %v4420
    %4438 = vst.msk [vmem:[%s4427 + $0xf0] sm:$0xff] %vm2173, %v4421
    %4439 = vst.msk [vmem:[%s4427 + $0x108] sm:$0xff] %vm2173, %v4422
    %4440 = vst.msk [vmem:[%s4427 + $0x120] sm:$0xff] %vm2173, %v4423
    %4441 = vst.msk [vmem:[%s4427 + $0x138] sm:$0xff] %vm2173, %v4424
    %4442 = vst.msk [vmem:[%s4427 + $0x150] sm:$0xff] %vm2173, %v4425
    %4443 = vst.msk [vmem:[%s4427 + $0x168] sm:$0xff] %vm2173, %v4426
    %v4444 = vld [vmem:[%s2336 + $0x1] sm:$0xff]
    %v4445 = vld [vmem:[%s2336 + $0x11] sm:$0xff]
    %v4446 = vld [vmem:[%s2336 + $0x21] sm:$0xff]
    %v4447 = vld [vmem:[%s2336 + $0x31] sm:$0xff]
    %v4448 = vld [vmem:[%s2336 + $0x41] sm:$0xff]
    %v4449 = vld [vmem:[%s2336 + $0x51] sm:$0xff]
    %v4450 = vld [vmem:[%s2336 + $0x61] sm:$0xff]
    %v4451 = vld [vmem:[%s2336 + $0x71] sm:$0xff]
    %v4452 = vld [vmem:[%s2336 + $0x91] sm:$0xff]
    %v4453 = vld [vmem:[%s2336 + $0xa1] sm:$0xff]
    %v4454 = vld [vmem:[%s2336 + $0xb1] sm:$0xff]
    %v4455 = vld [vmem:[%s2336 + $0xc1] sm:$0xff]
    %v4456 = vld [vmem:[%s2336 + $0xd1] sm:$0xff]
    %v4457 = vld [vmem:[%s2336 + $0xe1] sm:$0xff]
    %v4458 = vld [vmem:[%s2336 + $0xf1] sm:$0xff]
    %v4459 = vld [vmem:[%s2336 + $0x101] sm:$0xff]
    %4476 = vrot.lane.b32.xlu0 %v4444, 32
    %v4477 = vpop.permute.xlu0 %4476
    %4478 = vrot.lane.b32.xlu0 %v4445, 32
    %v4479 = vpop.permute.xlu0 %4478
    %4480 = vrot.lane.b32.xlu0 %v4446, 32
    %v4481 = vpop.permute.xlu0 %4480
    %4482 = vrot.lane.b32.xlu0 %v4447, 32
    %v4483 = vpop.permute.xlu0 %4482
    %4484 = vrot.lane.b32.xlu0 %v4448, 32
    %v4485 = vpop.permute.xlu0 %4484
    %4486 = vrot.lane.b32.xlu0 %v4449, 32
    %v4487 = vpop.permute.xlu0 %4486
    %4488 = vrot.lane.b32.xlu0 %v4450, 32
    %v4489 = vpop.permute.xlu0 %4488
    %4490 = vrot.lane.b32.xlu0 %v4451, 32
    %v4491 = vpop.permute.xlu0 %4490
    %4492 = vrot.lane.b32.xlu0 %v4452, 32
    %v4493 = vpop.permute.xlu0 %4492
    %4494 = vrot.lane.b32.xlu0 %v4453, 32
    %v4495 = vpop.permute.xlu0 %4494
    %4496 = vrot.lane.b32.xlu0 %v4454, 32
    %v4497 = vpop.permute.xlu0 %4496
    %4498 = vrot.lane.b32.xlu0 %v4455, 32
    %v4499 = vpop.permute.xlu0 %4498
    %4500 = vrot.lane.b32.xlu0 %v4456, 32
    %v4501 = vpop.permute.xlu0 %4500
    %4502 = vrot.lane.b32.xlu0 %v4457, 32
    %v4503 = vpop.permute.xlu0 %4502
    %4504 = vrot.lane.b32.xlu0 %v4458, 32
    %v4505 = vpop.permute.xlu0 %4504
    %4506 = vrot.lane.b32.xlu0 %v4459, 32
    %v4507 = vpop.permute.xlu0 %4506
    %4524 = vst.msk [vmem:[%s4427] sm:$0xff] %vm2500, %v4477
    %4525 = vst.msk [vmem:[%s4427 + $0x18] sm:$0xff] %vm2500, %v4479
    %4526 = vst.msk [vmem:[%s4427 + $0x30] sm:$0xff] %vm2500, %v4481
    %4527 = vst.msk [vmem:[%s4427 + $0x48] sm:$0xff] %vm2500, %v4483
    %4528 = vst.msk [vmem:[%s4427 + $0x60] sm:$0xff] %vm2500, %v4485
    %4529 = vst.msk [vmem:[%s4427 + $0x78] sm:$0xff] %vm2500, %v4487
    %4530 = vst.msk [vmem:[%s4427 + $0x90] sm:$0xff] %vm2500, %v4489
    %4531 = vst.msk [vmem:[%s4427 + $0xa8] sm:$0xff] %vm2500, %v4491
    %4532 = vst.msk [vmem:[%s4427 + $0xc0] sm:$0xff] %vm2500, %v4493
    %4533 = vst.msk [vmem:[%s4427 + $0xd8] sm:$0xff] %vm2500, %v4495
    %4534 = vst.msk [vmem:[%s4427 + $0xf0] sm:$0xff] %vm2500, %v4497
    %4535 = vst.msk [vmem:[%s4427 + $0x108] sm:$0xff] %vm2500, %v4499
    %4536 = vst.msk [vmem:[%s4427 + $0x120] sm:$0xff] %vm2500, %v4501
    %4537 = vst.msk [vmem:[%s4427 + $0x138] sm:$0xff] %vm2500, %v4503
    %4538 = vst.msk [vmem:[%s4427 + $0x150] sm:$0xff] %vm2500, %v4505
    %4539 = vst.msk [vmem:[%s4427 + $0x168] sm:$0xff] %vm2500, %v4507
    %v4540 = vld [vmem:[%s2319 + $0x1] sm:$0xff]
    %v4541 = vld [vmem:[%s2319 + $0x11] sm:$0xff]
    %v4542 = vld [vmem:[%s2319 + $0x21] sm:$0xff]
    %v4543 = vld [vmem:[%s2319 + $0x31] sm:$0xff]
    %v4544 = vld [vmem:[%s2319 + $0x41] sm:$0xff]
    %v4545 = vld [vmem:[%s2319 + $0x51] sm:$0xff]
    %v4546 = vld [vmem:[%s2319 + $0x61] sm:$0xff]
    %v4547 = vld [vmem:[%s2319 + $0x71] sm:$0xff]
    %v4548 = vld [vmem:[%s2319 + $0x91] sm:$0xff]
    %v4549 = vld [vmem:[%s2319 + $0xa1] sm:$0xff]
    %v4550 = vld [vmem:[%s2319 + $0xb1] sm:$0xff]
    %v4551 = vld [vmem:[%s2319 + $0xc1] sm:$0xff]
    %v4552 = vld [vmem:[%s2319 + $0xd1] sm:$0xff]
    %v4553 = vld [vmem:[%s2319 + $0xe1] sm:$0xff]
    %v4554 = vld [vmem:[%s2319 + $0xf1] sm:$0xff]
    %v4555 = vld [vmem:[%s2319 + $0x101] sm:$0xff]
    %4572 = vrot.lane.b32.xlu0 %v4540, 64
    %v4573 = vpop.permute.xlu0 %4572
    %4574 = vrot.lane.b32.xlu0 %v4541, 64
    %v4575 = vpop.permute.xlu0 %4574
    %4576 = vrot.lane.b32.xlu0 %v4542, 64
    %v4577 = vpop.permute.xlu0 %4576
    %4578 = vrot.lane.b32.xlu0 %v4543, 64
    %v4579 = vpop.permute.xlu0 %4578
    %4580 = vrot.lane.b32.xlu0 %v4544, 64
    %v4581 = vpop.permute.xlu0 %4580
    %4582 = vrot.lane.b32.xlu0 %v4545, 64
    %v4583 = vpop.permute.xlu0 %4582
    %4584 = vrot.lane.b32.xlu0 %v4546, 64
    %v4585 = vpop.permute.xlu0 %4584
    %4586 = vrot.lane.b32.xlu0 %v4547, 64
    %v4587 = vpop.permute.xlu0 %4586
    %4588 = vrot.lane.b32.xlu0 %v4548, 64
    %v4589 = vpop.permute.xlu0 %4588
    %4590 = vrot.lane.b32.xlu0 %v4549, 64
    %v4591 = vpop.permute.xlu0 %4590
    %4592 = vrot.lane.b32.xlu0 %v4550, 64
    %v4593 = vpop.permute.xlu0 %4592
    %4594 = vrot.lane.b32.xlu0 %v4551, 64
    %v4595 = vpop.permute.xlu0 %4594
    %4596 = vrot.lane.b32.xlu0 %v4552, 64
    %v4597 = vpop.permute.xlu0 %4596
    %4598 = vrot.lane.b32.xlu0 %v4553, 64
    %v4599 = vpop.permute.xlu0 %4598
    %4600 = vrot.lane.b32.xlu0 %v4554, 64
    %v4601 = vpop.permute.xlu0 %4600
    %4602 = vrot.lane.b32.xlu0 %v4555, 64
    %v4603 = vpop.permute.xlu0 %4602
    %4620 = vst.msk [vmem:[%s4427] sm:$0xff] %vm2597, %v4573
    %4621 = vst.msk [vmem:[%s4427 + $0x18] sm:$0xff] %vm2597, %v4575
    %4622 = vst.msk [vmem:[%s4427 + $0x30] sm:$0xff] %vm2597, %v4577
    %4623 = vst.msk [vmem:[%s4427 + $0x48] sm:$0xff] %vm2597, %v4579
    %4624 = vst.msk [vmem:[%s4427 + $0x60] sm:$0xff] %vm2597, %v4581
    %4625 = vst.msk [vmem:[%s4427 + $0x78] sm:$0xff] %vm2597, %v4583
    %4626 = vst.msk [vmem:[%s4427 + $0x90] sm:$0xff] %vm2597, %v4585
    %4627 = vst.msk [vmem:[%s4427 + $0xa8] sm:$0xff] %vm2597, %v4587
    %4628 = vst.msk [vmem:[%s4427 + $0xc0] sm:$0xff] %vm2597, %v4589
    %4629 = vst.msk [vmem:[%s4427 + $0xd8] sm:$0xff] %vm2597, %v4591
    %4630 = vst.msk [vmem:[%s4427 + $0xf0] sm:$0xff] %vm2597, %v4593
    %4631 = vst.msk [vmem:[%s4427 + $0x108] sm:$0xff] %vm2597, %v4595
    %4632 = vst.msk [vmem:[%s4427 + $0x120] sm:$0xff] %vm2597, %v4597
    %4633 = vst.msk [vmem:[%s4427 + $0x138] sm:$0xff] %vm2597, %v4599
    %4634 = vst.msk [vmem:[%s4427 + $0x150] sm:$0xff] %vm2597, %v4601
    %4635 = vst.msk [vmem:[%s4427 + $0x168] sm:$0xff] %vm2597, %v4603
    %v4636 = vld [vmem:[%s2353] sm:$0xff]
    %v4637 = vld [vmem:[%s2353 + $0x10] sm:$0xff]
    %v4638 = vld [vmem:[%s2353 + $0x20] sm:$0xff]
    %v4639 = vld [vmem:[%s2353 + $0x30] sm:$0xff]
    %v4640 = vld [vmem:[%s2353 + $0x40] sm:$0xff]
    %v4641 = vld [vmem:[%s2353 + $0x50] sm:$0xff]
    %v4642 = vld [vmem:[%s2353 + $0x60] sm:$0xff]
    %v4643 = vld [vmem:[%s2353 + $0x70] sm:$0xff]
    %v4644 = vld [vmem:[%s2353 + $0x90] sm:$0xff]
    %v4645 = vld [vmem:[%s2353 + $0xa0] sm:$0xff]
    %v4646 = vld [vmem:[%s2353 + $0xb0] sm:$0xff]
    %v4647 = vld [vmem:[%s2353 + $0xc0] sm:$0xff]
    %v4648 = vld [vmem:[%s2353 + $0xd0] sm:$0xff]
    %v4649 = vld [vmem:[%s2353 + $0xe0] sm:$0xff]
    %v4650 = vld [vmem:[%s2353 + $0xf0] sm:$0xff]
    %v4651 = vld [vmem:[%s2353 + $0x100] sm:$0xff]
    %4668 = vrot.lane.b32.xlu0 %v4636, 96
    %v4669 = vpop.permute.xlu0 %4668
    %4670 = vrot.lane.b32.xlu0 %v4637, 96
    %v4671 = vpop.permute.xlu0 %4670
    %4672 = vrot.lane.b32.xlu0 %v4638, 96
    %v4673 = vpop.permute.xlu0 %4672
    %4674 = vrot.lane.b32.xlu0 %v4639, 96
    %v4675 = vpop.permute.xlu0 %4674
    %4676 = vrot.lane.b32.xlu0 %v4640, 96
    %v4677 = vpop.permute.xlu0 %4676
    %4678 = vrot.lane.b32.xlu0 %v4641, 96
    %v4679 = vpop.permute.xlu0 %4678
    %4680 = vrot.lane.b32.xlu0 %v4642, 96
    %v4681 = vpop.permute.xlu0 %4680
    %4682 = vrot.lane.b32.xlu0 %v4643, 96
    %v4683 = vpop.permute.xlu0 %4682
    %4684 = vrot.lane.b32.xlu0 %v4644, 96
    %v4685 = vpop.permute.xlu0 %4684
    %4686 = vrot.lane.b32.xlu0 %v4645, 96
    %v4687 = vpop.permute.xlu0 %4686
    %4688 = vrot.lane.b32.xlu0 %v4646, 96
    %v4689 = vpop.permute.xlu0 %4688
    %4690 = vrot.lane.b32.xlu0 %v4647, 96
    %v4691 = vpop.permute.xlu0 %4690
    %4692 = vrot.lane.b32.xlu0 %v4648, 96
    %v4693 = vpop.permute.xlu0 %4692
    %4694 = vrot.lane.b32.xlu0 %v4649, 96
    %v4695 = vpop.permute.xlu0 %4694
    %4696 = vrot.lane.b32.xlu0 %v4650, 96
    %v4697 = vpop.permute.xlu0 %4696
    %4698 = vrot.lane.b32.xlu0 %v4651, 96
    %v4699 = vpop.permute.xlu0 %4698
    %4716 = vst.msk [vmem:[%s4427] sm:$0xff] %vm2694, %v4669
    %4717 = vst.msk [vmem:[%s4427 + $0x18] sm:$0xff] %vm2694, %v4671
    %4718 = vst.msk [vmem:[%s4427 + $0x30] sm:$0xff] %vm2694, %v4673
    %4719 = vst.msk [vmem:[%s4427 + $0x48] sm:$0xff] %vm2694, %v4675
    %4720 = vst.msk [vmem:[%s4427 + $0x60] sm:$0xff] %vm2694, %v4677
    %4721 = vst.msk [vmem:[%s4427 + $0x78] sm:$0xff] %vm2694, %v4679
    %4722 = vst.msk [vmem:[%s4427 + $0x90] sm:$0xff] %vm2694, %v4681
    %4723 = vst.msk [vmem:[%s4427 + $0xa8] sm:$0xff] %vm2694, %v4683
    %4724 = vst.msk [vmem:[%s4427 + $0xc0] sm:$0xff] %vm2694, %v4685
    %4725 = vst.msk [vmem:[%s4427 + $0xd8] sm:$0xff] %vm2694, %v4687
    %4726 = vst.msk [vmem:[%s4427 + $0xf0] sm:$0xff] %vm2694, %v4689
    %4727 = vst.msk [vmem:[%s4427 + $0x108] sm:$0xff] %vm2694, %v4691
    %4728 = vst.msk [vmem:[%s4427 + $0x120] sm:$0xff] %vm2694, %v4693
    %4729 = vst.msk [vmem:[%s4427 + $0x138] sm:$0xff] %vm2694, %v4695
    %4730 = vst.msk [vmem:[%s4427 + $0x150] sm:$0xff] %vm2694, %v4697
    %4731 = vst.msk [vmem:[%s4427 + $0x168] sm:$0xff] %vm2694, %v4699
    %v4732 = vld [vmem:[%s2370 + $0x1] sm:$0xff]
    %v4733 = vld [vmem:[%s2370 + $0x11] sm:$0xff]
    %v4734 = vld [vmem:[%s2370 + $0x21] sm:$0xff]
    %v4735 = vld [vmem:[%s2370 + $0x31] sm:$0xff]
    %v4736 = vld [vmem:[%s2370 + $0x41] sm:$0xff]
    %v4737 = vld [vmem:[%s2370 + $0x51] sm:$0xff]
    %v4738 = vld [vmem:[%s2370 + $0x61] sm:$0xff]
    %v4739 = vld [vmem:[%s2370 + $0x71] sm:$0xff]
    %v4740 = vld [vmem:[%s2370 + $0x91] sm:$0xff]
    %v4741 = vld [vmem:[%s2370 + $0xa1] sm:$0xff]
    %v4742 = vld [vmem:[%s2370 + $0xb1] sm:$0xff]
    %v4743 = vld [vmem:[%s2370 + $0xc1] sm:$0xff]
    %v4744 = vld [vmem:[%s2370 + $0xd1] sm:$0xff]
    %v4745 = vld [vmem:[%s2370 + $0xe1] sm:$0xff]
    %v4746 = vld [vmem:[%s2370 + $0xf1] sm:$0xff]
    %v4747 = vld [vmem:[%s2370 + $0x101] sm:$0xff]
    %4748 = vst.msk [vmem:[%s4427 + $0x8] sm:$0xff] %vm2173, %v4732
    %4749 = vst.msk [vmem:[%s4427 + $0x20] sm:$0xff] %vm2173, %v4733
    %4750 = vst.msk [vmem:[%s4427 + $0x38] sm:$0xff] %vm2173, %v4734
    %4751 = vst.msk [vmem:[%s4427 + $0x50] sm:$0xff] %vm2173, %v4735
    %4752 = vst.msk [vmem:[%s4427 + $0x68] sm:$0xff] %vm2173, %v4736
    %4753 = vst.msk [vmem:[%s4427 + $0x80] sm:$0xff] %vm2173, %v4737
    %4754 = vst.msk [vmem:[%s4427 + $0x98] sm:$0xff] %vm2173, %v4738
    %4755 = vst.msk [vmem:[%s4427 + $0xb0] sm:$0xff] %vm2173, %v4739
    %4756 = vst.msk [vmem:[%s4427 + $0xc8] sm:$0xff] %vm2173, %v4740
    %4757 = vst.msk [vmem:[%s4427 + $0xe0] sm:$0xff] %vm2173, %v4741
    %4758 = vst.msk [vmem:[%s4427 + $0xf8] sm:$0xff] %vm2173, %v4742
    %4759 = vst.msk [vmem:[%s4427 + $0x110] sm:$0xff] %vm2173, %v4743
    %4760 = vst.msk [vmem:[%s4427 + $0x128] sm:$0xff] %vm2173, %v4744
    %4761 = vst.msk [vmem:[%s4427 + $0x140] sm:$0xff] %vm2173, %v4745
    %4762 = vst.msk [vmem:[%s4427 + $0x158] sm:$0xff] %vm2173, %v4746
    %4763 = vst.msk [vmem:[%s4427 + $0x170] sm:$0xff] %vm2173, %v4747
    %v4764 = vld [vmem:[%s2353 + $0x1] sm:$0xff]
    %v4765 = vld [vmem:[%s2353 + $0x11] sm:$0xff]
    %v4766 = vld [vmem:[%s2353 + $0x21] sm:$0xff]
    %v4767 = vld [vmem:[%s2353 + $0x31] sm:$0xff]
    %v4768 = vld [vmem:[%s2353 + $0x41] sm:$0xff]
    %v4769 = vld [vmem:[%s2353 + $0x51] sm:$0xff]
    %v4770 = vld [vmem:[%s2353 + $0x61] sm:$0xff]
    %v4771 = vld [vmem:[%s2353 + $0x71] sm:$0xff]
    %v4772 = vld [vmem:[%s2353 + $0x91] sm:$0xff]
    %v4773 = vld [vmem:[%s2353 + $0xa1] sm:$0xff]
    %v4774 = vld [vmem:[%s2353 + $0xb1] sm:$0xff]
    %v4775 = vld [vmem:[%s2353 + $0xc1] sm:$0xff]
    %v4776 = vld [vmem:[%s2353 + $0xd1] sm:$0xff]
    %v4777 = vld [vmem:[%s2353 + $0xe1] sm:$0xff]
    %v4778 = vld [vmem:[%s2353 + $0xf1] sm:$0xff]
    %v4779 = vld [vmem:[%s2353 + $0x101] sm:$0xff]
    %4796 = vrot.lane.b32.xlu0 %v4764, 32
    %v4797 = vpop.permute.xlu0 %4796
    %4798 = vrot.lane.b32.xlu0 %v4765, 32
    %v4799 = vpop.permute.xlu0 %4798
    %4800 = vrot.lane.b32.xlu0 %v4766, 32
    %v4801 = vpop.permute.xlu0 %4800
    %4802 = vrot.lane.b32.xlu0 %v4767, 32
    %v4803 = vpop.permute.xlu0 %4802
    %4804 = vrot.lane.b32.xlu0 %v4768, 32
    %v4805 = vpop.permute.xlu0 %4804
    %4806 = vrot.lane.b32.xlu0 %v4769, 32
    %v4807 = vpop.permute.xlu0 %4806
    %4808 = vrot.lane.b32.xlu0 %v4770, 32
    %v4809 = vpop.permute.xlu0 %4808
    %4810 = vrot.lane.b32.xlu0 %v4771, 32
    %v4811 = vpop.permute.xlu0 %4810
    %4812 = vrot.lane.b32.xlu0 %v4772, 32
    %v4813 = vpop.permute.xlu0 %4812
    %4814 = vrot.lane.b32.xlu0 %v4773, 32
    %v4815 = vpop.permute.xlu0 %4814
    %4816 = vrot.lane.b32.xlu0 %v4774, 32
    %v4817 = vpop.permute.xlu0 %4816
    %4818 = vrot.lane.b32.xlu0 %v4775, 32
    %v4819 = vpop.permute.xlu0 %4818
    %4820 = vrot.lane.b32.xlu0 %v4776, 32
    %v4821 = vpop.permute.xlu0 %4820
    %4822 = vrot.lane.b32.xlu0 %v4777, 32
    %v4823 = vpop.permute.xlu0 %4822
    %4824 = vrot.lane.b32.xlu0 %v4778, 32
    %v4825 = vpop.permute.xlu0 %4824
    %4826 = vrot.lane.b32.xlu0 %v4779, 32
    %v4827 = vpop.permute.xlu0 %4826
    %4844 = vst.msk [vmem:[%s4427 + $0x8] sm:$0xff] %vm2500, %v4797
    %4845 = vst.msk [vmem:[%s4427 + $0x20] sm:$0xff] %vm2500, %v4799
    %4846 = vst.msk [vmem:[%s4427 + $0x38] sm:$0xff] %vm2500, %v4801
    %4847 = vst.msk [vmem:[%s4427 + $0x50] sm:$0xff] %vm2500, %v4803
    %4848 = vst.msk [vmem:[%s4427 + $0x68] sm:$0xff] %vm2500, %v4805
    %4849 = vst.msk [vmem:[%s4427 + $0x80] sm:$0xff] %vm2500, %v4807
    %4850 = vst.msk [vmem:[%s4427 + $0x98] sm:$0xff] %vm2500, %v4809
    %4851 = vst.msk [vmem:[%s4427 + $0xb0] sm:$0xff] %vm2500, %v4811
    %4852 = vst.msk [vmem:[%s4427 + $0xc8] sm:$0xff] %vm2500, %v4813
    %4853 = vst.msk [vmem:[%s4427 + $0xe0] sm:$0xff] %vm2500, %v4815
    %4854 = vst.msk [vmem:[%s4427 + $0xf8] sm:$0xff] %vm2500, %v4817
    %4855 = vst.msk [vmem:[%s4427 + $0x110] sm:$0xff] %vm2500, %v4819
    %4856 = vst.msk [vmem:[%s4427 + $0x128] sm:$0xff] %vm2500, %v4821
    %4857 = vst.msk [vmem:[%s4427 + $0x140] sm:$0xff] %vm2500, %v4823
    %4858 = vst.msk [vmem:[%s4427 + $0x158] sm:$0xff] %vm2500, %v4825
    %4859 = vst.msk [vmem:[%s4427 + $0x170] sm:$0xff] %vm2500, %v4827
    %v4860 = vld [vmem:[%s4282] sm:$0xff]
    %v4861 = vld [vmem:[%s4282 + $0x10] sm:$0xff]
    %v4862 = vld [vmem:[%s4282 + $0x20] sm:$0xff]
    %v4863 = vld [vmem:[%s4282 + $0x30] sm:$0xff]
    %v4864 = vld [vmem:[%s4282 + $0x40] sm:$0xff]
    %v4865 = vld [vmem:[%s4282 + $0x50] sm:$0xff]
    %v4866 = vld [vmem:[%s4282 + $0x60] sm:$0xff]
    %v4867 = vld [vmem:[%s4282 + $0x70] sm:$0xff]
    %v4868 = vld [vmem:[%s4282 + $0x90] sm:$0xff]
    %v4869 = vld [vmem:[%s4282 + $0xa0] sm:$0xff]
    %v4870 = vld [vmem:[%s4282 + $0xb0] sm:$0xff]
    %v4871 = vld [vmem:[%s4282 + $0xc0] sm:$0xff]
    %v4872 = vld [vmem:[%s4282 + $0xd0] sm:$0xff]
    %v4873 = vld [vmem:[%s4282 + $0xe0] sm:$0xff]
    %v4874 = vld [vmem:[%s4282 + $0xf0] sm:$0xff]
    %v4875 = vld [vmem:[%s4282 + $0x100] sm:$0xff]
    %4892 = vrot.lane.b32.xlu0 %v4860, 64
    %v4893 = vpop.permute.xlu0 %4892
    %4894 = vrot.lane.b32.xlu0 %v4861, 64
    %v4895 = vpop.permute.xlu0 %4894
    %4896 = vrot.lane.b32.xlu0 %v4862, 64
    %v4897 = vpop.permute.xlu0 %4896
    %4898 = vrot.lane.b32.xlu0 %v4863, 64
    %v4899 = vpop.permute.xlu0 %4898
    %4900 = vrot.lane.b32.xlu0 %v4864, 64
    %v4901 = vpop.permute.xlu0 %4900
    %4902 = vrot.lane.b32.xlu0 %v4865, 64
    %v4903 = vpop.permute.xlu0 %4902
    %4904 = vrot.lane.b32.xlu0 %v4866, 64
    %v4905 = vpop.permute.xlu0 %4904
    %4906 = vrot.lane.b32.xlu0 %v4867, 64
    %v4907 = vpop.permute.xlu0 %4906
    %4908 = vrot.lane.b32.xlu0 %v4868, 64
    %v4909 = vpop.permute.xlu0 %4908
    %4910 = vrot.lane.b32.xlu0 %v4869, 64
    %v4911 = vpop.permute.xlu0 %4910
    %4912 = vrot.lane.b32.xlu0 %v4870, 64
    %v4913 = vpop.permute.xlu0 %4912
    %4914 = vrot.lane.b32.xlu0 %v4871, 64
    %v4915 = vpop.permute.xlu0 %4914
    %4916 = vrot.lane.b32.xlu0 %v4872, 64
    %v4917 = vpop.permute.xlu0 %4916
    %4918 = vrot.lane.b32.xlu0 %v4873, 64
    %v4919 = vpop.permute.xlu0 %4918
    %4920 = vrot.lane.b32.xlu0 %v4874, 64
    %v4921 = vpop.permute.xlu0 %4920
    %4922 = vrot.lane.b32.xlu0 %v4875, 64
    %v4923 = vpop.permute.xlu0 %4922
    %4940 = vst.msk [vmem:[%s4427 + $0x8] sm:$0xff] %vm2597, %v4893
    %4941 = vst.msk [vmem:[%s4427 + $0x20] sm:$0xff] %vm2597, %v4895
    %4942 = vst.msk [vmem:[%s4427 + $0x38] sm:$0xff] %vm2597, %v4897
    %4943 = vst.msk [vmem:[%s4427 + $0x50] sm:$0xff] %vm2597, %v4899
    %4944 = vst.msk [vmem:[%s4427 + $0x68] sm:$0xff] %vm2597, %v4901
    %4945 = vst.msk [vmem:[%s4427 + $0x80] sm:$0xff] %vm2597, %v4903
    %4946 = vst.msk [vmem:[%s4427 + $0x98] sm:$0xff] %vm2597, %v4905
    %4947 = vst.msk [vmem:[%s4427 + $0xb0] sm:$0xff] %vm2597, %v4907
    %4948 = vst.msk [vmem:[%s4427 + $0xc8] sm:$0xff] %vm2597, %v4909
    %4949 = vst.msk [vmem:[%s4427 + $0xe0] sm:$0xff] %vm2597, %v4911
    %4950 = vst.msk [vmem:[%s4427 + $0xf8] sm:$0xff] %vm2597, %v4913
    %4951 = vst.msk [vmem:[%s4427 + $0x110] sm:$0xff] %vm2597, %v4915
    %4952 = vst.msk [vmem:[%s4427 + $0x128] sm:$0xff] %vm2597, %v4917
    %4953 = vst.msk [vmem:[%s4427 + $0x140] sm:$0xff] %vm2597, %v4919
    %4954 = vst.msk [vmem:[%s4427 + $0x158] sm:$0xff] %vm2597, %v4921
    %4955 = vst.msk [vmem:[%s4427 + $0x170] sm:$0xff] %vm2597, %v4923
    %v4956 = vld [vmem:[%s4185 + $0x1] sm:$0xff]
    %v4957 = vld [vmem:[%s4185 + $0x11] sm:$0xff]
    %v4958 = vld [vmem:[%s4185 + $0x21] sm:$0xff]
    %v4959 = vld [vmem:[%s4185 + $0x31] sm:$0xff]
    %v4960 = vld [vmem:[%s4185 + $0x41] sm:$0xff]
    %v4961 = vld [vmem:[%s4185 + $0x51] sm:$0xff]
    %v4962 = vld [vmem:[%s4185 + $0x61] sm:$0xff]
    %v4963 = vld [vmem:[%s4185 + $0x71] sm:$0xff]
    %v4964 = vld [vmem:[%s4185 + $0x91] sm:$0xff]
    %v4965 = vld [vmem:[%s4185 + $0xa1] sm:$0xff]
    %v4966 = vld [vmem:[%s4185 + $0xb1] sm:$0xff]
    %v4967 = vld [vmem:[%s4185 + $0xc1] sm:$0xff]
    %v4968 = vld [vmem:[%s4185 + $0xd1] sm:$0xff]
    %v4969 = vld [vmem:[%s4185 + $0xe1] sm:$0xff]
    %v4970 = vld [vmem:[%s4185 + $0xf1] sm:$0xff]
    %v4971 = vld [vmem:[%s4185 + $0x101] sm:$0xff]
    %4988 = vrot.lane.b32.xlu0 %v4956, 96
    %v4989 = vpop.permute.xlu0 %4988
    %4990 = vrot.lane.b32.xlu0 %v4957, 96
    %v4991 = vpop.permute.xlu0 %4990
    %4992 = vrot.lane.b32.xlu0 %v4958, 96
    %v4993 = vpop.permute.xlu0 %4992
    %4994 = vrot.lane.b32.xlu0 %v4959, 96
    %v4995 = vpop.permute.xlu0 %4994
    %4996 = vrot.lane.b32.xlu0 %v4960, 96
    %v4997 = vpop.permute.xlu0 %4996
    %4998 = vrot.lane.b32.xlu0 %v4961, 96
    %v4999 = vpop.permute.xlu0 %4998
    %5000 = vrot.lane.b32.xlu0 %v4962, 96
    %v5001 = vpop.permute.xlu0 %5000
    %5002 = vrot.lane.b32.xlu0 %v4963, 96
    %v5003 = vpop.permute.xlu0 %5002
    %5004 = vrot.lane.b32.xlu0 %v4964, 96
    %v5005 = vpop.permute.xlu0 %5004
    %5006 = vrot.lane.b32.xlu0 %v4965, 96
    %v5007 = vpop.permute.xlu0 %5006
    %5008 = vrot.lane.b32.xlu0 %v4966, 96
    %v5009 = vpop.permute.xlu0 %5008
    %5010 = vrot.lane.b32.xlu0 %v4967, 96
    %v5011 = vpop.permute.xlu0 %5010
    %5012 = vrot.lane.b32.xlu0 %v4968, 96
    %v5013 = vpop.permute.xlu0 %5012
    %5014 = vrot.lane.b32.xlu0 %v4969, 96
    %v5015 = vpop.permute.xlu0 %5014
    %5016 = vrot.lane.b32.xlu0 %v4970, 96
    %v5017 = vpop.permute.xlu0 %5016
    %5018 = vrot.lane.b32.xlu0 %v4971, 96
    %v5019 = vpop.permute.xlu0 %5018
    %5036 = vst.msk [vmem:[%s4427 + $0x8] sm:$0xff] %vm2694, %v4989
    %5037 = vst.msk [vmem:[%s4427 + $0x20] sm:$0xff] %vm2694, %v4991
    %5038 = vst.msk [vmem:[%s4427 + $0x38] sm:$0xff] %vm2694, %v4993
    %5039 = vst.msk [vmem:[%s4427 + $0x50] sm:$0xff] %vm2694, %v4995
    %5040 = vst.msk [vmem:[%s4427 + $0x68] sm:$0xff] %vm2694, %v4997
    %5041 = vst.msk [vmem:[%s4427 + $0x80] sm:$0xff] %vm2694, %v4999
    %5042 = vst.msk [vmem:[%s4427 + $0x98] sm:$0xff] %vm2694, %v5001
    %5043 = vst.msk [vmem:[%s4427 + $0xb0] sm:$0xff] %vm2694, %v5003
    %5044 = vst.msk [vmem:[%s4427 + $0xc8] sm:$0xff] %vm2694, %v5005
    %5045 = vst.msk [vmem:[%s4427 + $0xe0] sm:$0xff] %vm2694, %v5007
    %5046 = vst.msk [vmem:[%s4427 + $0xf8] sm:$0xff] %vm2694, %v5009
    %5047 = vst.msk [vmem:[%s4427 + $0x110] sm:$0xff] %vm2694, %v5011
    %5048 = vst.msk [vmem:[%s4427 + $0x128] sm:$0xff] %vm2694, %v5013
    %5049 = vst.msk [vmem:[%s4427 + $0x140] sm:$0xff] %vm2694, %v5015
    %5050 = vst.msk [vmem:[%s4427 + $0x158] sm:$0xff] %vm2694, %v5017
    %5051 = vst.msk [vmem:[%s4427 + $0x170] sm:$0xff] %vm2694, %v5019
    %v5052 = vld [vmem:[%s4282 + $0x1] sm:$0xff]
    %v5053 = vld [vmem:[%s4282 + $0x11] sm:$0xff]
    %v5054 = vld [vmem:[%s4282 + $0x21] sm:$0xff]
    %v5055 = vld [vmem:[%s4282 + $0x31] sm:$0xff]
    %v5056 = vld [vmem:[%s4282 + $0x41] sm:$0xff]
    %v5057 = vld [vmem:[%s4282 + $0x51] sm:$0xff]
    %v5058 = vld [vmem:[%s4282 + $0x61] sm:$0xff]
    %v5059 = vld [vmem:[%s4282 + $0x71] sm:$0xff]
    %v5060 = vld [vmem:[%s4282 + $0x91] sm:$0xff]
    %v5061 = vld [vmem:[%s4282 + $0xa1] sm:$0xff]
    %v5062 = vld [vmem:[%s4282 + $0xb1] sm:$0xff]
    %v5063 = vld [vmem:[%s4282 + $0xc1] sm:$0xff]
    %v5064 = vld [vmem:[%s4282 + $0xd1] sm:$0xff]
    %v5065 = vld [vmem:[%s4282 + $0xe1] sm:$0xff]
    %v5066 = vld [vmem:[%s4282 + $0xf1] sm:$0xff]
    %v5067 = vld [vmem:[%s4282 + $0x101] sm:$0xff]
    %5068 = vst.msk [vmem:[%s4427 + $0x10] sm:$0xff] %vm2173, %v5052
    %5069 = vst.msk [vmem:[%s4427 + $0x28] sm:$0xff] %vm2173, %v5053
    %5070 = vst.msk [vmem:[%s4427 + $0x40] sm:$0xff] %vm2173, %v5054
    %5071 = vst.msk [vmem:[%s4427 + $0x58] sm:$0xff] %vm2173, %v5055
    %5072 = vst.msk [vmem:[%s4427 + $0x70] sm:$0xff] %vm2173, %v5056
    %5073 = vst.msk [vmem:[%s4427 + $0x88] sm:$0xff] %vm2173, %v5057
    %5074 = vst.msk [vmem:[%s4427 + $0xa0] sm:$0xff] %vm2173, %v5058
    %5075 = vst.msk [vmem:[%s4427 + $0xb8] sm:$0xff] %vm2173, %v5059
    %5076 = vst.msk [vmem:[%s4427 + $0xd0] sm:$0xff] %vm2173, %v5060
    %5077 = vst.msk [vmem:[%s4427 + $0xe8] sm:$0xff] %vm2173, %v5061
    %5078 = vst.msk [vmem:[%s4427 + $0x100] sm:$0xff] %vm2173, %v5062
    %5079 = vst.msk [vmem:[%s4427 + $0x118] sm:$0xff] %vm2173, %v5063
    %5080 = vst.msk [vmem:[%s4427 + $0x130] sm:$0xff] %vm2173, %v5064
    %5081 = vst.msk [vmem:[%s4427 + $0x148] sm:$0xff] %vm2173, %v5065
    %5082 = vst.msk [vmem:[%s4427 + $0x160] sm:$0xff] %vm2173, %v5066
    %5083 = vst.msk [vmem:[%s4427 + $0x178] sm:$0xff] %vm2173, %v5067
    %v5084 = vld [vmem:[#allocation3] sm:$0xff]
    %v5085 = vld [vmem:[#allocation3 + $0x8] sm:$0xff]
    %v5086 = vld [vmem:[#allocation3 + $0x10] sm:$0xff]
    %v5087 = vld [vmem:[#allocation3 + $0x18] sm:$0xff]
    %v5088 = vld [vmem:[#allocation3 + $0x20] sm:$0xff]
    %v5089 = vld [vmem:[#allocation3 + $0x28] sm:$0xff]
    %v5090 = vld [vmem:[#allocation3 + $0x30] sm:$0xff]
    %v5091 = vld [vmem:[#allocation3 + $0x38] sm:$0xff]
    %v5092 = vld [vmem:[#allocation3 + $0x40] sm:$0xff]
    %v5093 = vld [vmem:[#allocation3 + $0x48] sm:$0xff]
    %v5094 = vld [vmem:[#allocation3 + $0x50] sm:$0xff]
    %v5095 = vld [vmem:[#allocation3 + $0x58] sm:$0xff]
    %v5096 = vld [vmem:[#allocation3 + $0x60] sm:$0xff]
    %v5097 = vld [vmem:[#allocation3 + $0x68] sm:$0xff]
    %v5098 = vld [vmem:[#allocation3 + $0x70] sm:$0xff]
    %v5099 = vld [vmem:[#allocation3 + $0x78] sm:$0xff]
    %v5100 = vld [vmem:[#allocation3 + $0x80] sm:$0xff]
    %v5101 = vld [vmem:[#allocation3 + $0x88] sm:$0xff]
    %v5102 = vld [vmem:[#allocation3 + $0x90] sm:$0xff]
    %v5103 = vld [vmem:[#allocation3 + $0x98] sm:$0xff]
    %v5104 = vld [vmem:[#allocation3 + $0xa0] sm:$0xff]
    %v5105 = vld [vmem:[#allocation3 + $0xa8] sm:$0xff]
    %v5106 = vld [vmem:[#allocation3 + $0xb0] sm:$0xff]
    %v5107 = vld [vmem:[#allocation3 + $0xb8] sm:$0xff]
    %v5108 = vld [vmem:[#allocation3 + $0xc0] sm:$0xff]
    %v5109 = vld [vmem:[#allocation3 + $0xc8] sm:$0xff]
    %v5110 = vld [vmem:[#allocation3 + $0xd0] sm:$0xff]
    %v5111 = vld [vmem:[#allocation3 + $0xd8] sm:$0xff]
    %v5112 = vld [vmem:[#allocation3 + $0xe0] sm:$0xff]
    %v5113 = vld [vmem:[#allocation3 + $0xe8] sm:$0xff]
    %v5114 = vld [vmem:[#allocation3 + $0xf0] sm:$0xff]
    %v5115 = vld [vmem:[#allocation3 + $0xf8] sm:$0xff]
    %v5116 = vld [vmem:[#allocation3 + $0x100] sm:$0xff]
    %v5117 = vld [vmem:[#allocation3 + $0x108] sm:$0xff]
    %v5118 = vld [vmem:[#allocation3 + $0x110] sm:$0xff]
    %v5119 = vld [vmem:[#allocation3 + $0x118] sm:$0xff]
    %v5120 = vld [vmem:[#allocation3 + $0x120] sm:$0xff]
    %v5121 = vld [vmem:[#allocation3 + $0x128] sm:$0xff]
    %v5122 = vld [vmem:[#allocation3 + $0x130] sm:$0xff]
    %v5123 = vld [vmem:[#allocation3 + $0x138] sm:$0xff]
    %v5124 = vld [vmem:[#allocation3 + $0x140] sm:$0xff]
    %v5125 = vld [vmem:[#allocation3 + $0x148] sm:$0xff]
    %v5126 = vld [vmem:[#allocation3 + $0x150] sm:$0xff]
    %v5127 = vld [vmem:[#allocation3 + $0x158] sm:$0xff]
    %v5128 = vld [vmem:[#allocation3 + $0x160] sm:$0xff]
    %v5129 = vld [vmem:[#allocation3 + $0x168] sm:$0xff]
    %v5130 = vld [vmem:[#allocation3 + $0x170] sm:$0xff]
    %v5131 = vld [vmem:[#allocation3 + $0x178] sm:$0xff]
    %v5132 = vld [vmem:[#allocation3 + $0x180] sm:$0xff]
    %v5133 = vld [vmem:[#allocation3 + $0x188] sm:$0xff]
    %v5134 = vld [vmem:[#allocation3 + $0x190] sm:$0xff]
    %v5135 = vld [vmem:[#allocation3 + $0x198] sm:$0xff]
    %v5136 = vld [vmem:[#allocation3 + $0x1a0] sm:$0xff]
    %v5137 = vld [vmem:[#allocation3 + $0x1a8] sm:$0xff]
    %v5138 = vld [vmem:[#allocation3 + $0x1b0] sm:$0xff]
    %v5139 = vld [vmem:[#allocation3 + $0x1b8] sm:$0xff]
    %v5140 = vld [vmem:[#allocation3 + $0x1c0] sm:$0xff]
    %v5141 = vld [vmem:[#allocation3 + $0x1c8] sm:$0xff]
    %v5142 = vld [vmem:[#allocation3 + $0x1d0] sm:$0xff]
    %v5143 = vld [vmem:[#allocation3 + $0x1d8] sm:$0xff]
    %v5144 = vld [vmem:[#allocation3 + $0x1e0] sm:$0xff]
    %v5145 = vld [vmem:[#allocation3 + $0x1e8] sm:$0xff]
    %v5146 = vld [vmem:[#allocation3 + $0x1f0] sm:$0xff]
    %v5147 = vld [vmem:[#allocation3 + $0x1f8] sm:$0xff]
    %v5148 = vld [vmem:[#allocation3 + $0x200] sm:$0xff]
    %v5149 = vld [vmem:[#allocation3 + $0x208] sm:$0xff]
    %v5150 = vld [vmem:[#allocation3 + $0x210] sm:$0xff]
    %v5151 = vld [vmem:[#allocation3 + $0x218] sm:$0xff]
    %v5152 = vld [vmem:[#allocation3 + $0x220] sm:$0xff]
    %v5153 = vld [vmem:[#allocation3 + $0x228] sm:$0xff]
    %v5154 = vld [vmem:[#allocation3 + $0x230] sm:$0xff]
    %v5155 = vld [vmem:[#allocation3 + $0x238] sm:$0xff]
    %v5156 = vld [vmem:[#allocation3 + $0x240] sm:$0xff]
    %v5157 = vld [vmem:[#allocation3 + $0x248] sm:$0xff]
    %v5158 = vld [vmem:[#allocation3 + $0x250] sm:$0xff]
    %v5159 = vld [vmem:[#allocation3 + $0x258] sm:$0xff]
    %v5160 = vld [vmem:[#allocation3 + $0x260] sm:$0xff]
    %v5161 = vld [vmem:[#allocation3 + $0x268] sm:$0xff]
    %v5162 = vld [vmem:[#allocation3 + $0x270] sm:$0xff]
    %v5163 = vld [vmem:[#allocation3 + $0x278] sm:$0xff]
    %v5164 = vld [vmem:[#allocation3 + $0x280] sm:$0xff]
    %v5165 = vld [vmem:[#allocation3 + $0x288] sm:$0xff]
    %v5166 = vld [vmem:[#allocation3 + $0x290] sm:$0xff]
    %v5167 = vld [vmem:[#allocation3 + $0x298] sm:$0xff]
    %v5168 = vld [vmem:[#allocation3 + $0x2a0] sm:$0xff]
    %v5169 = vld [vmem:[#allocation3 + $0x2a8] sm:$0xff]
    %v5170 = vld [vmem:[#allocation3 + $0x2b0] sm:$0xff]
    %v5171 = vld [vmem:[#allocation3 + $0x2b8] sm:$0xff]
    %v5172 = vld [vmem:[#allocation3 + $0x2c0] sm:$0xff]
    %v5173 = vld [vmem:[#allocation3 + $0x2c8] sm:$0xff]
    %v5174 = vld [vmem:[#allocation3 + $0x2d0] sm:$0xff]
    %v5175 = vld [vmem:[#allocation3 + $0x2d8] sm:$0xff]
    %v5176 = vld [vmem:[#allocation3 + $0x2e0] sm:$0xff]
    %v5177 = vld [vmem:[#allocation3 + $0x2e8] sm:$0xff]
    %v5178 = vld [vmem:[#allocation3 + $0x2f0] sm:$0xff]
    %v5179 = vld [vmem:[#allocation3 + $0x2f8] sm:$0xff]
    %v5180 = vld [vmem:[#allocation3 + $0x300] sm:$0xff]
    %v5181 = vld [vmem:[#allocation3 + $0x308] sm:$0xff]
    %v5182 = vld [vmem:[#allocation3 + $0x310] sm:$0xff]
    %v5183 = vld [vmem:[#allocation3 + $0x318] sm:$0xff]
    %v5184 = vld [vmem:[#allocation3 + $0x320] sm:$0xff]
    %v5185 = vld [vmem:[#allocation3 + $0x328] sm:$0xff]
    %v5186 = vld [vmem:[#allocation3 + $0x330] sm:$0xff]
    %v5187 = vld [vmem:[#allocation3 + $0x338] sm:$0xff]
    %v5188 = vld [vmem:[#allocation3 + $0x340] sm:$0xff]
    %v5189 = vld [vmem:[#allocation3 + $0x348] sm:$0xff]
    %v5190 = vld [vmem:[#allocation3 + $0x350] sm:$0xff]
    %v5191 = vld [vmem:[#allocation3 + $0x358] sm:$0xff]
    %v5192 = vld [vmem:[#allocation3 + $0x360] sm:$0xff]
    %v5193 = vld [vmem:[#allocation3 + $0x368] sm:$0xff]
    %v5194 = vld [vmem:[#allocation3 + $0x370] sm:$0xff]
    %v5195 = vld [vmem:[#allocation3 + $0x378] sm:$0xff]
    %v5196 = vld [vmem:[#allocation3 + $0x380] sm:$0xff]
    %v5197 = vld [vmem:[#allocation3 + $0x388] sm:$0xff]
    %v5198 = vld [vmem:[#allocation3 + $0x390] sm:$0xff]
    %v5199 = vld [vmem:[#allocation3 + $0x398] sm:$0xff]
    %v5200 = vld [vmem:[#allocation3 + $0x3a0] sm:$0xff]
    %v5201 = vld [vmem:[#allocation3 + $0x3a8] sm:$0xff]
    %v5202 = vld [vmem:[#allocation3 + $0x3b0] sm:$0xff]
    %v5203 = vld [vmem:[#allocation3 + $0x3b8] sm:$0xff]
    %v5204 = vld [vmem:[#allocation3 + $0x3c0] sm:$0xff]
    %v5205 = vld [vmem:[#allocation3 + $0x3c8] sm:$0xff]
    %v5206 = vld [vmem:[#allocation3 + $0x3d0] sm:$0xff]
    %v5207 = vld [vmem:[#allocation3 + $0x3d8] sm:$0xff]
    %v5208 = vld [vmem:[#allocation3 + $0x3e0] sm:$0xff]
    %v5209 = vld [vmem:[#allocation3 + $0x3e8] sm:$0xff]
    %v5210 = vld [vmem:[#allocation3 + $0x3f0] sm:$0xff]
    %v5211 = vld [vmem:[#allocation3 + $0x3f8] sm:$0xff]
    %v5212 = vld [vmem:[#allocation3 + $0x400] sm:$0xff]
    %v5213 = vld [vmem:[#allocation3 + $0x408] sm:$0xff]
    %v5214 = vld [vmem:[#allocation3 + $0x410] sm:$0xff]
    %v5215 = vld [vmem:[#allocation3 + $0x418] sm:$0xff]
    %v5216 = vld [vmem:[#allocation3 + $0x420] sm:$0xff]
    %v5217 = vld [vmem:[#allocation3 + $0x428] sm:$0xff]
    %v5218 = vld [vmem:[#allocation3 + $0x430] sm:$0xff]
    %v5219 = vld [vmem:[#allocation3 + $0x438] sm:$0xff]
    %v5220 = vld [vmem:[#allocation3 + $0x440] sm:$0xff]
    %v5221 = vld [vmem:[#allocation3 + $0x448] sm:$0xff]
    %v5222 = vld [vmem:[#allocation3 + $0x450] sm:$0xff]
    %v5223 = vld [vmem:[#allocation3 + $0x458] sm:$0xff]
    %v5224 = vld [vmem:[#allocation3 + $0x460] sm:$0xff]
    %v5225 = vld [vmem:[#allocation3 + $0x468] sm:$0xff]
    %v5226 = vld [vmem:[#allocation3 + $0x470] sm:$0xff]
    %v5227 = vld [vmem:[#allocation3 + $0x478] sm:$0xff]
    %v5228 = vld [vmem:[#allocation3 + $0x480] sm:$0xff]
    %v5229 = vld [vmem:[#allocation3 + $0x488] sm:$0xff]
    %v5230 = vld [vmem:[#allocation3 + $0x490] sm:$0xff]
    %v5231 = vld [vmem:[#allocation3 + $0x498] sm:$0xff]
    %v5232 = vld [vmem:[#allocation3 + $0x4a0] sm:$0xff]
    %v5233 = vld [vmem:[#allocation3 + $0x4a8] sm:$0xff]
    %v5234 = vld [vmem:[#allocation3 + $0x4b0] sm:$0xff]
    %v5235 = vld [vmem:[#allocation3 + $0x4b8] sm:$0xff]
    %v5236 = vld [vmem:[#allocation3 + $0x4c0] sm:$0xff]
    %v5237 = vld [vmem:[#allocation3 + $0x4c8] sm:$0xff]
    %v5238 = vld [vmem:[#allocation3 + $0x4d0] sm:$0xff]
    %v5239 = vld [vmem:[#allocation3 + $0x4d8] sm:$0xff]
    %v5240 = vld [vmem:[#allocation3 + $0x4e0] sm:$0xff]
    %v5241 = vld [vmem:[#allocation3 + $0x4e8] sm:$0xff]
    %v5242 = vld [vmem:[#allocation3 + $0x4f0] sm:$0xff]
    %v5243 = vld [vmem:[#allocation3 + $0x4f8] sm:$0xff]
    %v5244 = vld [vmem:[#allocation3 + $0x500] sm:$0xff]
    %v5245 = vld [vmem:[#allocation3 + $0x508] sm:$0xff]
    %v5246 = vld [vmem:[#allocation3 + $0x510] sm:$0xff]
    %v5247 = vld [vmem:[#allocation3 + $0x518] sm:$0xff]
    %v5248 = vld [vmem:[#allocation3 + $0x520] sm:$0xff]
    %v5249 = vld [vmem:[#allocation3 + $0x528] sm:$0xff]
    %v5250 = vld [vmem:[#allocation3 + $0x530] sm:$0xff]
    %v5251 = vld [vmem:[#allocation3 + $0x538] sm:$0xff]
    %v5252 = vld [vmem:[#allocation3 + $0x540] sm:$0xff]
    %v5253 = vld [vmem:[#allocation3 + $0x548] sm:$0xff]
    %v5254 = vld [vmem:[#allocation3 + $0x550] sm:$0xff]
    %v5255 = vld [vmem:[#allocation3 + $0x558] sm:$0xff]
    %v5256 = vld [vmem:[#allocation3 + $0x560] sm:$0xff]
    %v5257 = vld [vmem:[#allocation3 + $0x568] sm:$0xff]
    %v5258 = vld [vmem:[#allocation3 + $0x570] sm:$0xff]
    %v5259 = vld [vmem:[#allocation3 + $0x578] sm:$0xff]
    %v5260 = vld [vmem:[#allocation3 + $0x580] sm:$0xff]
    %v5261 = vld [vmem:[#allocation3 + $0x588] sm:$0xff]
    %v5262 = vld [vmem:[#allocation3 + $0x590] sm:$0xff]
    %v5263 = vld [vmem:[#allocation3 + $0x598] sm:$0xff]
    %v5264 = vld [vmem:[#allocation3 + $0x5a0] sm:$0xff]
    %v5265 = vld [vmem:[#allocation3 + $0x5a8] sm:$0xff]
    %v5266 = vld [vmem:[#allocation3 + $0x5b0] sm:$0xff]
    %v5267 = vld [vmem:[#allocation3 + $0x5b8] sm:$0xff]
    %v5268 = vld [vmem:[#allocation3 + $0x5c0] sm:$0xff]
    %v5269 = vld [vmem:[#allocation3 + $0x5c8] sm:$0xff]
    %v5270 = vld [vmem:[#allocation3 + $0x5d0] sm:$0xff]
    %v5271 = vld [vmem:[#allocation3 + $0x5d8] sm:$0xff]
    %v5272 = vld [vmem:[#allocation3 + $0x5e0] sm:$0xff]
    %v5273 = vld [vmem:[#allocation3 + $0x5e8] sm:$0xff]
    %v5274 = vld [vmem:[#allocation3 + $0x5f0] sm:$0xff]
    %v5275 = vld [vmem:[#allocation3 + $0x5f8] sm:$0xff]
    %v5276 = vld [vmem:[%s3] sm:$0xff]
    %v5277 = vld [vmem:[%s3 + $0x8] sm:$0xff]
    %v5278 = vld [vmem:[%s3 + $0x10] sm:$0xff]
    %v5279 = vld [vmem:[%s3 + $0x18] sm:$0xff]
    %v5280 = vld [vmem:[%s3 + $0x20] sm:$0xff]
    %v5281 = vld [vmem:[%s3 + $0x28] sm:$0xff]
    %v5282 = vld [vmem:[%s3 + $0x30] sm:$0xff]
    %v5283 = vld [vmem:[%s3 + $0x38] sm:$0xff]
    %v5284 = vld [vmem:[%s3 + $0x40] sm:$0xff]
    %v5285 = vld [vmem:[%s3 + $0x48] sm:$0xff]
    %v5286 = vld [vmem:[%s3 + $0x50] sm:$0xff]
    %v5287 = vld [vmem:[%s3 + $0x58] sm:$0xff]
    %v5288 = vld [vmem:[%s3 + $0x60] sm:$0xff]
    %v5289 = vld [vmem:[%s3 + $0x68] sm:$0xff]
    %v5290 = vld [vmem:[%s3 + $0x70] sm:$0xff]
    %v5291 = vld [vmem:[%s3 + $0x78] sm:$0xff]
    %v5292 = vld [vmem:[%s3 + $0x80] sm:$0xff]
    %v5293 = vld [vmem:[%s3 + $0x88] sm:$0xff]
    %v5294 = vld [vmem:[%s3 + $0x90] sm:$0xff]
    %v5295 = vld [vmem:[%s3 + $0x98] sm:$0xff]
    %v5296 = vld [vmem:[%s3 + $0xa0] sm:$0xff]
    %v5297 = vld [vmem:[%s3 + $0xa8] sm:$0xff]
    %v5298 = vld [vmem:[%s3 + $0xb0] sm:$0xff]
    %v5299 = vld [vmem:[%s3 + $0xb8] sm:$0xff]
    %v5300 = vld [vmem:[%s3 + $0xc0] sm:$0xff]
    %v5301 = vld [vmem:[%s3 + $0xc8] sm:$0xff]
    %v5302 = vld [vmem:[%s3 + $0xd0] sm:$0xff]
    %v5303 = vld [vmem:[%s3 + $0xd8] sm:$0xff]
    %v5304 = vld [vmem:[%s3 + $0xe0] sm:$0xff]
    %v5305 = vld [vmem:[%s3 + $0xe8] sm:$0xff]
    %v5306 = vld [vmem:[%s3 + $0xf0] sm:$0xff]
    %v5307 = vld [vmem:[%s3 + $0xf8] sm:$0xff]
    %v5308 = vld [vmem:[%s3 + $0x100] sm:$0xff]
    %v5309 = vld [vmem:[%s3 + $0x108] sm:$0xff]
    %v5310 = vld [vmem:[%s3 + $0x110] sm:$0xff]
    %v5311 = vld [vmem:[%s3 + $0x118] sm:$0xff]
    %v5313 = vsel %vm2173, %v5086, 0
    %v5316 = vsel %vm2173, %v5089, 0
    %v5319 = vsel %vm2173, %v5092, 0
    %v5322 = vsel %vm2173, %v5095, 0
    %v5325 = vsel %vm2173, %v5098, 0
    %v5328 = vsel %vm2173, %v5101, 0
    %v5331 = vsel %vm2173, %v5104, 0
    %v5334 = vsel %vm2173, %v5107, 0
    %v5337 = vsel %vm2173, %v5110, 0
    %v5340 = vsel %vm2173, %v5113, 0
    %v5343 = vsel %vm2173, %v5116, 0
    %v5346 = vsel %vm2173, %v5119, 0
    %v5349 = vsel %vm2173, %v5122, 0
    %v5352 = vsel %vm2173, %v5125, 0
    %v5355 = vsel %vm2173, %v5128, 0
    %v5358 = vsel %vm2173, %v5131, 0
    %v5361 = vsel %vm2173, %v5134, 0
    %v5364 = vsel %vm2173, %v5137, 0
    %v5367 = vsel %vm2173, %v5140, 0
    %v5370 = vsel %vm2173, %v5143, 0
    %v5373 = vsel %vm2173, %v5146, 0
    %v5376 = vsel %vm2173, %v5149, 0
    %v5379 = vsel %vm2173, %v5152, 0
    %v5382 = vsel %vm2173, %v5155, 0
    %v5385 = vsel %vm2173, %v5158, 0
    %v5388 = vsel %vm2173, %v5161, 0
    %v5391 = vsel %vm2173, %v5164, 0
    %v5394 = vsel %vm2173, %v5167, 0
    %v5397 = vsel %vm2173, %v5170, 0
    %v5400 = vsel %vm2173, %v5173, 0
    %v5403 = vsel %vm2173, %v5176, 0
    %v5406 = vsel %vm2173, %v5179, 0
    %v5409 = vsel %vm2173, %v5182, 0
    %v5412 = vsel %vm2173, %v5185, 0
    %v5415 = vsel %vm2173, %v5188, 0
    %v5418 = vsel %vm2173, %v5191, 0
    %v5421 = vsel %vm2173, %v5194, 0
    %v5424 = vsel %vm2173, %v5197, 0
    %v5427 = vsel %vm2173, %v5200, 0
    %v5430 = vsel %vm2173, %v5203, 0
    %v5433 = vsel %vm2173, %v5206, 0
    %v5436 = vsel %vm2173, %v5209, 0
    %v5439 = vsel %vm2173, %v5212, 0
    %v5442 = vsel %vm2173, %v5215, 0
    %v5445 = vsel %vm2173, %v5218, 0
    %v5448 = vsel %vm2173, %v5221, 0
    %v5451 = vsel %vm2173, %v5224, 0
    %v5454 = vsel %vm2173, %v5227, 0
    %v5457 = vsel %vm2173, %v5230, 0
    %v5460 = vsel %vm2173, %v5233, 0
    %v5463 = vsel %vm2173, %v5236, 0
    %v5466 = vsel %vm2173, %v5239, 0
    %v5469 = vsel %vm2173, %v5242, 0
    %v5472 = vsel %vm2173, %v5245, 0
    %v5475 = vsel %vm2173, %v5248, 0
    %v5478 = vsel %vm2173, %v5251, 0
    %v5481 = vsel %vm2173, %v5254, 0
    %v5484 = vsel %vm2173, %v5257, 0
    %v5487 = vsel %vm2173, %v5260, 0
    %v5490 = vsel %vm2173, %v5263, 0
    %v5493 = vsel %vm2173, %v5266, 0
    %v5496 = vsel %vm2173, %v5269, 0
    %v5499 = vsel %vm2173, %v5272, 0
    %v5502 = vsel %vm2173, %v5275, 0
    %5504 = vmatpush.msra.mxu0 %v5291
    %5505 = vmatpush.msra.mxu0 %v5290
    %5506 = vmatpush.msra.mxu0 %v5289
    %5507 = vmatpush.msra.mxu0 %v5288
    %5508 = vmatpush.msra.mxu0 %v5287
    %5509 = vmatpush.msra.mxu0 %v5286
    %5510 = vmatpush.msra.mxu0 %v5285
    %5511 = vmatpush.msra.mxu0 %v5284
    %5512 = vmatpush.msra.mxu0 %v5283
    %5513 = vmatpush.msra.mxu0 %v5282
    %5514 = vmatpush.msra.mxu0 %v5281
    %5515 = vmatpush.msra.mxu0 %v5280
    %5516 = vmatpush.msra.mxu0 %v5279
    %5517 = vmatpush.msra.mxu0 %v5278
    %5518 = vmatpush.msra.mxu0 %v5277
    %5519 = vmatpush.msra.mxu0 %v5276
    %5520 = vmatmul.f32.gmra.mxu0 %v5084
    %v5521 = vpop.f32.mrf.mxu0
    %v5522 = vadd.f32 0.0, %v5521
    %5523 = vmatmul.f32.gmra.mxu0 %v5087
    %v5524 = vpop.f32.mrf.mxu0
    %v5525 = vadd.f32 0.0, %v5524
    %5526 = vmatmul.f32.gmra.mxu0 %v5090
    %v5527 = vpop.f32.mrf.mxu0
    %v5528 = vadd.f32 0.0, %v5527
    %5529 = vmatmul.f32.gmra.mxu0 %v5093
    %v5530 = vpop.f32.mrf.mxu0
    %v5531 = vadd.f32 0.0, %v5530
    %5532 = vmatmul.f32.gmra.mxu0 %v5096
    %v5533 = vpop.f32.mrf.mxu0
    %v5534 = vadd.f32 0.0, %v5533
    %5535 = vmatmul.f32.gmra.mxu0 %v5099
    %v5536 = vpop.f32.mrf.mxu0
    %v5537 = vadd.f32 0.0, %v5536
    %5538 = vmatmul.f32.gmra.mxu0 %v5102
    %v5539 = vpop.f32.mrf.mxu0
    %v5540 = vadd.f32 0.0, %v5539
    %5541 = vmatmul.f32.gmra.mxu0 %v5105
    %v5542 = vpop.f32.mrf.mxu0
    %v5543 = vadd.f32 0.0, %v5542
    %5544 = vmatmul.f32.gmra.mxu0 %v5108
    %v5545 = vpop.f32.mrf.mxu0
    %v5546 = vadd.f32 0.0, %v5545
    %5547 = vmatmul.f32.gmra.mxu0 %v5111
    %v5548 = vpop.f32.mrf.mxu0
    %v5549 = vadd.f32 0.0, %v5548
    %5550 = vmatmul.f32.gmra.mxu0 %v5114
    %v5551 = vpop.f32.mrf.mxu0
    %v5552 = vadd.f32 0.0, %v5551
    %5553 = vmatmul.f32.gmra.mxu0 %v5117
    %v5554 = vpop.f32.mrf.mxu0
    %v5555 = vadd.f32 0.0, %v5554
    %5556 = vmatmul.f32.gmra.mxu0 %v5120
    %v5557 = vpop.f32.mrf.mxu0
    %v5558 = vadd.f32 0.0, %v5557
    %5559 = vmatmul.f32.gmra.mxu0 %v5123
    %v5560 = vpop.f32.mrf.mxu0
    %v5561 = vadd.f32 0.0, %v5560
    %5562 = vmatmul.f32.gmra.mxu0 %v5126
    %v5563 = vpop.f32.mrf.mxu0
    %v5564 = vadd.f32 0.0, %v5563
    %5565 = vmatmul.f32.gmra.mxu0 %v5129
    %v5566 = vpop.f32.mrf.mxu0
    %v5567 = vadd.f32 0.0, %v5566
    %5568 = vmatmul.f32.gmra.mxu0 %v5132
    %v5569 = vpop.f32.mrf.mxu0
    %v5570 = vadd.f32 0.0, %v5569
    %5571 = vmatmul.f32.gmra.mxu0 %v5135
    %v5572 = vpop.f32.mrf.mxu0
    %v5573 = vadd.f32 0.0, %v5572
    %5574 = vmatmul.f32.gmra.mxu0 %v5138
    %v5575 = vpop.f32.mrf.mxu0
    %v5576 = vadd.f32 0.0, %v5575
    %5577 = vmatmul.f32.gmra.mxu0 %v5141
    %v5578 = vpop.f32.mrf.mxu0
    %v5579 = vadd.f32 0.0, %v5578
    %5580 = vmatmul.f32.gmra.mxu0 %v5144
    %v5581 = vpop.f32.mrf.mxu0
    %v5582 = vadd.f32 0.0, %v5581
    %5583 = vmatmul.f32.gmra.mxu0 %v5147
    %v5584 = vpop.f32.mrf.mxu0
    %v5585 = vadd.f32 0.0, %v5584
    %5586 = vmatmul.f32.gmra.mxu0 %v5150
    %v5587 = vpop.f32.mrf.mxu0
    %v5588 = vadd.f32 0.0, %v5587
    %5589 = vmatmul.f32.gmra.mxu0 %v5153
    %v5590 = vpop.f32.mrf.mxu0
    %v5591 = vadd.f32 0.0, %v5590
    %5592 = vmatmul.f32.gmra.mxu0 %v5156
    %v5593 = vpop.f32.mrf.mxu0
    %v5594 = vadd.f32 0.0, %v5593
    %5595 = vmatmul.f32.gmra.mxu0 %v5159
    %v5596 = vpop.f32.mrf.mxu0
    %v5597 = vadd.f32 0.0, %v5596
    %5598 = vmatmul.f32.gmra.mxu0 %v5162
    %v5599 = vpop.f32.mrf.mxu0
    %v5600 = vadd.f32 0.0, %v5599
    %5601 = vmatmul.f32.gmra.mxu0 %v5165
    %v5602 = vpop.f32.mrf.mxu0
    %v5603 = vadd.f32 0.0, %v5602
    %5604 = vmatmul.f32.gmra.mxu0 %v5168
    %v5605 = vpop.f32.mrf.mxu0
    %v5606 = vadd.f32 0.0, %v5605
    %5607 = vmatmul.f32.gmra.mxu0 %v5171
    %v5608 = vpop.f32.mrf.mxu0
    %v5609 = vadd.f32 0.0, %v5608
    %5610 = vmatmul.f32.gmra.mxu0 %v5174
    %v5611 = vpop.f32.mrf.mxu0
    %v5612 = vadd.f32 0.0, %v5611
    %5613 = vmatmul.f32.gmra.mxu0 %v5177
    %v5614 = vpop.f32.mrf.mxu0
    %v5615 = vadd.f32 0.0, %v5614
    %5616 = vmatmul.f32.gmra.mxu0 %v5180
    %v5617 = vpop.f32.mrf.mxu0
    %v5618 = vadd.f32 0.0, %v5617
    %5619 = vmatmul.f32.gmra.mxu0 %v5183
    %v5620 = vpop.f32.mrf.mxu0
    %v5621 = vadd.f32 0.0, %v5620
    %5622 = vmatmul.f32.gmra.mxu0 %v5186
    %v5623 = vpop.f32.mrf.mxu0
    %v5624 = vadd.f32 0.0, %v5623
    %5625 = vmatmul.f32.gmra.mxu0 %v5189
    %v5626 = vpop.f32.mrf.mxu0
    %v5627 = vadd.f32 0.0, %v5626
    %5628 = vmatmul.f32.gmra.mxu0 %v5192
    %v5629 = vpop.f32.mrf.mxu0
    %v5630 = vadd.f32 0.0, %v5629
    %5631 = vmatmul.f32.gmra.mxu0 %v5195
    %v5632 = vpop.f32.mrf.mxu0
    %v5633 = vadd.f32 0.0, %v5632
    %5634 = vmatmul.f32.gmra.mxu0 %v5198
    %v5635 = vpop.f32.mrf.mxu0
    %v5636 = vadd.f32 0.0, %v5635
    %5637 = vmatmul.f32.gmra.mxu0 %v5201
    %v5638 = vpop.f32.mrf.mxu0
    %v5639 = vadd.f32 0.0, %v5638
    %5640 = vmatmul.f32.gmra.mxu0 %v5204
    %v5641 = vpop.f32.mrf.mxu0
    %v5642 = vadd.f32 0.0, %v5641
    %5643 = vmatmul.f32.gmra.mxu0 %v5207
    %v5644 = vpop.f32.mrf.mxu0
    %v5645 = vadd.f32 0.0, %v5644
    %5646 = vmatmul.f32.gmra.mxu0 %v5210
    %v5647 = vpop.f32.mrf.mxu0
    %v5648 = vadd.f32 0.0, %v5647
    %5649 = vmatmul.f32.gmra.mxu0 %v5213
    %v5650 = vpop.f32.mrf.mxu0
    %v5651 = vadd.f32 0.0, %v5650
    %5652 = vmatmul.f32.gmra.mxu0 %v5216
    %v5653 = vpop.f32.mrf.mxu0
    %v5654 = vadd.f32 0.0, %v5653
    %5655 = vmatmul.f32.gmra.mxu0 %v5219
    %v5656 = vpop.f32.mrf.mxu0
    %v5657 = vadd.f32 0.0, %v5656
    %5658 = vmatmul.f32.gmra.mxu0 %v5222
    %v5659 = vpop.f32.mrf.mxu0
    %v5660 = vadd.f32 0.0, %v5659
    %5661 = vmatmul.f32.gmra.mxu0 %v5225
    %v5662 = vpop.f32.mrf.mxu0
    %v5663 = vadd.f32 0.0, %v5662
    %5664 = vmatmul.f32.gmra.mxu0 %v5228
    %v5665 = vpop.f32.mrf.mxu0
    %v5666 = vadd.f32 0.0, %v5665
    %5667 = vmatmul.f32.gmra.mxu0 %v5231
    %v5668 = vpop.f32.mrf.mxu0
    %v5669 = vadd.f32 0.0, %v5668
    %5670 = vmatmul.f32.gmra.mxu0 %v5234
    %v5671 = vpop.f32.mrf.mxu0
    %v5672 = vadd.f32 0.0, %v5671
    %5673 = vmatmul.f32.gmra.mxu0 %v5237
    %v5674 = vpop.f32.mrf.mxu0
    %v5675 = vadd.f32 0.0, %v5674
    %5676 = vmatmul.f32.gmra.mxu0 %v5240
    %v5677 = vpop.f32.mrf.mxu0
    %v5678 = vadd.f32 0.0, %v5677
    %5679 = vmatmul.f32.gmra.mxu0 %v5243
    %v5680 = vpop.f32.mrf.mxu0
    %v5681 = vadd.f32 0.0, %v5680
    %5682 = vmatmul.f32.gmra.mxu0 %v5246
    %v5683 = vpop.f32.mrf.mxu0
    %v5684 = vadd.f32 0.0, %v5683
    %5685 = vmatmul.f32.gmra.mxu0 %v5249
    %v5686 = vpop.f32.mrf.mxu0
    %v5687 = vadd.f32 0.0, %v5686
    %5688 = vmatmul.f32.gmra.mxu0 %v5252
    %v5689 = vpop.f32.mrf.mxu0
    %v5690 = vadd.f32 0.0, %v5689
    %5691 = vmatmul.f32.gmra.mxu0 %v5255
    %v5692 = vpop.f32.mrf.mxu0
    %v5693 = vadd.f32 0.0, %v5692
    %5694 = vmatmul.f32.gmra.mxu0 %v5258
    %v5695 = vpop.f32.mrf.mxu0
    %v5696 = vadd.f32 0.0, %v5695
    %5697 = vmatmul.f32.gmra.mxu0 %v5261
    %v5698 = vpop.f32.mrf.mxu0
    %v5699 = vadd.f32 0.0, %v5698
    %5700 = vmatmul.f32.gmra.mxu0 %v5264
    %v5701 = vpop.f32.mrf.mxu0
    %v5702 = vadd.f32 0.0, %v5701
    %5703 = vmatmul.f32.gmra.mxu0 %v5267
    %v5704 = vpop.f32.mrf.mxu0
    %v5705 = vadd.f32 0.0, %v5704
    %5706 = vmatmul.f32.gmra.mxu0 %v5270
    %v5707 = vpop.f32.mrf.mxu0
    %v5708 = vadd.f32 0.0, %v5707
    %5709 = vmatmul.f32.gmra.mxu0 %v5273
    %v5710 = vpop.f32.mrf.mxu0
    %v5711 = vadd.f32 0.0, %v5710
    %5712 = vdwg.mxu0
    %5713 = vmatpush.msra.mxu0 %v5307
    %5714 = vmatpush.msra.mxu0 %v5306
    %5715 = vmatpush.msra.mxu0 %v5305
    %5716 = vmatpush.msra.mxu0 %v5304
    %5717 = vmatpush.msra.mxu0 %v5303
    %5718 = vmatpush.msra.mxu0 %v5302
    %5719 = vmatpush.msra.mxu0 %v5301
    %5720 = vmatpush.msra.mxu0 %v5300
    %5721 = vmatpush.msra.mxu0 %v5299
    %5722 = vmatpush.msra.mxu0 %v5298
    %5723 = vmatpush.msra.mxu0 %v5297
    %5724 = vmatpush.msra.mxu0 %v5296
    %5725 = vmatpush.msra.mxu0 %v5295
    %5726 = vmatpush.msra.mxu0 %v5294
    %5727 = vmatpush.msra.mxu0 %v5293
    %5728 = vmatpush.msra.mxu0 %v5292
    %5729 = vmatmul.f32.gmra.mxu0 %v5085
    %v5730 = vpop.f32.mrf.mxu0
    %v5731 = vadd.f32 %v5522, %v5730
    %5732 = vmatmul.f32.gmra.mxu0 %v5088
    %v5733 = vpop.f32.mrf.mxu0
    %v5734 = vadd.f32 %v5525, %v5733
    %5735 = vmatmul.f32.gmra.mxu0 %v5091
    %v5736 = vpop.f32.mrf.mxu0
    %v5737 = vadd.f32 %v5528, %v5736
    %5738 = vmatmul.f32.gmra.mxu0 %v5094
    %v5739 = vpop.f32.mrf.mxu0
    %v5740 = vadd.f32 %v5531, %v5739
    %5741 = vmatmul.f32.gmra.mxu0 %v5097
    %v5742 = vpop.f32.mrf.mxu0
    %v5743 = vadd.f32 %v5534, %v5742
    %5744 = vmatmul.f32.gmra.mxu0 %v5100
    %v5745 = vpop.f32.mrf.mxu0
    %v5746 = vadd.f32 %v5537, %v5745
    %5747 = vmatmul.f32.gmra.mxu0 %v5103
    %v5748 = vpop.f32.mrf.mxu0
    %v5749 = vadd.f32 %v5540, %v5748
    %5750 = vmatmul.f32.gmra.mxu0 %v5106
    %v5751 = vpop.f32.mrf.mxu0
    %v5752 = vadd.f32 %v5543, %v5751
    %5753 = vmatmul.f32.gmra.mxu0 %v5109
    %v5754 = vpop.f32.mrf.mxu0
    %v5755 = vadd.f32 %v5546, %v5754
    %5756 = vmatmul.f32.gmra.mxu0 %v5112
    %v5757 = vpop.f32.mrf.mxu0
    %v5758 = vadd.f32 %v5549, %v5757
    %5759 = vmatmul.f32.gmra.mxu0 %v5115
    %v5760 = vpop.f32.mrf.mxu0
    %v5761 = vadd.f32 %v5552, %v5760
    %5762 = vmatmul.f32.gmra.mxu0 %v5118
    %v5763 = vpop.f32.mrf.mxu0
    %v5764 = vadd.f32 %v5555, %v5763
    %5765 = vmatmul.f32.gmra.mxu0 %v5121
    %v5766 = vpop.f32.mrf.mxu0
    %v5767 = vadd.f32 %v5558, %v5766
    %5768 = vmatmul.f32.gmra.mxu0 %v5124
    %v5769 = vpop.f32.mrf.mxu0
    %v5770 = vadd.f32 %v5561, %v5769
    %5771 = vmatmul.f32.gmra.mxu0 %v5127
    %v5772 = vpop.f32.mrf.mxu0
    %v5773 = vadd.f32 %v5564, %v5772
    %5774 = vmatmul.f32.gmra.mxu0 %v5130
    %v5775 = vpop.f32.mrf.mxu0
    %v5776 = vadd.f32 %v5567, %v5775
    %5777 = vmatmul.f32.gmra.mxu0 %v5133
    %v5778 = vpop.f32.mrf.mxu0
    %v5779 = vadd.f32 %v5570, %v5778
    %5780 = vmatmul.f32.gmra.mxu0 %v5136
    %v5781 = vpop.f32.mrf.mxu0
    %v5782 = vadd.f32 %v5573, %v5781
    %5783 = vmatmul.f32.gmra.mxu0 %v5139
    %v5784 = vpop.f32.mrf.mxu0
    %v5785 = vadd.f32 %v5576, %v5784
    %5786 = vmatmul.f32.gmra.mxu0 %v5142
    %v5787 = vpop.f32.mrf.mxu0
    %v5788 = vadd.f32 %v5579, %v5787
    %5789 = vmatmul.f32.gmra.mxu0 %v5145
    %v5790 = vpop.f32.mrf.mxu0
    %v5791 = vadd.f32 %v5582, %v5790
    %5792 = vmatmul.f32.gmra.mxu0 %v5148
    %v5793 = vpop.f32.mrf.mxu0
    %v5794 = vadd.f32 %v5585, %v5793
    %5795 = vmatmul.f32.gmra.mxu0 %v5151
    %v5796 = vpop.f32.mrf.mxu0
    %v5797 = vadd.f32 %v5588, %v5796
    %5798 = vmatmul.f32.gmra.mxu0 %v5154
    %v5799 = vpop.f32.mrf.mxu0
    %v5800 = vadd.f32 %v5591, %v5799
    %5801 = vmatmul.f32.gmra.mxu0 %v5157
    %v5802 = vpop.f32.mrf.mxu0
    %v5803 = vadd.f32 %v5594, %v5802
    %5804 = vmatmul.f32.gmra.mxu0 %v5160
    %v5805 = vpop.f32.mrf.mxu0
    %v5806 = vadd.f32 %v5597, %v5805
    %5807 = vmatmul.f32.gmra.mxu0 %v5163
    %v5808 = vpop.f32.mrf.mxu0
    %v5809 = vadd.f32 %v5600, %v5808
    %5810 = vmatmul.f32.gmra.mxu0 %v5166
    %v5811 = vpop.f32.mrf.mxu0
    %v5812 = vadd.f32 %v5603, %v5811
    %5813 = vmatmul.f32.gmra.mxu0 %v5169
    %v5814 = vpop.f32.mrf.mxu0
    %v5815 = vadd.f32 %v5606, %v5814
    %5816 = vmatmul.f32.gmra.mxu0 %v5172
    %v5817 = vpop.f32.mrf.mxu0
    %v5818 = vadd.f32 %v5609, %v5817
    %5819 = vmatmul.f32.gmra.mxu0 %v5175
    %v5820 = vpop.f32.mrf.mxu0
    %v5821 = vadd.f32 %v5612, %v5820
    %5822 = vmatmul.f32.gmra.mxu0 %v5178
    %v5823 = vpop.f32.mrf.mxu0
    %v5824 = vadd.f32 %v5615, %v5823
    %5825 = vmatmul.f32.gmra.mxu0 %v5181
    %v5826 = vpop.f32.mrf.mxu0
    %v5827 = vadd.f32 %v5618, %v5826
    %5828 = vmatmul.f32.gmra.mxu0 %v5184
    %v5829 = vpop.f32.mrf.mxu0
    %v5830 = vadd.f32 %v5621, %v5829
    %5831 = vmatmul.f32.gmra.mxu0 %v5187
    %v5832 = vpop.f32.mrf.mxu0
    %v5833 = vadd.f32 %v5624, %v5832
    %5834 = vmatmul.f32.gmra.mxu0 %v5190
    %v5835 = vpop.f32.mrf.mxu0
    %v5836 = vadd.f32 %v5627, %v5835
    %5837 = vmatmul.f32.gmra.mxu0 %v5193
    %v5838 = vpop.f32.mrf.mxu0
    %v5839 = vadd.f32 %v5630, %v5838
    %5840 = vmatmul.f32.gmra.mxu0 %v5196
    %v5841 = vpop.f32.mrf.mxu0
    %v5842 = vadd.f32 %v5633, %v5841
    %5843 = vmatmul.f32.gmra.mxu0 %v5199
    %v5844 = vpop.f32.mrf.mxu0
    %v5845 = vadd.f32 %v5636, %v5844
    %5846 = vmatmul.f32.gmra.mxu0 %v5202
    %v5847 = vpop.f32.mrf.mxu0
    %v5848 = vadd.f32 %v5639, %v5847
    %5849 = vmatmul.f32.gmra.mxu0 %v5205
    %v5850 = vpop.f32.mrf.mxu0
    %v5851 = vadd.f32 %v5642, %v5850
    %5852 = vmatmul.f32.gmra.mxu0 %v5208
    %v5853 = vpop.f32.mrf.mxu0
    %v5854 = vadd.f32 %v5645, %v5853
    %5855 = vmatmul.f32.gmra.mxu0 %v5211
    %v5856 = vpop.f32.mrf.mxu0
    %v5857 = vadd.f32 %v5648, %v5856
    %5858 = vmatmul.f32.gmra.mxu0 %v5214
    %v5859 = vpop.f32.mrf.mxu0
    %v5860 = vadd.f32 %v5651, %v5859
    %5861 = vmatmul.f32.gmra.mxu0 %v5217
    %v5862 = vpop.f32.mrf.mxu0
    %v5863 = vadd.f32 %v5654, %v5862
    %5864 = vmatmul.f32.gmra.mxu0 %v5220
    %v5865 = vpop.f32.mrf.mxu0
    %v5866 = vadd.f32 %v5657, %v5865
    %5867 = vmatmul.f32.gmra.mxu0 %v5223
    %v5868 = vpop.f32.mrf.mxu0
    %v5869 = vadd.f32 %v5660, %v5868
    %5870 = vmatmul.f32.gmra.mxu0 %v5226
    %v5871 = vpop.f32.mrf.mxu0
    %v5872 = vadd.f32 %v5663, %v5871
    %5873 = vmatmul.f32.gmra.mxu0 %v5229
    %v5874 = vpop.f32.mrf.mxu0
    %v5875 = vadd.f32 %v5666, %v5874
    %5876 = vmatmul.f32.gmra.mxu0 %v5232
    %v5877 = vpop.f32.mrf.mxu0
    %v5878 = vadd.f32 %v5669, %v5877
    %5879 = vmatmul.f32.gmra.mxu0 %v5235
    %v5880 = vpop.f32.mrf.mxu0
    %v5881 = vadd.f32 %v5672, %v5880
    %5882 = vmatmul.f32.gmra.mxu0 %v5238
    %v5883 = vpop.f32.mrf.mxu0
    %v5884 = vadd.f32 %v5675, %v5883
    %5885 = vmatmul.f32.gmra.mxu0 %v5241
    %v5886 = vpop.f32.mrf.mxu0
    %v5887 = vadd.f32 %v5678, %v5886
    %5888 = vmatmul.f32.gmra.mxu0 %v5244
    %v5889 = vpop.f32.mrf.mxu0
    %v5890 = vadd.f32 %v5681, %v5889
    %5891 = vmatmul.f32.gmra.mxu0 %v5247
    %v5892 = vpop.f32.mrf.mxu0
    %v5893 = vadd.f32 %v5684, %v5892
    %5894 = vmatmul.f32.gmra.mxu0 %v5250
    %v5895 = vpop.f32.mrf.mxu0
    %v5896 = vadd.f32 %v5687, %v5895
    %5897 = vmatmul.f32.gmra.mxu0 %v5253
    %v5898 = vpop.f32.mrf.mxu0
    %v5899 = vadd.f32 %v5690, %v5898
    %5900 = vmatmul.f32.gmra.mxu0 %v5256
    %v5901 = vpop.f32.mrf.mxu0
    %v5902 = vadd.f32 %v5693, %v5901
    %5903 = vmatmul.f32.gmra.mxu0 %v5259
    %v5904 = vpop.f32.mrf.mxu0
    %v5905 = vadd.f32 %v5696, %v5904
    %5906 = vmatmul.f32.gmra.mxu0 %v5262
    %v5907 = vpop.f32.mrf.mxu0
    %v5908 = vadd.f32 %v5699, %v5907
    %5909 = vmatmul.f32.gmra.mxu0 %v5265
    %v5910 = vpop.f32.mrf.mxu0
    %v5911 = vadd.f32 %v5702, %v5910
    %5912 = vmatmul.f32.gmra.mxu0 %v5268
    %v5913 = vpop.f32.mrf.mxu0
    %v5914 = vadd.f32 %v5705, %v5913
    %5915 = vmatmul.f32.gmra.mxu0 %v5271
    %v5916 = vpop.f32.mrf.mxu0
    %v5917 = vadd.f32 %v5708, %v5916
    %5918 = vmatmul.f32.gmra.mxu0 %v5274
    %v5919 = vpop.f32.mrf.mxu0
    %v5920 = vadd.f32 %v5711, %v5919
    %5921 = vdwg.mxu0
    %5922 = vmatpush.msra.mxu0 0.0
    %5923 = vmatpush.msra.mxu0 0.0
    %5924 = vmatpush.msra.mxu0 0.0
    %5925 = vmatpush.msra.mxu0 0.0
    %5926 = vmatpush.msra.mxu0 0.0
    %5927 = vmatpush.msra.mxu0 0.0
    %5928 = vmatpush.msra.mxu0 0.0
    %5929 = vmatpush.msra.mxu0 0.0
    %5930 = vmatpush.msra.mxu0 0.0
    %5931 = vmatpush.msra.mxu0 0.0
    %5932 = vmatpush.msra.mxu0 0.0
    %5933 = vmatpush.msra.mxu0 0.0
    %5934 = vmatpush.msra.mxu0 %v5311
    %5935 = vmatpush.msra.mxu0 %v5310
    %5936 = vmatpush.msra.mxu0 %v5309
    %5937 = vmatpush.msra.mxu0 %v5308
    %5938 = vmatmul.f32.gmra.mxu0 %v5313
    %v5939 = vpop.f32.mrf.mxu0
    %v5940 = vadd.f32 %v5731, %v5939
    %5941 = vmatmul.f32.gmra.mxu0 %v5316
    %v5942 = vpop.f32.mrf.mxu0
    %v5943 = vadd.f32 %v5734, %v5942
    %5944 = vmatmul.f32.gmra.mxu0 %v5319
    %v5945 = vpop.f32.mrf.mxu0
    %v5946 = vadd.f32 %v5737, %v5945
    %5947 = vmatmul.f32.gmra.mxu0 %v5322
    %v5948 = vpop.f32.mrf.mxu0
    %v5949 = vadd.f32 %v5740, %v5948
    %5950 = vmatmul.f32.gmra.mxu0 %v5325
    %v5951 = vpop.f32.mrf.mxu0
    %v5952 = vadd.f32 %v5743, %v5951
    %5953 = vmatmul.f32.gmra.mxu0 %v5328
    %v5954 = vpop.f32.mrf.mxu0
    %v5955 = vadd.f32 %v5746, %v5954
    %5956 = vmatmul.f32.gmra.mxu0 %v5331
    %v5957 = vpop.f32.mrf.mxu0
    %v5958 = vadd.f32 %v5749, %v5957
    %5959 = vmatmul.f32.gmra.mxu0 %v5334
    %v5960 = vpop.f32.mrf.mxu0
    %v5961 = vadd.f32 %v5752, %v5960
    %5962 = vmatmul.f32.gmra.mxu0 %v5337
    %v5963 = vpop.f32.mrf.mxu0
    %v5964 = vadd.f32 %v5755, %v5963
    %5965 = vmatmul.f32.gmra.mxu0 %v5340
    %v5966 = vpop.f32.mrf.mxu0
    %v5967 = vadd.f32 %v5758, %v5966
    %5968 = vmatmul.f32.gmra.mxu0 %v5343
    %v5969 = vpop.f32.mrf.mxu0
    %v5970 = vadd.f32 %v5761, %v5969
    %5971 = vmatmul.f32.gmra.mxu0 %v5346
    %v5972 = vpop.f32.mrf.mxu0
    %v5973 = vadd.f32 %v5764, %v5972
    %5974 = vmatmul.f32.gmra.mxu0 %v5349
    %v5975 = vpop.f32.mrf.mxu0
    %v5976 = vadd.f32 %v5767, %v5975
    %5977 = vmatmul.f32.gmra.mxu0 %v5352
    %v5978 = vpop.f32.mrf.mxu0
    %v5979 = vadd.f32 %v5770, %v5978
    %5980 = vmatmul.f32.gmra.mxu0 %v5355
    %v5981 = vpop.f32.mrf.mxu0
    %v5982 = vadd.f32 %v5773, %v5981
    %5983 = vmatmul.f32.gmra.mxu0 %v5358
    %v5984 = vpop.f32.mrf.mxu0
    %v5985 = vadd.f32 %v5776, %v5984
    %5986 = vmatmul.f32.gmra.mxu0 %v5361
    %v5987 = vpop.f32.mrf.mxu0
    %v5988 = vadd.f32 %v5779, %v5987
    %5989 = vmatmul.f32.gmra.mxu0 %v5364
    %v5990 = vpop.f32.mrf.mxu0
    %v5991 = vadd.f32 %v5782, %v5990
    %5992 = vmatmul.f32.gmra.mxu0 %v5367
    %v5993 = vpop.f32.mrf.mxu0
    %v5994 = vadd.f32 %v5785, %v5993
    %5995 = vmatmul.f32.gmra.mxu0 %v5370
    %v5996 = vpop.f32.mrf.mxu0
    %v5997 = vadd.f32 %v5788, %v5996
    %5998 = vmatmul.f32.gmra.mxu0 %v5373
    %v5999 = vpop.f32.mrf.mxu0
    %v6000 = vadd.f32 %v5791, %v5999
    %6001 = vmatmul.f32.gmra.mxu0 %v5376
    %v6002 = vpop.f32.mrf.mxu0
    %v6003 = vadd.f32 %v5794, %v6002
    %6004 = vmatmul.f32.gmra.mxu0 %v5379
    %v6005 = vpop.f32.mrf.mxu0
    %v6006 = vadd.f32 %v5797, %v6005
    %6007 = vmatmul.f32.gmra.mxu0 %v5382
    %v6008 = vpop.f32.mrf.mxu0
    %v6009 = vadd.f32 %v5800, %v6008
    %6010 = vmatmul.f32.gmra.mxu0 %v5385
    %v6011 = vpop.f32.mrf.mxu0
    %v6012 = vadd.f32 %v5803, %v6011
    %6013 = vmatmul.f32.gmra.mxu0 %v5388
    %v6014 = vpop.f32.mrf.mxu0
    %v6015 = vadd.f32 %v5806, %v6014
    %6016 = vmatmul.f32.gmra.mxu0 %v5391
    %v6017 = vpop.f32.mrf.mxu0
    %v6018 = vadd.f32 %v5809, %v6017
    %6019 = vmatmul.f32.gmra.mxu0 %v5394
    %v6020 = vpop.f32.mrf.mxu0
    %v6021 = vadd.f32 %v5812, %v6020
    %6022 = vmatmul.f32.gmra.mxu0 %v5397
    %v6023 = vpop.f32.mrf.mxu0
    %v6024 = vadd.f32 %v5815, %v6023
    %6025 = vmatmul.f32.gmra.mxu0 %v5400
    %v6026 = vpop.f32.mrf.mxu0
    %v6027 = vadd.f32 %v5818, %v6026
    %6028 = vmatmul.f32.gmra.mxu0 %v5403
    %v6029 = vpop.f32.mrf.mxu0
    %v6030 = vadd.f32 %v5821, %v6029
    %6031 = vmatmul.f32.gmra.mxu0 %v5406
    %v6032 = vpop.f32.mrf.mxu0
    %v6033 = vadd.f32 %v5824, %v6032
    %6034 = vmatmul.f32.gmra.mxu0 %v5409
    %v6035 = vpop.f32.mrf.mxu0
    %v6036 = vadd.f32 %v5827, %v6035
    %6037 = vmatmul.f32.gmra.mxu0 %v5412
    %v6038 = vpop.f32.mrf.mxu0
    %v6039 = vadd.f32 %v5830, %v6038
    %6040 = vmatmul.f32.gmra.mxu0 %v5415
    %v6041 = vpop.f32.mrf.mxu0
    %v6042 = vadd.f32 %v5833, %v6041
    %6043 = vmatmul.f32.gmra.mxu0 %v5418
    %v6044 = vpop.f32.mrf.mxu0
    %v6045 = vadd.f32 %v5836, %v6044
    %6046 = vmatmul.f32.gmra.mxu0 %v5421
    %v6047 = vpop.f32.mrf.mxu0
    %v6048 = vadd.f32 %v5839, %v6047
    %6049 = vmatmul.f32.gmra.mxu0 %v5424
    %v6050 = vpop.f32.mrf.mxu0
    %v6051 = vadd.f32 %v5842, %v6050
    %6052 = vmatmul.f32.gmra.mxu0 %v5427
    %v6053 = vpop.f32.mrf.mxu0
    %v6054 = vadd.f32 %v5845, %v6053
    %6055 = vmatmul.f32.gmra.mxu0 %v5430
    %v6056 = vpop.f32.mrf.mxu0
    %v6057 = vadd.f32 %v5848, %v6056
    %6058 = vmatmul.f32.gmra.mxu0 %v5433
    %v6059 = vpop.f32.mrf.mxu0
    %v6060 = vadd.f32 %v5851, %v6059
    %6061 = vmatmul.f32.gmra.mxu0 %v5436
    %v6062 = vpop.f32.mrf.mxu0
    %v6063 = vadd.f32 %v5854, %v6062
    %6064 = vmatmul.f32.gmra.mxu0 %v5439
    %v6065 = vpop.f32.mrf.mxu0
    %v6066 = vadd.f32 %v5857, %v6065
    %6067 = vmatmul.f32.gmra.mxu0 %v5442
    %v6068 = vpop.f32.mrf.mxu0
    %v6069 = vadd.f32 %v5860, %v6068
    %6070 = vmatmul.f32.gmra.mxu0 %v5445
    %v6071 = vpop.f32.mrf.mxu0
    %v6072 = vadd.f32 %v5863, %v6071
    %6073 = vmatmul.f32.gmra.mxu0 %v5448
    %v6074 = vpop.f32.mrf.mxu0
    %v6075 = vadd.f32 %v5866, %v6074
    %6076 = vmatmul.f32.gmra.mxu0 %v5451
    %v6077 = vpop.f32.mrf.mxu0
    %v6078 = vadd.f32 %v5869, %v6077
    %6079 = vmatmul.f32.gmra.mxu0 %v5454
    %v6080 = vpop.f32.mrf.mxu0
    %v6081 = vadd.f32 %v5872, %v6080
    %6082 = vmatmul.f32.gmra.mxu0 %v5457
    %v6083 = vpop.f32.mrf.mxu0
    %v6084 = vadd.f32 %v5875, %v6083
    %6085 = vmatmul.f32.gmra.mxu0 %v5460
    %v6086 = vpop.f32.mrf.mxu0
    %v6087 = vadd.f32 %v5878, %v6086
    %6088 = vmatmul.f32.gmra.mxu0 %v5463
    %v6089 = vpop.f32.mrf.mxu0
    %v6090 = vadd.f32 %v5881, %v6089
    %6091 = vmatmul.f32.gmra.mxu0 %v5466
    %v6092 = vpop.f32.mrf.mxu0
    %v6093 = vadd.f32 %v5884, %v6092
    %6094 = vmatmul.f32.gmra.mxu0 %v5469
    %v6095 = vpop.f32.mrf.mxu0
    %v6096 = vadd.f32 %v5887, %v6095
    %6097 = vmatmul.f32.gmra.mxu0 %v5472
    %v6098 = vpop.f32.mrf.mxu0
    %v6099 = vadd.f32 %v5890, %v6098
    %6100 = vmatmul.f32.gmra.mxu0 %v5475
    %v6101 = vpop.f32.mrf.mxu0
    %v6102 = vadd.f32 %v5893, %v6101
    %6103 = vmatmul.f32.gmra.mxu0 %v5478
    %v6104 = vpop.f32.mrf.mxu0
    %v6105 = vadd.f32 %v5896, %v6104
    %6106 = vmatmul.f32.gmra.mxu0 %v5481
    %v6107 = vpop.f32.mrf.mxu0
    %v6108 = vadd.f32 %v5899, %v6107
    %6109 = vmatmul.f32.gmra.mxu0 %v5484
    %v6110 = vpop.f32.mrf.mxu0
    %v6111 = vadd.f32 %v5902, %v6110
    %6112 = vmatmul.f32.gmra.mxu0 %v5487
    %v6113 = vpop.f32.mrf.mxu0
    %v6114 = vadd.f32 %v5905, %v6113
    %6115 = vmatmul.f32.gmra.mxu0 %v5490
    %v6116 = vpop.f32.mrf.mxu0
    %v6117 = vadd.f32 %v5908, %v6116
    %6118 = vmatmul.f32.gmra.mxu0 %v5493
    %v6119 = vpop.f32.mrf.mxu0
    %v6120 = vadd.f32 %v5911, %v6119
    %6121 = vmatmul.f32.gmra.mxu0 %v5496
    %v6122 = vpop.f32.mrf.mxu0
    %v6123 = vadd.f32 %v5914, %v6122
    %6124 = vmatmul.f32.gmra.mxu0 %v5499
    %v6125 = vpop.f32.mrf.mxu0
    %v6126 = vadd.f32 %v5917, %v6125
    %6127 = vmatmul.f32.gmra.mxu0 %v5502
    %v6128 = vpop.f32.mrf.mxu0
    %v6129 = vadd.f32 %v5920, %v6128
    %6130 = vdwg.mxu0
    %v6131 = vmax.f32 %v5940, %v5988
    %v6132 = vmax.f32 %v5943, %v5991
    %v6133 = vmax.f32 %v5946, %v5994
    %v6134 = vmax.f32 %v5949, %v5997
    %v6135 = vmax.f32 %v5952, %v6000
    %v6136 = vmax.f32 %v5955, %v6003
    %v6137 = vmax.f32 %v5958, %v6006
    %v6138 = vmax.f32 %v5961, %v6009
    %v6139 = vmax.f32 %v5964, %v6012
    %v6140 = vmax.f32 %v5967, %v6015
    %v6141 = vmax.f32 %v5970, %v6018
    %v6142 = vmax.f32 %v5973, %v6021
    %v6143 = vmax.f32 %v5976, %v6024
    %v6144 = vmax.f32 %v5979, %v6027
    %v6145 = vmax.f32 %v5982, %v6030
    %v6146 = vmax.f32 %v5985, %v6033
    %v6147 = vmax.f32 %v6036, %v6084
    %v6148 = vmax.f32 %v6039, %v6087
    %v6149 = vmax.f32 %v6042, %v6090
    %v6150 = vmax.f32 %v6045, %v6093
    %v6151 = vmax.f32 %v6048, %v6096
    %v6152 = vmax.f32 %v6051, %v6099
    %v6153 = vmax.f32 %v6054, %v6102
    %v6154 = vmax.f32 %v6057, %v6105
    %v6155 = vmax.f32 %v6060, %v6108
    %v6156 = vmax.f32 %v6063, %v6111
    %v6157 = vmax.f32 %v6066, %v6114
    %v6158 = vmax.f32 %v6069, %v6117
    %v6159 = vmax.f32 %v6072, %v6120
    %v6160 = vmax.f32 %v6075, %v6123
    %v6161 = vmax.f32 %v6078, %v6126
    %v6162 = vmax.f32 %v6081, %v6129
    %v6163 = vmax.f32 %v6131, %v6147
    %v6164 = vmax.f32 %v6132, %v6148
    %v6165 = vmax.f32 %v6133, %v6149
    %v6166 = vmax.f32 %v6134, %v6150
    %v6167 = vmax.f32 %v6135, %v6151
    %v6168 = vmax.f32 %v6136, %v6152
    %v6169 = vmax.f32 %v6137, %v6153
    %v6170 = vmax.f32 %v6138, %v6154
    %v6171 = vmax.f32 %v6139, %v6155
    %v6172 = vmax.f32 %v6140, %v6156
    %v6173 = vmax.f32 %v6141, %v6157
    %v6174 = vmax.f32 %v6142, %v6158
    %v6175 = vmax.f32 %v6143, %v6159
    %v6176 = vmax.f32 %v6144, %v6160
    %v6177 = vmax.f32 %v6145, %v6161
    %v6178 = vmax.f32 %v6146, %v6162
    %v6179 = vld [vmem:[%s4] sm:$0x1]
    %v6181 = vperm.slane %v6179, 0
    %v6183 = vadd.f32 %v6163, %v6181
    %v6184 = vadd.f32 %v6164, %v6181
    %v6185 = vadd.f32 %v6165, %v6181
    %v6186 = vadd.f32 %v6166, %v6181
    %v6187 = vadd.f32 %v6167, %v6181
    %v6188 = vadd.f32 %v6168, %v6181
    %v6189 = vadd.f32 %v6169, %v6181
    %v6190 = vadd.f32 %v6170, %v6181
    %v6191 = vadd.f32 %v6171, %v6181
    %v6192 = vadd.f32 %v6172, %v6181
    %v6193 = vadd.f32 %v6173, %v6181
    %v6194 = vadd.f32 %v6174, %v6181
    %v6195 = vadd.f32 %v6175, %v6181
    %v6196 = vadd.f32 %v6176, %v6181
    %v6197 = vadd.f32 %v6177, %v6181
    %v6198 = vadd.f32 %v6178, %v6181
    %v6199 = vmax.f32 %v6183, 0.0
    %v6200 = vmax.f32 %v6184, 0.0
    %v6201 = vmax.f32 %v6185, 0.0
    %v6202 = vmax.f32 %v6186, 0.0
    %v6203 = vmax.f32 %v6187, 0.0
    %v6204 = vmax.f32 %v6188, 0.0
    %v6205 = vmax.f32 %v6189, 0.0
    %v6206 = vmax.f32 %v6190, 0.0
    %v6207 = vmax.f32 %v6191, 0.0
    %v6208 = vmax.f32 %v6192, 0.0
    %v6209 = vmax.f32 %v6193, 0.0
    %v6210 = vmax.f32 %v6194, 0.0
    %v6211 = vmax.f32 %v6195, 0.0
    %v6212 = vmax.f32 %v6196, 0.0
    %v6213 = vmax.f32 %v6197, 0.0
    %v6214 = vmax.f32 %v6198, 0.0
    %6215 = vxpose.xlu0.b32.start [1/16] %v6199, 128
    %6216 = vxpose.xlu0.b32.cont [2/16] %v6200, 128
    %6217 = vxpose.xlu0.b32.cont [3/16] %v6201, 128
    %6218 = vxpose.xlu0.b32.cont [4/16] %v6202, 128
    %6219 = vxpose.xlu0.b32.cont [5/16] %v6203, 128
    %6220 = vxpose.xlu0.b32.cont [6/16] %v6204, 128
    %6221 = vxpose.xlu0.b32.cont [7/16] %v6205, 128
    %6222 = vxpose.xlu0.b32.cont [8/16] %v6206, 128
    %6223 = vxpose.xlu0.b32.cont [9/16] %v6207, 128
    %6224 = vxpose.xlu0.b32.cont [10/16] %v6208, 128
    %6225 = vxpose.xlu0.b32.cont [11/16] %v6209, 128
    %6226 = vxpose.xlu0.b32.cont [12/16] %v6210, 128
    %6227 = vxpose.xlu0.b32.cont [13/16] %v6211, 128
    %6228 = vxpose.xlu0.b32.cont [14/16] %v6212, 128
    %6229 = vxpose.xlu0.b32.cont [15/16] %v6213, 128
    %6230 = vxpose.xlu0.b32.end [16/16] %v6214, 128
    %v6231 = vpop.trf.xlu0
    %v6232 = vpop.trf.xlu0
    %v6233 = vpop.trf.xlu0
    %v6234 = vpop.trf.xlu0
    %v6235 = vpop.trf.xlu0
    %v6236 = vpop.trf.xlu0
    %v6237 = vpop.trf.xlu0
    %v6238 = vpop.trf.xlu0
    %v6239 = vpop.trf.xlu0
    %v6240 = vpop.trf.xlu0
    %v6241 = vpop.trf.xlu0
    %v6242 = vpop.trf.xlu0
    %v6243 = vpop.trf.xlu0
    %v6244 = vpop.trf.xlu0
    %v6245 = vpop.trf.xlu0
    %v6246 = vpop.trf.xlu0
    %vm6247 = vcmask 516096
    %6248 = vst.msk [vmem:[#allocation4] sm:$0x1] %vm6247, %v6231
    %6250 = vrot.lane.b32.xlu0 %v6231, 64
    %v6251 = vpop.permute.xlu0 %6250
    %6253 = vst.msk [vmem:[#allocation4 + $0x1] sm:$0x1] %vm6247, %v6251
    %v6254 = vrot.slane %v6231, 7
    %v6255 = vrot.slane %v6254, 2
    %6256 = vrot.lane.b32.xlu0 %v6255, 64
    %v6257 = vpop.permute.xlu0 %6256
    %vm6259 = vcmask 1040896
    %6260 = vst.msk [vmem:[#allocation4] sm:$0x1] %vm6259, %v6257
    %6262 = vst.msk [vmem:[#allocation4 + $0x1] sm:$0x1] %vm6259, %v6255
    %6263 = vst.sshfl [vmem:[#allocation1] sm:$0xff pattern:$0x73625140] %v6231
    %s6264 = scalar_lea.vmem [#allocation1], 1
    %v6265 = vld [vmem:[%s6264] ss:$4 sm:$0xff]
    %6267 = vst.msk [vmem:[#allocation4 + $0x2] sm:$0x1] %vm6247, %v6265
    %6268 = vst.sshfl [vmem:[#allocation1] sm:$0xff pattern:$0x73625140] %v6231
    %s6269 = scalar_lea.vmem [#allocation1], 1
    %v6270 = vld [vmem:[%s6269] ss:$4 sm:$0xff]
    %6271 = vrot.lane.b32.xlu0 %v6270, 64
    %v6272 = vpop.permute.xlu0 %6271
    %6274 = vst.msk [vmem:[#allocation4 + $0x3] sm:$0x1] %vm6247, %v6272
    %6275 = vst.sshfl [vmem:[#allocation1] sm:$0xff pattern:$0x73625140] %v6231
    %s6276 = scalar_lea.vmem [#allocation1], 1
    %v6277 = vld [vmem:[%s6276] ss:$4 sm:$0xff]
    %v6278 = vrot.slane %v6277, 7
    %v6279 = vrot.slane %v6278, 2
    %6280 = vrot.lane.b32.xlu0 %v6279, 64
    %v6281 = vpop.permute.xlu0 %6280
    %6283 = vst.msk [vmem:[#allocation4 + $0x2] sm:$0x1] %vm6259, %v6281
    %6284 = vst.sshfl [vmem:[#allocation1] sm:$0xff pattern:$0x73625140] %v6231
    %s6285 = scalar_lea.vmem [#allocation1], 1
    %v6286 = vld [vmem:[%s6285] ss:$4 sm:$0xff]
    %v6287 = vrot.slane %v6286, 7
    %v6288 = vrot.slane %v6287, 2
    %6290 = vst.msk [vmem:[#allocation4 + $0x3] sm:$0x1] %vm6259, %v6288
    %6291 = vst.sshfl [vmem:[#allocation1] sm:$0xff pattern:$0x73625140] %v6231
    %s6292 = scalar_lea.vmem [#allocation1], 2
    %v6293 = vld [vmem:[%s6292] ss:$4 sm:$0xff]
    %6295 = vst.msk [vmem:[#allocation4 + $0x4] sm:$0x1] %vm6247, %v6293
    %6296 = vst.sshfl [vmem:[#allocation1] sm:$0xff pattern:$0x73625140] %v6231
    %s6297 = scalar_lea.vmem [#allocation1], 2
    %v6298 = vld [vmem:[%s6297] ss:$4 sm:$0xff]
    %6299 = vrot.lane.b32.xlu0 %v6298, 64
    %v6300 = vpop.permute.xlu0 %6299
    %6302 = vst.msk [vmem:[#allocation4 + $0x5] sm:$0x1] %vm6247, %v6300
    %6303 = vst.sshfl [vmem:[#allocation1] sm:$0xff pattern:$0x73625140] %v6231
    %s6304 = scalar_lea.vmem [#allocation1], 2
    %v6305 = vld [vmem:[%s6304] ss:$4 sm:$0xff]
    %v6306 = vrot.slane %v6305, 7
    %v6307 = vrot.slane %v6306, 2
    %6308 = vrot.lane.b32.xlu0 %v6307, 64
    %v6309 = vpop.permute.xlu0 %6308
    %6311 = vst.msk [vmem:[#allocation4 + $0x4] sm:$0x1] %vm6259, %v6309
    %6312 = vst.sshfl [vmem:[#allocation1] sm:$0xff pattern:$0x73625140] %v6231
    %s6313 = scalar_lea.vmem [#allocation1], 2
    %v6314 = vld [vmem:[%s6313] ss:$4 sm:$0xff]
    %v6315 = vrot.slane %v6314, 7
    %v6316 = vrot.slane %v6315, 2
    %6318 = vst.msk [vmem:[#allocation4 + $0x5] sm:$0x1] %vm6259, %v6316
    %6319 = vst.sshfl [vmem:[#allocation1] sm:$0xff pattern:$0x73625140] %v6231
    %s6320 = scalar_lea.vmem [#allocation1], 3
    %v6321 = vld [vmem:[%s6320] ss:$4 sm:$0xff]
    %6323 = vst.msk [vmem:[#allocation4 + $0x6] sm:$0x1] %vm6247, %v6321
    %6324 = vst.sshfl [vmem:[#allocation1] sm:$0xff pattern:$0x73625140] %v6231
    %s6325 = scalar_lea.vmem [#allocation1], 3
    %v6326 = vld [vmem:[%s6325] ss:$4 sm:$0xff]
    %6327 = vrot.lane.b32.xlu0 %v6326, 64
    %v6328 = vpop.permute.xlu0 %6327
    %6330 = vst.msk [vmem:[#allocation4 + $0x7] sm:$0x1] %vm6247, %v6328
    %6331 = vst.sshfl [vmem:[#allocation1] sm:$0xff pattern:$0x73625140] %v6231
    %s6332 = scalar_lea.vmem [#allocation1], 3
    %v6333 = vld [vmem:[%s6332] ss:$4 sm:$0xff]
    %v6334 = vrot.slane %v6333, 7
    %v6335 = vrot.slane %v6334, 2
    %6336 = vrot.lane.b32.xlu0 %v6335, 64
    %v6337 = vpop.permute.xlu0 %6336
    %6339 = vst.msk [vmem:[#allocation4 + $0x6] sm:$0x1] %vm6259, %v6337
    %6340 = vst.sshfl [vmem:[#allocation1] sm:$0xff pattern:$0x73625140] %v6231
    %s6341 = scalar_lea.vmem [#allocation1], 3
    %v6342 = vld [vmem:[%s6341] ss:$4 sm:$0xff]
    %v6343 = vrot.slane %v6342, 7
    %v6344 = vrot.slane %v6343, 2
    %6346 = vst.msk [vmem:[#allocation4 + $0x7] sm:$0x1] %vm6259, %v6344
    %6347 = vst.msk [vmem:[#allocation4 + $0x8] sm:$0x1] %vm6247, %v6232
    %6349 = vrot.lane.b32.xlu0 %v6232, 64
    %v6350 = vpop.permute.xlu0 %6349
    %6352 = vst.msk [vmem:[#allocation4 + $0x9] sm:$0x1] %vm6247, %v6350
    %v6353 = vrot.slane %v6232, 7
    %v6354 = vrot.slane %v6353, 2
    %6355 = vrot.lane.b32.xlu0 %v6354, 64
    %v6356 = vpop.permute.xlu0 %6355
    %6358 = vst.msk [vmem:[#allocation4 + $0x8] sm:$0x1] %vm6259, %v6356
    %6360 = vst.msk [vmem:[#allocation4 + $0x9] sm:$0x1] %vm6259, %v6354
    %6361 = vst.sshfl [vmem:[#allocation1] sm:$0xff pattern:$0x73625140] %v6232
    %s6362 = scalar_lea.vmem [#allocation1], 1
    %v6363 = vld [vmem:[%s6362] ss:$4 sm:$0xff]
    %6365 = vst.msk [vmem:[#allocation4 + $0xa] sm:$0x1] %vm6247, %v6363
    %6366 = vst.sshfl [vmem:[#allocation1] sm:$0xff pattern:$0x73625140] %v6232
    %s6367 = scalar_lea.vmem [#allocation1], 1
    %v6368 = vld [vmem:[%s6367] ss:$4 sm:$0xff]
    %6369 = vrot.lane.b32.xlu0 %v6368, 64
    %v6370 = vpop.permute.xlu0 %6369
    %6372 = vst.msk [vmem:[#allocation4 + $0xb] sm:$0x1] %vm6247, %v6370
    %6373 = vst.sshfl [vmem:[#allocation1] sm:$0xff pattern:$0x73625140] %v6232
    %s6374 = scalar_lea.vmem [#allocation1], 1
    %v6375 = vld [vmem:[%s6374] ss:$4 sm:$0xff]
    %v6376 = vrot.slane %v6375, 7
    %v6377 = vrot.slane %v6376, 2
    %6378 = vrot.lane.b32.xlu0 %v6377, 64
    %v6379 = vpop.permute.xlu0 %6378
    %6381 = vst.msk [vmem:[#allocation4 + $0xa] sm:$0x1] %vm6259, %v6379
    %6382 = vst.sshfl [vmem:[#allocation1] sm:$0xff pattern:$0x73625140] %v6232
    %s6383 = scalar_lea.vmem [#allocation1], 1
    %v6384 = vld [vmem:[%s6383] ss:$4 sm:$0xff]
    %v6385 = vrot.slane %v6384, 7
    %v6386 = vrot.slane %v6385, 2
    %6388 = vst.msk [vmem:[#allocation4 + $0xb] sm:$0x1] %vm6259, %v6386
    %6389 = vst.sshfl [vmem:[#allocation1] sm:$0xff pattern:$0x73625140] %v6232
    %s6390 = scalar_lea.vmem [#allocation1], 2
    %v6391 = vld [vmem:[%s6390] ss:$4 sm:$0xff]
    %6393 = vst.msk [vmem:[#allocation4 + $0xc] sm:$0x1] %vm6247, %v6391
    %6394 = vst.sshfl [vmem:[#allocation1] sm:$0xff pattern:$0x73625140] %v6232
    %s6395 = scalar_lea.vmem [#allocation1], 2
    %v6396 = vld [vmem:[%s6395] ss:$4 sm:$0xff]
    %6397 = vrot.lane.b32.xlu0 %v6396, 64
    %v6398 = vpop.permute.xlu0 %6397
    %6400 = vst.msk [vmem:[#allocation4 + $0xd] sm:$0x1] %vm6247, %v6398
    %6401 = vst.sshfl [vmem:[#allocation1] sm:$0xff pattern:$0x73625140] %v6232
    %s6402 = scalar_lea.vmem [#allocation1], 2
    %v6403 = vld [vmem:[%s6402] ss:$4 sm:$0xff]
    %v6404 = vrot.slane %v6403, 7
    %v6405 = vrot.slane %v6404, 2
    %6406 = vrot.lane.b32.xlu0 %v6405, 64
    %v6407 = vpop.permute.xlu0 %6406
    %6409 = vst.msk [vmem:[#allocation4 + $0xc] sm:$0x1] %vm6259, %v6407
    %6410 = vst.sshfl [vmem:[#allocation1] sm:$0xff pattern:$0x73625140] %v6232
    %s6411 = scalar_lea.vmem [#allocation1], 2
    %v6412 = vld [vmem:[%s6411] ss:$4 sm:$0xff]
    %v6413 = vrot.slane %v6412, 7
    %v6414 = vrot.slane %v6413, 2
    %6416 = vst.msk [vmem:[#allocation4 + $0xd] sm:$0x1] %vm6259, %v6414
    %6417 = vst.sshfl [vmem:[#allocation1] sm:$0xff pattern:$0x73625140] %v6232
    %s6418 = scalar_lea.vmem [#allocation1], 3
    %v6419 = vld [vmem:[%s6418] ss:$4 sm:$0xff]
    %6421 = vst.msk [vmem:[#allocation4 + $0xe] sm:$0x1] %vm6247, %v6419
    %6422 = vst.sshfl [vmem:[#allocation1] sm:$0xff pattern:$0x73625140] %v6232
    %s6423 = scalar_lea.vmem [#allocation1], 3
    %v6424 = vld [vmem:[%s6423] ss:$4 sm:$0xff]
    %6425 = vrot.lane.b32.xlu0 %v6424, 64
    %v6426 = vpop.permute.xlu0 %6425
    %6428 = vst.msk [vmem:[#allocation4 + $0xf] sm:$0x1] %vm6247, %v6426
    %6429 = vst.sshfl [vmem:[#allocation1] sm:$0xff pattern:$0x73625140] %v6232
    %s6430 = scalar_lea.vmem [#allocation1], 3
    %v6431 = vld [vmem:[%s6430] ss:$4 sm:$0xff]
    %v6432 = vrot.slane %v6431, 7
    %v6433 = vrot.slane %v6432, 2
    %6434 = vrot.lane.b32.xlu0 %v6433, 64
    %v6435 = vpop.permute.xlu0 %6434
    %6437 = vst.msk [vmem:[#allocation4 + $0xe] sm:$0x1] %vm6259, %v6435
    %6438 = vst.sshfl [vmem:[#allocation1] sm:$0xff pattern:$0x73625140] %v6232
    %s6439 = scalar_lea.vmem [#allocation1], 3
    %v6440 = vld [vmem:[%s6439] ss:$4 sm:$0xff]
    %v6441 = vrot.slane %v6440, 7
    %v6442 = vrot.slane %v6441, 2
    %6444 = vst.msk [vmem:[#allocation4 + $0xf] sm:$0x1] %vm6259, %v6442
    %v6445 = vld [vmem:[#allocation4] sm:$0xff]
    %v6446 = vld [vmem:[#allocation4 + $0x8] sm:$0xff]
    %v6447 = vld [vmem:[%s5] sm:$0xff]
    %v6448 = vld [vmem:[%s5 + $0x8] sm:$0xff]
    %v6449 = vld [vmem:[%s5 + $0x10] sm:$0xff]
    %v6450 = vld [vmem:[%s5 + $0x18] sm:$0xff]
    %v6451 = vld [vmem:[%s5 + $0x20] sm:$0xff]
    %v6452 = vld [vmem:[%s5 + $0x28] sm:$0xff]
    %v6453 = vld [vmem:[%s5 + $0x30] sm:$0xff]
    %v6454 = vld [vmem:[%s5 + $0x38] sm:$0xff]
    %v6455 = vld [vmem:[%s5 + $0x40] sm:$0xff]
    %v6456 = vld [vmem:[%s5 + $0x48] sm:$0xff]
    %v6457 = vld [vmem:[%s5 + $0x50] sm:$0xff]
    %v6458 = vld [vmem:[%s5 + $0x58] sm:$0xff]
    %v6459 = vld [vmem:[%s5 + $0x60] sm:$0xff]
    %v6460 = vld [vmem:[%s5 + $0x68] sm:$0xff]
    %v6461 = vld [vmem:[%s5 + $0x70] sm:$0xff]
    %v6462 = vld [vmem:[%s5 + $0x78] sm:$0xff]
    %v6463 = vld [vmem:[%s5 + $0x80] sm:$0xff]
    %v6464 = vld [vmem:[%s5 + $0x88] sm:$0xff]
    %v6465 = vld [vmem:[%s5 + $0x90] sm:$0xff]
    %v6466 = vld [vmem:[%s5 + $0x98] sm:$0xff]
    %v6467 = vld [vmem:[%s5 + $0xa0] sm:$0xff]
    %v6468 = vld [vmem:[%s5 + $0xa8] sm:$0xff]
    %v6469 = vld [vmem:[%s5 + $0xb0] sm:$0xff]
    %v6470 = vld [vmem:[%s5 + $0xb8] sm:$0xff]
    %v6471 = vld [vmem:[%s5 + $0xc0] sm:$0xff]
    %v6472 = vld [vmem:[%s5 + $0xc8] sm:$0xff]
    %v6473 = vld [vmem:[%s5 + $0xd0] sm:$0xff]
    %v6474 = vld [vmem:[%s5 + $0xd8] sm:$0xff]
    %v6475 = vld [vmem:[%s5 + $0xe0] sm:$0xff]
    %v6476 = vld [vmem:[%s5 + $0xe8] sm:$0xff]
    %v6477 = vld [vmem:[%s5 + $0xf0] sm:$0xff]
    %v6478 = vld [vmem:[%s5 + $0xf8] sm:$0xff]
    %v6479 = vld [vmem:[%s5 + $0x100] sm:$0xff]
    %v6480 = vld [vmem:[%s5 + $0x108] sm:$0xff]
    %v6481 = vld [vmem:[%s5 + $0x110] sm:$0xff]
    %v6482 = vld [vmem:[%s5 + $0x118] sm:$0xff]
    %v6483 = vld [vmem:[%s5 + $0x120] sm:$0xff]
    %v6484 = vld [vmem:[%s5 + $0x128] sm:$0xff]
    %v6485 = vld [vmem:[%s5 + $0x130] sm:$0xff]
    %v6486 = vld [vmem:[%s5 + $0x138] sm:$0xff]
    %v6487 = vld [vmem:[%s5 + $0x140] sm:$0xff]
    %v6488 = vld [vmem:[%s5 + $0x148] sm:$0xff]
    %v6489 = vld [vmem:[%s5 + $0x150] sm:$0xff]
    %v6490 = vld [vmem:[%s5 + $0x158] sm:$0xff]
    %v6491 = vld [vmem:[%s5 + $0x160] sm:$0xff]
    %v6492 = vld [vmem:[%s5 + $0x168] sm:$0xff]
    %v6493 = vld [vmem:[%s5 + $0x170] sm:$0xff]
    %v6494 = vld [vmem:[%s5 + $0x178] sm:$0xff]
    %v6495 = vld [vmem:[%s5 + $0x180] sm:$0xff]
    %v6496 = vld [vmem:[%s5 + $0x188] sm:$0xff]
    %v6497 = vld [vmem:[%s5 + $0x190] sm:$0xff]
    %v6498 = vld [vmem:[%s5 + $0x198] sm:$0xff]
    %v6499 = vld [vmem:[%s5 + $0x1a0] sm:$0xff]
    %v6500 = vld [vmem:[%s5 + $0x1a8] sm:$0xff]
    %v6501 = vld [vmem:[%s5 + $0x1b0] sm:$0xff]
    %v6502 = vld [vmem:[%s5 + $0x1b8] sm:$0xff]
    %v6503 = vld [vmem:[%s5 + $0x1c0] sm:$0xff]
    %v6504 = vld [vmem:[%s5 + $0x1c8] sm:$0xff]
    %v6505 = vld [vmem:[%s5 + $0x1d0] sm:$0xff]
    %v6506 = vld [vmem:[%s5 + $0x1d8] sm:$0xff]
    %v6507 = vld [vmem:[%s5 + $0x1e0] sm:$0xff]
    %v6508 = vld [vmem:[%s5 + $0x1e8] sm:$0xff]
    %v6509 = vld [vmem:[%s5 + $0x1f0] sm:$0xff]
    %v6510 = vld [vmem:[%s5 + $0x1f8] sm:$0xff]
    %v6511 = vld [vmem:[%s5 + $0x200] sm:$0xff]
    %v6512 = vld [vmem:[%s5 + $0x208] sm:$0xff]
    %v6513 = vld [vmem:[%s5 + $0x210] sm:$0xff]
    %v6514 = vld [vmem:[%s5 + $0x218] sm:$0xff]
    %v6515 = vld [vmem:[%s5 + $0x220] sm:$0xff]
    %v6516 = vld [vmem:[%s5 + $0x228] sm:$0xff]
    %v6517 = vld [vmem:[%s5 + $0x230] sm:$0xff]
    %v6518 = vld [vmem:[%s5 + $0x238] sm:$0xff]
    %v6519 = vld [vmem:[%s5 + $0x240] sm:$0xff]
    %v6520 = vld [vmem:[%s5 + $0x248] sm:$0xff]
    %v6521 = vld [vmem:[%s5 + $0x250] sm:$0xff]
    %v6522 = vld [vmem:[%s5 + $0x258] sm:$0xff]
    %v6523 = vld [vmem:[%s5 + $0x260] sm:$0xff]
    %v6524 = vld [vmem:[%s5 + $0x268] sm:$0xff]
    %v6525 = vld [vmem:[%s5 + $0x270] sm:$0xff]
    %v6526 = vld [vmem:[%s5 + $0x278] sm:$0xff]
    %v6527 = vld [vmem:[%s5 + $0x280] sm:$0xff]
    %v6528 = vld [vmem:[%s5 + $0x288] sm:$0xff]
    %v6529 = vld [vmem:[%s5 + $0x290] sm:$0xff]
    %v6530 = vld [vmem:[%s5 + $0x298] sm:$0xff]
    %v6531 = vld [vmem:[%s5 + $0x2a0] sm:$0xff]
    %v6532 = vld [vmem:[%s5 + $0x2a8] sm:$0xff]
    %v6533 = vld [vmem:[%s5 + $0x2b0] sm:$0xff]
    %v6534 = vld [vmem:[%s5 + $0x2b8] sm:$0xff]
    %v6535 = vld [vmem:[%s5 + $0x2c0] sm:$0xff]
    %v6536 = vld [vmem:[%s5 + $0x2c8] sm:$0xff]
    %v6537 = vld [vmem:[%s5 + $0x2d0] sm:$0xff]
    %v6538 = vld [vmem:[%s5 + $0x2d8] sm:$0xff]
    %v6539 = vld [vmem:[%s5 + $0x2e0] sm:$0xff]
    %v6540 = vld [vmem:[%s5 + $0x2e8] sm:$0xff]
    %v6541 = vld [vmem:[%s5 + $0x2f0] sm:$0xff]
    %v6542 = vld [vmem:[%s5 + $0x2f8] sm:$0xff]
    %v6543 = vld [vmem:[%s5 + $0x300] sm:$0xff]
    %v6544 = vld [vmem:[%s5 + $0x308] sm:$0xff]
    %v6545 = vld [vmem:[%s5 + $0x310] sm:$0xff]
    %v6546 = vld [vmem:[%s5 + $0x318] sm:$0xff]
    %v6547 = vld [vmem:[%s5 + $0x320] sm:$0xff]
    %v6548 = vld [vmem:[%s5 + $0x328] sm:$0xff]
    %v6549 = vld [vmem:[%s5 + $0x330] sm:$0xff]
    %v6550 = vld [vmem:[%s5 + $0x338] sm:$0xff]
    %v6551 = vld [vmem:[%s5 + $0x340] sm:$0xff]
    %v6552 = vld [vmem:[%s5 + $0x348] sm:$0xff]
    %v6553 = vld [vmem:[%s5 + $0x350] sm:$0xff]
    %v6554 = vld [vmem:[%s5 + $0x358] sm:$0xff]
    %v6555 = vld [vmem:[%s5 + $0x360] sm:$0xff]
    %v6556 = vld [vmem:[%s5 + $0x368] sm:$0xff]
    %v6557 = vld [vmem:[%s5 + $0x370] sm:$0xff]
    %v6558 = vld [vmem:[%s5 + $0x378] sm:$0xff]
    %v6559 = vld [vmem:[%s5 + $0x380] sm:$0xff]
    %v6560 = vld [vmem:[%s5 + $0x388] sm:$0xff]
    %v6561 = vld [vmem:[%s5 + $0x390] sm:$0xff]
    %v6562 = vld [vmem:[%s5 + $0x398] sm:$0xff]
    %v6563 = vld [vmem:[%s5 + $0x3a0] sm:$0xff]
    %v6564 = vld [vmem:[%s5 + $0x3a8] sm:$0xff]
    %v6565 = vld [vmem:[%s5 + $0x3b0] sm:$0xff]
    %v6566 = vld [vmem:[%s5 + $0x3b8] sm:$0xff]
    %v6567 = vld [vmem:[%s5 + $0x3c0] sm:$0xff]
    %v6568 = vld [vmem:[%s5 + $0x3c8] sm:$0xff]
    %v6569 = vld [vmem:[%s5 + $0x3d0] sm:$0xff]
    %v6570 = vld [vmem:[%s5 + $0x3d8] sm:$0xff]
    %v6571 = vld [vmem:[%s5 + $0x3e0] sm:$0xff]
    %v6572 = vld [vmem:[%s5 + $0x3e8] sm:$0xff]
    %v6573 = vld [vmem:[%s5 + $0x3f0] sm:$0xff]
    %v6574 = vld [vmem:[%s5 + $0x3f8] sm:$0xff]
    %v6575 = vld [vmem:[%s6] sm:$0x1]
    %v6577 = vperm.slane %v6575, 0
    %6581 = vst [vmem:[#allocation1] ss:$4 sm:$0xff] %v6445
    %s6582 = scalar_lea.vmem [#allocation1], 32
    %6583 = vst [vmem:[%s6582] ss:$4 sm:$0xff] %v6446
    %v6584 = vld.sshfl [vmem:[#allocation1] sm:$0xff pattern:$0x73625140]
    %v6585 = vld.sshfl [vmem:[#allocation1 + $0x8] sm:$0xff pattern:$0x73625140]
    %v6586 = vld.sshfl [vmem:[#allocation1 + $0x10] sm:$0xff pattern:$0x73625140]
    %v6587 = vld.sshfl [vmem:[#allocation1 + $0x18] sm:$0xff pattern:$0x73625140]
    %v6588 = vld.sshfl [vmem:[#allocation1 + $0x20] sm:$0xff pattern:$0x73625140]
    %v6589 = vld.sshfl [vmem:[#allocation1 + $0x28] sm:$0xff pattern:$0x73625140]
    %v6590 = vld.sshfl [vmem:[#allocation1 + $0x30] sm:$0xff pattern:$0x73625140]
    %v6591 = vld.sshfl [vmem:[#allocation1 + $0x38] sm:$0xff pattern:$0x73625140]
    %6600 = vmatpush.msra.mxu0 %v6462
    %6601 = vmatpush.msra.mxu0 %v6461
    %6602 = vmatpush.msra.mxu0 %v6460
    %6603 = vmatpush.msra.mxu0 %v6459
    %6604 = vmatpush.msra.mxu0 %v6458
    %6605 = vmatpush.msra.mxu0 %v6457
    %6606 = vmatpush.msra.mxu0 %v6456
    %6607 = vmatpush.msra.mxu0 %v6455
    %6608 = vmatpush.msra.mxu0 %v6454
    %6609 = vmatpush.msra.mxu0 %v6453
    %6610 = vmatpush.msra.mxu0 %v6452
    %6611 = vmatpush.msra.mxu0 %v6451
    %6612 = vmatpush.msra.mxu0 %v6450
    %6613 = vmatpush.msra.mxu0 %v6449
    %6614 = vmatpush.msra.mxu0 %v6448
    %6615 = vmatpush.msra.mxu0 %v6447
    %6616 = vmatmul.f32.gmra.mxu0 %v6584
    %v6617 = vpop.f32.mrf.mxu0
    %v6618 = vadd.f32 %v6577, %v6617
    %6619 = vdwg.mxu0
    %6620 = vmatpush.msra.mxu0 %v6478
    %6621 = vmatpush.msra.mxu0 %v6477
    %6622 = vmatpush.msra.mxu0 %v6476
    %6623 = vmatpush.msra.mxu0 %v6475
    %6624 = vmatpush.msra.mxu0 %v6474
    %6625 = vmatpush.msra.mxu0 %v6473
    %6626 = vmatpush.msra.mxu0 %v6472
    %6627 = vmatpush.msra.mxu0 %v6471
    %6628 = vmatpush.msra.mxu0 %v6470
    %6629 = vmatpush.msra.mxu0 %v6469
    %6630 = vmatpush.msra.mxu0 %v6468
    %6631 = vmatpush.msra.mxu0 %v6467
    %6632 = vmatpush.msra.mxu0 %v6466
    %6633 = vmatpush.msra.mxu0 %v6465
    %6634 = vmatpush.msra.mxu0 %v6464
    %6635 = vmatpush.msra.mxu0 %v6463
    %6636 = vmatmul.f32.gmra.mxu0 %v6585
    %v6637 = vpop.f32.mrf.mxu0
    %v6638 = vadd.f32 %v6618, %v6637
    %6639 = vdwg.mxu0
    %6640 = vmatpush.msra.mxu0 %v6494
    %6641 = vmatpush.msra.mxu0 %v6493
    %6642 = vmatpush.msra.mxu0 %v6492
    %6643 = vmatpush.msra.mxu0 %v6491
    %6644 = vmatpush.msra.mxu0 %v6490
    %6645 = vmatpush.msra.mxu0 %v6489
    %6646 = vmatpush.msra.mxu0 %v6488
    %6647 = vmatpush.msra.mxu0 %v6487
    %6648 = vmatpush.msra.mxu0 %v6486
    %6649 = vmatpush.msra.mxu0 %v6485
    %6650 = vmatpush.msra.mxu0 %v6484
    %6651 = vmatpush.msra.mxu0 %v6483
    %6652 = vmatpush.msra.mxu0 %v6482
    %6653 = vmatpush.msra.mxu0 %v6481
    %6654 = vmatpush.msra.mxu0 %v6480
    %6655 = vmatpush.msra.mxu0 %v6479
    %6656 = vmatmul.f32.gmra.mxu0 %v6586
    %v6657 = vpop.f32.mrf.mxu0
    %v6658 = vadd.f32 %v6638, %v6657
    %6659 = vdwg.mxu0
    %6660 = vmatpush.msra.mxu0 %v6510
    %6661 = vmatpush.msra.mxu0 %v6509
    %6662 = vmatpush.msra.mxu0 %v6508
    %6663 = vmatpush.msra.mxu0 %v6507
    %6664 = vmatpush.msra.mxu0 %v6506
    %6665 = vmatpush.msra.mxu0 %v6505
    %6666 = vmatpush.msra.mxu0 %v6504
    %6667 = vmatpush.msra.mxu0 %v6503
    %6668 = vmatpush.msra.mxu0 %v6502
    %6669 = vmatpush.msra.mxu0 %v6501
    %6670 = vmatpush.msra.mxu0 %v6500
    %6671 = vmatpush.msra.mxu0 %v6499
    %6672 = vmatpush.msra.mxu0 %v6498
    %6673 = vmatpush.msra.mxu0 %v6497
    %6674 = vmatpush.msra.mxu0 %v6496
    %6675 = vmatpush.msra.mxu0 %v6495
    %6676 = vmatmul.f32.gmra.mxu0 %v6587
    %v6677 = vpop.f32.mrf.mxu0
    %v6678 = vadd.f32 %v6658, %v6677
    %6679 = vdwg.mxu0
    %6680 = vmatpush.msra.mxu0 %v6526
    %6681 = vmatpush.msra.mxu0 %v6525
    %6682 = vmatpush.msra.mxu0 %v6524
    %6683 = vmatpush.msra.mxu0 %v6523
    %6684 = vmatpush.msra.mxu0 %v6522
    %6685 = vmatpush.msra.mxu0 %v6521
    %6686 = vmatpush.msra.mxu0 %v6520
    %6687 = vmatpush.msra.mxu0 %v6519
    %6688 = vmatpush.msra.mxu0 %v6518
    %6689 = vmatpush.msra.mxu0 %v6517
    %6690 = vmatpush.msra.mxu0 %v6516
    %6691 = vmatpush.msra.mxu0 %v6515
    %6692 = vmatpush.msra.mxu0 %v6514
    %6693 = vmatpush.msra.mxu0 %v6513
    %6694 = vmatpush.msra.mxu0 %v6512
    %6695 = vmatpush.msra.mxu0 %v6511
    %6696 = vmatmul.f32.gmra.mxu0 %v6588
    %v6697 = vpop.f32.mrf.mxu0
    %v6698 = vadd.f32 %v6678, %v6697
    %6699 = vdwg.mxu0
    %6700 = vmatpush.msra.mxu0 %v6542
    %6701 = vmatpush.msra.mxu0 %v6541
    %6702 = vmatpush.msra.mxu0 %v6540
    %6703 = vmatpush.msra.mxu0 %v6539
    %6704 = vmatpush.msra.mxu0 %v6538
    %6705 = vmatpush.msra.mxu0 %v6537
    %6706 = vmatpush.msra.mxu0 %v6536
    %6707 = vmatpush.msra.mxu0 %v6535
    %6708 = vmatpush.msra.mxu0 %v6534
    %6709 = vmatpush.msra.mxu0 %v6533
    %6710 = vmatpush.msra.mxu0 %v6532
    %6711 = vmatpush.msra.mxu0 %v6531
    %6712 = vmatpush.msra.mxu0 %v6530
    %6713 = vmatpush.msra.mxu0 %v6529
    %6714 = vmatpush.msra.mxu0 %v6528
    %6715 = vmatpush.msra.mxu0 %v6527
    %6716 = vmatmul.f32.gmra.mxu0 %v6589
    %v6717 = vpop.f32.mrf.mxu0
    %v6718 = vadd.f32 %v6698, %v6717
    %6719 = vdwg.mxu0
    %6720 = vmatpush.msra.mxu0 %v6558
    %6721 = vmatpush.msra.mxu0 %v6557
    %6722 = vmatpush.msra.mxu0 %v6556
    %6723 = vmatpush.msra.mxu0 %v6555
    %6724 = vmatpush.msra.mxu0 %v6554
    %6725 = vmatpush.msra.mxu0 %v6553
    %6726 = vmatpush.msra.mxu0 %v6552
    %6727 = vmatpush.msra.mxu0 %v6551
    %6728 = vmatpush.msra.mxu0 %v6550
    %6729 = vmatpush.msra.mxu0 %v6549
    %6730 = vmatpush.msra.mxu0 %v6548
    %6731 = vmatpush.msra.mxu0 %v6547
    %6732 = vmatpush.msra.mxu0 %v6546
    %6733 = vmatpush.msra.mxu0 %v6545
    %6734 = vmatpush.msra.mxu0 %v6544
    %6735 = vmatpush.msra.mxu0 %v6543
    %6736 = vmatmul.f32.gmra.mxu0 %v6590
    %v6737 = vpop.f32.mrf.mxu0
    %v6738 = vadd.f32 %v6718, %v6737
    %6739 = vdwg.mxu0
    %6740 = vmatpush.msra.mxu0 %v6574
    %6741 = vmatpush.msra.mxu0 %v6573
    %6742 = vmatpush.msra.mxu0 %v6572
    %6743 = vmatpush.msra.mxu0 %v6571
    %6744 = vmatpush.msra.mxu0 %v6570
    %6745 = vmatpush.msra.mxu0 %v6569
    %6746 = vmatpush.msra.mxu0 %v6568
    %6747 = vmatpush.msra.mxu0 %v6567
    %6748 = vmatpush.msra.mxu0 %v6566
    %6749 = vmatpush.msra.mxu0 %v6565
    %6750 = vmatpush.msra.mxu0 %v6564
    %6751 = vmatpush.msra.mxu0 %v6563
    %6752 = vmatpush.msra.mxu0 %v6562
    %6753 = vmatpush.msra.mxu0 %v6561
    %6754 = vmatpush.msra.mxu0 %v6560
    %6755 = vmatpush.msra.mxu0 %v6559
    %6756 = vmatmul.f32.gmra.mxu0 %v6591
    %v6757 = vpop.f32.mrf.mxu0
    %v6758 = vadd.f32 %v6738, %v6757
    %6759 = vdwg.mxu0
    %v6760 = vmax.f32 %v6758, 0.0
    %v6761 = vld [vmem:[%s7] sm:$0xff]
    %v6762 = vld [vmem:[%s7 + $0x8] sm:$0xff]
    %v6763 = vld [vmem:[%s7 + $0x10] sm:$0xff]
    %v6764 = vld [vmem:[%s7 + $0x18] sm:$0xff]
    %v6765 = vld [vmem:[%s7 + $0x20] sm:$0xff]
    %v6766 = vld [vmem:[%s7 + $0x28] sm:$0xff]
    %v6767 = vld [vmem:[%s7 + $0x30] sm:$0xff]
    %v6768 = vld [vmem:[%s7 + $0x38] sm:$0xff]
    %v6769 = vld [vmem:[%s8] sm:$0x1]
    %v6771 = vperm.slane %v6769, 0
    %vm6773 = vcmask 523264
    %v6775 = vsel %vm6773, %v6760, 0
    %6777 = vmatpush.msra.mxu0 0.0
    %6778 = vmatpush.msra.mxu0 0.0
    %6779 = vmatpush.msra.mxu0 0.0
    %6780 = vmatpush.msra.mxu0 0.0
    %6781 = vmatpush.msra.mxu0 0.0
    %6782 = vmatpush.msra.mxu0 0.0
    %6783 = vmatpush.msra.mxu0 0.0
    %6784 = vmatpush.msra.mxu0 0.0
    %6785 = vmatpush.msra.mxu0 %v6768
    %6786 = vmatpush.msra.mxu0 %v6767
    %6787 = vmatpush.msra.mxu0 %v6766
    %6788 = vmatpush.msra.mxu0 %v6765
    %6789 = vmatpush.msra.mxu0 %v6764
    %6790 = vmatpush.msra.mxu0 %v6763
    %6791 = vmatpush.msra.mxu0 %v6762
    %6792 = vmatpush.msra.mxu0 %v6761
    %6793 = vmatmul.f32.gmra.mxu0 %v6775
    %v6794 = vpop.f32.mrf.mxu0
    %v6795 = vadd.f32 %v6771, %v6794
    %6796 = vdwg.mxu0
    %vm6797 = vcmask 214016
    %6798 = vst.msk [vmem:[#allocation5] sm:$0x3] %vm6797, %v6795
    // Predicated region
    $region38: #{character_cnn_forward.1} parent=1 // pred_check
      _
    $region39: #{character_cnn_forward.1} parent=1 // pred_check_branch
      %6800 = sbr.rel (0) target = $region41
    $region40: #{character_cnn_forward.1} parent=1 // pred_region
      %6802 = vsyncadd [#allocation6], 0
      %s6804 = sshll.u32 [#allocation5], 4
      %s6805 = int_to_ptr.vmem [resolvable:$true] %s6804
      %s6806 = sshll.u32 %s9, 4
      %s6807 = int_to_ptr.hbm [resolvable:$true] %s6806
      %6809 = dma.vmem_to_hbm [thread:$0]  %s6805, 32, %s6807, [#allocation6]
    $region41: #{character_cnn_forward.1} parent=1 // pred_fallthru
      _
    // Predicated region
    $region42: #{character_cnn_forward.1} parent=1 // pred_check
      _
    $region43: #{character_cnn_forward.1} parent=1 // pred_check_branch
      %6811 = sbr.rel (0) target = $region45
    $region44: #{character_cnn_forward.1} parent=1 // pred_region
      %6813 = dma.done [#allocation6], 32
    $region45: #{character_cnn_forward.1} parent=1 // pred_fallthru
      _
    %6814 = vsyncpa [#allocation6], 1

</llo_original>
